<compile_context>
chip_gen: v7x
topology: tpu7x:2x2x1
jax: 0.10.0
libtpu: 0.0.40
codegen_flags: <defaults>
</compile_context>

<pallas_src>
import jax
import jax.numpy as jnp
from jax.experimental import pallas as pl
from jax.experimental.pallas import tpu as pltpu

LATENT_DIM = 32
HIDDEN = 1000          # logical width (matches the PyTorch module)
HIDDEN_PAD = 1024      # lane-aligned width used inside the kernel (zero padded)


def _round_up(x, m):
    return (x + m - 1) // m * m


def _leaky_relu(x, slope=0.2):
    return jnp.where(x > 0, x, slope * x)


def discriminator_kernel(x_ref,
                         w1_ref, b1_ref,
                         w2_ref, b2_ref,
                         w3_ref, b3_ref,
                         w4_ref, b4_ref,
                         o_ref):
    # Activations stay f32; weights are bf16. Cast to bf16 only at the MXU
    # inputs, accumulate in f32.
    h = jnp.dot(x_ref[...].astype(jnp.bfloat16), w1_ref[...],
                preferred_element_type=jnp.float32) + b1_ref[...]
    h = _leaky_relu(h)
    h = jnp.dot(h.astype(jnp.bfloat16), w2_ref[...],
                preferred_element_type=jnp.float32) + b2_ref[...]
    h = _leaky_relu(h)
    h = jnp.dot(h.astype(jnp.bfloat16), w3_ref[...],
                preferred_element_type=jnp.float32) + b3_ref[...]
    h = _leaky_relu(h)
    # Output head: [B,H] . [H,1] done as VPU multiply + lane (XLU) reduction
    # against a [1, H_PAD] weight row instead of a degenerate N=1 MXU pass.
    logit = (jnp.sum(h * w4_ref[...].astype(jnp.float32), axis=-1, keepdims=True)
             + b4_ref[...])
    o_ref[...] = jax.nn.sigmoid(logit).astype(o_ref.dtype)


@jax.jit
def discriminator_forward(x, params):
    """x: [B, LATENT_DIM] f32.  params: packed/padded bf16 weights + f32 biases.

    For best throughput, concatenate real+fake batches at the call site so the
    weight DMA is amortized over as many rows as possible.
    """
    (w1, b1), (w2, b2), (w3, b3), (w4, b4) = params
    B, D = x.shape

    # Batch tiling: single tile for small batches (no per-step grid overhead),
    # 128-row tiles otherwise so x/out double-buffer under compute while the
    # bf16 weights stay resident across grid steps.
    if B <= 128:
        b_pad = _round_up(max(B, 8), 8)
        tile_b = b_pad
    else:
        tile_b = 128
        b_pad = _round_up(B, tile_b)
    grid_b = b_pad // tile_b

    if b_pad != B:
        x = jnp.pad(x, ((0, b_pad - B), (0, 0)))

    def resident(arr):
        return pl.BlockSpec(arr.shape, lambda i: (0, 0))

    out = pl.pallas_call(
        discriminator_kernel,
        out_shape=jax.ShapeDtypeStruct((b_pad, 1), jnp.float32),
        grid=(grid_b,),
        in_specs=[
            pl.BlockSpec((tile_b, D), lambda i: (i, 0)),
            resident(w1), resident(b1),
            resident(w2), resident(b2),
            resident(w3), resident(b3),
            resident(w4), resident(b4),
        ],
        out_specs=pl.BlockSpec((tile_b, 1), lambda i: (i, 0)),
        compiler_params=pltpu.CompilerParams(
            dimension_semantics=("parallel",),   # megacore sharding on v7x
            vmem_limit_bytes=32 << 20,           # ~12 MiB actually needed; headroom safe on all gens
        ),
    )(x, w1, b1, w2, b2, w3, b3, w4, b4)
    return out[:B]


def init_params(key, latent_dim=LATENT_DIM, hidden=HIDDEN, hidden_pad=HIDDEN_PAD):
    """PyTorch nn.Linear-style init (uniform +/- 1/sqrt(fan_in)), then zero-pad
    hidden 1000 -> 1024 and cast weights to bf16 (biases stay f32).

    Weights are stored [in, out] so the kernel computes x @ W + b; the head
    weight is stored as a [1, hidden_pad] row for the VPU-reduction head.
    """
    dims = [(latent_dim, hidden), (hidden, hidden), (hidden, hidden), (hidden, 1)]
    raw = []
    for (fan_in, fan_out) in dims:
        key, kw, kb = jax.random.split(key, 3)
        bound = 1.0 / jnp.sqrt(jnp.float32(fan_in))
        w = jax.random.uniform(kw, (fan_in, fan_out), jnp.float32, -bound, bound)
        b = jax.random.uniform(kb, (1, fan_out), jnp.float32, -bound, bound)
        raw.append((w, b))

    (w1, b1), (w2, b2), (w3, b3), (w4, b4) = raw
    hp = hidden_pad - hidden

    w1p = jnp.pad(w1, ((0, 0), (0, hp))).astype(jnp.bfloat16)
    b1p = jnp.pad(b1, ((0, 0), (0, hp)))
    w2p = jnp.pad(w2, ((0, hp), (0, hp))).astype(jnp.bfloat16)
    b2p = jnp.pad(b2, ((0, 0), (0, hp)))
    w3p = jnp.pad(w3, ((0, hp), (0, hp))).astype(jnp.bfloat16)
    b3p = jnp.pad(b3, ((0, 0), (0, hp)))
    w4p = jnp.pad(w4.T, ((0, 0), (0, hp))).astype(jnp.bfloat16)  # [1, hidden_pad] row
    b4p = b4                                                     # [1, 1]

    return [(w1p, b1p), (w2p, b2p), (w3p, b3p), (w4p, b4p)]


def reference_forward(x, params):
    """Pure-JAX reference with identical mixed precision (bf16 weights, f32 acc).
    Zero-padded weight rows/cols contribute nothing (LeakyReLU(0)=0), so this
    matches the logical 1000-wide PyTorch module."""
    (w1, b1), (w2, b2), (w3, b3), (w4, b4) = params
    h = jnp.dot(x.astype(jnp.bfloat16), w1, preferred_element_type=jnp.float32) + b1
    h = jnp.where(h > 0, h, 0.2 * h)
    h = jnp.dot(h.astype(jnp.bfloat16), w2, preferred_element_type=jnp.float32) + b2
    h = jnp.where(h > 0, h, 0.2 * h)
    h = jnp.dot(h.astype(jnp.bfloat16), w3, preferred_element_type=jnp.float32) + b3
    h = jnp.where(h > 0, h, 0.2 * h)
    logit = jnp.sum(h * w4.astype(jnp.float32), axis=-1, keepdims=True) + b4
    return jax.nn.sigmoid(logit)


if __name__ == "__main__":
    key = jax.random.PRNGKey(0)
    key, kx1, kx2 = jax.random.split(key, 3)
    params = init_params(key)

    # Small batch (single grid step, sublane-aligned).
    x_small = jax.random.normal(kx1, (8, LATENT_DIM), jnp.float32)
    out_small = jax.block_until_ready(discriminator_forward(x_small, params))
    ref_small = reference_forward(x_small, params)
    assert out_small.shape == (8, 1), out_small.shape
    assert jnp.allclose(out_small, ref_small, atol=2e-3, rtol=2e-3), (
        f"max abs err {jnp.max(jnp.abs(out_small - ref_small))}")

    # Larger batch exercising the batch-tiled grid (pads 200 -> 256, 2 tiles of 128).
    x_big = jax.random.normal(kx2, (200, LATENT_DIM), jnp.float32)
    out_big = jax.block_until_ready(discriminator_forward(x_big, params))
    ref_big = reference_forward(x_big, params)
    assert out_big.shape == (200, 1), out_big.shape
    assert jnp.allclose(out_big, ref_big, atol=2e-3, rtol=2e-3), (
        f"max abs err {jnp.max(jnp.abs(out_big - ref_big))}")

    print("KERNEL_OK")
</pallas_src>

<mosaic_0001>
module attributes {stable_mosaic.version = 11 : i64} {
  func.func @discriminator_kernel(%arg0: i32, %arg1: memref<8x32xf32, #tpu.memory_space<vmem>>, %arg2: memref<32x1024xbf16, #tpu.memory_space<vmem>>, %arg3: memref<1x1024xf32, #tpu.memory_space<vmem>>, %arg4: memref<1024x1024xbf16, #tpu.memory_space<vmem>>, %arg5: memref<1x1024xf32, #tpu.memory_space<vmem>>, %arg6: memref<1024x1024xbf16, #tpu.memory_space<vmem>>, %arg7: memref<1x1024xf32, #tpu.memory_space<vmem>>, %arg8: memref<1x1024xbf16, #tpu.memory_space<vmem>>, %arg9: memref<1x1xf32, #tpu.memory_space<vmem>>, %arg10: memref<8x1xf32, #tpu.memory_space<vmem>>) attributes {dimension_semantics = [#tpu.dimension_semantics<parallel>], iteration_bounds = array<i64: 1>, scalar_prefetch = 0 : i64, scratch_operands = 0 : i64, tpu.core_type = #tpu.core_type<tc>, window_params = [{transform_indices = @transform_0, window_bounds = array<i64: 8, 32>}, {pipeline_mode = #tpu.pipeline_mode<synchronous>, transform_indices = @transform_1, window_bounds = array<i64: 32, 1024>}, {pipeline_mode = #tpu.pipeline_mode<synchronous>, transform_indices = @transform_2, window_bounds = array<i64: 1, 1024>}, {pipeline_mode = #tpu.pipeline_mode<synchronous>, transform_indices = @transform_3, window_bounds = array<i64: 1024, 1024>}, {pipeline_mode = #tpu.pipeline_mode<synchronous>, transform_indices = @transform_4, window_bounds = array<i64: 1, 1024>}, {pipeline_mode = #tpu.pipeline_mode<synchronous>, transform_indices = @transform_5, window_bounds = array<i64: 1024, 1024>}, {pipeline_mode = #tpu.pipeline_mode<synchronous>, transform_indices = @transform_6, window_bounds = array<i64: 1, 1024>}, {pipeline_mode = #tpu.pipeline_mode<synchronous>, transform_indices = @transform_7, window_bounds = array<i64: 1, 1024>}, {pipeline_mode = #tpu.pipeline_mode<synchronous>, transform_indices = @transform_8, window_bounds = array<i64: 1, 1>}, {transform_indices = @transform_9, window_bounds = array<i64: 8, 1>}]} {
    %c0 = arith.constant 0 : index
    %c0_0 = arith.constant 0 : index
    %0 = vector.load %arg1[%c0, %c0_0] : memref<8x32xf32, #tpu.memory_space<vmem>>, vector<8x32xf32>
    %1 = arith.truncf %0 : vector<8x32xf32> to vector<8x32xbf16>
    %c0_1 = arith.constant 0 : index
    %c0_2 = arith.constant 0 : index
    %2 = vector.load %arg2[%c0_1, %c0_2] : memref<32x1024xbf16, #tpu.memory_space<vmem>>, vector<32x1024xbf16>
    %cst = arith.constant dense<0.000000e+00> : vector<8x1024xf32>
    %3 = tpu.matmul %1, %2, %cst {dimension_numbers = #tpu.dot_dimension_numbers<[1], [0], [0], [1], [0, 0, 1, 1], [], []>} : vector<8x32xbf16>, vector<32x1024xbf16>, vector<8x1024xf32> -> vector<8x1024xf32>
    %c0_3 = arith.constant 0 : index
    %c0_4 = arith.constant 0 : index
    %4 = vector.load %arg3[%c0_3, %c0_4] : memref<1x1024xf32, #tpu.memory_space<vmem>>, vector<1x1024xf32>
    %5 = vector.broadcast %4 : vector<1x1024xf32> to vector<8x1024xf32>
    %6 = arith.addf %3, %5 : vector<8x1024xf32>
    %cst_5 = arith.constant 0.000000e+00 : f32
    %7 = vector.broadcast %cst_5 : f32 to vector<8x1024xf32>
    %8 = arith.cmpf ogt, %6, %7 : vector<8x1024xf32>
    %cst_6 = arith.constant 2.000000e-01 : f32
    %9 = vector.broadcast %cst_6 : f32 to vector<8x1024xf32>
    %10 = arith.mulf %9, %6 : vector<8x1024xf32>
    %11 = arith.select %8, %6, %10 : vector<8x1024xi1>, vector<8x1024xf32>
    %12 = arith.truncf %11 : vector<8x1024xf32> to vector<8x1024xbf16>
    %c0_7 = arith.constant 0 : index
    %c0_8 = arith.constant 0 : index
    %13 = vector.load %arg4[%c0_7, %c0_8] : memref<1024x1024xbf16, #tpu.memory_space<vmem>>, vector<1024x1024xbf16>
    %cst_9 = arith.constant dense<0.000000e+00> : vector<8x1024xf32>
    %14 = tpu.matmul %12, %13, %cst_9 {dimension_numbers = #tpu.dot_dimension_numbers<[1], [0], [0], [1], [0, 0, 1, 1], [], []>} : vector<8x1024xbf16>, vector<1024x1024xbf16>, vector<8x1024xf32> -> vector<8x1024xf32>
    %c0_10 = arith.constant 0 : index
    %c0_11 = arith.constant 0 : index
    %15 = vector.load %arg5[%c0_10, %c0_11] : memref<1x1024xf32, #tpu.memory_space<vmem>>, vector<1x1024xf32>
    %16 = vector.broadcast %15 : vector<1x1024xf32> to vector<8x1024xf32>
    %17 = arith.addf %14, %16 : vector<8x1024xf32>
    %cst_12 = arith.constant 0.000000e+00 : f32
    %18 = vector.broadcast %cst_12 : f32 to vector<8x1024xf32>
    %19 = arith.cmpf ogt, %17, %18 : vector<8x1024xf32>
    %cst_13 = arith.constant 2.000000e-01 : f32
    %20 = vector.broadcast %cst_13 : f32 to vector<8x1024xf32>
    %21 = arith.mulf %20, %17 : vector<8x1024xf32>
    %22 = arith.select %19, %17, %21 : vector<8x1024xi1>, vector<8x1024xf32>
    %23 = arith.truncf %22 : vector<8x1024xf32> to vector<8x1024xbf16>
    %c0_14 = arith.constant 0 : index
    %c0_15 = arith.constant 0 : index
    %24 = vector.load %arg6[%c0_14, %c0_15] : memref<1024x1024xbf16, #tpu.memory_space<vmem>>, vector<1024x1024xbf16>
    %cst_16 = arith.constant dense<0.000000e+00> : vector<8x1024xf32>
    %25 = tpu.matmul %23, %24, %cst_16 {dimension_numbers = #tpu.dot_dimension_numbers<[1], [0], [0], [1], [0, 0, 1, 1], [], []>} : vector<8x1024xbf16>, vector<1024x1024xbf16>, vector<8x1024xf32> -> vector<8x1024xf32>
    %c0_17 = arith.constant 0 : index
    %c0_18 = arith.constant 0 : index
    %26 = vector.load %arg7[%c0_17, %c0_18] : memref<1x1024xf32, #tpu.memory_space<vmem>>, vector<1x1024xf32>
    %27 = vector.broadcast %26 : vector<1x1024xf32> to vector<8x1024xf32>
    %28 = arith.addf %25, %27 : vector<8x1024xf32>
    %cst_19 = arith.constant 0.000000e+00 : f32
    %29 = vector.broadcast %cst_19 : f32 to vector<8x1024xf32>
    %30 = arith.cmpf ogt, %28, %29 : vector<8x1024xf32>
    %cst_20 = arith.constant 2.000000e-01 : f32
    %31 = vector.broadcast %cst_20 : f32 to vector<8x1024xf32>
    %32 = arith.mulf %31, %28 : vector<8x1024xf32>
    %33 = arith.select %30, %28, %32 : vector<8x1024xi1>, vector<8x1024xf32>
    %c0_21 = arith.constant 0 : index
    %c0_22 = arith.constant 0 : index
    %34 = vector.load %arg8[%c0_21, %c0_22] : memref<1x1024xbf16, #tpu.memory_space<vmem>>, vector<1x1024xbf16>
    %35 = arith.extf %34 : vector<1x1024xbf16> to vector<1x1024xf32>
    %36 = vector.broadcast %35 : vector<1x1024xf32> to vector<8x1024xf32>
    %37 = arith.mulf %33, %36 : vector<8x1024xf32>
    %cst_23 = arith.constant dense<0.000000e+00> : vector<8xf32>
    %38 = vector.multi_reduction <add>, %37, %cst_23 [1] : vector<8x1024xf32> to vector<8xf32>
    %39 = vector.shape_cast %38 : vector<8xf32> to vector<8x1xf32>
    %c0_24 = arith.constant 0 : index
    %c0_25 = arith.constant 0 : index
    %40 = vector.load %arg9[%c0_24, %c0_25] : memref<1x1xf32, #tpu.memory_space<vmem>>, vector<1x1xf32>
    %41 = vector.broadcast %40 : vector<1x1xf32> to vector<8x1xf32>
    %42 = arith.addf %39, %41 : vector<8x1xf32>
    %43 = arith.negf %42 : vector<8x1xf32>
    %44 = math.exp %43 : vector<8x1xf32>
    %cst_26 = arith.constant 1.000000e+00 : f32
    %45 = vector.broadcast %cst_26 : f32 to vector<8x1xf32>
    %46 = arith.addf %45, %44 : vector<8x1xf32>
    %47 = arith.divf %45, %46 : vector<8x1xf32>
    %c0_27 = arith.constant 0 : index
    %c0_28 = arith.constant 0 : index
    %48 = vector.load %arg10[%c0_27, %c0_28] : memref<8x1xf32, #tpu.memory_space<vmem>>, vector<8x1xf32>
    tpu.vector_store %arg10[%c0_27, %c0_28], %47 {strides = array<i32>} : memref<8x1xf32, #tpu.memory_space<vmem>>, vector<8x1xf32>,
    return
  }
  func.func @transform_0(%arg0: i32) -> (i32, i32) {
    %c0_i32 = arith.constant 0 : i32
    %c0_i32_0 = arith.constant 0 : i32
    return %arg0, %c0_i32 : i32, i32
  }
  func.func @transform_1(%arg0: i32) -> (i32, i32) {
    %c0_i32 = arith.constant 0 : i32
    %c0_i32_0 = arith.constant 0 : i32
    %c0_i32_1 = arith.constant 0 : i32
    return %c0_i32, %c0_i32_0 : i32, i32
  }
  func.func @transform_2(%arg0: i32) -> (i32, i32) {
    %c0_i32 = arith.constant 0 : i32
    %c0_i32_0 = arith.constant 0 : i32
    %c0_i32_1 = arith.constant 0 : i32
    return %c0_i32, %c0_i32_0 : i32, i32
  }
  func.func @transform_3(%arg0: i32) -> (i32, i32) {
    %c0_i32 = arith.constant 0 : i32
    %c0_i32_0 = arith.constant 0 : i32
    %c0_i32_1 = arith.constant 0 : i32
    return %c0_i32, %c0_i32_0 : i32, i32
  }
  func.func @transform_4(%arg0: i32) -> (i32, i32) {
    %c0_i32 = arith.constant 0 : i32
    %c0_i32_0 = arith.constant 0 : i32
    %c0_i32_1 = arith.constant 0 : i32
    return %c0_i32, %c0_i32_0 : i32, i32
  }
  func.func @transform_5(%arg0: i32) -> (i32, i32) {
    %c0_i32 = arith.constant 0 : i32
    %c0_i32_0 = arith.constant 0 : i32
    %c0_i32_1 = arith.constant 0 : i32
    return %c0_i32, %c0_i32_0 : i32, i32
  }
  func.func @transform_6(%arg0: i32) -> (i32, i32) {
    %c0_i32 = arith.constant 0 : i32
    %c0_i32_0 = arith.constant 0 : i32
    %c0_i32_1 = arith.constant 0 : i32
    return %c0_i32, %c0_i32_0 : i32, i32
  }
  func.func @transform_7(%arg0: i32) -> (i32, i32) {
    %c0_i32 = arith.constant 0 : i32
    %c0_i32_0 = arith.constant 0 : i32
    %c0_i32_1 = arith.constant 0 : i32
    return %c0_i32, %c0_i32_0 : i32, i32
  }
  func.func @transform_8(%arg0: i32) -> (i32, i32) {
    %c0_i32 = arith.constant 0 : i32
    %c0_i32_0 = arith.constant 0 : i32
    %c0_i32_1 = arith.constant 0 : i32
    return %c0_i32, %c0_i32_0 : i32, i32
  }
  func.func @transform_9(%arg0: i32) -> (i32, i32) {
    %c0_i32 = arith.constant 0 : i32
    %c0_i32_0 = arith.constant 0 : i32
    return %arg0, %c0_i32 : i32, i32
  }
}

</mosaic_0001>

<llo_original>
// kernel: discriminator_forward.1
$region0: #{discriminator_forward.1}
  #allocation0 [shape = 'u32[]', space=smem, size = 0x4, offset = 0x4, fixed_abs, tag = 'smem constant byte address 0x4 - core index']
  #allocation1 [shape = 'u32[144,128]{1,0:T(1,128)}', space=vmem, size = 0x12000, scoped, tag = 'internal scratch']
  #allocation2 [shape = 'f32[1,1]{1,0:T(1,128)S(1)}', space=vmem, size = 0x200, scoped, tag = 'scoped memory for discriminator_forward.1']
  %s0 = inlined_call_operand.hbm [shape: f32[8,32], index: 0, kind: input, shape index: {}]
  %s1 = inlined_call_operand.hbm [shape: bf16[32,1024], index: 1, kind: input, shape index: {}]
  %s2 = inlined_call_operand.hbm [shape: f32[1,1024], index: 2, kind: input, shape index: {}]
  %s3 = inlined_call_operand.hbm [shape: bf16[1024,1024], index: 3, kind: input, shape index: {}]
  %s4 = inlined_call_operand.hbm [shape: f32[1,1024], index: 4, kind: input, shape index: {}]
  %s5 = inlined_call_operand.hbm [shape: bf16[1024,1024], index: 5, kind: input, shape index: {}]
  %s6 = inlined_call_operand.hbm [shape: f32[1,1024], index: 6, kind: input, shape index: {}]
  %s7 = inlined_call_operand.hbm [shape: bf16[1,1024], index: 7, kind: input, shape index: {}]
  %s8 = inlined_call_operand.<no memory space> [shape: f32[1,1], index: 8, kind: input, shape index: {}]
  %s9 = inlined_call_operand.vmem [shape: f32[8,1], index: 9, kind: output, shape index: {}]
  %s10 = sld [smem:[#allocation0]]
  $region78: #{discriminator_forward.1} parent=0
    _
  %s12 = ssub.s32 1, %s10
  %s13 = scalar_select 0, %s12, %s10
  %v14 = vstv %s8
  %15 = vst [vmem:[#allocation2] sm:$0x1] %v14
  $region1: #{discriminator_forward.1} parent=0
    #allocation3 [shape = 'u8[4096]{0}', space=vmem, size = 0x1000, scoped, tag = 'input window, operand 0, single buffered']
    #allocation4 [shape = 's32[1]{0}', space=sflag, size = 0x4, scoped, tag = 'scoped memory for discriminator_forward.1']
    #allocation5 [shape = 'u8[65536]{0}', space=vmem, size = 0x10000, scoped, tag = 'input window, operand 1, single buffered']
    #allocation6 [shape = 's32[1]{0}', space=sflag, size = 0x4, scoped, tag = 'scoped memory for discriminator_forward.1']
    #allocation7 [shape = 'u8[4096]{0}', space=vmem, size = 0x1000, scoped, tag = 'input window, operand 2, single buffered']
    #allocation8 [shape = 'u8[2097152]{0}', space=vmem, size = 0x200000, scoped, tag = 'input window, operand 3, single buffered']
    #allocation9 [shape = 's32[1]{0}', space=sflag, size = 0x4, scoped, tag = 'scoped memory for discriminator_forward.1']
    #allocation10 [shape = 'u8[4096]{0}', space=vmem, size = 0x1000, scoped, tag = 'input window, operand 4, single buffered']
    #allocation11 [shape = 'u8[2097152]{0}', space=vmem, size = 0x200000, scoped, tag = 'input window, operand 5, single buffered']
    #allocation12 [shape = 's32[1]{0}', space=sflag, size = 0x4, scoped, tag = 'scoped memory for discriminator_forward.1']
    #allocation13 [shape = 'u8[4096]{0}', space=vmem, size = 0x1000, scoped, tag = 'input window, operand 6, single buffered']
    #allocation14 [shape = 'u8[4096]{0}', space=vmem, size = 0x1000, scoped, tag = 'input window, operand 7, single buffered']
    #allocation15 [shape = 's32[1]{0}', space=sflag, size = 0x4, scoped, tag = 'scoped memory for discriminator_forward.1']
    %16 = vsyncpa [#allocation4], 0
    %17 = vsyncpa [#allocation6], 0
    %18 = vsyncpa [#allocation9], 0
    %19 = vsyncpa [#allocation12], 0
    %20 = vsyncpa [#allocation15], 0
    // Predicated region
    $region2: #{discriminator_forward.1} parent=1 // pred_check
      _
    $region3: #{discriminator_forward.1} parent=1 // pred_check_branch
      %22 = sbr.rel (0) target = $region5
    $region4: #{discriminator_forward.1} parent=1 // pred_region
      %s24 = ssub.s32 128, 128
      %25 = vsyncadd [#allocation4], %s24
      %s27 = sshll.u32 [#allocation3], 4
      %s28 = int_to_ptr.vmem [resolvable:$true] %s27
      %30 = dma.hbm_to_vmem [thread:$0]  %s0, 128, %s28, [#allocation4]
    $region5: #{discriminator_forward.1} parent=1 // pred_fallthru
      _
    // Predicated region
    $region6: #{discriminator_forward.1} parent=1 // pred_check
      _
    $region7: #{discriminator_forward.1} parent=1 // pred_check_branch
      %32 = sbr.rel (0) target = $region9
    $region8: #{discriminator_forward.1} parent=1 // pred_region
      %s34 = ssub.s32 2048, 2048
      %35 = vsyncadd [#allocation6], %s34
      %s36 = sshll.u32 [#allocation5], 4
      %s37 = int_to_ptr.vmem [resolvable:$true] %s36
      %42 = dma.hbm_to_vmem [thread:$0]  %s1, 2048, %s37, [#allocation6], 512, 512, 32
    $region9: #{discriminator_forward.1} parent=1 // pred_fallthru
      _
    // Predicated region
    $region10: #{discriminator_forward.1} parent=1 // pred_check
      _
    $region11: #{discriminator_forward.1} parent=1 // pred_check_branch
      %44 = sbr.rel (0) target = $region13
    $region12: #{discriminator_forward.1} parent=1 // pred_region
      %s46 = ssub.s32 128, 128
      %47 = vsyncadd [#allocation6], %s46
      %s49 = sshll.u32 [#allocation7], 4
      %s50 = int_to_ptr.vmem [resolvable:$true] %s49
      %52 = dma.hbm_to_vmem [thread:$0]  %s2, 128, %s50, [#allocation6]
    $region13: #{discriminator_forward.1} parent=1 // pred_fallthru
      _
    // Predicated region
    $region14: #{discriminator_forward.1} parent=1 // pred_check
      _
    $region15: #{discriminator_forward.1} parent=1 // pred_check_branch
      %54 = sbr.rel (0) target = $region17
    $region16: #{discriminator_forward.1} parent=1 // pred_region
      %s56 = ssub.s32 65536, 65536
      %57 = vsyncadd [#allocation9], %s56
      %s58 = sshll.u32 [#allocation8], 4
      %s59 = int_to_ptr.vmem [resolvable:$true] %s58
      %64 = dma.hbm_to_vmem [thread:$0]  %s3, 65536, %s59, [#allocation9], 512, 512, 32
    $region17: #{discriminator_forward.1} parent=1 // pred_fallthru
      _
    // Predicated region
    $region18: #{discriminator_forward.1} parent=1 // pred_check
      _
    $region19: #{discriminator_forward.1} parent=1 // pred_check_branch
      %66 = sbr.rel (0) target = $region21
    $region20: #{discriminator_forward.1} parent=1 // pred_region
      %s68 = ssub.s32 128, 128
      %69 = vsyncadd [#allocation9], %s68
      %s71 = sshll.u32 [#allocation10], 4
      %s72 = int_to_ptr.vmem [resolvable:$true] %s71
      %74 = dma.hbm_to_vmem [thread:$0]  %s4, 128, %s72, [#allocation9]
    $region21: #{discriminator_forward.1} parent=1 // pred_fallthru
      _
    // Predicated region
    $region22: #{discriminator_forward.1} parent=1 // pred_check
      _
    $region23: #{discriminator_forward.1} parent=1 // pred_check_branch
      %76 = sbr.rel (0) target = $region25
    $region24: #{discriminator_forward.1} parent=1 // pred_region
      %s78 = ssub.s32 65536, 65536
      %79 = vsyncadd [#allocation12], %s78
      %s80 = sshll.u32 [#allocation11], 4
      %s81 = int_to_ptr.vmem [resolvable:$true] %s80
      %86 = dma.hbm_to_vmem [thread:$0]  %s5, 65536, %s81, [#allocation12], 512, 512, 32
    $region25: #{discriminator_forward.1} parent=1 // pred_fallthru
      _
    // Predicated region
    $region26: #{discriminator_forward.1} parent=1 // pred_check
      _
    $region27: #{discriminator_forward.1} parent=1 // pred_check_branch
      %88 = sbr.rel (0) target = $region29
    $region28: #{discriminator_forward.1} parent=1 // pred_region
      %s90 = ssub.s32 128, 128
      %91 = vsyncadd [#allocation12], %s90
      %s93 = sshll.u32 [#allocation13], 4
      %s94 = int_to_ptr.vmem [resolvable:$true] %s93
      %96 = dma.hbm_to_vmem [thread:$0]  %s6, 128, %s94, [#allocation12]
    $region29: #{discriminator_forward.1} parent=1 // pred_fallthru
      _
    // Predicated region
    $region30: #{discriminator_forward.1} parent=1 // pred_check
      _
    $region31: #{discriminator_forward.1} parent=1 // pred_check_branch
      %98 = sbr.rel (0) target = $region33
    $region32: #{discriminator_forward.1} parent=1 // pred_region
      %s100 = ssub.s32 128, 128
      %101 = vsyncadd [#allocation15], %s100
      %s103 = sshll.u32 [#allocation14], 4
      %s104 = int_to_ptr.vmem [resolvable:$true] %s103
      %106 = dma.hbm_to_vmem [thread:$0]  %s7, 128, %s104, [#allocation15]
    $region33: #{discriminator_forward.1} parent=1 // pred_fallthru
      _
    // Predicated region
    $region34: #{discriminator_forward.1} parent=1 // pred_check
      _
    $region35: #{discriminator_forward.1} parent=1 // pred_check_branch
      %108 = sbr.rel (0) target = $region37
    $region36: #{discriminator_forward.1} parent=1 // pred_region
      _
    $region37: #{discriminator_forward.1} parent=1 // pred_fallthru
      _
    // Predicated region
    $region38: #{discriminator_forward.1} parent=1 // pred_check
      _
    $region39: #{discriminator_forward.1} parent=1 // pred_check_branch
      %110 = sbr.rel (0) target = $region41
    $region40: #{discriminator_forward.1} parent=1 // pred_region
      %111 = dma.done [#allocation4], 128
    $region41: #{discriminator_forward.1} parent=1 // pred_fallthru
      _
    // Predicated region
    $region42: #{discriminator_forward.1} parent=1 // pred_check
      _
    $region43: #{discriminator_forward.1} parent=1 // pred_check_branch
      %113 = sbr.rel (0) target = $region45
    $region44: #{discriminator_forward.1} parent=1 // pred_region
      %114 = dma.done [#allocation6], 2048
    $region45: #{discriminator_forward.1} parent=1 // pred_fallthru
      _
    // Predicated region
    $region46: #{discriminator_forward.1} parent=1 // pred_check
      _
    $region47: #{discriminator_forward.1} parent=1 // pred_check_branch
      %116 = sbr.rel (0) target = $region49
    $region48: #{discriminator_forward.1} parent=1 // pred_region
      %117 = dma.done [#allocation6], 128
    $region49: #{discriminator_forward.1} parent=1 // pred_fallthru
      _
    // Predicated region
    $region50: #{discriminator_forward.1} parent=1 // pred_check
      _
    $region51: #{discriminator_forward.1} parent=1 // pred_check_branch
      %119 = sbr.rel (0) target = $region53
    $region52: #{discriminator_forward.1} parent=1 // pred_region
      %120 = dma.done [#allocation9], 65536
    $region53: #{discriminator_forward.1} parent=1 // pred_fallthru
      _
    // Predicated region
    $region54: #{discriminator_forward.1} parent=1 // pred_check
      _
    $region55: #{discriminator_forward.1} parent=1 // pred_check_branch
      %122 = sbr.rel (0) target = $region57
    $region56: #{discriminator_forward.1} parent=1 // pred_region
      %123 = dma.done [#allocation9], 128
    $region57: #{discriminator_forward.1} parent=1 // pred_fallthru
      _
    // Predicated region
    $region58: #{discriminator_forward.1} parent=1 // pred_check
      _
    $region59: #{discriminator_forward.1} parent=1 // pred_check_branch
      %125 = sbr.rel (0) target = $region61
    $region60: #{discriminator_forward.1} parent=1 // pred_region
      %126 = dma.done [#allocation12], 65536
    $region61: #{discriminator_forward.1} parent=1 // pred_fallthru
      _
    // Predicated region
    $region62: #{discriminator_forward.1} parent=1 // pred_check
      _
    $region63: #{discriminator_forward.1} parent=1 // pred_check_branch
      %128 = sbr.rel (0) target = $region65
    $region64: #{discriminator_forward.1} parent=1 // pred_region
      %129 = dma.done [#allocation12], 128
    $region65: #{discriminator_forward.1} parent=1 // pred_fallthru
      _
    // Predicated region
    $region66: #{discriminator_forward.1} parent=1 // pred_check
      _
    $region67: #{discriminator_forward.1} parent=1 // pred_check_branch
      %131 = sbr.rel (0) target = $region69
    $region68: #{discriminator_forward.1} parent=1 // pred_region
      %132 = dma.done [#allocation15], 128
    $region69: #{discriminator_forward.1} parent=1 // pred_fallthru
      _
    %v134 = vld [vmem:[#allocation3] sm:$0xff]
    %v135 = vpack.c.bf16 %v134, %v134
    %v136 = vld [vmem:[#allocation5] sm:$0xff]
    %v137 = vld [vmem:[#allocation5 + $0x8] sm:$0xff]
    %v138 = vld [vmem:[#allocation5 + $0x10] sm:$0xff]
    %v139 = vld [vmem:[#allocation5 + $0x18] sm:$0xff]
    %v140 = vld [vmem:[#allocation5 + $0x20] sm:$0xff]
    %v141 = vld [vmem:[#allocation5 + $0x28] sm:$0xff]
    %v142 = vld [vmem:[#allocation5 + $0x30] sm:$0xff]
    %v143 = vld [vmem:[#allocation5 + $0x38] sm:$0xff]
    %v144 = vld [vmem:[#allocation5 + $0x40] sm:$0xff]
    %v145 = vld [vmem:[#allocation5 + $0x48] sm:$0xff]
    %v146 = vld [vmem:[#allocation5 + $0x50] sm:$0xff]
    %v147 = vld [vmem:[#allocation5 + $0x58] sm:$0xff]
    %v148 = vld [vmem:[#allocation5 + $0x60] sm:$0xff]
    %v149 = vld [vmem:[#allocation5 + $0x68] sm:$0xff]
    %v150 = vld [vmem:[#allocation5 + $0x70] sm:$0xff]
    %v151 = vld [vmem:[#allocation5 + $0x78] sm:$0xff]
    %v152 = vld [vmem:[#allocation7] sm:$0xff]
    %v154 = vlaneseq
    %v155 = vshrl.u32 %v154, 7
    %v156 = vsub.s32 0, %v155
    %v157 = vrot.slane %v152, %v156
    %v158 = vlaneseq
    %v159 = vshrl.u32 %v158, 7
    %v160 = vsub.s32 1, %v159
    %v161 = vrot.slane %v152, %v160
    %v162 = vlaneseq
    %v163 = vshrl.u32 %v162, 7
    %v164 = vsub.s32 2, %v163
    %v165 = vrot.slane %v152, %v164
    %v166 = vlaneseq
    %v167 = vshrl.u32 %v166, 7
    %v168 = vsub.s32 3, %v167
    %v169 = vrot.slane %v152, %v168
    %v170 = vlaneseq
    %v171 = vshrl.u32 %v170, 7
    %v172 = vsub.s32 4, %v171
    %v173 = vrot.slane %v152, %v172
    %v174 = vlaneseq
    %v175 = vshrl.u32 %v174, 7
    %v176 = vsub.s32 5, %v175
    %v177 = vrot.slane %v152, %v176
    %v178 = vlaneseq
    %v179 = vshrl.u32 %v178, 7
    %v180 = vsub.s32 6, %v179
    %v181 = vrot.slane %v152, %v180
    %v182 = vlaneseq
    %v183 = vshrl.u32 %v182, 7
    %v184 = vsub.s32 7, %v183
    %v185 = vrot.slane %v152, %v184
    %v210 = vunpack.c.l.b16 %v136
    %v211 = vunpack.c.h.b16 %v136
    %v212 = vunpack.c.l.b16 %v137
    %v213 = vunpack.c.h.b16 %v137
    %v214 = vunpack.c.l.b16 %v138
    %v215 = vunpack.c.h.b16 %v138
    %v216 = vunpack.c.l.b16 %v139
    %v217 = vunpack.c.h.b16 %v139
    %v218 = vunpack.c.l.b16 %v140
    %v219 = vunpack.c.h.b16 %v140
    %v220 = vunpack.c.l.b16 %v141
    %v221 = vunpack.c.h.b16 %v141
    %v222 = vunpack.c.l.b16 %v142
    %v223 = vunpack.c.h.b16 %v142
    %v224 = vunpack.c.l.b16 %v143
    %v225 = vunpack.c.h.b16 %v143
    %v226 = vunpack.c.l.b16 %v144
    %v227 = vunpack.c.h.b16 %v144
    %v228 = vunpack.c.l.b16 %v145
    %v229 = vunpack.c.h.b16 %v145
    %v230 = vunpack.c.l.b16 %v146
    %v231 = vunpack.c.h.b16 %v146
    %v232 = vunpack.c.l.b16 %v147
    %v233 = vunpack.c.h.b16 %v147
    %v234 = vunpack.c.l.b16 %v148
    %v235 = vunpack.c.h.b16 %v148
    %v236 = vunpack.c.l.b16 %v149
    %v237 = vunpack.c.h.b16 %v149
    %v238 = vunpack.c.l.b16 %v150
    %v239 = vunpack.c.h.b16 %v150
    %v240 = vunpack.c.l.b16 %v151
    %v241 = vunpack.c.h.b16 %v151
    %v242 = vpack.c.b16 %v218, %v210
    %v243 = vpack.c.b16 %v219, %v211
    %v244 = vpack.c.b16 %v220, %v212
    %v245 = vpack.c.b16 %v221, %v213
    %v246 = vpack.c.b16 %v222, %v214
    %v247 = vpack.c.b16 %v223, %v215
    %v248 = vpack.c.b16 %v224, %v216
    %v249 = vpack.c.b16 %v225, %v217
    %v250 = vpack.c.b16 %v234, %v226
    %v251 = vpack.c.b16 %v235, %v227
    %v252 = vpack.c.b16 %v236, %v228
    %v253 = vpack.c.b16 %v237, %v229
    %v254 = vpack.c.b16 %v238, %v230
    %v255 = vpack.c.b16 %v239, %v231
    %v256 = vpack.c.b16 %v240, %v232
    %v257 = vpack.c.b16 %v241, %v233
    %vm274 = vcmask 261120
    %v276 = vsel %vm274, %v135, 0
    %278 = vmatprep.subr.bf16.mxu0 %v243
    %279 = vmatpush1.bf16.msra.mxu0 %v242
    %280 = vmatprep.subr.bf16.mxu0 %v251
    %281 = vmatpush1.bf16.msra.mxu0 %v250
    %282 = vmatprep.subr.bf16.mxu0 0
    %283 = vmatpush1.bf16.msra.mxu0 0
    %284 = vmatprep.subr.bf16.mxu0 0
    %285 = vmatpush1.bf16.msra.mxu0 0
    %286 = vmatprep.subr.bf16.mxu0 0
    %287 = vmatpush1.bf16.msra.mxu0 0
    %288 = vmatprep.subr.bf16.mxu0 0
    %289 = vmatpush1.bf16.msra.mxu0 0
    %290 = vmatprep.subr.bf16.mxu0 0
    %291 = vmatpush1.bf16.msra.mxu0 0
    %292 = vmatprep.subr.bf16.mxu0 0
    %293 = vmatpush1.bf16.msra.mxu0 0
    %294 = vmatprep.subr.bf16.mxu0 0
    %295 = vmatpush1.bf16.msra.mxu0 0
    %296 = vmatprep.subr.bf16.mxu0 0
    %297 = vmatpush1.bf16.msra.mxu0 0
    %298 = vmatprep.subr.bf16.mxu0 0
    %299 = vmatpush1.bf16.msra.mxu0 0
    %300 = vmatprep.subr.bf16.mxu0 0
    %301 = vmatpush1.bf16.msra.mxu0 0
    %302 = vmatprep.subr.bf16.mxu0 0
    %303 = vmatpush1.bf16.msra.mxu0 0
    %304 = vmatprep.subr.bf16.mxu0 0
    %305 = vmatpush1.bf16.msra.mxu0 0
    %306 = vmatprep.subr.bf16.mxu0 0
    %307 = vmatpush1.bf16.msra.mxu0 0
    %308 = vmatprep.subr.bf16.mxu0 0
    %309 = vmatpush1.bf16.msra.mxu0 0
    %310 = vmatprep.mubr.bf16.mxu0 0
    %311 = vmatmul.mubr.bf16.gmra.mrb[0].mxu0 %v276
    %v312 = vpop.f32.mrb[0].mxu0
    %v313 = vadd.f32 %v157, %v312
    %v314 = vpop.f32.mrb[0].mxu0
    %v315 = vadd.f32 %v161, %v314
    %v316 = vpop.f32.mrb[0].mxu0
    %v317 = vpop.f32.mrb[0].mxu0
    %318 = vdwg.mxu0
    %319 = vmatprep.subr.bf16.mxu0 %v245
    %320 = vmatpush1.bf16.msra.mxu0 %v244
    %321 = vmatprep.subr.bf16.mxu0 %v253
    %322 = vmatpush1.bf16.msra.mxu0 %v252
    %323 = vmatprep.subr.bf16.mxu0 0
    %324 = vmatpush1.bf16.msra.mxu0 0
    %325 = vmatprep.subr.bf16.mxu0 0
    %326 = vmatpush1.bf16.msra.mxu0 0
    %327 = vmatprep.subr.bf16.mxu0 0
    %328 = vmatpush1.bf16.msra.mxu0 0
    %329 = vmatprep.subr.bf16.mxu0 0
    %330 = vmatpush1.bf16.msra.mxu0 0
    %331 = vmatprep.subr.bf16.mxu0 0
    %332 = vmatpush1.bf16.msra.mxu0 0
    %333 = vmatprep.subr.bf16.mxu0 0
    %334 = vmatpush1.bf16.msra.mxu0 0
    %335 = vmatprep.subr.bf16.mxu0 0
    %336 = vmatpush1.bf16.msra.mxu0 0
    %337 = vmatprep.subr.bf16.mxu0 0
    %338 = vmatpush1.bf16.msra.mxu0 0
    %339 = vmatprep.subr.bf16.mxu0 0
    %340 = vmatpush1.bf16.msra.mxu0 0
    %341 = vmatprep.subr.bf16.mxu0 0
    %342 = vmatpush1.bf16.msra.mxu0 0
    %343 = vmatprep.subr.bf16.mxu0 0
    %344 = vmatpush1.bf16.msra.mxu0 0
    %345 = vmatprep.subr.bf16.mxu0 0
    %346 = vmatpush1.bf16.msra.mxu0 0
    %347 = vmatprep.subr.bf16.mxu0 0
    %348 = vmatpush1.bf16.msra.mxu0 0
    %349 = vmatprep.subr.bf16.mxu0 0
    %350 = vmatpush1.bf16.msra.mxu0 0
    %351 = vmatprep.mubr.bf16.mxu0 0
    %352 = vmatmul.mubr.bf16.gmra.mrb[0].mxu0 %v276
    %v353 = vpop.f32.mrb[0].mxu0
    %v354 = vadd.f32 %v165, %v353
    %v355 = vpop.f32.mrb[0].mxu0
    %v356 = vadd.f32 %v169, %v355
    %v357 = vpop.f32.mrb[0].mxu0
    %v358 = vpop.f32.mrb[0].mxu0
    %359 = vdwg.mxu0
    %360 = vmatprep.subr.bf16.mxu0 %v247
    %361 = vmatpush1.bf16.msra.mxu0 %v246
    %362 = vmatprep.subr.bf16.mxu0 %v255
    %363 = vmatpush1.bf16.msra.mxu0 %v254
    %364 = vmatprep.subr.bf16.mxu0 0
    %365 = vmatpush1.bf16.msra.mxu0 0
    %366 = vmatprep.subr.bf16.mxu0 0
    %367 = vmatpush1.bf16.msra.mxu0 0
    %368 = vmatprep.subr.bf16.mxu0 0
    %369 = vmatpush1.bf16.msra.mxu0 0
    %370 = vmatprep.subr.bf16.mxu0 0
    %371 = vmatpush1.bf16.msra.mxu0 0
    %372 = vmatprep.subr.bf16.mxu0 0
    %373 = vmatpush1.bf16.msra.mxu0 0
    %374 = vmatprep.subr.bf16.mxu0 0
    %375 = vmatpush1.bf16.msra.mxu0 0
    %376 = vmatprep.subr.bf16.mxu0 0
    %377 = vmatpush1.bf16.msra.mxu0 0
    %378 = vmatprep.subr.bf16.mxu0 0
    %379 = vmatpush1.bf16.msra.mxu0 0
    %380 = vmatprep.subr.bf16.mxu0 0
    %381 = vmatpush1.bf16.msra.mxu0 0
    %382 = vmatprep.subr.bf16.mxu0 0
    %383 = vmatpush1.bf16.msra.mxu0 0
    %384 = vmatprep.subr.bf16.mxu0 0
    %385 = vmatpush1.bf16.msra.mxu0 0
    %386 = vmatprep.subr.bf16.mxu0 0
    %387 = vmatpush1.bf16.msra.mxu0 0
    %388 = vmatprep.subr.bf16.mxu0 0
    %389 = vmatpush1.bf16.msra.mxu0 0
    %390 = vmatprep.subr.bf16.mxu0 0
    %391 = vmatpush1.bf16.msra.mxu0 0
    %392 = vmatprep.mubr.bf16.mxu0 0
    %393 = vmatmul.mubr.bf16.gmra.mrb[0].mxu0 %v276
    %v394 = vpop.f32.mrb[0].mxu0
    %v395 = vadd.f32 %v173, %v394
    %v396 = vpop.f32.mrb[0].mxu0
    %v397 = vadd.f32 %v177, %v396
    %v398 = vpop.f32.mrb[0].mxu0
    %v399 = vpop.f32.mrb[0].mxu0
    %400 = vdwg.mxu0
    %401 = vmatprep.subr.bf16.mxu0 %v249
    %402 = vmatpush1.bf16.msra.mxu0 %v248
    %403 = vmatprep.subr.bf16.mxu0 %v257
    %404 = vmatpush1.bf16.msra.mxu0 %v256
    %405 = vmatprep.subr.bf16.mxu0 0
    %406 = vmatpush1.bf16.msra.mxu0 0
    %407 = vmatprep.subr.bf16.mxu0 0
    %408 = vmatpush1.bf16.msra.mxu0 0
    %409 = vmatprep.subr.bf16.mxu0 0
    %410 = vmatpush1.bf16.msra.mxu0 0
    %411 = vmatprep.subr.bf16.mxu0 0
    %412 = vmatpush1.bf16.msra.mxu0 0
    %413 = vmatprep.subr.bf16.mxu0 0
    %414 = vmatpush1.bf16.msra.mxu0 0
    %415 = vmatprep.subr.bf16.mxu0 0
    %416 = vmatpush1.bf16.msra.mxu0 0
    %417 = vmatprep.subr.bf16.mxu0 0
    %418 = vmatpush1.bf16.msra.mxu0 0
    %419 = vmatprep.subr.bf16.mxu0 0
    %420 = vmatpush1.bf16.msra.mxu0 0
    %421 = vmatprep.subr.bf16.mxu0 0
    %422 = vmatpush1.bf16.msra.mxu0 0
    %423 = vmatprep.subr.bf16.mxu0 0
    %424 = vmatpush1.bf16.msra.mxu0 0
    %425 = vmatprep.subr.bf16.mxu0 0
    %426 = vmatpush1.bf16.msra.mxu0 0
    %427 = vmatprep.subr.bf16.mxu0 0
    %428 = vmatpush1.bf16.msra.mxu0 0
    %429 = vmatprep.subr.bf16.mxu0 0
    %430 = vmatpush1.bf16.msra.mxu0 0
    %431 = vmatprep.subr.bf16.mxu0 0
    %432 = vmatpush1.bf16.msra.mxu0 0
    %433 = vmatprep.mubr.bf16.mxu0 0
    %434 = vmatmul.mubr.bf16.gmra.mrb[0].mxu0 %v276
    %v435 = vpop.f32.mrb[0].mxu0
    %v436 = vadd.f32 %v181, %v435
    %v437 = vpop.f32.mrb[0].mxu0
    %v438 = vadd.f32 %v185, %v437
    %v439 = vpop.f32.mrb[0].mxu0
    %v440 = vpop.f32.mrb[0].mxu0
    %441 = vdwg.mxu0
    %vm442 = vcmp.gt.f32.partialorder %v313, 0.0
    %vm443 = vcmp.gt.f32.partialorder %v315, 0.0
    %vm444 = vcmp.gt.f32.partialorder %v354, 0.0
    %vm445 = vcmp.gt.f32.partialorder %v356, 0.0
    %vm446 = vcmp.gt.f32.partialorder %v395, 0.0
    %vm447 = vcmp.gt.f32.partialorder %v397, 0.0
    %vm448 = vcmp.gt.f32.partialorder %v436, 0.0
    %vm449 = vcmp.gt.f32.partialorder %v438, 0.0
    %v450 = vmul.f32 %v313, 0.2
    %v451 = vmul.f32 %v315, 0.2
    %v452 = vmul.f32 %v354, 0.2
    %v453 = vmul.f32 %v356, 0.2
    %v454 = vmul.f32 %v395, 0.2
    %v455 = vmul.f32 %v397, 0.2
    %v456 = vmul.f32 %v436, 0.2
    %v457 = vmul.f32 %v438, 0.2
    %v458 = vsel %vm442, %v313, %v450
    %v459 = vsel %vm443, %v315, %v451
    %v460 = vsel %vm444, %v354, %v452
    %v461 = vsel %vm445, %v356, %v453
    %v462 = vsel %vm446, %v395, %v454
    %v463 = vsel %vm447, %v397, %v455
    %v464 = vsel %vm448, %v436, %v456
    %v465 = vsel %vm449, %v438, %v457
    %v466 = vpack.c.bf16 %v458, %v458
    %v467 = vpack.c.bf16 %v459, %v459
    %v468 = vpack.c.bf16 %v460, %v460
    %v469 = vpack.c.bf16 %v461, %v461
    %v470 = vpack.c.bf16 %v462, %v462
    %v471 = vpack.c.bf16 %v463, %v463
    %v472 = vpack.c.bf16 %v464, %v464
    %v473 = vpack.c.bf16 %v465, %v465
    %v474 = vld [vmem:[#allocation8] sm:$0xff]
    %v475 = vld [vmem:[#allocation8 + $0x8] sm:$0xff]
    %v476 = vld [vmem:[#allocation8 + $0x10] sm:$0xff]
    %v477 = vld [vmem:[#allocation8 + $0x18] sm:$0xff]
    %v478 = vld [vmem:[#allocation8 + $0x20] sm:$0xff]
    %v479 = vld [vmem:[#allocation8 + $0x28] sm:$0xff]
    %v480 = vld [vmem:[#allocation8 + $0x30] sm:$0xff]
    %v481 = vld [vmem:[#allocation8 + $0x38] sm:$0xff]
    %v482 = vld [vmem:[#allocation8 + $0x40] sm:$0xff]
    %v483 = vld [vmem:[#allocation8 + $0x48] sm:$0xff]
    %v484 = vld [vmem:[#allocation8 + $0x50] sm:$0xff]
    %v485 = vld [vmem:[#allocation8 + $0x58] sm:$0xff]
    %v486 = vld [vmem:[#allocation8 + $0x60] sm:$0xff]
    %v487 = vld [vmem:[#allocation8 + $0x68] sm:$0xff]
    %v488 = vld [vmem:[#allocation8 + $0x70] sm:$0xff]
    %v489 = vld [vmem:[#allocation8 + $0x78] sm:$0xff]
    %v490 = vld [vmem:[#allocation8 + $0x80] sm:$0xff]
    %v491 = vld [vmem:[#allocation8 + $0x88] sm:$0xff]
    %v492 = vld [vmem:[#allocation8 + $0x90] sm:$0xff]
    %v493 = vld [vmem:[#allocation8 + $0x98] sm:$0xff]
    %v494 = vld [vmem:[#allocation8 + $0xa0] sm:$0xff]
    %v495 = vld [vmem:[#allocation8 + $0xa8] sm:$0xff]
    %v496 = vld [vmem:[#allocation8 + $0xb0] sm:$0xff]
    %v497 = vld [vmem:[#allocation8 + $0xb8] sm:$0xff]
    %v498 = vld [vmem:[#allocation8 + $0xc0] sm:$0xff]
    %v499 = vld [vmem:[#allocation8 + $0xc8] sm:$0xff]
    %v500 = vld [vmem:[#allocation8 + $0xd0] sm:$0xff]
    %v501 = vld [vmem:[#allocation8 + $0xd8] sm:$0xff]
    %v502 = vld [vmem:[#allocation8 + $0xe0] sm:$0xff]
    %v503 = vld [vmem:[#allocation8 + $0xe8] sm:$0xff]
    %v504 = vld [vmem:[#allocation8 + $0xf0] sm:$0xff]
    %v505 = vld [vmem:[#allocation8 + $0xf8] sm:$0xff]
    %v506 = vld [vmem:[#allocation8 + $0x100] sm:$0xff]
    %v507 = vld [vmem:[#allocation8 + $0x108] sm:$0xff]
    %v508 = vld [vmem:[#allocation8 + $0x110] sm:$0xff]
    %v509 = vld [vmem:[#allocation8 + $0x118] sm:$0xff]
    %v510 = vld [vmem:[#allocation8 + $0x120] sm:$0xff]
    %v511 = vld [vmem:[#allocation8 + $0x128] sm:$0xff]
    %v512 = vld [vmem:[#allocation8 + $0x130] sm:$0xff]
    %v513 = vld [vmem:[#allocation8 + $0x138] sm:$0xff]
    %v514 = vld [vmem:[#allocation8 + $0x140] sm:$0xff]
    %v515 = vld [vmem:[#allocation8 + $0x148] sm:$0xff]
    %v516 = vld [vmem:[#allocation8 + $0x150] sm:$0xff]
    %v517 = vld [vmem:[#allocation8 + $0x158] sm:$0xff]
    %v518 = vld [vmem:[#allocation8 + $0x160] sm:$0xff]
    %v519 = vld [vmem:[#allocation8 + $0x168] sm:$0xff]
    %v520 = vld [vmem:[#allocation8 + $0x170] sm:$0xff]
    %v521 = vld [vmem:[#allocation8 + $0x178] sm:$0xff]
    %v522 = vld [vmem:[#allocation8 + $0x180] sm:$0xff]
    %v523 = vld [vmem:[#allocation8 + $0x188] sm:$0xff]
    %v524 = vld [vmem:[#allocation8 + $0x190] sm:$0xff]
    %v525 = vld [vmem:[#allocation8 + $0x198] sm:$0xff]
    %v526 = vld [vmem:[#allocation8 + $0x1a0] sm:$0xff]
    %v527 = vld [vmem:[#allocation8 + $0x1a8] sm:$0xff]
    %v528 = vld [vmem:[#allocation8 + $0x1b0] sm:$0xff]
    %v529 = vld [vmem:[#allocation8 + $0x1b8] sm:$0xff]
    %v530 = vld [vmem:[#allocation8 + $0x1c0] sm:$0xff]
    %v531 = vld [vmem:[#allocation8 + $0x1c8] sm:$0xff]
    %v532 = vld [vmem:[#allocation8 + $0x1d0] sm:$0xff]
    %v533 = vld [vmem:[#allocation8 + $0x1d8] sm:$0xff]
    %v534 = vld [vmem:[#allocation8 + $0x1e0] sm:$0xff]
    %v535 = vld [vmem:[#allocation8 + $0x1e8] sm:$0xff]
    %v536 = vld [vmem:[#allocation8 + $0x1f0] sm:$0xff]
    %v537 = vld [vmem:[#allocation8 + $0x1f8] sm:$0xff]
    %v538 = vld [vmem:[#allocation8 + $0x200] sm:$0xff]
    %v539 = vld [vmem:[#allocation8 + $0x208] sm:$0xff]
    %v540 = vld [vmem:[#allocation8 + $0x210] sm:$0xff]
    %v541 = vld [vmem:[#allocation8 + $0x218] sm:$0xff]
    %v542 = vld [vmem:[#allocation8 + $0x220] sm:$0xff]
    %v543 = vld [vmem:[#allocation8 + $0x228] sm:$0xff]
    %v544 = vld [vmem:[#allocation8 + $0x230] sm:$0xff]
    %v545 = vld [vmem:[#allocation8 + $0x238] sm:$0xff]
    %v546 = vld [vmem:[#allocation8 + $0x240] sm:$0xff]
    %v547 = vld [vmem:[#allocation8 + $0x248] sm:$0xff]
    %v548 = vld [vmem:[#allocation8 + $0x250] sm:$0xff]
    %v549 = vld [vmem:[#allocation8 + $0x258] sm:$0xff]
    %v550 = vld [vmem:[#allocation8 + $0x260] sm:$0xff]
    %v551 = vld [vmem:[#allocation8 + $0x268] sm:$0xff]
    %v552 = vld [vmem:[#allocation8 + $0x270] sm:$0xff]
    %v553 = vld [vmem:[#allocation8 + $0x278] sm:$0xff]
    %v554 = vld [vmem:[#allocation8 + $0x280] sm:$0xff]
    %v555 = vld [vmem:[#allocation8 + $0x288] sm:$0xff]
    %v556 = vld [vmem:[#allocation8 + $0x290] sm:$0xff]
    %v557 = vld [vmem:[#allocation8 + $0x298] sm:$0xff]
    %v558 = vld [vmem:[#allocation8 + $0x2a0] sm:$0xff]
    %v559 = vld [vmem:[#allocation8 + $0x2a8] sm:$0xff]
    %v560 = vld [vmem:[#allocation8 + $0x2b0] sm:$0xff]
    %v561 = vld [vmem:[#allocation8 + $0x2b8] sm:$0xff]
    %v562 = vld [vmem:[#allocation8 + $0x2c0] sm:$0xff]
    %v563 = vld [vmem:[#allocation8 + $0x2c8] sm:$0xff]
    %v564 = vld [vmem:[#allocation8 + $0x2d0] sm:$0xff]
    %v565 = vld [vmem:[#allocation8 + $0x2d8] sm:$0xff]
    %v566 = vld [vmem:[#allocation8 + $0x2e0] sm:$0xff]
    %v567 = vld [vmem:[#allocation8 + $0x2e8] sm:$0xff]
    %v568 = vld [vmem:[#allocation8 + $0x2f0] sm:$0xff]
    %v569 = vld [vmem:[#allocation8 + $0x2f8] sm:$0xff]
    %v570 = vld [vmem:[#allocation8 + $0x300] sm:$0xff]
    %v571 = vld [vmem:[#allocation8 + $0x308] sm:$0xff]
    %v572 = vld [vmem:[#allocation8 + $0x310] sm:$0xff]
    %v573 = vld [vmem:[#allocation8 + $0x318] sm:$0xff]
    %v574 = vld [vmem:[#allocation8 + $0x320] sm:$0xff]
    %v575 = vld [vmem:[#allocation8 + $0x328] sm:$0xff]
    %v576 = vld [vmem:[#allocation8 + $0x330] sm:$0xff]
    %v577 = vld [vmem:[#allocation8 + $0x338] sm:$0xff]
    %v578 = vld [vmem:[#allocation8 + $0x340] sm:$0xff]
    %v579 = vld [vmem:[#allocation8 + $0x348] sm:$0xff]
    %v580 = vld [vmem:[#allocation8 + $0x350] sm:$0xff]
    %v581 = vld [vmem:[#allocation8 + $0x358] sm:$0xff]
    %v582 = vld [vmem:[#allocation8 + $0x360] sm:$0xff]
    %v583 = vld [vmem:[#allocation8 + $0x368] sm:$0xff]
    %v584 = vld [vmem:[#allocation8 + $0x370] sm:$0xff]
    %v585 = vld [vmem:[#allocation8 + $0x378] sm:$0xff]
    %v586 = vld [vmem:[#allocation8 + $0x380] sm:$0xff]
    %v587 = vld [vmem:[#allocation8 + $0x388] sm:$0xff]
    %v588 = vld [vmem:[#allocation8 + $0x390] sm:$0xff]
    %v589 = vld [vmem:[#allocation8 + $0x398] sm:$0xff]
    %v590 = vld [vmem:[#allocation8 + $0x3a0] sm:$0xff]
    %v591 = vld [vmem:[#allocation8 + $0x3a8] sm:$0xff]
    %v592 = vld [vmem:[#allocation8 + $0x3b0] sm:$0xff]
    %v593 = vld [vmem:[#allocation8 + $0x3b8] sm:$0xff]
    %v594 = vld [vmem:[#allocation8 + $0x3c0] sm:$0xff]
    %v595 = vld [vmem:[#allocation8 + $0x3c8] sm:$0xff]
    %v596 = vld [vmem:[#allocation8 + $0x3d0] sm:$0xff]
    %v597 = vld [vmem:[#allocation8 + $0x3d8] sm:$0xff]
    %v598 = vld [vmem:[#allocation8 + $0x3e0] sm:$0xff]
    %v599 = vld [vmem:[#allocation8 + $0x3e8] sm:$0xff]
    %v600 = vld [vmem:[#allocation8 + $0x3f0] sm:$0xff]
    %v601 = vld [vmem:[#allocation8 + $0x3f8] sm:$0xff]
    %v602 = vld [vmem:[#allocation8 + $0x400] sm:$0xff]
    %v603 = vld [vmem:[#allocation8 + $0x408] sm:$0xff]
    %v604 = vld [vmem:[#allocation8 + $0x410] sm:$0xff]
    %v605 = vld [vmem:[#allocation8 + $0x418] sm:$0xff]
    %v606 = vld [vmem:[#allocation8 + $0x420] sm:$0xff]
    %v607 = vld [vmem:[#allocation8 + $0x428] sm:$0xff]
    %v608 = vld [vmem:[#allocation8 + $0x430] sm:$0xff]
    %v609 = vld [vmem:[#allocation8 + $0x438] sm:$0xff]
    %v610 = vld [vmem:[#allocation8 + $0x440] sm:$0xff]
    %v611 = vld [vmem:[#allocation8 + $0x448] sm:$0xff]
    %v612 = vld [vmem:[#allocation8 + $0x450] sm:$0xff]
    %v613 = vld [vmem:[#allocation8 + $0x458] sm:$0xff]
    %v614 = vld [vmem:[#allocation8 + $0x460] sm:$0xff]
    %v615 = vld [vmem:[#allocation8 + $0x468] sm:$0xff]
    %v616 = vld [vmem:[#allocation8 + $0x470] sm:$0xff]
    %v617 = vld [vmem:[#allocation8 + $0x478] sm:$0xff]
    %v618 = vld [vmem:[#allocation8 + $0x480] sm:$0xff]
    %v619 = vld [vmem:[#allocation8 + $0x488] sm:$0xff]
    %v620 = vld [vmem:[#allocation8 + $0x490] sm:$0xff]
    %v621 = vld [vmem:[#allocation8 + $0x498] sm:$0xff]
    %v622 = vld [vmem:[#allocation8 + $0x4a0] sm:$0xff]
    %v623 = vld [vmem:[#allocation8 + $0x4a8] sm:$0xff]
    %v624 = vld [vmem:[#allocation8 + $0x4b0] sm:$0xff]
    %v625 = vld [vmem:[#allocation8 + $0x4b8] sm:$0xff]
    %v626 = vld [vmem:[#allocation8 + $0x4c0] sm:$0xff]
    %v627 = vld [vmem:[#allocation8 + $0x4c8] sm:$0xff]
    %v628 = vld [vmem:[#allocation8 + $0x4d0] sm:$0xff]
    %v629 = vld [vmem:[#allocation8 + $0x4d8] sm:$0xff]
    %v630 = vld [vmem:[#allocation8 + $0x4e0] sm:$0xff]
    %v631 = vld [vmem:[#allocation8 + $0x4e8] sm:$0xff]
    %v632 = vld [vmem:[#allocation8 + $0x4f0] sm:$0xff]
    %v633 = vld [vmem:[#allocation8 + $0x4f8] sm:$0xff]
    %v634 = vld [vmem:[#allocation8 + $0x500] sm:$0xff]
    %v635 = vld [vmem:[#allocation8 + $0x508] sm:$0xff]
    %v636 = vld [vmem:[#allocation8 + $0x510] sm:$0xff]
    %v637 = vld [vmem:[#allocation8 + $0x518] sm:$0xff]
    %v638 = vld [vmem:[#allocation8 + $0x520] sm:$0xff]
    %v639 = vld [vmem:[#allocation8 + $0x528] sm:$0xff]
    %v640 = vld [vmem:[#allocation8 + $0x530] sm:$0xff]
    %v641 = vld [vmem:[#allocation8 + $0x538] sm:$0xff]
    %v642 = vld [vmem:[#allocation8 + $0x540] sm:$0xff]
    %v643 = vld [vmem:[#allocation8 + $0x548] sm:$0xff]
    %v644 = vld [vmem:[#allocation8 + $0x550] sm:$0xff]
    %v645 = vld [vmem:[#allocation8 + $0x558] sm:$0xff]
    %v646 = vld [vmem:[#allocation8 + $0x560] sm:$0xff]
    %v647 = vld [vmem:[#allocation8 + $0x568] sm:$0xff]
    %v648 = vld [vmem:[#allocation8 + $0x570] sm:$0xff]
    %v649 = vld [vmem:[#allocation8 + $0x578] sm:$0xff]
    %v650 = vld [vmem:[#allocation8 + $0x580] sm:$0xff]
    %v651 = vld [vmem:[#allocation8 + $0x588] sm:$0xff]
    %v652 = vld [vmem:[#allocation8 + $0x590] sm:$0xff]
    %v653 = vld [vmem:[#allocation8 + $0x598] sm:$0xff]
    %v654 = vld [vmem:[#allocation8 + $0x5a0] sm:$0xff]
    %v655 = vld [vmem:[#allocation8 + $0x5a8] sm:$0xff]
    %v656 = vld [vmem:[#allocation8 + $0x5b0] sm:$0xff]
    %v657 = vld [vmem:[#allocation8 + $0x5b8] sm:$0xff]
    %v658 = vld [vmem:[#allocation8 + $0x5c0] sm:$0xff]
    %v659 = vld [vmem:[#allocation8 + $0x5c8] sm:$0xff]
    %v660 = vld [vmem:[#allocation8 + $0x5d0] sm:$0xff]
    %v661 = vld [vmem:[#allocation8 + $0x5d8] sm:$0xff]
    %v662 = vld [vmem:[#allocation8 + $0x5e0] sm:$0xff]
    %v663 = vld [vmem:[#allocation8 + $0x5e8] sm:$0xff]
    %v664 = vld [vmem:[#allocation8 + $0x5f0] sm:$0xff]
    %v665 = vld [vmem:[#allocation8 + $0x5f8] sm:$0xff]
    %v666 = vld [vmem:[#allocation8 + $0x600] sm:$0xff]
    %v667 = vld [vmem:[#allocation8 + $0x608] sm:$0xff]
    %v668 = vld [vmem:[#allocation8 + $0x610] sm:$0xff]
    %v669 = vld [vmem:[#allocation8 + $0x618] sm:$0xff]
    %v670 = vld [vmem:[#allocation8 + $0x620] sm:$0xff]
    %v671 = vld [vmem:[#allocation8 + $0x628] sm:$0xff]
    %v672 = vld [vmem:[#allocation8 + $0x630] sm:$0xff]
    %v673 = vld [vmem:[#allocation8 + $0x638] sm:$0xff]
    %v674 = vld [vmem:[#allocation8 + $0x640] sm:$0xff]
    %v675 = vld [vmem:[#allocation8 + $0x648] sm:$0xff]
    %v676 = vld [vmem:[#allocation8 + $0x650] sm:$0xff]
    %v677 = vld [vmem:[#allocation8 + $0x658] sm:$0xff]
    %v678 = vld [vmem:[#allocation8 + $0x660] sm:$0xff]
    %v679 = vld [vmem:[#allocation8 + $0x668] sm:$0xff]
    %v680 = vld [vmem:[#allocation8 + $0x670] sm:$0xff]
    %v681 = vld [vmem:[#allocation8 + $0x678] sm:$0xff]
    %v682 = vld [vmem:[#allocation8 + $0x680] sm:$0xff]
    %v683 = vld [vmem:[#allocation8 + $0x688] sm:$0xff]
    %v684 = vld [vmem:[#allocation8 + $0x690] sm:$0xff]
    %v685 = vld [vmem:[#allocation8 + $0x698] sm:$0xff]
    %v686 = vld [vmem:[#allocation8 + $0x6a0] sm:$0xff]
    %v687 = vld [vmem:[#allocation8 + $0x6a8] sm:$0xff]
    %v688 = vld [vmem:[#allocation8 + $0x6b0] sm:$0xff]
    %v689 = vld [vmem:[#allocation8 + $0x6b8] sm:$0xff]
    %v690 = vld [vmem:[#allocation8 + $0x6c0] sm:$0xff]
    %v691 = vld [vmem:[#allocation8 + $0x6c8] sm:$0xff]
    %v692 = vld [vmem:[#allocation8 + $0x6d0] sm:$0xff]
    %v693 = vld [vmem:[#allocation8 + $0x6d8] sm:$0xff]
    %v694 = vld [vmem:[#allocation8 + $0x6e0] sm:$0xff]
    %v695 = vld [vmem:[#allocation8 + $0x6e8] sm:$0xff]
    %v696 = vld [vmem:[#allocation8 + $0x6f0] sm:$0xff]
    %v697 = vld [vmem:[#allocation8 + $0x6f8] sm:$0xff]
    %v698 = vld [vmem:[#allocation8 + $0x700] sm:$0xff]
    %v699 = vld [vmem:[#allocation8 + $0x708] sm:$0xff]
    %v700 = vld [vmem:[#allocation8 + $0x710] sm:$0xff]
    %v701 = vld [vmem:[#allocation8 + $0x718] sm:$0xff]
    %v702 = vld [vmem:[#allocation8 + $0x720] sm:$0xff]
    %v703 = vld [vmem:[#allocation8 + $0x728] sm:$0xff]
    %v704 = vld [vmem:[#allocation8 + $0x730] sm:$0xff]
    %v705 = vld [vmem:[#allocation8 + $0x738] sm:$0xff]
    %v706 = vld [vmem:[#allocation8 + $0x740] sm:$0xff]
    %v707 = vld [vmem:[#allocation8 + $0x748] sm:$0xff]
    %v708 = vld [vmem:[#allocation8 + $0x750] sm:$0xff]
    %v709 = vld [vmem:[#allocation8 + $0x758] sm:$0xff]
    %v710 = vld [vmem:[#allocation8 + $0x760] sm:$0xff]
    %v711 = vld [vmem:[#allocation8 + $0x768] sm:$0xff]
    %v712 = vld [vmem:[#allocation8 + $0x770] sm:$0xff]
    %v713 = vld [vmem:[#allocation8 + $0x778] sm:$0xff]
    %v714 = vld [vmem:[#allocation8 + $0x780] sm:$0xff]
    %v715 = vld [vmem:[#allocation8 + $0x788] sm:$0xff]
    %v716 = vld [vmem:[#allocation8 + $0x790] sm:$0xff]
    %v717 = vld [vmem:[#allocation8 + $0x798] sm:$0xff]
    %v718 = vld [vmem:[#allocation8 + $0x7a0] sm:$0xff]
    %v719 = vld [vmem:[#allocation8 + $0x7a8] sm:$0xff]
    %v720 = vld [vmem:[#allocation8 + $0x7b0] sm:$0xff]
    %v721 = vld [vmem:[#allocation8 + $0x7b8] sm:$0xff]
    %v722 = vld [vmem:[#allocation8 + $0x7c0] sm:$0xff]
    %v723 = vld [vmem:[#allocation8 + $0x7c8] sm:$0xff]
    %v724 = vld [vmem:[#allocation8 + $0x7d0] sm:$0xff]
    %v725 = vld [vmem:[#allocation8 + $0x7d8] sm:$0xff]
    %v726 = vld [vmem:[#allocation8 + $0x7e0] sm:$0xff]
    %v727 = vld [vmem:[#allocation8 + $0x7e8] sm:$0xff]
    %v728 = vld [vmem:[#allocation8 + $0x7f0] sm:$0xff]
    %v729 = vld [vmem:[#allocation8 + $0x7f8] sm:$0xff]
    %v730 = vld [vmem:[#allocation8 + $0x800] sm:$0xff]
    %v731 = vld [vmem:[#allocation8 + $0x808] sm:$0xff]
    %v732 = vld [vmem:[#allocation8 + $0x810] sm:$0xff]
    %v733 = vld [vmem:[#allocation8 + $0x818] sm:$0xff]
    %v734 = vld [vmem:[#allocation8 + $0x820] sm:$0xff]
    %v735 = vld [vmem:[#allocation8 + $0x828] sm:$0xff]
    %v736 = vld [vmem:[#allocation8 + $0x830] sm:$0xff]
    %v737 = vld [vmem:[#allocation8 + $0x838] sm:$0xff]
    %v738 = vld [vmem:[#allocation8 + $0x840] sm:$0xff]
    %v739 = vld [vmem:[#allocation8 + $0x848] sm:$0xff]
    %v740 = vld [vmem:[#allocation8 + $0x850] sm:$0xff]
    %v741 = vld [vmem:[#allocation8 + $0x858] sm:$0xff]
    %v742 = vld [vmem:[#allocation8 + $0x860] sm:$0xff]
    %v743 = vld [vmem:[#allocation8 + $0x868] sm:$0xff]
    %v744 = vld [vmem:[#allocation8 + $0x870] sm:$0xff]
    %v745 = vld [vmem:[#allocation8 + $0x878] sm:$0xff]
    %v746 = vld [vmem:[#allocation8 + $0x880] sm:$0xff]
    %v747 = vld [vmem:[#allocation8 + $0x888] sm:$0xff]
    %v748 = vld [vmem:[#allocation8 + $0x890] sm:$0xff]
    %v749 = vld [vmem:[#allocation8 + $0x898] sm:$0xff]
    %v750 = vld [vmem:[#allocation8 + $0x8a0] sm:$0xff]
    %v751 = vld [vmem:[#allocation8 + $0x8a8] sm:$0xff]
    %v752 = vld [vmem:[#allocation8 + $0x8b0] sm:$0xff]
    %v753 = vld [vmem:[#allocation8 + $0x8b8] sm:$0xff]
    %v754 = vld [vmem:[#allocation8 + $0x8c0] sm:$0xff]
    %v755 = vld [vmem:[#allocation8 + $0x8c8] sm:$0xff]
    %v756 = vld [vmem:[#allocation8 + $0x8d0] sm:$0xff]
    %v757 = vld [vmem:[#allocation8 + $0x8d8] sm:$0xff]
    %v758 = vld [vmem:[#allocation8 + $0x8e0] sm:$0xff]
    %v759 = vld [vmem:[#allocation8 + $0x8e8] sm:$0xff]
    %v760 = vld [vmem:[#allocation8 + $0x8f0] sm:$0xff]
    %v761 = vld [vmem:[#allocation8 + $0x8f8] sm:$0xff]
    %v762 = vld [vmem:[#allocation8 + $0x900] sm:$0xff]
    %v763 = vld [vmem:[#allocation8 + $0x908] sm:$0xff]
    %v764 = vld [vmem:[#allocation8 + $0x910] sm:$0xff]
    %v765 = vld [vmem:[#allocation8 + $0x918] sm:$0xff]
    %v766 = vld [vmem:[#allocation8 + $0x920] sm:$0xff]
    %v767 = vld [vmem:[#allocation8 + $0x928] sm:$0xff]
    %v768 = vld [vmem:[#allocation8 + $0x930] sm:$0xff]
    %v769 = vld [vmem:[#allocation8 + $0x938] sm:$0xff]
    %v770 = vld [vmem:[#allocation8 + $0x940] sm:$0xff]
    %v771 = vld [vmem:[#allocation8 + $0x948] sm:$0xff]
    %v772 = vld [vmem:[#allocation8 + $0x950] sm:$0xff]
    %v773 = vld [vmem:[#allocation8 + $0x958] sm:$0xff]
    %v774 = vld [vmem:[#allocation8 + $0x960] sm:$0xff]
    %v775 = vld [vmem:[#allocation8 + $0x968] sm:$0xff]
    %v776 = vld [vmem:[#allocation8 + $0x970] sm:$0xff]
    %v777 = vld [vmem:[#allocation8 + $0x978] sm:$0xff]
    %v778 = vld [vmem:[#allocation8 + $0x980] sm:$0xff]
    %v779 = vld [vmem:[#allocation8 + $0x988] sm:$0xff]
    %v780 = vld [vmem:[#allocation8 + $0x990] sm:$0xff]
    %v781 = vld [vmem:[#allocation8 + $0x998] sm:$0xff]
    %v782 = vld [vmem:[#allocation8 + $0x9a0] sm:$0xff]
    %v783 = vld [vmem:[#allocation8 + $0x9a8] sm:$0xff]
    %v784 = vld [vmem:[#allocation8 + $0x9b0] sm:$0xff]
    %v785 = vld [vmem:[#allocation8 + $0x9b8] sm:$0xff]
    %v786 = vld [vmem:[#allocation8 + $0x9c0] sm:$0xff]
    %v787 = vld [vmem:[#allocation8 + $0x9c8] sm:$0xff]
    %v788 = vld [vmem:[#allocation8 + $0x9d0] sm:$0xff]
    %v789 = vld [vmem:[#allocation8 + $0x9d8] sm:$0xff]
    %v790 = vld [vmem:[#allocation8 + $0x9e0] sm:$0xff]
    %v791 = vld [vmem:[#allocation8 + $0x9e8] sm:$0xff]
    %v792 = vld [vmem:[#allocation8 + $0x9f0] sm:$0xff]
    %v793 = vld [vmem:[#allocation8 + $0x9f8] sm:$0xff]
    %v794 = vld [vmem:[#allocation8 + $0xa00] sm:$0xff]
    %v795 = vld [vmem:[#allocation8 + $0xa08] sm:$0xff]
    %v796 = vld [vmem:[#allocation8 + $0xa10] sm:$0xff]
    %v797 = vld [vmem:[#allocation8 + $0xa18] sm:$0xff]
    %v798 = vld [vmem:[#allocation8 + $0xa20] sm:$0xff]
    %v799 = vld [vmem:[#allocation8 + $0xa28] sm:$0xff]
    %v800 = vld [vmem:[#allocation8 + $0xa30] sm:$0xff]
    %v801 = vld [vmem:[#allocation8 + $0xa38] sm:$0xff]
    %v802 = vld [vmem:[#allocation8 + $0xa40] sm:$0xff]
    %v803 = vld [vmem:[#allocation8 + $0xa48] sm:$0xff]
    %v804 = vld [vmem:[#allocation8 + $0xa50] sm:$0xff]
    %v805 = vld [vmem:[#allocation8 + $0xa58] sm:$0xff]
    %v806 = vld [vmem:[#allocation8 + $0xa60] sm:$0xff]
    %v807 = vld [vmem:[#allocation8 + $0xa68] sm:$0xff]
    %v808 = vld [vmem:[#allocation8 + $0xa70] sm:$0xff]
    %v809 = vld [vmem:[#allocation8 + $0xa78] sm:$0xff]
    %v810 = vld [vmem:[#allocation8 + $0xa80] sm:$0xff]
    %v811 = vld [vmem:[#allocation8 + $0xa88] sm:$0xff]
    %v812 = vld [vmem:[#allocation8 + $0xa90] sm:$0xff]
    %v813 = vld [vmem:[#allocation8 + $0xa98] sm:$0xff]
    %v814 = vld [vmem:[#allocation8 + $0xaa0] sm:$0xff]
    %v815 = vld [vmem:[#allocation8 + $0xaa8] sm:$0xff]
    %v816 = vld [vmem:[#allocation8 + $0xab0] sm:$0xff]
    %v817 = vld [vmem:[#allocation8 + $0xab8] sm:$0xff]
    %v818 = vld [vmem:[#allocation8 + $0xac0] sm:$0xff]
    %v819 = vld [vmem:[#allocation8 + $0xac8] sm:$0xff]
    %v820 = vld [vmem:[#allocation8 + $0xad0] sm:$0xff]
    %v821 = vld [vmem:[#allocation8 + $0xad8] sm:$0xff]
    %v822 = vld [vmem:[#allocation8 + $0xae0] sm:$0xff]
    %v823 = vld [vmem:[#allocation8 + $0xae8] sm:$0xff]
    %v824 = vld [vmem:[#allocation8 + $0xaf0] sm:$0xff]
    %v825 = vld [vmem:[#allocation8 + $0xaf8] sm:$0xff]
    %v826 = vld [vmem:[#allocation8 + $0xb00] sm:$0xff]
    %v827 = vld [vmem:[#allocation8 + $0xb08] sm:$0xff]
    %v828 = vld [vmem:[#allocation8 + $0xb10] sm:$0xff]
    %v829 = vld [vmem:[#allocation8 + $0xb18] sm:$0xff]
    %v830 = vld [vmem:[#allocation8 + $0xb20] sm:$0xff]
    %v831 = vld [vmem:[#allocation8 + $0xb28] sm:$0xff]
    %v832 = vld [vmem:[#allocation8 + $0xb30] sm:$0xff]
    %v833 = vld [vmem:[#allocation8 + $0xb38] sm:$0xff]
    %v834 = vld [vmem:[#allocation8 + $0xb40] sm:$0xff]
    %v835 = vld [vmem:[#allocation8 + $0xb48] sm:$0xff]
    %v836 = vld [vmem:[#allocation8 + $0xb50] sm:$0xff]
    %v837 = vld [vmem:[#allocation8 + $0xb58] sm:$0xff]
    %v838 = vld [vmem:[#allocation8 + $0xb60] sm:$0xff]
    %v839 = vld [vmem:[#allocation8 + $0xb68] sm:$0xff]
    %v840 = vld [vmem:[#allocation8 + $0xb70] sm:$0xff]
    %v841 = vld [vmem:[#allocation8 + $0xb78] sm:$0xff]
    %v842 = vld [vmem:[#allocation8 + $0xb80] sm:$0xff]
    %v843 = vld [vmem:[#allocation8 + $0xb88] sm:$0xff]
    %v844 = vld [vmem:[#allocation8 + $0xb90] sm:$0xff]
    %v845 = vld [vmem:[#allocation8 + $0xb98] sm:$0xff]
    %v846 = vld [vmem:[#allocation8 + $0xba0] sm:$0xff]
    %v847 = vld [vmem:[#allocation8 + $0xba8] sm:$0xff]
    %v848 = vld [vmem:[#allocation8 + $0xbb0] sm:$0xff]
    %v849 = vld [vmem:[#allocation8 + $0xbb8] sm:$0xff]
    %v850 = vld [vmem:[#allocation8 + $0xbc0] sm:$0xff]
    %v851 = vld [vmem:[#allocation8 + $0xbc8] sm:$0xff]
    %v852 = vld [vmem:[#allocation8 + $0xbd0] sm:$0xff]
    %v853 = vld [vmem:[#allocation8 + $0xbd8] sm:$0xff]
    %v854 = vld [vmem:[#allocation8 + $0xbe0] sm:$0xff]
    %v855 = vld [vmem:[#allocation8 + $0xbe8] sm:$0xff]
    %v856 = vld [vmem:[#allocation8 + $0xbf0] sm:$0xff]
    %v857 = vld [vmem:[#allocation8 + $0xbf8] sm:$0xff]
    %v858 = vld [vmem:[#allocation8 + $0xc00] sm:$0xff]
    %v859 = vld [vmem:[#allocation8 + $0xc08] sm:$0xff]
    %v860 = vld [vmem:[#allocation8 + $0xc10] sm:$0xff]
    %v861 = vld [vmem:[#allocation8 + $0xc18] sm:$0xff]
    %v862 = vld [vmem:[#allocation8 + $0xc20] sm:$0xff]
    %v863 = vld [vmem:[#allocation8 + $0xc28] sm:$0xff]
    %v864 = vld [vmem:[#allocation8 + $0xc30] sm:$0xff]
    %v865 = vld [vmem:[#allocation8 + $0xc38] sm:$0xff]
    %v866 = vld [vmem:[#allocation8 + $0xc40] sm:$0xff]
    %v867 = vld [vmem:[#allocation8 + $0xc48] sm:$0xff]
    %v868 = vld [vmem:[#allocation8 + $0xc50] sm:$0xff]
    %v869 = vld [vmem:[#allocation8 + $0xc58] sm:$0xff]
    %v870 = vld [vmem:[#allocation8 + $0xc60] sm:$0xff]
    %v871 = vld [vmem:[#allocation8 + $0xc68] sm:$0xff]
    %v872 = vld [vmem:[#allocation8 + $0xc70] sm:$0xff]
    %v873 = vld [vmem:[#allocation8 + $0xc78] sm:$0xff]
    %v874 = vld [vmem:[#allocation8 + $0xc80] sm:$0xff]
    %v875 = vld [vmem:[#allocation8 + $0xc88] sm:$0xff]
    %v876 = vld [vmem:[#allocation8 + $0xc90] sm:$0xff]
    %v877 = vld [vmem:[#allocation8 + $0xc98] sm:$0xff]
    %v878 = vld [vmem:[#allocation8 + $0xca0] sm:$0xff]
    %v879 = vld [vmem:[#allocation8 + $0xca8] sm:$0xff]
    %v880 = vld [vmem:[#allocation8 + $0xcb0] sm:$0xff]
    %v881 = vld [vmem:[#allocation8 + $0xcb8] sm:$0xff]
    %v882 = vld [vmem:[#allocation8 + $0xcc0] sm:$0xff]
    %v883 = vld [vmem:[#allocation8 + $0xcc8] sm:$0xff]
    %v884 = vld [vmem:[#allocation8 + $0xcd0] sm:$0xff]
    %v885 = vld [vmem:[#allocation8 + $0xcd8] sm:$0xff]
    %v886 = vld [vmem:[#allocation8 + $0xce0] sm:$0xff]
    %v887 = vld [vmem:[#allocation8 + $0xce8] sm:$0xff]
    %v888 = vld [vmem:[#allocation8 + $0xcf0] sm:$0xff]
    %v889 = vld [vmem:[#allocation8 + $0xcf8] sm:$0xff]
    %v890 = vld [vmem:[#allocation8 + $0xd00] sm:$0xff]
    %v891 = vld [vmem:[#allocation8 + $0xd08] sm:$0xff]
    %v892 = vld [vmem:[#allocation8 + $0xd10] sm:$0xff]
    %v893 = vld [vmem:[#allocation8 + $0xd18] sm:$0xff]
    %v894 = vld [vmem:[#allocation8 + $0xd20] sm:$0xff]
    %v895 = vld [vmem:[#allocation8 + $0xd28] sm:$0xff]
    %v896 = vld [vmem:[#allocation8 + $0xd30] sm:$0xff]
    %v897 = vld [vmem:[#allocation8 + $0xd38] sm:$0xff]
    %v898 = vld [vmem:[#allocation8 + $0xd40] sm:$0xff]
    %v899 = vld [vmem:[#allocation8 + $0xd48] sm:$0xff]
    %v900 = vld [vmem:[#allocation8 + $0xd50] sm:$0xff]
    %v901 = vld [vmem:[#allocation8 + $0xd58] sm:$0xff]
    %v902 = vld [vmem:[#allocation8 + $0xd60] sm:$0xff]
    %v903 = vld [vmem:[#allocation8 + $0xd68] sm:$0xff]
    %v904 = vld [vmem:[#allocation8 + $0xd70] sm:$0xff]
    %v905 = vld [vmem:[#allocation8 + $0xd78] sm:$0xff]
    %v906 = vld [vmem:[#allocation8 + $0xd80] sm:$0xff]
    %v907 = vld [vmem:[#allocation8 + $0xd88] sm:$0xff]
    %v908 = vld [vmem:[#allocation8 + $0xd90] sm:$0xff]
    %v909 = vld [vmem:[#allocation8 + $0xd98] sm:$0xff]
    %v910 = vld [vmem:[#allocation8 + $0xda0] sm:$0xff]
    %v911 = vld [vmem:[#allocation8 + $0xda8] sm:$0xff]
    %v912 = vld [vmem:[#allocation8 + $0xdb0] sm:$0xff]
    %v913 = vld [vmem:[#allocation8 + $0xdb8] sm:$0xff]
    %v914 = vld [vmem:[#allocation8 + $0xdc0] sm:$0xff]
    %v915 = vld [vmem:[#allocation8 + $0xdc8] sm:$0xff]
    %v916 = vld [vmem:[#allocation8 + $0xdd0] sm:$0xff]
    %v917 = vld [vmem:[#allocation8 + $0xdd8] sm:$0xff]
    %v918 = vld [vmem:[#allocation8 + $0xde0] sm:$0xff]
    %v919 = vld [vmem:[#allocation8 + $0xde8] sm:$0xff]
    %v920 = vld [vmem:[#allocation8 + $0xdf0] sm:$0xff]
    %v921 = vld [vmem:[#allocation8 + $0xdf8] sm:$0xff]
    %v922 = vld [vmem:[#allocation8 + $0xe00] sm:$0xff]
    %v923 = vld [vmem:[#allocation8 + $0xe08] sm:$0xff]
    %v924 = vld [vmem:[#allocation8 + $0xe10] sm:$0xff]
    %v925 = vld [vmem:[#allocation8 + $0xe18] sm:$0xff]
    %v926 = vld [vmem:[#allocation8 + $0xe20] sm:$0xff]
    %v927 = vld [vmem:[#allocation8 + $0xe28] sm:$0xff]
    %v928 = vld [vmem:[#allocation8 + $0xe30] sm:$0xff]
    %v929 = vld [vmem:[#allocation8 + $0xe38] sm:$0xff]
    %v930 = vld [vmem:[#allocation8 + $0xe40] sm:$0xff]
    %v931 = vld [vmem:[#allocation8 + $0xe48] sm:$0xff]
    %v932 = vld [vmem:[#allocation8 + $0xe50] sm:$0xff]
    %v933 = vld [vmem:[#allocation8 + $0xe58] sm:$0xff]
    %v934 = vld [vmem:[#allocation8 + $0xe60] sm:$0xff]
    %v935 = vld [vmem:[#allocation8 + $0xe68] sm:$0xff]
    %v936 = vld [vmem:[#allocation8 + $0xe70] sm:$0xff]
    %v937 = vld [vmem:[#allocation8 + $0xe78] sm:$0xff]
    %v938 = vld [vmem:[#allocation8 + $0xe80] sm:$0xff]
    %v939 = vld [vmem:[#allocation8 + $0xe88] sm:$0xff]
    %v940 = vld [vmem:[#allocation8 + $0xe90] sm:$0xff]
    %v941 = vld [vmem:[#allocation8 + $0xe98] sm:$0xff]
    %v942 = vld [vmem:[#allocation8 + $0xea0] sm:$0xff]
    %v943 = vld [vmem:[#allocation8 + $0xea8] sm:$0xff]
    %v944 = vld [vmem:[#allocation8 + $0xeb0] sm:$0xff]
    %v945 = vld [vmem:[#allocation8 + $0xeb8] sm:$0xff]
    %v946 = vld [vmem:[#allocation8 + $0xec0] sm:$0xff]
    %v947 = vld [vmem:[#allocation8 + $0xec8] sm:$0xff]
    %v948 = vld [vmem:[#allocation8 + $0xed0] sm:$0xff]
    %v949 = vld [vmem:[#allocation8 + $0xed8] sm:$0xff]
    %v950 = vld [vmem:[#allocation8 + $0xee0] sm:$0xff]
    %v951 = vld [vmem:[#allocation8 + $0xee8] sm:$0xff]
    %v952 = vld [vmem:[#allocation8 + $0xef0] sm:$0xff]
    %v953 = vld [vmem:[#allocation8 + $0xef8] sm:$0xff]
    %v954 = vld [vmem:[#allocation8 + $0xf00] sm:$0xff]
    %v955 = vld [vmem:[#allocation8 + $0xf08] sm:$0xff]
    %v956 = vld [vmem:[#allocation8 + $0xf10] sm:$0xff]
    %v957 = vld [vmem:[#allocation8 + $0xf18] sm:$0xff]
    %v958 = vld [vmem:[#allocation8 + $0xf20] sm:$0xff]
    %v959 = vld [vmem:[#allocation8 + $0xf28] sm:$0xff]
    %v960 = vld [vmem:[#allocation8 + $0xf30] sm:$0xff]
    %v961 = vld [vmem:[#allocation8 + $0xf38] sm:$0xff]
    %v962 = vld [vmem:[#allocation8 + $0xf40] sm:$0xff]
    %v963 = vld [vmem:[#allocation8 + $0xf48] sm:$0xff]
    %v964 = vld [vmem:[#allocation8 + $0xf50] sm:$0xff]
    %v965 = vld [vmem:[#allocation8 + $0xf58] sm:$0xff]
    %v966 = vld [vmem:[#allocation8 + $0xf60] sm:$0xff]
    %v967 = vld [vmem:[#allocation8 + $0xf68] sm:$0xff]
    %v968 = vld [vmem:[#allocation8 + $0xf70] sm:$0xff]
    %v969 = vld [vmem:[#allocation8 + $0xf78] sm:$0xff]
    %v970 = vld [vmem:[#allocation8 + $0xf80] sm:$0xff]
    %v971 = vld [vmem:[#allocation8 + $0xf88] sm:$0xff]
    %v972 = vld [vmem:[#allocation8 + $0xf90] sm:$0xff]
    %v973 = vld [vmem:[#allocation8 + $0xf98] sm:$0xff]
    %v974 = vld [vmem:[#allocation8 + $0xfa0] sm:$0xff]
    %v975 = vld [vmem:[#allocation8 + $0xfa8] sm:$0xff]
    %v976 = vld [vmem:[#allocation8 + $0xfb0] sm:$0xff]
    %v977 = vld [vmem:[#allocation8 + $0xfb8] sm:$0xff]
    %v978 = vld [vmem:[#allocation8 + $0xfc0] sm:$0xff]
    %v979 = vld [vmem:[#allocation8 + $0xfc8] sm:$0xff]
    %v980 = vld [vmem:[#allocation8 + $0xfd0] sm:$0xff]
    %v981 = vld [vmem:[#allocation8 + $0xfd8] sm:$0xff]
    %v982 = vld [vmem:[#allocation8 + $0xfe0] sm:$0xff]
    %v983 = vld [vmem:[#allocation8 + $0xfe8] sm:$0xff]
    %v984 = vld [vmem:[#allocation8 + $0xff0] sm:$0xff]
    %v985 = vld [vmem:[#allocation8 + $0xff8] sm:$0xff]
    %v986 = vld [vmem:[#allocation10] sm:$0xff]
    %v988 = vlaneseq
    %v989 = vshrl.u32 %v988, 7
    %v990 = vsub.s32 0, %v989
    %v991 = vrot.slane %v986, %v990
    %v992 = vlaneseq
    %v993 = vshrl.u32 %v992, 7
    %v994 = vsub.s32 1, %v993
    %v995 = vrot.slane %v986, %v994
    %v996 = vlaneseq
    %v997 = vshrl.u32 %v996, 7
    %v998 = vsub.s32 2, %v997
    %v999 = vrot.slane %v986, %v998
    %v1000 = vlaneseq
    %v1001 = vshrl.u32 %v1000, 7
    %v1002 = vsub.s32 3, %v1001
    %v1003 = vrot.slane %v986, %v1002
    %v1004 = vlaneseq
    %v1005 = vshrl.u32 %v1004, 7
    %v1006 = vsub.s32 4, %v1005
    %v1007 = vrot.slane %v986, %v1006
    %v1008 = vlaneseq
    %v1009 = vshrl.u32 %v1008, 7
    %v1010 = vsub.s32 5, %v1009
    %v1011 = vrot.slane %v986, %v1010
    %v1012 = vlaneseq
    %v1013 = vshrl.u32 %v1012, 7
    %v1014 = vsub.s32 6, %v1013
    %v1015 = vrot.slane %v986, %v1014
    %v1016 = vlaneseq
    %v1017 = vshrl.u32 %v1016, 7
    %v1018 = vsub.s32 7, %v1017
    %v1019 = vrot.slane %v986, %v1018
    %v1540 = vunpack.c.l.b16 %v474
    %v1541 = vunpack.c.h.b16 %v474
    %v1542 = vunpack.c.l.b16 %v475
    %v1543 = vunpack.c.h.b16 %v475
    %v1544 = vunpack.c.l.b16 %v476
    %v1545 = vunpack.c.h.b16 %v476
    %v1546 = vunpack.c.l.b16 %v477
    %v1547 = vunpack.c.h.b16 %v477
    %v1548 = vunpack.c.l.b16 %v478
    %v1549 = vunpack.c.h.b16 %v478
    %v1550 = vunpack.c.l.b16 %v479
    %v1551 = vunpack.c.h.b16 %v479
    %v1552 = vunpack.c.l.b16 %v480
    %v1553 = vunpack.c.h.b16 %v480
    %v1554 = vunpack.c.l.b16 %v481
    %v1555 = vunpack.c.h.b16 %v481
    %v1556 = vunpack.c.l.b16 %v482
    %v1557 = vunpack.c.h.b16 %v482
    %v1558 = vunpack.c.l.b16 %v483
    %v1559 = vunpack.c.h.b16 %v483
    %v1560 = vunpack.c.l.b16 %v484
    %v1561 = vunpack.c.h.b16 %v484
    %v1562 = vunpack.c.l.b16 %v485
    %v1563 = vunpack.c.h.b16 %v485
    %v1564 = vunpack.c.l.b16 %v486
    %v1565 = vunpack.c.h.b16 %v486
    %v1566 = vunpack.c.l.b16 %v487
    %v1567 = vunpack.c.h.b16 %v487
    %v1568 = vunpack.c.l.b16 %v488
    %v1569 = vunpack.c.h.b16 %v488
    %v1570 = vunpack.c.l.b16 %v489
    %v1571 = vunpack.c.h.b16 %v489
    %v1572 = vunpack.c.l.b16 %v490
    %v1573 = vunpack.c.h.b16 %v490
    %v1574 = vunpack.c.l.b16 %v491
    %v1575 = vunpack.c.h.b16 %v491
    %v1576 = vunpack.c.l.b16 %v492
    %v1577 = vunpack.c.h.b16 %v492
    %v1578 = vunpack.c.l.b16 %v493
    %v1579 = vunpack.c.h.b16 %v493
    %v1580 = vunpack.c.l.b16 %v494
    %v1581 = vunpack.c.h.b16 %v494
    %v1582 = vunpack.c.l.b16 %v495
    %v1583 = vunpack.c.h.b16 %v495
    %v1584 = vunpack.c.l.b16 %v496
    %v1585 = vunpack.c.h.b16 %v496
    %v1586 = vunpack.c.l.b16 %v497
    %v1587 = vunpack.c.h.b16 %v497
    %v1588 = vunpack.c.l.b16 %v498
    %v1589 = vunpack.c.h.b16 %v498
    %v1590 = vunpack.c.l.b16 %v499
    %v1591 = vunpack.c.h.b16 %v499
    %v1592 = vunpack.c.l.b16 %v500
    %v1593 = vunpack.c.h.b16 %v500
    %v1594 = vunpack.c.l.b16 %v501
    %v1595 = vunpack.c.h.b16 %v501
    %v1596 = vunpack.c.l.b16 %v502
    %v1597 = vunpack.c.h.b16 %v502
    %v1598 = vunpack.c.l.b16 %v503
    %v1599 = vunpack.c.h.b16 %v503
    %v1600 = vunpack.c.l.b16 %v504
    %v1601 = vunpack.c.h.b16 %v504
    %v1602 = vunpack.c.l.b16 %v505
    %v1603 = vunpack.c.h.b16 %v505
    %v1604 = vunpack.c.l.b16 %v506
    %v1605 = vunpack.c.h.b16 %v506
    %v1606 = vunpack.c.l.b16 %v507
    %v1607 = vunpack.c.h.b16 %v507
    %v1608 = vunpack.c.l.b16 %v508
    %v1609 = vunpack.c.h.b16 %v508
    %v1610 = vunpack.c.l.b16 %v509
    %v1611 = vunpack.c.h.b16 %v509
    %v1612 = vunpack.c.l.b16 %v510
    %v1613 = vunpack.c.h.b16 %v510
    %v1614 = vunpack.c.l.b16 %v511
    %v1615 = vunpack.c.h.b16 %v511
    %v1616 = vunpack.c.l.b16 %v512
    %v1617 = vunpack.c.h.b16 %v512
    %v1618 = vunpack.c.l.b16 %v513
    %v1619 = vunpack.c.h.b16 %v513
    %v1620 = vunpack.c.l.b16 %v514
    %v1621 = vunpack.c.h.b16 %v514
    %v1622 = vunpack.c.l.b16 %v515
    %v1623 = vunpack.c.h.b16 %v515
    %v1624 = vunpack.c.l.b16 %v516
    %v1625 = vunpack.c.h.b16 %v516
    %v1626 = vunpack.c.l.b16 %v517
    %v1627 = vunpack.c.h.b16 %v517
    %v1628 = vunpack.c.l.b16 %v518
    %v1629 = vunpack.c.h.b16 %v518
    %v1630 = vunpack.c.l.b16 %v519
    %v1631 = vunpack.c.h.b16 %v519
    %v1632 = vunpack.c.l.b16 %v520
    %v1633 = vunpack.c.h.b16 %v520
    %v1634 = vunpack.c.l.b16 %v521
    %v1635 = vunpack.c.h.b16 %v521
    %v1636 = vunpack.c.l.b16 %v522
    %v1637 = vunpack.c.h.b16 %v522
    %v1638 = vunpack.c.l.b16 %v523
    %v1639 = vunpack.c.h.b16 %v523
    %v1640 = vunpack.c.l.b16 %v524
    %v1641 = vunpack.c.h.b16 %v524
    %v1642 = vunpack.c.l.b16 %v525
    %v1643 = vunpack.c.h.b16 %v525
    %v1644 = vunpack.c.l.b16 %v526
    %v1645 = vunpack.c.h.b16 %v526
    %v1646 = vunpack.c.l.b16 %v527
    %v1647 = vunpack.c.h.b16 %v527
    %v1648 = vunpack.c.l.b16 %v528
    %v1649 = vunpack.c.h.b16 %v528
    %v1650 = vunpack.c.l.b16 %v529
    %v1651 = vunpack.c.h.b16 %v529
    %v1652 = vunpack.c.l.b16 %v530
    %v1653 = vunpack.c.h.b16 %v530
    %v1654 = vunpack.c.l.b16 %v531
    %v1655 = vunpack.c.h.b16 %v531
    %v1656 = vunpack.c.l.b16 %v532
    %v1657 = vunpack.c.h.b16 %v532
    %v1658 = vunpack.c.l.b16 %v533
    %v1659 = vunpack.c.h.b16 %v533
    %v1660 = vunpack.c.l.b16 %v534
    %v1661 = vunpack.c.h.b16 %v534
    %v1662 = vunpack.c.l.b16 %v535
    %v1663 = vunpack.c.h.b16 %v535
    %v1664 = vunpack.c.l.b16 %v536
    %v1665 = vunpack.c.h.b16 %v536
    %v1666 = vunpack.c.l.b16 %v537
    %v1667 = vunpack.c.h.b16 %v537
    %v1668 = vunpack.c.l.b16 %v538
    %v1669 = vunpack.c.h.b16 %v538
    %v1670 = vunpack.c.l.b16 %v539
    %v1671 = vunpack.c.h.b16 %v539
    %v1672 = vunpack.c.l.b16 %v540
    %v1673 = vunpack.c.h.b16 %v540
    %v1674 = vunpack.c.l.b16 %v541
    %v1675 = vunpack.c.h.b16 %v541
    %v1676 = vunpack.c.l.b16 %v542
    %v1677 = vunpack.c.h.b16 %v542
    %v1678 = vunpack.c.l.b16 %v543
    %v1679 = vunpack.c.h.b16 %v543
    %v1680 = vunpack.c.l.b16 %v544
    %v1681 = vunpack.c.h.b16 %v544
    %v1682 = vunpack.c.l.b16 %v545
    %v1683 = vunpack.c.h.b16 %v545
    %v1684 = vunpack.c.l.b16 %v546
    %v1685 = vunpack.c.h.b16 %v546
    %v1686 = vunpack.c.l.b16 %v547
    %v1687 = vunpack.c.h.b16 %v547
    %v1688 = vunpack.c.l.b16 %v548
    %v1689 = vunpack.c.h.b16 %v548
    %v1690 = vunpack.c.l.b16 %v549
    %v1691 = vunpack.c.h.b16 %v549
    %v1692 = vunpack.c.l.b16 %v550
    %v1693 = vunpack.c.h.b16 %v550
    %v1694 = vunpack.c.l.b16 %v551
    %v1695 = vunpack.c.h.b16 %v551
    %v1696 = vunpack.c.l.b16 %v552
    %v1697 = vunpack.c.h.b16 %v552
    %v1698 = vunpack.c.l.b16 %v553
    %v1699 = vunpack.c.h.b16 %v553
    %v1700 = vunpack.c.l.b16 %v554
    %v1701 = vunpack.c.h.b16 %v554
    %v1702 = vunpack.c.l.b16 %v555
    %v1703 = vunpack.c.h.b16 %v555
    %v1704 = vunpack.c.l.b16 %v556
    %v1705 = vunpack.c.h.b16 %v556
    %v1706 = vunpack.c.l.b16 %v557
    %v1707 = vunpack.c.h.b16 %v557
    %v1708 = vunpack.c.l.b16 %v558
    %v1709 = vunpack.c.h.b16 %v558
    %v1710 = vunpack.c.l.b16 %v559
    %v1711 = vunpack.c.h.b16 %v559
    %v1712 = vunpack.c.l.b16 %v560
    %v1713 = vunpack.c.h.b16 %v560
    %v1714 = vunpack.c.l.b16 %v561
    %v1715 = vunpack.c.h.b16 %v561
    %v1716 = vunpack.c.l.b16 %v562
    %v1717 = vunpack.c.h.b16 %v562
    %v1718 = vunpack.c.l.b16 %v563
    %v1719 = vunpack.c.h.b16 %v563
    %v1720 = vunpack.c.l.b16 %v564
    %v1721 = vunpack.c.h.b16 %v564
    %v1722 = vunpack.c.l.b16 %v565
    %v1723 = vunpack.c.h.b16 %v565
    %v1724 = vunpack.c.l.b16 %v566
    %v1725 = vunpack.c.h.b16 %v566
    %v1726 = vunpack.c.l.b16 %v567
    %v1727 = vunpack.c.h.b16 %v567
    %v1728 = vunpack.c.l.b16 %v568
    %v1729 = vunpack.c.h.b16 %v568
    %v1730 = vunpack.c.l.b16 %v569
    %v1731 = vunpack.c.h.b16 %v569
    %v1732 = vunpack.c.l.b16 %v570
    %v1733 = vunpack.c.h.b16 %v570
    %v1734 = vunpack.c.l.b16 %v571
    %v1735 = vunpack.c.h.b16 %v571
    %v1736 = vunpack.c.l.b16 %v572
    %v1737 = vunpack.c.h.b16 %v572
    %v1738 = vunpack.c.l.b16 %v573
    %v1739 = vunpack.c.h.b16 %v573
    %v1740 = vunpack.c.l.b16 %v574
    %v1741 = vunpack.c.h.b16 %v574
    %v1742 = vunpack.c.l.b16 %v575
    %v1743 = vunpack.c.h.b16 %v575
    %v1744 = vunpack.c.l.b16 %v576
    %v1745 = vunpack.c.h.b16 %v576
    %v1746 = vunpack.c.l.b16 %v577
    %v1747 = vunpack.c.h.b16 %v577
    %v1748 = vunpack.c.l.b16 %v578
    %v1749 = vunpack.c.h.b16 %v578
    %v1750 = vunpack.c.l.b16 %v579
    %v1751 = vunpack.c.h.b16 %v579
    %v1752 = vunpack.c.l.b16 %v580
    %v1753 = vunpack.c.h.b16 %v580
    %v1754 = vunpack.c.l.b16 %v581
    %v1755 = vunpack.c.h.b16 %v581
    %v1756 = vunpack.c.l.b16 %v582
    %v1757 = vunpack.c.h.b16 %v582
    %v1758 = vunpack.c.l.b16 %v583
    %v1759 = vunpack.c.h.b16 %v583
    %v1760 = vunpack.c.l.b16 %v584
    %v1761 = vunpack.c.h.b16 %v584
    %v1762 = vunpack.c.l.b16 %v585
    %v1763 = vunpack.c.h.b16 %v585
    %v1764 = vunpack.c.l.b16 %v586
    %v1765 = vunpack.c.h.b16 %v586
    %v1766 = vunpack.c.l.b16 %v587
    %v1767 = vunpack.c.h.b16 %v587
    %v1768 = vunpack.c.l.b16 %v588
    %v1769 = vunpack.c.h.b16 %v588
    %v1770 = vunpack.c.l.b16 %v589
    %v1771 = vunpack.c.h.b16 %v589
    %v1772 = vunpack.c.l.b16 %v590
    %v1773 = vunpack.c.h.b16 %v590
    %v1774 = vunpack.c.l.b16 %v591
    %v1775 = vunpack.c.h.b16 %v591
    %v1776 = vunpack.c.l.b16 %v592
    %v1777 = vunpack.c.h.b16 %v592
    %v1778 = vunpack.c.l.b16 %v593
    %v1779 = vunpack.c.h.b16 %v593
    %v1780 = vunpack.c.l.b16 %v594
    %v1781 = vunpack.c.h.b16 %v594
    %v1782 = vunpack.c.l.b16 %v595
    %v1783 = vunpack.c.h.b16 %v595
    %v1784 = vunpack.c.l.b16 %v596
    %v1785 = vunpack.c.h.b16 %v596
    %v1786 = vunpack.c.l.b16 %v597
    %v1787 = vunpack.c.h.b16 %v597
    %v1788 = vunpack.c.l.b16 %v598
    %v1789 = vunpack.c.h.b16 %v598
    %v1790 = vunpack.c.l.b16 %v599
    %v1791 = vunpack.c.h.b16 %v599
    %v1792 = vunpack.c.l.b16 %v600
    %v1793 = vunpack.c.h.b16 %v600
    %v1794 = vunpack.c.l.b16 %v601
    %v1795 = vunpack.c.h.b16 %v601
    %v1796 = vunpack.c.l.b16 %v602
    %v1797 = vunpack.c.h.b16 %v602
    %v1798 = vunpack.c.l.b16 %v603
    %v1799 = vunpack.c.h.b16 %v603
    %v1800 = vunpack.c.l.b16 %v604
    %v1801 = vunpack.c.h.b16 %v604
    %v1802 = vunpack.c.l.b16 %v605
    %v1803 = vunpack.c.h.b16 %v605
    %v1804 = vunpack.c.l.b16 %v606
    %v1805 = vunpack.c.h.b16 %v606
    %v1806 = vunpack.c.l.b16 %v607
    %v1807 = vunpack.c.h.b16 %v607
    %v1808 = vunpack.c.l.b16 %v608
    %v1809 = vunpack.c.h.b16 %v608
    %v1810 = vunpack.c.l.b16 %v609
    %v1811 = vunpack.c.h.b16 %v609
    %v1812 = vunpack.c.l.b16 %v610
    %v1813 = vunpack.c.h.b16 %v610
    %v1814 = vunpack.c.l.b16 %v611
    %v1815 = vunpack.c.h.b16 %v611
    %v1816 = vunpack.c.l.b16 %v612
    %v1817 = vunpack.c.h.b16 %v612
    %v1818 = vunpack.c.l.b16 %v613
    %v1819 = vunpack.c.h.b16 %v613
    %v1820 = vunpack.c.l.b16 %v614
    %v1821 = vunpack.c.h.b16 %v614
    %v1822 = vunpack.c.l.b16 %v615
    %v1823 = vunpack.c.h.b16 %v615
    %v1824 = vunpack.c.l.b16 %v616
    %v1825 = vunpack.c.h.b16 %v616
    %v1826 = vunpack.c.l.b16 %v617
    %v1827 = vunpack.c.h.b16 %v617
    %v1828 = vunpack.c.l.b16 %v618
    %v1829 = vunpack.c.h.b16 %v618
    %v1830 = vunpack.c.l.b16 %v619
    %v1831 = vunpack.c.h.b16 %v619
    %v1832 = vunpack.c.l.b16 %v620
    %v1833 = vunpack.c.h.b16 %v620
    %v1834 = vunpack.c.l.b16 %v621
    %v1835 = vunpack.c.h.b16 %v621
    %v1836 = vunpack.c.l.b16 %v622
    %v1837 = vunpack.c.h.b16 %v622
    %v1838 = vunpack.c.l.b16 %v623
    %v1839 = vunpack.c.h.b16 %v623
    %v1840 = vunpack.c.l.b16 %v624
    %v1841 = vunpack.c.h.b16 %v624
    %v1842 = vunpack.c.l.b16 %v625
    %v1843 = vunpack.c.h.b16 %v625
    %v1844 = vunpack.c.l.b16 %v626
    %v1845 = vunpack.c.h.b16 %v626
    %v1846 = vunpack.c.l.b16 %v627
    %v1847 = vunpack.c.h.b16 %v627
    %v1848 = vunpack.c.l.b16 %v628
    %v1849 = vunpack.c.h.b16 %v628
    %v1850 = vunpack.c.l.b16 %v629
    %v1851 = vunpack.c.h.b16 %v629
    %v1852 = vunpack.c.l.b16 %v630
    %v1853 = vunpack.c.h.b16 %v630
    %v1854 = vunpack.c.l.b16 %v631
    %v1855 = vunpack.c.h.b16 %v631
    %v1856 = vunpack.c.l.b16 %v632
    %v1857 = vunpack.c.h.b16 %v632
    %v1858 = vunpack.c.l.b16 %v633
    %v1859 = vunpack.c.h.b16 %v633
    %v1860 = vunpack.c.l.b16 %v634
    %v1861 = vunpack.c.h.b16 %v634
    %v1862 = vunpack.c.l.b16 %v635
    %v1863 = vunpack.c.h.b16 %v635
    %v1864 = vunpack.c.l.b16 %v636
    %v1865 = vunpack.c.h.b16 %v636
    %v1866 = vunpack.c.l.b16 %v637
    %v1867 = vunpack.c.h.b16 %v637
    %v1868 = vunpack.c.l.b16 %v638
    %v1869 = vunpack.c.h.b16 %v638
    %v1870 = vunpack.c.l.b16 %v639
    %v1871 = vunpack.c.h.b16 %v639
    %v1872 = vunpack.c.l.b16 %v640
    %v1873 = vunpack.c.h.b16 %v640
    %v1874 = vunpack.c.l.b16 %v641
    %v1875 = vunpack.c.h.b16 %v641
    %v1876 = vunpack.c.l.b16 %v642
    %v1877 = vunpack.c.h.b16 %v642
    %v1878 = vunpack.c.l.b16 %v643
    %v1879 = vunpack.c.h.b16 %v643
    %v1880 = vunpack.c.l.b16 %v644
    %v1881 = vunpack.c.h.b16 %v644
    %v1882 = vunpack.c.l.b16 %v645
    %v1883 = vunpack.c.h.b16 %v645
    %v1884 = vunpack.c.l.b16 %v646
    %v1885 = vunpack.c.h.b16 %v646
    %v1886 = vunpack.c.l.b16 %v647
    %v1887 = vunpack.c.h.b16 %v647
    %v1888 = vunpack.c.l.b16 %v648
    %v1889 = vunpack.c.h.b16 %v648
    %v1890 = vunpack.c.l.b16 %v649
    %v1891 = vunpack.c.h.b16 %v649
    %v1892 = vunpack.c.l.b16 %v650
    %v1893 = vunpack.c.h.b16 %v650
    %v1894 = vunpack.c.l.b16 %v651
    %v1895 = vunpack.c.h.b16 %v651
    %v1896 = vunpack.c.l.b16 %v652
    %v1897 = vunpack.c.h.b16 %v652
    %v1898 = vunpack.c.l.b16 %v653
    %v1899 = vunpack.c.h.b16 %v653
    %v1900 = vunpack.c.l.b16 %v654
    %v1901 = vunpack.c.h.b16 %v654
    %v1902 = vunpack.c.l.b16 %v655
    %v1903 = vunpack.c.h.b16 %v655
    %v1904 = vunpack.c.l.b16 %v656
    %v1905 = vunpack.c.h.b16 %v656
    %v1906 = vunpack.c.l.b16 %v657
    %v1907 = vunpack.c.h.b16 %v657
    %v1908 = vunpack.c.l.b16 %v658
    %v1909 = vunpack.c.h.b16 %v658
    %v1910 = vunpack.c.l.b16 %v659
    %v1911 = vunpack.c.h.b16 %v659
    %v1912 = vunpack.c.l.b16 %v660
    %v1913 = vunpack.c.h.b16 %v660
    %v1914 = vunpack.c.l.b16 %v661
    %v1915 = vunpack.c.h.b16 %v661
    %v1916 = vunpack.c.l.b16 %v662
    %v1917 = vunpack.c.h.b16 %v662
    %v1918 = vunpack.c.l.b16 %v663
    %v1919 = vunpack.c.h.b16 %v663
    %v1920 = vunpack.c.l.b16 %v664
    %v1921 = vunpack.c.h.b16 %v664
    %v1922 = vunpack.c.l.b16 %v665
    %v1923 = vunpack.c.h.b16 %v665
    %v1924 = vunpack.c.l.b16 %v666
    %v1925 = vunpack.c.h.b16 %v666
    %v1926 = vunpack.c.l.b16 %v667
    %v1927 = vunpack.c.h.b16 %v667
    %v1928 = vunpack.c.l.b16 %v668
    %v1929 = vunpack.c.h.b16 %v668
    %v1930 = vunpack.c.l.b16 %v669
    %v1931 = vunpack.c.h.b16 %v669
    %v1932 = vunpack.c.l.b16 %v670
    %v1933 = vunpack.c.h.b16 %v670
    %v1934 = vunpack.c.l.b16 %v671
    %v1935 = vunpack.c.h.b16 %v671
    %v1936 = vunpack.c.l.b16 %v672
    %v1937 = vunpack.c.h.b16 %v672
    %v1938 = vunpack.c.l.b16 %v673
    %v1939 = vunpack.c.h.b16 %v673
    %v1940 = vunpack.c.l.b16 %v674
    %v1941 = vunpack.c.h.b16 %v674
    %v1942 = vunpack.c.l.b16 %v675
    %v1943 = vunpack.c.h.b16 %v675
    %v1944 = vunpack.c.l.b16 %v676
    %v1945 = vunpack.c.h.b16 %v676
    %v1946 = vunpack.c.l.b16 %v677
    %v1947 = vunpack.c.h.b16 %v677
    %v1948 = vunpack.c.l.b16 %v678
    %v1949 = vunpack.c.h.b16 %v678
    %v1950 = vunpack.c.l.b16 %v679
    %v1951 = vunpack.c.h.b16 %v679
    %v1952 = vunpack.c.l.b16 %v680
    %v1953 = vunpack.c.h.b16 %v680
    %v1954 = vunpack.c.l.b16 %v681
    %v1955 = vunpack.c.h.b16 %v681
    %v1956 = vunpack.c.l.b16 %v682
    %v1957 = vunpack.c.h.b16 %v682
    %v1958 = vunpack.c.l.b16 %v683
    %v1959 = vunpack.c.h.b16 %v683
    %v1960 = vunpack.c.l.b16 %v684
    %v1961 = vunpack.c.h.b16 %v684
    %v1962 = vunpack.c.l.b16 %v685
    %v1963 = vunpack.c.h.b16 %v685
    %v1964 = vunpack.c.l.b16 %v686
    %v1965 = vunpack.c.h.b16 %v686
    %v1966 = vunpack.c.l.b16 %v687
    %v1967 = vunpack.c.h.b16 %v687
    %v1968 = vunpack.c.l.b16 %v688
    %v1969 = vunpack.c.h.b16 %v688
    %v1970 = vunpack.c.l.b16 %v689
    %v1971 = vunpack.c.h.b16 %v689
    %v1972 = vunpack.c.l.b16 %v690
    %v1973 = vunpack.c.h.b16 %v690
    %v1974 = vunpack.c.l.b16 %v691
    %v1975 = vunpack.c.h.b16 %v691
    %v1976 = vunpack.c.l.b16 %v692
    %v1977 = vunpack.c.h.b16 %v692
    %v1978 = vunpack.c.l.b16 %v693
    %v1979 = vunpack.c.h.b16 %v693
    %v1980 = vunpack.c.l.b16 %v694
    %v1981 = vunpack.c.h.b16 %v694
    %v1982 = vunpack.c.l.b16 %v695
    %v1983 = vunpack.c.h.b16 %v695
    %v1984 = vunpack.c.l.b16 %v696
    %v1985 = vunpack.c.h.b16 %v696
    %v1986 = vunpack.c.l.b16 %v697
    %v1987 = vunpack.c.h.b16 %v697
    %v1988 = vunpack.c.l.b16 %v698
    %v1989 = vunpack.c.h.b16 %v698
    %v1990 = vunpack.c.l.b16 %v699
    %v1991 = vunpack.c.h.b16 %v699
    %v1992 = vunpack.c.l.b16 %v700
    %v1993 = vunpack.c.h.b16 %v700
    %v1994 = vunpack.c.l.b16 %v701
    %v1995 = vunpack.c.h.b16 %v701
    %v1996 = vunpack.c.l.b16 %v702
    %v1997 = vunpack.c.h.b16 %v702
    %v1998 = vunpack.c.l.b16 %v703
    %v1999 = vunpack.c.h.b16 %v703
    %v2000 = vunpack.c.l.b16 %v704
    %v2001 = vunpack.c.h.b16 %v704
    %v2002 = vunpack.c.l.b16 %v705
    %v2003 = vunpack.c.h.b16 %v705
    %v2004 = vunpack.c.l.b16 %v706
    %v2005 = vunpack.c.h.b16 %v706
    %v2006 = vunpack.c.l.b16 %v707
    %v2007 = vunpack.c.h.b16 %v707
    %v2008 = vunpack.c.l.b16 %v708
    %v2009 = vunpack.c.h.b16 %v708
    %v2010 = vunpack.c.l.b16 %v709
    %v2011 = vunpack.c.h.b16 %v709
    %v2012 = vunpack.c.l.b16 %v710
    %v2013 = vunpack.c.h.b16 %v710
    %v2014 = vunpack.c.l.b16 %v711
    %v2015 = vunpack.c.h.b16 %v711
    %v2016 = vunpack.c.l.b16 %v712
    %v2017 = vunpack.c.h.b16 %v712
    %v2018 = vunpack.c.l.b16 %v713
    %v2019 = vunpack.c.h.b16 %v713
    %v2020 = vunpack.c.l.b16 %v714
    %v2021 = vunpack.c.h.b16 %v714
    %v2022 = vunpack.c.l.b16 %v715
    %v2023 = vunpack.c.h.b16 %v715
    %v2024 = vunpack.c.l.b16 %v716
    %v2025 = vunpack.c.h.b16 %v716
    %v2026 = vunpack.c.l.b16 %v717
    %v2027 = vunpack.c.h.b16 %v717
    %v2028 = vunpack.c.l.b16 %v718
    %v2029 = vunpack.c.h.b16 %v718
    %v2030 = vunpack.c.l.b16 %v719
    %v2031 = vunpack.c.h.b16 %v719
    %v2032 = vunpack.c.l.b16 %v720
    %v2033 = vunpack.c.h.b16 %v720
    %v2034 = vunpack.c.l.b16 %v721
    %v2035 = vunpack.c.h.b16 %v721
    %v2036 = vunpack.c.l.b16 %v722
    %v2037 = vunpack.c.h.b16 %v722
    %v2038 = vunpack.c.l.b16 %v723
    %v2039 = vunpack.c.h.b16 %v723
    %v2040 = vunpack.c.l.b16 %v724
    %v2041 = vunpack.c.h.b16 %v724
    %v2042 = vunpack.c.l.b16 %v725
    %v2043 = vunpack.c.h.b16 %v725
    %v2044 = vunpack.c.l.b16 %v726
    %v2045 = vunpack.c.h.b16 %v726
    %v2046 = vunpack.c.l.b16 %v727
    %v2047 = vunpack.c.h.b16 %v727
    %v2048 = vunpack.c.l.b16 %v728
    %v2049 = vunpack.c.h.b16 %v728
    %v2050 = vunpack.c.l.b16 %v729
    %v2051 = vunpack.c.h.b16 %v729
    %v2052 = vunpack.c.l.b16 %v730
    %v2053 = vunpack.c.h.b16 %v730
    %v2054 = vunpack.c.l.b16 %v731
    %v2055 = vunpack.c.h.b16 %v731
    %v2056 = vunpack.c.l.b16 %v732
    %v2057 = vunpack.c.h.b16 %v732
    %v2058 = vunpack.c.l.b16 %v733
    %v2059 = vunpack.c.h.b16 %v733
    %v2060 = vunpack.c.l.b16 %v734
    %v2061 = vunpack.c.h.b16 %v734
    %v2062 = vunpack.c.l.b16 %v735
    %v2063 = vunpack.c.h.b16 %v735
    %v2064 = vunpack.c.l.b16 %v736
    %v2065 = vunpack.c.h.b16 %v736
    %v2066 = vunpack.c.l.b16 %v737
    %v2067 = vunpack.c.h.b16 %v737
    %v2068 = vunpack.c.l.b16 %v738
    %v2069 = vunpack.c.h.b16 %v738
    %v2070 = vunpack.c.l.b16 %v739
    %v2071 = vunpack.c.h.b16 %v739
    %v2072 = vunpack.c.l.b16 %v740
    %v2073 = vunpack.c.h.b16 %v740
    %v2074 = vunpack.c.l.b16 %v741
    %v2075 = vunpack.c.h.b16 %v741
    %v2076 = vunpack.c.l.b16 %v742
    %v2077 = vunpack.c.h.b16 %v742
    %v2078 = vunpack.c.l.b16 %v743
    %v2079 = vunpack.c.h.b16 %v743
    %v2080 = vunpack.c.l.b16 %v744
    %v2081 = vunpack.c.h.b16 %v744
    %v2082 = vunpack.c.l.b16 %v745
    %v2083 = vunpack.c.h.b16 %v745
    %v2084 = vunpack.c.l.b16 %v746
    %v2085 = vunpack.c.h.b16 %v746
    %v2086 = vunpack.c.l.b16 %v747
    %v2087 = vunpack.c.h.b16 %v747
    %v2088 = vunpack.c.l.b16 %v748
    %v2089 = vunpack.c.h.b16 %v748
    %v2090 = vunpack.c.l.b16 %v749
    %v2091 = vunpack.c.h.b16 %v749
    %v2092 = vunpack.c.l.b16 %v750
    %v2093 = vunpack.c.h.b16 %v750
    %v2094 = vunpack.c.l.b16 %v751
    %v2095 = vunpack.c.h.b16 %v751
    %v2096 = vunpack.c.l.b16 %v752
    %v2097 = vunpack.c.h.b16 %v752
    %v2098 = vunpack.c.l.b16 %v753
    %v2099 = vunpack.c.h.b16 %v753
    %v2100 = vunpack.c.l.b16 %v754
    %v2101 = vunpack.c.h.b16 %v754
    %v2102 = vunpack.c.l.b16 %v755
    %v2103 = vunpack.c.h.b16 %v755
    %v2104 = vunpack.c.l.b16 %v756
    %v2105 = vunpack.c.h.b16 %v756
    %v2106 = vunpack.c.l.b16 %v757
    %v2107 = vunpack.c.h.b16 %v757
    %v2108 = vunpack.c.l.b16 %v758
    %v2109 = vunpack.c.h.b16 %v758
    %v2110 = vunpack.c.l.b16 %v759
    %v2111 = vunpack.c.h.b16 %v759
    %v2112 = vunpack.c.l.b16 %v760
    %v2113 = vunpack.c.h.b16 %v760
    %v2114 = vunpack.c.l.b16 %v761
    %v2115 = vunpack.c.h.b16 %v761
    %v2116 = vunpack.c.l.b16 %v762
    %v2117 = vunpack.c.h.b16 %v762
    %v2118 = vunpack.c.l.b16 %v763
    %v2119 = vunpack.c.h.b16 %v763
    %v2120 = vunpack.c.l.b16 %v764
    %v2121 = vunpack.c.h.b16 %v764
    %v2122 = vunpack.c.l.b16 %v765
    %v2123 = vunpack.c.h.b16 %v765
    %v2124 = vunpack.c.l.b16 %v766
    %v2125 = vunpack.c.h.b16 %v766
    %v2126 = vunpack.c.l.b16 %v767
    %v2127 = vunpack.c.h.b16 %v767
    %v2128 = vunpack.c.l.b16 %v768
    %v2129 = vunpack.c.h.b16 %v768
    %v2130 = vunpack.c.l.b16 %v769
    %v2131 = vunpack.c.h.b16 %v769
    %v2132 = vunpack.c.l.b16 %v770
    %v2133 = vunpack.c.h.b16 %v770
    %v2134 = vunpack.c.l.b16 %v771
    %v2135 = vunpack.c.h.b16 %v771
    %v2136 = vunpack.c.l.b16 %v772
    %v2137 = vunpack.c.h.b16 %v772
    %v2138 = vunpack.c.l.b16 %v773
    %v2139 = vunpack.c.h.b16 %v773
    %v2140 = vunpack.c.l.b16 %v774
    %v2141 = vunpack.c.h.b16 %v774
    %v2142 = vunpack.c.l.b16 %v775
    %v2143 = vunpack.c.h.b16 %v775
    %v2144 = vunpack.c.l.b16 %v776
    %v2145 = vunpack.c.h.b16 %v776
    %v2146 = vunpack.c.l.b16 %v777
    %v2147 = vunpack.c.h.b16 %v777
    %v2148 = vunpack.c.l.b16 %v778
    %v2149 = vunpack.c.h.b16 %v778
    %v2150 = vunpack.c.l.b16 %v779
    %v2151 = vunpack.c.h.b16 %v779
    %v2152 = vunpack.c.l.b16 %v780
    %v2153 = vunpack.c.h.b16 %v780
    %v2154 = vunpack.c.l.b16 %v781
    %v2155 = vunpack.c.h.b16 %v781
    %v2156 = vunpack.c.l.b16 %v782
    %v2157 = vunpack.c.h.b16 %v782
    %v2158 = vunpack.c.l.b16 %v783
    %v2159 = vunpack.c.h.b16 %v783
    %v2160 = vunpack.c.l.b16 %v784
    %v2161 = vunpack.c.h.b16 %v784
    %v2162 = vunpack.c.l.b16 %v785
    %v2163 = vunpack.c.h.b16 %v785
    %v2164 = vunpack.c.l.b16 %v786
    %v2165 = vunpack.c.h.b16 %v786
    %v2166 = vunpack.c.l.b16 %v787
    %v2167 = vunpack.c.h.b16 %v787
    %v2168 = vunpack.c.l.b16 %v788
    %v2169 = vunpack.c.h.b16 %v788
    %v2170 = vunpack.c.l.b16 %v789
    %v2171 = vunpack.c.h.b16 %v789
    %v2172 = vunpack.c.l.b16 %v790
    %v2173 = vunpack.c.h.b16 %v790
    %v2174 = vunpack.c.l.b16 %v791
    %v2175 = vunpack.c.h.b16 %v791
    %v2176 = vunpack.c.l.b16 %v792
    %v2177 = vunpack.c.h.b16 %v792
    %v2178 = vunpack.c.l.b16 %v793
    %v2179 = vunpack.c.h.b16 %v793
    %v2180 = vunpack.c.l.b16 %v794
    %v2181 = vunpack.c.h.b16 %v794
    %v2182 = vunpack.c.l.b16 %v795
    %v2183 = vunpack.c.h.b16 %v795
    %v2184 = vunpack.c.l.b16 %v796
    %v2185 = vunpack.c.h.b16 %v796
    %v2186 = vunpack.c.l.b16 %v797
    %v2187 = vunpack.c.h.b16 %v797
    %v2188 = vunpack.c.l.b16 %v798
    %v2189 = vunpack.c.h.b16 %v798
    %v2190 = vunpack.c.l.b16 %v799
    %v2191 = vunpack.c.h.b16 %v799
    %v2192 = vunpack.c.l.b16 %v800
    %v2193 = vunpack.c.h.b16 %v800
    %v2194 = vunpack.c.l.b16 %v801
    %v2195 = vunpack.c.h.b16 %v801
    %v2196 = vunpack.c.l.b16 %v802
    %v2197 = vunpack.c.h.b16 %v802
    %v2198 = vunpack.c.l.b16 %v803
    %v2199 = vunpack.c.h.b16 %v803
    %v2200 = vunpack.c.l.b16 %v804
    %v2201 = vunpack.c.h.b16 %v804
    %v2202 = vunpack.c.l.b16 %v805
    %v2203 = vunpack.c.h.b16 %v805
    %v2204 = vunpack.c.l.b16 %v806
    %v2205 = vunpack.c.h.b16 %v806
    %v2206 = vunpack.c.l.b16 %v807
    %v2207 = vunpack.c.h.b16 %v807
    %v2208 = vunpack.c.l.b16 %v808
    %v2209 = vunpack.c.h.b16 %v808
    %v2210 = vunpack.c.l.b16 %v809
    %v2211 = vunpack.c.h.b16 %v809
    %v2212 = vunpack.c.l.b16 %v810
    %v2213 = vunpack.c.h.b16 %v810
    %v2214 = vunpack.c.l.b16 %v811
    %v2215 = vunpack.c.h.b16 %v811
    %v2216 = vunpack.c.l.b16 %v812
    %v2217 = vunpack.c.h.b16 %v812
    %v2218 = vunpack.c.l.b16 %v813
    %v2219 = vunpack.c.h.b16 %v813
    %v2220 = vunpack.c.l.b16 %v814
    %v2221 = vunpack.c.h.b16 %v814
    %v2222 = vunpack.c.l.b16 %v815
    %v2223 = vunpack.c.h.b16 %v815
    %v2224 = vunpack.c.l.b16 %v816
    %v2225 = vunpack.c.h.b16 %v816
    %v2226 = vunpack.c.l.b16 %v817
    %v2227 = vunpack.c.h.b16 %v817
    %v2228 = vunpack.c.l.b16 %v818
    %v2229 = vunpack.c.h.b16 %v818
    %v2230 = vunpack.c.l.b16 %v819
    %v2231 = vunpack.c.h.b16 %v819
    %v2232 = vunpack.c.l.b16 %v820
    %v2233 = vunpack.c.h.b16 %v820
    %v2234 = vunpack.c.l.b16 %v821
    %v2235 = vunpack.c.h.b16 %v821
    %v2236 = vunpack.c.l.b16 %v822
    %v2237 = vunpack.c.h.b16 %v822
    %v2238 = vunpack.c.l.b16 %v823
    %v2239 = vunpack.c.h.b16 %v823
    %v2240 = vunpack.c.l.b16 %v824
    %v2241 = vunpack.c.h.b16 %v824
    %v2242 = vunpack.c.l.b16 %v825
    %v2243 = vunpack.c.h.b16 %v825
    %v2244 = vunpack.c.l.b16 %v826
    %v2245 = vunpack.c.h.b16 %v826
    %v2246 = vunpack.c.l.b16 %v827
    %v2247 = vunpack.c.h.b16 %v827
    %v2248 = vunpack.c.l.b16 %v828
    %v2249 = vunpack.c.h.b16 %v828
    %v2250 = vunpack.c.l.b16 %v829
    %v2251 = vunpack.c.h.b16 %v829
    %v2252 = vunpack.c.l.b16 %v830
    %v2253 = vunpack.c.h.b16 %v830
    %v2254 = vunpack.c.l.b16 %v831
    %v2255 = vunpack.c.h.b16 %v831
    %v2256 = vunpack.c.l.b16 %v832
    %v2257 = vunpack.c.h.b16 %v832
    %v2258 = vunpack.c.l.b16 %v833
    %v2259 = vunpack.c.h.b16 %v833
    %v2260 = vunpack.c.l.b16 %v834
    %v2261 = vunpack.c.h.b16 %v834
    %v2262 = vunpack.c.l.b16 %v835
    %v2263 = vunpack.c.h.b16 %v835
    %v2264 = vunpack.c.l.b16 %v836
    %v2265 = vunpack.c.h.b16 %v836
    %v2266 = vunpack.c.l.b16 %v837
    %v2267 = vunpack.c.h.b16 %v837
    %v2268 = vunpack.c.l.b16 %v838
    %v2269 = vunpack.c.h.b16 %v838
    %v2270 = vunpack.c.l.b16 %v839
    %v2271 = vunpack.c.h.b16 %v839
    %v2272 = vunpack.c.l.b16 %v840
    %v2273 = vunpack.c.h.b16 %v840
    %v2274 = vunpack.c.l.b16 %v841
    %v2275 = vunpack.c.h.b16 %v841
    %v2276 = vunpack.c.l.b16 %v842
    %v2277 = vunpack.c.h.b16 %v842
    %v2278 = vunpack.c.l.b16 %v843
    %v2279 = vunpack.c.h.b16 %v843
    %v2280 = vunpack.c.l.b16 %v844
    %v2281 = vunpack.c.h.b16 %v844
    %v2282 = vunpack.c.l.b16 %v845
    %v2283 = vunpack.c.h.b16 %v845
    %v2284 = vunpack.c.l.b16 %v846
    %v2285 = vunpack.c.h.b16 %v846
    %v2286 = vunpack.c.l.b16 %v847
    %v2287 = vunpack.c.h.b16 %v847
    %v2288 = vunpack.c.l.b16 %v848
    %v2289 = vunpack.c.h.b16 %v848
    %v2290 = vunpack.c.l.b16 %v849
    %v2291 = vunpack.c.h.b16 %v849
    %v2292 = vunpack.c.l.b16 %v850
    %v2293 = vunpack.c.h.b16 %v850
    %v2294 = vunpack.c.l.b16 %v851
    %v2295 = vunpack.c.h.b16 %v851
    %v2296 = vunpack.c.l.b16 %v852
    %v2297 = vunpack.c.h.b16 %v852
    %v2298 = vunpack.c.l.b16 %v853
    %v2299 = vunpack.c.h.b16 %v853
    %v2300 = vunpack.c.l.b16 %v854
    %v2301 = vunpack.c.h.b16 %v854
    %v2302 = vunpack.c.l.b16 %v855
    %v2303 = vunpack.c.h.b16 %v855
    %v2304 = vunpack.c.l.b16 %v856
    %v2305 = vunpack.c.h.b16 %v856
    %v2306 = vunpack.c.l.b16 %v857
    %v2307 = vunpack.c.h.b16 %v857
    %v2308 = vunpack.c.l.b16 %v858
    %v2309 = vunpack.c.h.b16 %v858
    %v2310 = vunpack.c.l.b16 %v859
    %v2311 = vunpack.c.h.b16 %v859
    %v2312 = vunpack.c.l.b16 %v860
    %v2313 = vunpack.c.h.b16 %v860
    %v2314 = vunpack.c.l.b16 %v861
    %v2315 = vunpack.c.h.b16 %v861
    %v2316 = vunpack.c.l.b16 %v862
    %v2317 = vunpack.c.h.b16 %v862
    %v2318 = vunpack.c.l.b16 %v863
    %v2319 = vunpack.c.h.b16 %v863
    %v2320 = vunpack.c.l.b16 %v864
    %v2321 = vunpack.c.h.b16 %v864
    %v2322 = vunpack.c.l.b16 %v865
    %v2323 = vunpack.c.h.b16 %v865
    %v2324 = vunpack.c.l.b16 %v866
    %v2325 = vunpack.c.h.b16 %v866
    %v2326 = vunpack.c.l.b16 %v867
    %v2327 = vunpack.c.h.b16 %v867
    %v2328 = vunpack.c.l.b16 %v868
    %v2329 = vunpack.c.h.b16 %v868
    %v2330 = vunpack.c.l.b16 %v869
    %v2331 = vunpack.c.h.b16 %v869
    %v2332 = vunpack.c.l.b16 %v870
    %v2333 = vunpack.c.h.b16 %v870
    %v2334 = vunpack.c.l.b16 %v871
    %v2335 = vunpack.c.h.b16 %v871
    %v2336 = vunpack.c.l.b16 %v872
    %v2337 = vunpack.c.h.b16 %v872
    %v2338 = vunpack.c.l.b16 %v873
    %v2339 = vunpack.c.h.b16 %v873
    %v2340 = vunpack.c.l.b16 %v874
    %v2341 = vunpack.c.h.b16 %v874
    %v2342 = vunpack.c.l.b16 %v875
    %v2343 = vunpack.c.h.b16 %v875
    %v2344 = vunpack.c.l.b16 %v876
    %v2345 = vunpack.c.h.b16 %v876
    %v2346 = vunpack.c.l.b16 %v877
    %v2347 = vunpack.c.h.b16 %v877
    %v2348 = vunpack.c.l.b16 %v878
    %v2349 = vunpack.c.h.b16 %v878
    %v2350 = vunpack.c.l.b16 %v879
    %v2351 = vunpack.c.h.b16 %v879
    %v2352 = vunpack.c.l.b16 %v880
    %v2353 = vunpack.c.h.b16 %v880
    %v2354 = vunpack.c.l.b16 %v881
    %v2355 = vunpack.c.h.b16 %v881
    %v2356 = vunpack.c.l.b16 %v882
    %v2357 = vunpack.c.h.b16 %v882
    %v2358 = vunpack.c.l.b16 %v883
    %v2359 = vunpack.c.h.b16 %v883
    %v2360 = vunpack.c.l.b16 %v884
    %v2361 = vunpack.c.h.b16 %v884
    %v2362 = vunpack.c.l.b16 %v885
    %v2363 = vunpack.c.h.b16 %v885
    %v2364 = vunpack.c.l.b16 %v886
    %v2365 = vunpack.c.h.b16 %v886
    %v2366 = vunpack.c.l.b16 %v887
    %v2367 = vunpack.c.h.b16 %v887
    %v2368 = vunpack.c.l.b16 %v888
    %v2369 = vunpack.c.h.b16 %v888
    %v2370 = vunpack.c.l.b16 %v889
    %v2371 = vunpack.c.h.b16 %v889
    %v2372 = vunpack.c.l.b16 %v890
    %v2373 = vunpack.c.h.b16 %v890
    %v2374 = vunpack.c.l.b16 %v891
    %v2375 = vunpack.c.h.b16 %v891
    %v2376 = vunpack.c.l.b16 %v892
    %v2377 = vunpack.c.h.b16 %v892
    %v2378 = vunpack.c.l.b16 %v893
    %v2379 = vunpack.c.h.b16 %v893
    %v2380 = vunpack.c.l.b16 %v894
    %v2381 = vunpack.c.h.b16 %v894
    %v2382 = vunpack.c.l.b16 %v895
    %v2383 = vunpack.c.h.b16 %v895
    %v2384 = vunpack.c.l.b16 %v896
    %v2385 = vunpack.c.h.b16 %v896
    %v2386 = vunpack.c.l.b16 %v897
    %v2387 = vunpack.c.h.b16 %v897
    %v2388 = vunpack.c.l.b16 %v898
    %v2389 = vunpack.c.h.b16 %v898
    %v2390 = vunpack.c.l.b16 %v899
    %v2391 = vunpack.c.h.b16 %v899
    %v2392 = vunpack.c.l.b16 %v900
    %v2393 = vunpack.c.h.b16 %v900
    %v2394 = vunpack.c.l.b16 %v901
    %v2395 = vunpack.c.h.b16 %v901
    %v2396 = vunpack.c.l.b16 %v902
    %v2397 = vunpack.c.h.b16 %v902
    %v2398 = vunpack.c.l.b16 %v903
    %v2399 = vunpack.c.h.b16 %v903
    %v2400 = vunpack.c.l.b16 %v904
    %v2401 = vunpack.c.h.b16 %v904
    %v2402 = vunpack.c.l.b16 %v905
    %v2403 = vunpack.c.h.b16 %v905
    %v2404 = vunpack.c.l.b16 %v906
    %v2405 = vunpack.c.h.b16 %v906
    %v2406 = vunpack.c.l.b16 %v907
    %v2407 = vunpack.c.h.b16 %v907
    %v2408 = vunpack.c.l.b16 %v908
    %v2409 = vunpack.c.h.b16 %v908
    %v2410 = vunpack.c.l.b16 %v909
    %v2411 = vunpack.c.h.b16 %v909
    %v2412 = vunpack.c.l.b16 %v910
    %v2413 = vunpack.c.h.b16 %v910
    %v2414 = vunpack.c.l.b16 %v911
    %v2415 = vunpack.c.h.b16 %v911
    %v2416 = vunpack.c.l.b16 %v912
    %v2417 = vunpack.c.h.b16 %v912
    %v2418 = vunpack.c.l.b16 %v913
    %v2419 = vunpack.c.h.b16 %v913
    %v2420 = vunpack.c.l.b16 %v914
    %v2421 = vunpack.c.h.b16 %v914
    %v2422 = vunpack.c.l.b16 %v915
    %v2423 = vunpack.c.h.b16 %v915
    %v2424 = vunpack.c.l.b16 %v916
    %v2425 = vunpack.c.h.b16 %v916
    %v2426 = vunpack.c.l.b16 %v917
    %v2427 = vunpack.c.h.b16 %v917
    %v2428 = vunpack.c.l.b16 %v918
    %v2429 = vunpack.c.h.b16 %v918
    %v2430 = vunpack.c.l.b16 %v919
    %v2431 = vunpack.c.h.b16 %v919
    %v2432 = vunpack.c.l.b16 %v920
    %v2433 = vunpack.c.h.b16 %v920
    %v2434 = vunpack.c.l.b16 %v921
    %v2435 = vunpack.c.h.b16 %v921
    %v2436 = vunpack.c.l.b16 %v922
    %v2437 = vunpack.c.h.b16 %v922
    %v2438 = vunpack.c.l.b16 %v923
    %v2439 = vunpack.c.h.b16 %v923
    %v2440 = vunpack.c.l.b16 %v924
    %v2441 = vunpack.c.h.b16 %v924
    %v2442 = vunpack.c.l.b16 %v925
    %v2443 = vunpack.c.h.b16 %v925
    %v2444 = vunpack.c.l.b16 %v926
    %v2445 = vunpack.c.h.b16 %v926
    %v2446 = vunpack.c.l.b16 %v927
    %v2447 = vunpack.c.h.b16 %v927
    %v2448 = vunpack.c.l.b16 %v928
    %v2449 = vunpack.c.h.b16 %v928
    %v2450 = vunpack.c.l.b16 %v929
    %v2451 = vunpack.c.h.b16 %v929
    %v2452 = vunpack.c.l.b16 %v930
    %v2453 = vunpack.c.h.b16 %v930
    %v2454 = vunpack.c.l.b16 %v931
    %v2455 = vunpack.c.h.b16 %v931
    %v2456 = vunpack.c.l.b16 %v932
    %v2457 = vunpack.c.h.b16 %v932
    %v2458 = vunpack.c.l.b16 %v933
    %v2459 = vunpack.c.h.b16 %v933
    %v2460 = vunpack.c.l.b16 %v934
    %v2461 = vunpack.c.h.b16 %v934
    %v2462 = vunpack.c.l.b16 %v935
    %v2463 = vunpack.c.h.b16 %v935
    %v2464 = vunpack.c.l.b16 %v936
    %v2465 = vunpack.c.h.b16 %v936
    %v2466 = vunpack.c.l.b16 %v937
    %v2467 = vunpack.c.h.b16 %v937
    %v2468 = vunpack.c.l.b16 %v938
    %v2469 = vunpack.c.h.b16 %v938
    %v2470 = vunpack.c.l.b16 %v939
    %v2471 = vunpack.c.h.b16 %v939
    %v2472 = vunpack.c.l.b16 %v940
    %v2473 = vunpack.c.h.b16 %v940
    %v2474 = vunpack.c.l.b16 %v941
    %v2475 = vunpack.c.h.b16 %v941
    %v2476 = vunpack.c.l.b16 %v942
    %v2477 = vunpack.c.h.b16 %v942
    %v2478 = vunpack.c.l.b16 %v943
    %v2479 = vunpack.c.h.b16 %v943
    %v2480 = vunpack.c.l.b16 %v944
    %v2481 = vunpack.c.h.b16 %v944
    %v2482 = vunpack.c.l.b16 %v945
    %v2483 = vunpack.c.h.b16 %v945
    %v2484 = vunpack.c.l.b16 %v946
    %v2485 = vunpack.c.h.b16 %v946
    %v2486 = vunpack.c.l.b16 %v947
    %v2487 = vunpack.c.h.b16 %v947
    %v2488 = vunpack.c.l.b16 %v948
    %v2489 = vunpack.c.h.b16 %v948
    %v2490 = vunpack.c.l.b16 %v949
    %v2491 = vunpack.c.h.b16 %v949
    %v2492 = vunpack.c.l.b16 %v950
    %v2493 = vunpack.c.h.b16 %v950
    %v2494 = vunpack.c.l.b16 %v951
    %v2495 = vunpack.c.h.b16 %v951
    %v2496 = vunpack.c.l.b16 %v952
    %v2497 = vunpack.c.h.b16 %v952
    %v2498 = vunpack.c.l.b16 %v953
    %v2499 = vunpack.c.h.b16 %v953
    %v2500 = vunpack.c.l.b16 %v954
    %v2501 = vunpack.c.h.b16 %v954
    %v2502 = vunpack.c.l.b16 %v955
    %v2503 = vunpack.c.h.b16 %v955
    %v2504 = vunpack.c.l.b16 %v956
    %v2505 = vunpack.c.h.b16 %v956
    %v2506 = vunpack.c.l.b16 %v957
    %v2507 = vunpack.c.h.b16 %v957
    %v2508 = vunpack.c.l.b16 %v958
    %v2509 = vunpack.c.h.b16 %v958
    %v2510 = vunpack.c.l.b16 %v959
    %v2511 = vunpack.c.h.b16 %v959
    %v2512 = vunpack.c.l.b16 %v960
    %v2513 = vunpack.c.h.b16 %v960
    %v2514 = vunpack.c.l.b16 %v961
    %v2515 = vunpack.c.h.b16 %v961
    %v2516 = vunpack.c.l.b16 %v962
    %v2517 = vunpack.c.h.b16 %v962
    %v2518 = vunpack.c.l.b16 %v963
    %v2519 = vunpack.c.h.b16 %v963
    %v2520 = vunpack.c.l.b16 %v964
    %v2521 = vunpack.c.h.b16 %v964
    %v2522 = vunpack.c.l.b16 %v965
    %v2523 = vunpack.c.h.b16 %v965
    %v2524 = vunpack.c.l.b16 %v966
    %v2525 = vunpack.c.h.b16 %v966
    %v2526 = vunpack.c.l.b16 %v967
    %v2527 = vunpack.c.h.b16 %v967
    %v2528 = vunpack.c.l.b16 %v968
    %v2529 = vunpack.c.h.b16 %v968
    %v2530 = vunpack.c.l.b16 %v969
    %v2531 = vunpack.c.h.b16 %v969
    %v2532 = vunpack.c.l.b16 %v970
    %v2533 = vunpack.c.h.b16 %v970
    %v2534 = vunpack.c.l.b16 %v971
    %v2535 = vunpack.c.h.b16 %v971
    %v2536 = vunpack.c.l.b16 %v972
    %v2537 = vunpack.c.h.b16 %v972
    %v2538 = vunpack.c.l.b16 %v973
    %v2539 = vunpack.c.h.b16 %v973
    %v2540 = vunpack.c.l.b16 %v974
    %v2541 = vunpack.c.h.b16 %v974
    %v2542 = vunpack.c.l.b16 %v975
    %v2543 = vunpack.c.h.b16 %v975
    %v2544 = vunpack.c.l.b16 %v976
    %v2545 = vunpack.c.h.b16 %v976
    %v2546 = vunpack.c.l.b16 %v977
    %v2547 = vunpack.c.h.b16 %v977
    %v2548 = vunpack.c.l.b16 %v978
    %v2549 = vunpack.c.h.b16 %v978
    %v2550 = vunpack.c.l.b16 %v979
    %v2551 = vunpack.c.h.b16 %v979
    %v2552 = vunpack.c.l.b16 %v980
    %v2553 = vunpack.c.h.b16 %v980
    %v2554 = vunpack.c.l.b16 %v981
    %v2555 = vunpack.c.h.b16 %v981
    %v2556 = vunpack.c.l.b16 %v982
    %v2557 = vunpack.c.h.b16 %v982
    %v2558 = vunpack.c.l.b16 %v983
    %v2559 = vunpack.c.h.b16 %v983
    %v2560 = vunpack.c.l.b16 %v984
    %v2561 = vunpack.c.h.b16 %v984
    %v2562 = vunpack.c.l.b16 %v985
    %v2563 = vunpack.c.h.b16 %v985
    %v2564 = vpack.c.b16 %v1548, %v1540
    %v2565 = vpack.c.b16 %v1549, %v1541
    %v2566 = vpack.c.b16 %v1550, %v1542
    %v2567 = vpack.c.b16 %v1551, %v1543
    %v2568 = vpack.c.b16 %v1552, %v1544
    %v2569 = vpack.c.b16 %v1553, %v1545
    %v2570 = vpack.c.b16 %v1554, %v1546
    %v2571 = vpack.c.b16 %v1555, %v1547
    %v2572 = vpack.c.b16 %v1564, %v1556
    %v2573 = vpack.c.b16 %v1565, %v1557
    %v2574 = vpack.c.b16 %v1566, %v1558
    %v2575 = vpack.c.b16 %v1567, %v1559
    %v2576 = vpack.c.b16 %v1568, %v1560
    %v2577 = vpack.c.b16 %v1569, %v1561
    %v2578 = vpack.c.b16 %v1570, %v1562
    %v2579 = vpack.c.b16 %v1571, %v1563
    %v2580 = vpack.c.b16 %v1580, %v1572
    %v2581 = vpack.c.b16 %v1581, %v1573
    %v2582 = vpack.c.b16 %v1582, %v1574
    %v2583 = vpack.c.b16 %v1583, %v1575
    %v2584 = vpack.c.b16 %v1584, %v1576
    %v2585 = vpack.c.b16 %v1585, %v1577
    %v2586 = vpack.c.b16 %v1586, %v1578
    %v2587 = vpack.c.b16 %v1587, %v1579
    %v2588 = vpack.c.b16 %v1596, %v1588
    %v2589 = vpack.c.b16 %v1597, %v1589
    %v2590 = vpack.c.b16 %v1598, %v1590
    %v2591 = vpack.c.b16 %v1599, %v1591
    %v2592 = vpack.c.b16 %v1600, %v1592
    %v2593 = vpack.c.b16 %v1601, %v1593
    %v2594 = vpack.c.b16 %v1602, %v1594
    %v2595 = vpack.c.b16 %v1603, %v1595
    %v2596 = vpack.c.b16 %v1612, %v1604
    %v2597 = vpack.c.b16 %v1613, %v1605
    %v2598 = vpack.c.b16 %v1614, %v1606
    %v2599 = vpack.c.b16 %v1615, %v1607
    %v2600 = vpack.c.b16 %v1616, %v1608
    %v2601 = vpack.c.b16 %v1617, %v1609
    %v2602 = vpack.c.b16 %v1618, %v1610
    %v2603 = vpack.c.b16 %v1619, %v1611
    %v2604 = vpack.c.b16 %v1628, %v1620
    %v2605 = vpack.c.b16 %v1629, %v1621
    %v2606 = vpack.c.b16 %v1630, %v1622
    %v2607 = vpack.c.b16 %v1631, %v1623
    %v2608 = vpack.c.b16 %v1632, %v1624
    %v2609 = vpack.c.b16 %v1633, %v1625
    %v2610 = vpack.c.b16 %v1634, %v1626
    %v2611 = vpack.c.b16 %v1635, %v1627
    %v2612 = vpack.c.b16 %v1644, %v1636
    %v2613 = vpack.c.b16 %v1645, %v1637
    %v2614 = vpack.c.b16 %v1646, %v1638
    %v2615 = vpack.c.b16 %v1647, %v1639
    %v2616 = vpack.c.b16 %v1648, %v1640
    %v2617 = vpack.c.b16 %v1649, %v1641
    %v2618 = vpack.c.b16 %v1650, %v1642
    %v2619 = vpack.c.b16 %v1651, %v1643
    %v2620 = vpack.c.b16 %v1660, %v1652
    %v2621 = vpack.c.b16 %v1661, %v1653
    %v2622 = vpack.c.b16 %v1662, %v1654
    %v2623 = vpack.c.b16 %v1663, %v1655
    %v2624 = vpack.c.b16 %v1664, %v1656
    %v2625 = vpack.c.b16 %v1665, %v1657
    %v2626 = vpack.c.b16 %v1666, %v1658
    %v2627 = vpack.c.b16 %v1667, %v1659
    %v2628 = vpack.c.b16 %v1676, %v1668
    %v2629 = vpack.c.b16 %v1677, %v1669
    %v2630 = vpack.c.b16 %v1678, %v1670
    %v2631 = vpack.c.b16 %v1679, %v1671
    %v2632 = vpack.c.b16 %v1680, %v1672
    %v2633 = vpack.c.b16 %v1681, %v1673
    %v2634 = vpack.c.b16 %v1682, %v1674
    %v2635 = vpack.c.b16 %v1683, %v1675
    %v2636 = vpack.c.b16 %v1692, %v1684
    %v2637 = vpack.c.b16 %v1693, %v1685
    %v2638 = vpack.c.b16 %v1694, %v1686
    %v2639 = vpack.c.b16 %v1695, %v1687
    %v2640 = vpack.c.b16 %v1696, %v1688
    %v2641 = vpack.c.b16 %v1697, %v1689
    %v2642 = vpack.c.b16 %v1698, %v1690
    %v2643 = vpack.c.b16 %v1699, %v1691
    %v2644 = vpack.c.b16 %v1708, %v1700
    %v2645 = vpack.c.b16 %v1709, %v1701
    %v2646 = vpack.c.b16 %v1710, %v1702
    %v2647 = vpack.c.b16 %v1711, %v1703
    %v2648 = vpack.c.b16 %v1712, %v1704
    %v2649 = vpack.c.b16 %v1713, %v1705
    %v2650 = vpack.c.b16 %v1714, %v1706
    %v2651 = vpack.c.b16 %v1715, %v1707
    %v2652 = vpack.c.b16 %v1724, %v1716
    %v2653 = vpack.c.b16 %v1725, %v1717
    %v2654 = vpack.c.b16 %v1726, %v1718
    %v2655 = vpack.c.b16 %v1727, %v1719
    %v2656 = vpack.c.b16 %v1728, %v1720
    %v2657 = vpack.c.b16 %v1729, %v1721
    %v2658 = vpack.c.b16 %v1730, %v1722
    %v2659 = vpack.c.b16 %v1731, %v1723
    %v2660 = vpack.c.b16 %v1740, %v1732
    %v2661 = vpack.c.b16 %v1741, %v1733
    %v2662 = vpack.c.b16 %v1742, %v1734
    %v2663 = vpack.c.b16 %v1743, %v1735
    %v2664 = vpack.c.b16 %v1744, %v1736
    %v2665 = vpack.c.b16 %v1745, %v1737
    %v2666 = vpack.c.b16 %v1746, %v1738
    %v2667 = vpack.c.b16 %v1747, %v1739
    %v2668 = vpack.c.b16 %v1756, %v1748
    %v2669 = vpack.c.b16 %v1757, %v1749
    %v2670 = vpack.c.b16 %v1758, %v1750
    %v2671 = vpack.c.b16 %v1759, %v1751
    %v2672 = vpack.c.b16 %v1760, %v1752
    %v2673 = vpack.c.b16 %v1761, %v1753
    %v2674 = vpack.c.b16 %v1762, %v1754
    %v2675 = vpack.c.b16 %v1763, %v1755
    %v2676 = vpack.c.b16 %v1772, %v1764
    %v2677 = vpack.c.b16 %v1773, %v1765
    %v2678 = vpack.c.b16 %v1774, %v1766
    %v2679 = vpack.c.b16 %v1775, %v1767
    %v2680 = vpack.c.b16 %v1776, %v1768
    %v2681 = vpack.c.b16 %v1777, %v1769
    %v2682 = vpack.c.b16 %v1778, %v1770
    %v2683 = vpack.c.b16 %v1779, %v1771
    %v2684 = vpack.c.b16 %v1788, %v1780
    %v2685 = vpack.c.b16 %v1789, %v1781
    %v2686 = vpack.c.b16 %v1790, %v1782
    %v2687 = vpack.c.b16 %v1791, %v1783
    %v2688 = vpack.c.b16 %v1792, %v1784
    %v2689 = vpack.c.b16 %v1793, %v1785
    %v2690 = vpack.c.b16 %v1794, %v1786
    %v2691 = vpack.c.b16 %v1795, %v1787
    %v2692 = vpack.c.b16 %v1804, %v1796
    %v2693 = vpack.c.b16 %v1805, %v1797
    %v2694 = vpack.c.b16 %v1806, %v1798
    %v2695 = vpack.c.b16 %v1807, %v1799
    %v2696 = vpack.c.b16 %v1808, %v1800
    %v2697 = vpack.c.b16 %v1809, %v1801
    %v2698 = vpack.c.b16 %v1810, %v1802
    %v2699 = vpack.c.b16 %v1811, %v1803
    %v2700 = vpack.c.b16 %v1820, %v1812
    %v2701 = vpack.c.b16 %v1821, %v1813
    %v2702 = vpack.c.b16 %v1822, %v1814
    %v2703 = vpack.c.b16 %v1823, %v1815
    %v2704 = vpack.c.b16 %v1824, %v1816
    %v2705 = vpack.c.b16 %v1825, %v1817
    %v2706 = vpack.c.b16 %v1826, %v1818
    %v2707 = vpack.c.b16 %v1827, %v1819
    %v2708 = vpack.c.b16 %v1836, %v1828
    %v2709 = vpack.c.b16 %v1837, %v1829
    %v2710 = vpack.c.b16 %v1838, %v1830
    %v2711 = vpack.c.b16 %v1839, %v1831
    %v2712 = vpack.c.b16 %v1840, %v1832
    %v2713 = vpack.c.b16 %v1841, %v1833
    %v2714 = vpack.c.b16 %v1842, %v1834
    %v2715 = vpack.c.b16 %v1843, %v1835
    %v2716 = vpack.c.b16 %v1852, %v1844
    %v2717 = vpack.c.b16 %v1853, %v1845
    %v2718 = vpack.c.b16 %v1854, %v1846
    %v2719 = vpack.c.b16 %v1855, %v1847
    %v2720 = vpack.c.b16 %v1856, %v1848
    %v2721 = vpack.c.b16 %v1857, %v1849
    %v2722 = vpack.c.b16 %v1858, %v1850
    %v2723 = vpack.c.b16 %v1859, %v1851
    %v2724 = vpack.c.b16 %v1868, %v1860
    %v2725 = vpack.c.b16 %v1869, %v1861
    %v2726 = vpack.c.b16 %v1870, %v1862
    %v2727 = vpack.c.b16 %v1871, %v1863
    %v2728 = vpack.c.b16 %v1872, %v1864
    %v2729 = vpack.c.b16 %v1873, %v1865
    %v2730 = vpack.c.b16 %v1874, %v1866
    %v2731 = vpack.c.b16 %v1875, %v1867
    %v2732 = vpack.c.b16 %v1884, %v1876
    %v2733 = vpack.c.b16 %v1885, %v1877
    %v2734 = vpack.c.b16 %v1886, %v1878
    %v2735 = vpack.c.b16 %v1887, %v1879
    %v2736 = vpack.c.b16 %v1888, %v1880
    %v2737 = vpack.c.b16 %v1889, %v1881
    %v2738 = vpack.c.b16 %v1890, %v1882
    %v2739 = vpack.c.b16 %v1891, %v1883
    %v2740 = vpack.c.b16 %v1900, %v1892
    %v2741 = vpack.c.b16 %v1901, %v1893
    %v2742 = vpack.c.b16 %v1902, %v1894
    %v2743 = vpack.c.b16 %v1903, %v1895
    %v2744 = vpack.c.b16 %v1904, %v1896
    %v2745 = vpack.c.b16 %v1905, %v1897
    %v2746 = vpack.c.b16 %v1906, %v1898
    %v2747 = vpack.c.b16 %v1907, %v1899
    %v2748 = vpack.c.b16 %v1916, %v1908
    %v2749 = vpack.c.b16 %v1917, %v1909
    %v2750 = vpack.c.b16 %v1918, %v1910
    %v2751 = vpack.c.b16 %v1919, %v1911
    %v2752 = vpack.c.b16 %v1920, %v1912
    %v2753 = vpack.c.b16 %v1921, %v1913
    %v2754 = vpack.c.b16 %v1922, %v1914
    %v2755 = vpack.c.b16 %v1923, %v1915
    %v2756 = vpack.c.b16 %v1932, %v1924
    %v2757 = vpack.c.b16 %v1933, %v1925
    %v2758 = vpack.c.b16 %v1934, %v1926
    %v2759 = vpack.c.b16 %v1935, %v1927
    %v2760 = vpack.c.b16 %v1936, %v1928
    %v2761 = vpack.c.b16 %v1937, %v1929
    %v2762 = vpack.c.b16 %v1938, %v1930
    %v2763 = vpack.c.b16 %v1939, %v1931
    %v2764 = vpack.c.b16 %v1948, %v1940
    %v2765 = vpack.c.b16 %v1949, %v1941
    %v2766 = vpack.c.b16 %v1950, %v1942
    %v2767 = vpack.c.b16 %v1951, %v1943
    %v2768 = vpack.c.b16 %v1952, %v1944
    %v2769 = vpack.c.b16 %v1953, %v1945
    %v2770 = vpack.c.b16 %v1954, %v1946
    %v2771 = vpack.c.b16 %v1955, %v1947
    %v2772 = vpack.c.b16 %v1964, %v1956
    %v2773 = vpack.c.b16 %v1965, %v1957
    %v2774 = vpack.c.b16 %v1966, %v1958
    %v2775 = vpack.c.b16 %v1967, %v1959
    %v2776 = vpack.c.b16 %v1968, %v1960
    %v2777 = vpack.c.b16 %v1969, %v1961
    %v2778 = vpack.c.b16 %v1970, %v1962
    %v2779 = vpack.c.b16 %v1971, %v1963
    %v2780 = vpack.c.b16 %v1980, %v1972
    %v2781 = vpack.c.b16 %v1981, %v1973
    %v2782 = vpack.c.b16 %v1982, %v1974
    %v2783 = vpack.c.b16 %v1983, %v1975
    %v2784 = vpack.c.b16 %v1984, %v1976
    %v2785 = vpack.c.b16 %v1985, %v1977
    %v2786 = vpack.c.b16 %v1986, %v1978
    %v2787 = vpack.c.b16 %v1987, %v1979
    %v2788 = vpack.c.b16 %v1996, %v1988
    %v2789 = vpack.c.b16 %v1997, %v1989
    %v2790 = vpack.c.b16 %v1998, %v1990
    %v2791 = vpack.c.b16 %v1999, %v1991
    %v2792 = vpack.c.b16 %v2000, %v1992
    %v2793 = vpack.c.b16 %v2001, %v1993
    %v2794 = vpack.c.b16 %v2002, %v1994
    %v2795 = vpack.c.b16 %v2003, %v1995
    %v2796 = vpack.c.b16 %v2012, %v2004
    %v2797 = vpack.c.b16 %v2013, %v2005
    %v2798 = vpack.c.b16 %v2014, %v2006
    %v2799 = vpack.c.b16 %v2015, %v2007
    %v2800 = vpack.c.b16 %v2016, %v2008
    %v2801 = vpack.c.b16 %v2017, %v2009
    %v2802 = vpack.c.b16 %v2018, %v2010
    %v2803 = vpack.c.b16 %v2019, %v2011
    %v2804 = vpack.c.b16 %v2028, %v2020
    %v2805 = vpack.c.b16 %v2029, %v2021
    %v2806 = vpack.c.b16 %v2030, %v2022
    %v2807 = vpack.c.b16 %v2031, %v2023
    %v2808 = vpack.c.b16 %v2032, %v2024
    %v2809 = vpack.c.b16 %v2033, %v2025
    %v2810 = vpack.c.b16 %v2034, %v2026
    %v2811 = vpack.c.b16 %v2035, %v2027
    %v2812 = vpack.c.b16 %v2044, %v2036
    %v2813 = vpack.c.b16 %v2045, %v2037
    %v2814 = vpack.c.b16 %v2046, %v2038
    %v2815 = vpack.c.b16 %v2047, %v2039
    %v2816 = vpack.c.b16 %v2048, %v2040
    %v2817 = vpack.c.b16 %v2049, %v2041
    %v2818 = vpack.c.b16 %v2050, %v2042
    %v2819 = vpack.c.b16 %v2051, %v2043
    %v2820 = vpack.c.b16 %v2060, %v2052
    %v2821 = vpack.c.b16 %v2061, %v2053
    %v2822 = vpack.c.b16 %v2062, %v2054
    %v2823 = vpack.c.b16 %v2063, %v2055
    %v2824 = vpack.c.b16 %v2064, %v2056
    %v2825 = vpack.c.b16 %v2065, %v2057
    %v2826 = vpack.c.b16 %v2066, %v2058
    %v2827 = vpack.c.b16 %v2067, %v2059
    %v2828 = vpack.c.b16 %v2076, %v2068
    %v2829 = vpack.c.b16 %v2077, %v2069
    %v2830 = vpack.c.b16 %v2078, %v2070
    %v2831 = vpack.c.b16 %v2079, %v2071
    %v2832 = vpack.c.b16 %v2080, %v2072
    %v2833 = vpack.c.b16 %v2081, %v2073
    %v2834 = vpack.c.b16 %v2082, %v2074
    %v2835 = vpack.c.b16 %v2083, %v2075
    %v2836 = vpack.c.b16 %v2092, %v2084
    %v2837 = vpack.c.b16 %v2093, %v2085
    %v2838 = vpack.c.b16 %v2094, %v2086
    %v2839 = vpack.c.b16 %v2095, %v2087
    %v2840 = vpack.c.b16 %v2096, %v2088
    %v2841 = vpack.c.b16 %v2097, %v2089
    %v2842 = vpack.c.b16 %v2098, %v2090
    %v2843 = vpack.c.b16 %v2099, %v2091
    %v2844 = vpack.c.b16 %v2108, %v2100
    %v2845 = vpack.c.b16 %v2109, %v2101
    %v2846 = vpack.c.b16 %v2110, %v2102
    %v2847 = vpack.c.b16 %v2111, %v2103
    %v2848 = vpack.c.b16 %v2112, %v2104
    %v2849 = vpack.c.b16 %v2113, %v2105
    %v2850 = vpack.c.b16 %v2114, %v2106
    %v2851 = vpack.c.b16 %v2115, %v2107
    %v2852 = vpack.c.b16 %v2124, %v2116
    %v2853 = vpack.c.b16 %v2125, %v2117
    %v2854 = vpack.c.b16 %v2126, %v2118
    %v2855 = vpack.c.b16 %v2127, %v2119
    %v2856 = vpack.c.b16 %v2128, %v2120
    %v2857 = vpack.c.b16 %v2129, %v2121
    %v2858 = vpack.c.b16 %v2130, %v2122
    %v2859 = vpack.c.b16 %v2131, %v2123
    %v2860 = vpack.c.b16 %v2140, %v2132
    %v2861 = vpack.c.b16 %v2141, %v2133
    %v2862 = vpack.c.b16 %v2142, %v2134
    %v2863 = vpack.c.b16 %v2143, %v2135
    %v2864 = vpack.c.b16 %v2144, %v2136
    %v2865 = vpack.c.b16 %v2145, %v2137
    %v2866 = vpack.c.b16 %v2146, %v2138
    %v2867 = vpack.c.b16 %v2147, %v2139
    %v2868 = vpack.c.b16 %v2156, %v2148
    %v2869 = vpack.c.b16 %v2157, %v2149
    %v2870 = vpack.c.b16 %v2158, %v2150
    %v2871 = vpack.c.b16 %v2159, %v2151
    %v2872 = vpack.c.b16 %v2160, %v2152
    %v2873 = vpack.c.b16 %v2161, %v2153
    %v2874 = vpack.c.b16 %v2162, %v2154
    %v2875 = vpack.c.b16 %v2163, %v2155
    %v2876 = vpack.c.b16 %v2172, %v2164
    %v2877 = vpack.c.b16 %v2173, %v2165
    %v2878 = vpack.c.b16 %v2174, %v2166
    %v2879 = vpack.c.b16 %v2175, %v2167
    %v2880 = vpack.c.b16 %v2176, %v2168
    %v2881 = vpack.c.b16 %v2177, %v2169
    %v2882 = vpack.c.b16 %v2178, %v2170
    %v2883 = vpack.c.b16 %v2179, %v2171
    %v2884 = vpack.c.b16 %v2188, %v2180
    %v2885 = vpack.c.b16 %v2189, %v2181
    %v2886 = vpack.c.b16 %v2190, %v2182
    %v2887 = vpack.c.b16 %v2191, %v2183
    %v2888 = vpack.c.b16 %v2192, %v2184
    %v2889 = vpack.c.b16 %v2193, %v2185
    %v2890 = vpack.c.b16 %v2194, %v2186
    %v2891 = vpack.c.b16 %v2195, %v2187
    %v2892 = vpack.c.b16 %v2204, %v2196
    %v2893 = vpack.c.b16 %v2205, %v2197
    %v2894 = vpack.c.b16 %v2206, %v2198
    %v2895 = vpack.c.b16 %v2207, %v2199
    %v2896 = vpack.c.b16 %v2208, %v2200
    %v2897 = vpack.c.b16 %v2209, %v2201
    %v2898 = vpack.c.b16 %v2210, %v2202
    %v2899 = vpack.c.b16 %v2211, %v2203
    %v2900 = vpack.c.b16 %v2220, %v2212
    %v2901 = vpack.c.b16 %v2221, %v2213
    %v2902 = vpack.c.b16 %v2222, %v2214
    %v2903 = vpack.c.b16 %v2223, %v2215
    %v2904 = vpack.c.b16 %v2224, %v2216
    %v2905 = vpack.c.b16 %v2225, %v2217
    %v2906 = vpack.c.b16 %v2226, %v2218
    %v2907 = vpack.c.b16 %v2227, %v2219
    %v2908 = vpack.c.b16 %v2236, %v2228
    %v2909 = vpack.c.b16 %v2237, %v2229
    %v2910 = vpack.c.b16 %v2238, %v2230
    %v2911 = vpack.c.b16 %v2239, %v2231
    %v2912 = vpack.c.b16 %v2240, %v2232
    %v2913 = vpack.c.b16 %v2241, %v2233
    %v2914 = vpack.c.b16 %v2242, %v2234
    %v2915 = vpack.c.b16 %v2243, %v2235
    %v2916 = vpack.c.b16 %v2252, %v2244
    %v2917 = vpack.c.b16 %v2253, %v2245
    %v2918 = vpack.c.b16 %v2254, %v2246
    %v2919 = vpack.c.b16 %v2255, %v2247
    %v2920 = vpack.c.b16 %v2256, %v2248
    %v2921 = vpack.c.b16 %v2257, %v2249
    %v2922 = vpack.c.b16 %v2258, %v2250
    %v2923 = vpack.c.b16 %v2259, %v2251
    %v2924 = vpack.c.b16 %v2268, %v2260
    %v2925 = vpack.c.b16 %v2269, %v2261
    %v2926 = vpack.c.b16 %v2270, %v2262
    %v2927 = vpack.c.b16 %v2271, %v2263
    %v2928 = vpack.c.b16 %v2272, %v2264
    %v2929 = vpack.c.b16 %v2273, %v2265
    %v2930 = vpack.c.b16 %v2274, %v2266
    %v2931 = vpack.c.b16 %v2275, %v2267
    %v2932 = vpack.c.b16 %v2284, %v2276
    %v2933 = vpack.c.b16 %v2285, %v2277
    %v2934 = vpack.c.b16 %v2286, %v2278
    %v2935 = vpack.c.b16 %v2287, %v2279
    %v2936 = vpack.c.b16 %v2288, %v2280
    %v2937 = vpack.c.b16 %v2289, %v2281
    %v2938 = vpack.c.b16 %v2290, %v2282
    %v2939 = vpack.c.b16 %v2291, %v2283
    %v2940 = vpack.c.b16 %v2300, %v2292
    %v2941 = vpack.c.b16 %v2301, %v2293
    %v2942 = vpack.c.b16 %v2302, %v2294
    %v2943 = vpack.c.b16 %v2303, %v2295
    %v2944 = vpack.c.b16 %v2304, %v2296
    %v2945 = vpack.c.b16 %v2305, %v2297
    %v2946 = vpack.c.b16 %v2306, %v2298
    %v2947 = vpack.c.b16 %v2307, %v2299
    %v2948 = vpack.c.b16 %v2316, %v2308
    %v2949 = vpack.c.b16 %v2317, %v2309
    %v2950 = vpack.c.b16 %v2318, %v2310
    %v2951 = vpack.c.b16 %v2319, %v2311
    %v2952 = vpack.c.b16 %v2320, %v2312
    %v2953 = vpack.c.b16 %v2321, %v2313
    %v2954 = vpack.c.b16 %v2322, %v2314
    %v2955 = vpack.c.b16 %v2323, %v2315
    %v2956 = vpack.c.b16 %v2332, %v2324
    %v2957 = vpack.c.b16 %v2333, %v2325
    %v2958 = vpack.c.b16 %v2334, %v2326
    %v2959 = vpack.c.b16 %v2335, %v2327
    %v2960 = vpack.c.b16 %v2336, %v2328
    %v2961 = vpack.c.b16 %v2337, %v2329
    %v2962 = vpack.c.b16 %v2338, %v2330
    %v2963 = vpack.c.b16 %v2339, %v2331
    %v2964 = vpack.c.b16 %v2348, %v2340
    %v2965 = vpack.c.b16 %v2349, %v2341
    %v2966 = vpack.c.b16 %v2350, %v2342
    %v2967 = vpack.c.b16 %v2351, %v2343
    %v2968 = vpack.c.b16 %v2352, %v2344
    %v2969 = vpack.c.b16 %v2353, %v2345
    %v2970 = vpack.c.b16 %v2354, %v2346
    %v2971 = vpack.c.b16 %v2355, %v2347
    %v2972 = vpack.c.b16 %v2364, %v2356
    %v2973 = vpack.c.b16 %v2365, %v2357
    %v2974 = vpack.c.b16 %v2366, %v2358
    %v2975 = vpack.c.b16 %v2367, %v2359
    %v2976 = vpack.c.b16 %v2368, %v2360
    %v2977 = vpack.c.b16 %v2369, %v2361
    %v2978 = vpack.c.b16 %v2370, %v2362
    %v2979 = vpack.c.b16 %v2371, %v2363
    %v2980 = vpack.c.b16 %v2380, %v2372
    %v2981 = vpack.c.b16 %v2381, %v2373
    %v2982 = vpack.c.b16 %v2382, %v2374
    %v2983 = vpack.c.b16 %v2383, %v2375
    %v2984 = vpack.c.b16 %v2384, %v2376
    %v2985 = vpack.c.b16 %v2385, %v2377
    %v2986 = vpack.c.b16 %v2386, %v2378
    %v2987 = vpack.c.b16 %v2387, %v2379
    %v2988 = vpack.c.b16 %v2396, %v2388
    %v2989 = vpack.c.b16 %v2397, %v2389
    %v2990 = vpack.c.b16 %v2398, %v2390
    %v2991 = vpack.c.b16 %v2399, %v2391
    %v2992 = vpack.c.b16 %v2400, %v2392
    %v2993 = vpack.c.b16 %v2401, %v2393
    %v2994 = vpack.c.b16 %v2402, %v2394
    %v2995 = vpack.c.b16 %v2403, %v2395
    %v2996 = vpack.c.b16 %v2412, %v2404
    %v2997 = vpack.c.b16 %v2413, %v2405
    %v2998 = vpack.c.b16 %v2414, %v2406
    %v2999 = vpack.c.b16 %v2415, %v2407
    %v3000 = vpack.c.b16 %v2416, %v2408
    %v3001 = vpack.c.b16 %v2417, %v2409
    %v3002 = vpack.c.b16 %v2418, %v2410
    %v3003 = vpack.c.b16 %v2419, %v2411
    %v3004 = vpack.c.b16 %v2428, %v2420
    %v3005 = vpack.c.b16 %v2429, %v2421
    %v3006 = vpack.c.b16 %v2430, %v2422
    %v3007 = vpack.c.b16 %v2431, %v2423
    %v3008 = vpack.c.b16 %v2432, %v2424
    %v3009 = vpack.c.b16 %v2433, %v2425
    %v3010 = vpack.c.b16 %v2434, %v2426
    %v3011 = vpack.c.b16 %v2435, %v2427
    %v3012 = vpack.c.b16 %v2444, %v2436
    %v3013 = vpack.c.b16 %v2445, %v2437
    %v3014 = vpack.c.b16 %v2446, %v2438
    %v3015 = vpack.c.b16 %v2447, %v2439
    %v3016 = vpack.c.b16 %v2448, %v2440
    %v3017 = vpack.c.b16 %v2449, %v2441
    %v3018 = vpack.c.b16 %v2450, %v2442
    %v3019 = vpack.c.b16 %v2451, %v2443
    %v3020 = vpack.c.b16 %v2460, %v2452
    %v3021 = vpack.c.b16 %v2461, %v2453
    %v3022 = vpack.c.b16 %v2462, %v2454
    %v3023 = vpack.c.b16 %v2463, %v2455
    %v3024 = vpack.c.b16 %v2464, %v2456
    %v3025 = vpack.c.b16 %v2465, %v2457
    %v3026 = vpack.c.b16 %v2466, %v2458
    %v3027 = vpack.c.b16 %v2467, %v2459
    %v3028 = vpack.c.b16 %v2476, %v2468
    %v3029 = vpack.c.b16 %v2477, %v2469
    %v3030 = vpack.c.b16 %v2478, %v2470
    %v3031 = vpack.c.b16 %v2479, %v2471
    %v3032 = vpack.c.b16 %v2480, %v2472
    %v3033 = vpack.c.b16 %v2481, %v2473
    %v3034 = vpack.c.b16 %v2482, %v2474
    %v3035 = vpack.c.b16 %v2483, %v2475
    %v3036 = vpack.c.b16 %v2492, %v2484
    %v3037 = vpack.c.b16 %v2493, %v2485
    %v3038 = vpack.c.b16 %v2494, %v2486
    %v3039 = vpack.c.b16 %v2495, %v2487
    %v3040 = vpack.c.b16 %v2496, %v2488
    %v3041 = vpack.c.b16 %v2497, %v2489
    %v3042 = vpack.c.b16 %v2498, %v2490
    %v3043 = vpack.c.b16 %v2499, %v2491
    %v3044 = vpack.c.b16 %v2508, %v2500
    %v3045 = vpack.c.b16 %v2509, %v2501
    %v3046 = vpack.c.b16 %v2510, %v2502
    %v3047 = vpack.c.b16 %v2511, %v2503
    %v3048 = vpack.c.b16 %v2512, %v2504
    %v3049 = vpack.c.b16 %v2513, %v2505
    %v3050 = vpack.c.b16 %v2514, %v2506
    %v3051 = vpack.c.b16 %v2515, %v2507
    %v3052 = vpack.c.b16 %v2524, %v2516
    %v3053 = vpack.c.b16 %v2525, %v2517
    %v3054 = vpack.c.b16 %v2526, %v2518
    %v3055 = vpack.c.b16 %v2527, %v2519
    %v3056 = vpack.c.b16 %v2528, %v2520
    %v3057 = vpack.c.b16 %v2529, %v2521
    %v3058 = vpack.c.b16 %v2530, %v2522
    %v3059 = vpack.c.b16 %v2531, %v2523
    %v3060 = vpack.c.b16 %v2540, %v2532
    %v3061 = vpack.c.b16 %v2541, %v2533
    %v3062 = vpack.c.b16 %v2542, %v2534
    %v3063 = vpack.c.b16 %v2543, %v2535
    %v3064 = vpack.c.b16 %v2544, %v2536
    %v3065 = vpack.c.b16 %v2545, %v2537
    %v3066 = vpack.c.b16 %v2546, %v2538
    %v3067 = vpack.c.b16 %v2547, %v2539
    %v3068 = vpack.c.b16 %v2556, %v2548
    %v3069 = vpack.c.b16 %v2557, %v2549
    %v3070 = vpack.c.b16 %v2558, %v2550
    %v3071 = vpack.c.b16 %v2559, %v2551
    %v3072 = vpack.c.b16 %v2560, %v2552
    %v3073 = vpack.c.b16 %v2561, %v2553
    %v3074 = vpack.c.b16 %v2562, %v2554
    %v3075 = vpack.c.b16 %v2563, %v2555
    %3588 = vmatprep.subr.bf16.mxu0 %v2565
    %3589 = vmatpush1.bf16.msra.mxu0 %v2564
    %3590 = vmatprep.subr.bf16.mxu0 %v2573
    %3591 = vmatpush1.bf16.msra.mxu0 %v2572
    %3592 = vmatprep.subr.bf16.mxu0 %v2581
    %3593 = vmatpush1.bf16.msra.mxu0 %v2580
    %3594 = vmatprep.subr.bf16.mxu0 %v2589
    %3595 = vmatpush1.bf16.msra.mxu0 %v2588
    %3596 = vmatprep.subr.bf16.mxu0 %v2597
    %3597 = vmatpush1.bf16.msra.mxu0 %v2596
    %3598 = vmatprep.subr.bf16.mxu0 %v2605
    %3599 = vmatpush1.bf16.msra.mxu0 %v2604
    %3600 = vmatprep.subr.bf16.mxu0 %v2613
    %3601 = vmatpush1.bf16.msra.mxu0 %v2612
    %3602 = vmatprep.subr.bf16.mxu0 %v2621
    %3603 = vmatpush1.bf16.msra.mxu0 %v2620
    %3604 = vmatprep.subr.bf16.mxu0 %v2629
    %3605 = vmatpush1.bf16.msra.mxu0 %v2628
    %3606 = vmatprep.subr.bf16.mxu0 %v2637
    %3607 = vmatpush1.bf16.msra.mxu0 %v2636
    %3608 = vmatprep.subr.bf16.mxu0 %v2645
    %3609 = vmatpush1.bf16.msra.mxu0 %v2644
    %3610 = vmatprep.subr.bf16.mxu0 %v2653
    %3611 = vmatpush1.bf16.msra.mxu0 %v2652
    %3612 = vmatprep.subr.bf16.mxu0 %v2661
    %3613 = vmatpush1.bf16.msra.mxu0 %v2660
    %3614 = vmatprep.subr.bf16.mxu0 %v2669
    %3615 = vmatpush1.bf16.msra.mxu0 %v2668
    %3616 = vmatprep.subr.bf16.mxu0 %v2677
    %3617 = vmatpush1.bf16.msra.mxu0 %v2676
    %3618 = vmatprep.subr.bf16.mxu0 %v2685
    %3619 = vmatpush1.bf16.msra.mxu0 %v2684
    %3620 = vmatprep.mubr.bf16.mxu0 %v467
    %3621 = vmatmul.mubr.bf16.gmra.mrb[0].mxu0 %v466
    %v3622 = vpop.f32.mrb[0].mxu0
    %v3623 = vadd.f32 %v991, %v3622
    %v3624 = vpop.f32.mrb[0].mxu0
    %v3625 = vadd.f32 %v995, %v3624
    %v3626 = vpop.f32.mrb[0].mxu0
    %v3627 = vpop.f32.mrb[0].mxu0
    %3628 = vdwg.mxu0
    %3629 = vmatprep.subr.bf16.mxu0 %v2693
    %3630 = vmatpush1.bf16.msra.mxu0 %v2692
    %3631 = vmatprep.subr.bf16.mxu0 %v2701
    %3632 = vmatpush1.bf16.msra.mxu0 %v2700
    %3633 = vmatprep.subr.bf16.mxu0 %v2709
    %3634 = vmatpush1.bf16.msra.mxu0 %v2708
    %3635 = vmatprep.subr.bf16.mxu0 %v2717
    %3636 = vmatpush1.bf16.msra.mxu0 %v2716
    %3637 = vmatprep.subr.bf16.mxu0 %v2725
    %3638 = vmatpush1.bf16.msra.mxu0 %v2724
    %3639 = vmatprep.subr.bf16.mxu0 %v2733
    %3640 = vmatpush1.bf16.msra.mxu0 %v2732
    %3641 = vmatprep.subr.bf16.mxu0 %v2741
    %3642 = vmatpush1.bf16.msra.mxu0 %v2740
    %3643 = vmatprep.subr.bf16.mxu0 %v2749
    %3644 = vmatpush1.bf16.msra.mxu0 %v2748
    %3645 = vmatprep.subr.bf16.mxu0 %v2757
    %3646 = vmatpush1.bf16.msra.mxu0 %v2756
    %3647 = vmatprep.subr.bf16.mxu0 %v2765
    %3648 = vmatpush1.bf16.msra.mxu0 %v2764
    %3649 = vmatprep.subr.bf16.mxu0 %v2773
    %3650 = vmatpush1.bf16.msra.mxu0 %v2772
    %3651 = vmatprep.subr.bf16.mxu0 %v2781
    %3652 = vmatpush1.bf16.msra.mxu0 %v2780
    %3653 = vmatprep.subr.bf16.mxu0 %v2789
    %3654 = vmatpush1.bf16.msra.mxu0 %v2788
    %3655 = vmatprep.subr.bf16.mxu0 %v2797
    %3656 = vmatpush1.bf16.msra.mxu0 %v2796
    %3657 = vmatprep.subr.bf16.mxu0 %v2805
    %3658 = vmatpush1.bf16.msra.mxu0 %v2804
    %3659 = vmatprep.subr.bf16.mxu0 %v2813
    %3660 = vmatpush1.bf16.msra.mxu0 %v2812
    %3661 = vmatprep.mubr.bf16.mxu0 %v469
    %3662 = vmatmul.mubr.bf16.gmra.mrb[0].mxu0 %v468
    %v3663 = vpop.f32.mrb[0].mxu0
    %v3664 = vadd.f32 %v3623, %v3663
    %v3665 = vpop.f32.mrb[0].mxu0
    %v3666 = vadd.f32 %v3625, %v3665
    %v3667 = vpop.f32.mrb[0].mxu0
    %v3668 = vpop.f32.mrb[0].mxu0
    %3669 = vdwg.mxu0
    %3670 = vmatprep.subr.bf16.mxu0 %v2821
    %3671 = vmatpush1.bf16.msra.mxu0 %v2820
    %3672 = vmatprep.subr.bf16.mxu0 %v2829
    %3673 = vmatpush1.bf16.msra.mxu0 %v2828
    %3674 = vmatprep.subr.bf16.mxu0 %v2837
    %3675 = vmatpush1.bf16.msra.mxu0 %v2836
    %3676 = vmatprep.subr.bf16.mxu0 %v2845
    %3677 = vmatpush1.bf16.msra.mxu0 %v2844
    %3678 = vmatprep.subr.bf16.mxu0 %v2853
    %3679 = vmatpush1.bf16.msra.mxu0 %v2852
    %3680 = vmatprep.subr.bf16.mxu0 %v2861
    %3681 = vmatpush1.bf16.msra.mxu0 %v2860
    %3682 = vmatprep.subr.bf16.mxu0 %v2869
    %3683 = vmatpush1.bf16.msra.mxu0 %v2868
    %3684 = vmatprep.subr.bf16.mxu0 %v2877
    %3685 = vmatpush1.bf16.msra.mxu0 %v2876
    %3686 = vmatprep.subr.bf16.mxu0 %v2885
    %3687 = vmatpush1.bf16.msra.mxu0 %v2884
    %3688 = vmatprep.subr.bf16.mxu0 %v2893
    %3689 = vmatpush1.bf16.msra.mxu0 %v2892
    %3690 = vmatprep.subr.bf16.mxu0 %v2901
    %3691 = vmatpush1.bf16.msra.mxu0 %v2900
    %3692 = vmatprep.subr.bf16.mxu0 %v2909
    %3693 = vmatpush1.bf16.msra.mxu0 %v2908
    %3694 = vmatprep.subr.bf16.mxu0 %v2917
    %3695 = vmatpush1.bf16.msra.mxu0 %v2916
    %3696 = vmatprep.subr.bf16.mxu0 %v2925
    %3697 = vmatpush1.bf16.msra.mxu0 %v2924
    %3698 = vmatprep.subr.bf16.mxu0 %v2933
    %3699 = vmatpush1.bf16.msra.mxu0 %v2932
    %3700 = vmatprep.subr.bf16.mxu0 %v2941
    %3701 = vmatpush1.bf16.msra.mxu0 %v2940
    %3702 = vmatprep.mubr.bf16.mxu0 %v471
    %3703 = vmatmul.mubr.bf16.gmra.mrb[0].mxu0 %v470
    %v3704 = vpop.f32.mrb[0].mxu0
    %v3705 = vadd.f32 %v3664, %v3704
    %v3706 = vpop.f32.mrb[0].mxu0
    %v3707 = vadd.f32 %v3666, %v3706
    %v3708 = vpop.f32.mrb[0].mxu0
    %v3709 = vpop.f32.mrb[0].mxu0
    %3710 = vdwg.mxu0
    %3711 = vmatprep.subr.bf16.mxu0 %v2949
    %3712 = vmatpush1.bf16.msra.mxu0 %v2948
    %3713 = vmatprep.subr.bf16.mxu0 %v2957
    %3714 = vmatpush1.bf16.msra.mxu0 %v2956
    %3715 = vmatprep.subr.bf16.mxu0 %v2965
    %3716 = vmatpush1.bf16.msra.mxu0 %v2964
    %3717 = vmatprep.subr.bf16.mxu0 %v2973
    %3718 = vmatpush1.bf16.msra.mxu0 %v2972
    %3719 = vmatprep.subr.bf16.mxu0 %v2981
    %3720 = vmatpush1.bf16.msra.mxu0 %v2980
    %3721 = vmatprep.subr.bf16.mxu0 %v2989
    %3722 = vmatpush1.bf16.msra.mxu0 %v2988
    %3723 = vmatprep.subr.bf16.mxu0 %v2997
    %3724 = vmatpush1.bf16.msra.mxu0 %v2996
    %3725 = vmatprep.subr.bf16.mxu0 %v3005
    %3726 = vmatpush1.bf16.msra.mxu0 %v3004
    %3727 = vmatprep.subr.bf16.mxu0 %v3013
    %3728 = vmatpush1.bf16.msra.mxu0 %v3012
    %3729 = vmatprep.subr.bf16.mxu0 %v3021
    %3730 = vmatpush1.bf16.msra.mxu0 %v3020
    %3731 = vmatprep.subr.bf16.mxu0 %v3029
    %3732 = vmatpush1.bf16.msra.mxu0 %v3028
    %3733 = vmatprep.subr.bf16.mxu0 %v3037
    %3734 = vmatpush1.bf16.msra.mxu0 %v3036
    %3735 = vmatprep.subr.bf16.mxu0 %v3045
    %3736 = vmatpush1.bf16.msra.mxu0 %v3044
    %3737 = vmatprep.subr.bf16.mxu0 %v3053
    %3738 = vmatpush1.bf16.msra.mxu0 %v3052
    %3739 = vmatprep.subr.bf16.mxu0 %v3061
    %3740 = vmatpush1.bf16.msra.mxu0 %v3060
    %3741 = vmatprep.subr.bf16.mxu0 %v3069
    %3742 = vmatpush1.bf16.msra.mxu0 %v3068
    %3743 = vmatprep.mubr.bf16.mxu0 %v473
    %3744 = vmatmul.mubr.bf16.gmra.mrb[0].mxu0 %v472
    %v3745 = vpop.f32.mrb[0].mxu0
    %v3746 = vadd.f32 %v3705, %v3745
    %v3747 = vpop.f32.mrb[0].mxu0
    %v3748 = vadd.f32 %v3707, %v3747
    %v3749 = vpop.f32.mrb[0].mxu0
    %v3750 = vpop.f32.mrb[0].mxu0
    %3751 = vdwg.mxu0
    %3752 = vmatprep.subr.bf16.mxu0 %v2567
    %3753 = vmatpush1.bf16.msra.mxu0 %v2566
    %3754 = vmatprep.subr.bf16.mxu0 %v2575
    %3755 = vmatpush1.bf16.msra.mxu0 %v2574
    %3756 = vmatprep.subr.bf16.mxu0 %v2583
    %3757 = vmatpush1.bf16.msra.mxu0 %v2582
    %3758 = vmatprep.subr.bf16.mxu0 %v2591
    %3759 = vmatpush1.bf16.msra.mxu0 %v2590
    %3760 = vmatprep.subr.bf16.mxu0 %v2599
    %3761 = vmatpush1.bf16.msra.mxu0 %v2598
    %3762 = vmatprep.subr.bf16.mxu0 %v2607
    %3763 = vmatpush1.bf16.msra.mxu0 %v2606
    %3764 = vmatprep.subr.bf16.mxu0 %v2615
    %3765 = vmatpush1.bf16.msra.mxu0 %v2614
    %3766 = vmatprep.subr.bf16.mxu0 %v2623
    %3767 = vmatpush1.bf16.msra.mxu0 %v2622
    %3768 = vmatprep.subr.bf16.mxu0 %v2631
    %3769 = vmatpush1.bf16.msra.mxu0 %v2630
    %3770 = vmatprep.subr.bf16.mxu0 %v2639
    %3771 = vmatpush1.bf16.msra.mxu0 %v2638
    %3772 = vmatprep.subr.bf16.mxu0 %v2647
    %3773 = vmatpush1.bf16.msra.mxu0 %v2646
    %3774 = vmatprep.subr.bf16.mxu0 %v2655
    %3775 = vmatpush1.bf16.msra.mxu0 %v2654
    %3776 = vmatprep.subr.bf16.mxu0 %v2663
    %3777 = vmatpush1.bf16.msra.mxu0 %v2662
    %3778 = vmatprep.subr.bf16.mxu0 %v2671
    %3779 = vmatpush1.bf16.msra.mxu0 %v2670
    %3780 = vmatprep.subr.bf16.mxu0 %v2679
    %3781 = vmatpush1.bf16.msra.mxu0 %v2678
    %3782 = vmatprep.subr.bf16.mxu0 %v2687
    %3783 = vmatpush1.bf16.msra.mxu0 %v2686
    %3784 = vmatprep.mubr.bf16.mxu0 %v467
    %3785 = vmatmul.mubr.bf16.gmra.mrb[0].mxu0 %v466
    %v3786 = vpop.f32.mrb[0].mxu0
    %v3787 = vadd.f32 %v999, %v3786
    %v3788 = vpop.f32.mrb[0].mxu0
    %v3789 = vadd.f32 %v1003, %v3788
    %v3790 = vpop.f32.mrb[0].mxu0
    %v3791 = vpop.f32.mrb[0].mxu0
    %3792 = vdwg.mxu0
    %3793 = vmatprep.subr.bf16.mxu0 %v2695
    %3794 = vmatpush1.bf16.msra.mxu0 %v2694
    %3795 = vmatprep.subr.bf16.mxu0 %v2703
    %3796 = vmatpush1.bf16.msra.mxu0 %v2702
    %3797 = vmatprep.subr.bf16.mxu0 %v2711
    %3798 = vmatpush1.bf16.msra.mxu0 %v2710
    %3799 = vmatprep.subr.bf16.mxu0 %v2719
    %3800 = vmatpush1.bf16.msra.mxu0 %v2718
    %3801 = vmatprep.subr.bf16.mxu0 %v2727
    %3802 = vmatpush1.bf16.msra.mxu0 %v2726
    %3803 = vmatprep.subr.bf16.mxu0 %v2735
    %3804 = vmatpush1.bf16.msra.mxu0 %v2734
    %3805 = vmatprep.subr.bf16.mxu0 %v2743
    %3806 = vmatpush1.bf16.msra.mxu0 %v2742
    %3807 = vmatprep.subr.bf16.mxu0 %v2751
    %3808 = vmatpush1.bf16.msra.mxu0 %v2750
    %3809 = vmatprep.subr.bf16.mxu0 %v2759
    %3810 = vmatpush1.bf16.msra.mxu0 %v2758
    %3811 = vmatprep.subr.bf16.mxu0 %v2767
    %3812 = vmatpush1.bf16.msra.mxu0 %v2766
    %3813 = vmatprep.subr.bf16.mxu0 %v2775
    %3814 = vmatpush1.bf16.msra.mxu0 %v2774
    %3815 = vmatprep.subr.bf16.mxu0 %v2783
    %3816 = vmatpush1.bf16.msra.mxu0 %v2782
    %3817 = vmatprep.subr.bf16.mxu0 %v2791
    %3818 = vmatpush1.bf16.msra.mxu0 %v2790
    %3819 = vmatprep.subr.bf16.mxu0 %v2799
    %3820 = vmatpush1.bf16.msra.mxu0 %v2798
    %3821 = vmatprep.subr.bf16.mxu0 %v2807
    %3822 = vmatpush1.bf16.msra.mxu0 %v2806
    %3823 = vmatprep.subr.bf16.mxu0 %v2815
    %3824 = vmatpush1.bf16.msra.mxu0 %v2814
    %3825 = vmatprep.mubr.bf16.mxu0 %v469
    %3826 = vmatmul.mubr.bf16.gmra.mrb[0].mxu0 %v468
    %v3827 = vpop.f32.mrb[0].mxu0
    %v3828 = vadd.f32 %v3787, %v3827
    %v3829 = vpop.f32.mrb[0].mxu0
    %v3830 = vadd.f32 %v3789, %v3829
    %v3831 = vpop.f32.mrb[0].mxu0
    %v3832 = vpop.f32.mrb[0].mxu0
    %3833 = vdwg.mxu0
    %3834 = vmatprep.subr.bf16.mxu0 %v2823
    %3835 = vmatpush1.bf16.msra.mxu0 %v2822
    %3836 = vmatprep.subr.bf16.mxu0 %v2831
    %3837 = vmatpush1.bf16.msra.mxu0 %v2830
    %3838 = vmatprep.subr.bf16.mxu0 %v2839
    %3839 = vmatpush1.bf16.msra.mxu0 %v2838
    %3840 = vmatprep.subr.bf16.mxu0 %v2847
    %3841 = vmatpush1.bf16.msra.mxu0 %v2846
    %3842 = vmatprep.subr.bf16.mxu0 %v2855
    %3843 = vmatpush1.bf16.msra.mxu0 %v2854
    %3844 = vmatprep.subr.bf16.mxu0 %v2863
    %3845 = vmatpush1.bf16.msra.mxu0 %v2862
    %3846 = vmatprep.subr.bf16.mxu0 %v2871
    %3847 = vmatpush1.bf16.msra.mxu0 %v2870
    %3848 = vmatprep.subr.bf16.mxu0 %v2879
    %3849 = vmatpush1.bf16.msra.mxu0 %v2878
    %3850 = vmatprep.subr.bf16.mxu0 %v2887
    %3851 = vmatpush1.bf16.msra.mxu0 %v2886
    %3852 = vmatprep.subr.bf16.mxu0 %v2895
    %3853 = vmatpush1.bf16.msra.mxu0 %v2894
    %3854 = vmatprep.subr.bf16.mxu0 %v2903
    %3855 = vmatpush1.bf16.msra.mxu0 %v2902
    %3856 = vmatprep.subr.bf16.mxu0 %v2911
    %3857 = vmatpush1.bf16.msra.mxu0 %v2910
    %3858 = vmatprep.subr.bf16.mxu0 %v2919
    %3859 = vmatpush1.bf16.msra.mxu0 %v2918
    %3860 = vmatprep.subr.bf16.mxu0 %v2927
    %3861 = vmatpush1.bf16.msra.mxu0 %v2926
    %3862 = vmatprep.subr.bf16.mxu0 %v2935
    %3863 = vmatpush1.bf16.msra.mxu0 %v2934
    %3864 = vmatprep.subr.bf16.mxu0 %v2943
    %3865 = vmatpush1.bf16.msra.mxu0 %v2942
    %3866 = vmatprep.mubr.bf16.mxu0 %v471
    %3867 = vmatmul.mubr.bf16.gmra.mrb[0].mxu0 %v470
    %v3868 = vpop.f32.mrb[0].mxu0
    %v3869 = vadd.f32 %v3828, %v3868
    %v3870 = vpop.f32.mrb[0].mxu0
    %v3871 = vadd.f32 %v3830, %v3870
    %v3872 = vpop.f32.mrb[0].mxu0
    %v3873 = vpop.f32.mrb[0].mxu0
    %3874 = vdwg.mxu0
    %3875 = vmatprep.subr.bf16.mxu0 %v2951
    %3876 = vmatpush1.bf16.msra.mxu0 %v2950
    %3877 = vmatprep.subr.bf16.mxu0 %v2959
    %3878 = vmatpush1.bf16.msra.mxu0 %v2958
    %3879 = vmatprep.subr.bf16.mxu0 %v2967
    %3880 = vmatpush1.bf16.msra.mxu0 %v2966
    %3881 = vmatprep.subr.bf16.mxu0 %v2975
    %3882 = vmatpush1.bf16.msra.mxu0 %v2974
    %3883 = vmatprep.subr.bf16.mxu0 %v2983
    %3884 = vmatpush1.bf16.msra.mxu0 %v2982
    %3885 = vmatprep.subr.bf16.mxu0 %v2991
    %3886 = vmatpush1.bf16.msra.mxu0 %v2990
    %3887 = vmatprep.subr.bf16.mxu0 %v2999
    %3888 = vmatpush1.bf16.msra.mxu0 %v2998
    %3889 = vmatprep.subr.bf16.mxu0 %v3007
    %3890 = vmatpush1.bf16.msra.mxu0 %v3006
    %3891 = vmatprep.subr.bf16.mxu0 %v3015
    %3892 = vmatpush1.bf16.msra.mxu0 %v3014
    %3893 = vmatprep.subr.bf16.mxu0 %v3023
    %3894 = vmatpush1.bf16.msra.mxu0 %v3022
    %3895 = vmatprep.subr.bf16.mxu0 %v3031
    %3896 = vmatpush1.bf16.msra.mxu0 %v3030
    %3897 = vmatprep.subr.bf16.mxu0 %v3039
    %3898 = vmatpush1.bf16.msra.mxu0 %v3038
    %3899 = vmatprep.subr.bf16.mxu0 %v3047
    %3900 = vmatpush1.bf16.msra.mxu0 %v3046
    %3901 = vmatprep.subr.bf16.mxu0 %v3055
    %3902 = vmatpush1.bf16.msra.mxu0 %v3054
    %3903 = vmatprep.subr.bf16.mxu0 %v3063
    %3904 = vmatpush1.bf16.msra.mxu0 %v3062
    %3905 = vmatprep.subr.bf16.mxu0 %v3071
    %3906 = vmatpush1.bf16.msra.mxu0 %v3070
    %3907 = vmatprep.mubr.bf16.mxu0 %v473
    %3908 = vmatmul.mubr.bf16.gmra.mrb[0].mxu0 %v472
    %v3909 = vpop.f32.mrb[0].mxu0
    %v3910 = vadd.f32 %v3869, %v3909
    %v3911 = vpop.f32.mrb[0].mxu0
    %v3912 = vadd.f32 %v3871, %v3911
    %v3913 = vpop.f32.mrb[0].mxu0
    %v3914 = vpop.f32.mrb[0].mxu0
    %3915 = vdwg.mxu0
    %3916 = vmatprep.subr.bf16.mxu0 %v2569
    %3917 = vmatpush1.bf16.msra.mxu0 %v2568
    %3918 = vmatprep.subr.bf16.mxu0 %v2577
    %3919 = vmatpush1.bf16.msra.mxu0 %v2576
    %3920 = vmatprep.subr.bf16.mxu0 %v2585
    %3921 = vmatpush1.bf16.msra.mxu0 %v2584
    %3922 = vmatprep.subr.bf16.mxu0 %v2593
    %3923 = vmatpush1.bf16.msra.mxu0 %v2592
    %3924 = vmatprep.subr.bf16.mxu0 %v2601
    %3925 = vmatpush1.bf16.msra.mxu0 %v2600
    %3926 = vmatprep.subr.bf16.mxu0 %v2609
    %3927 = vmatpush1.bf16.msra.mxu0 %v2608
    %3928 = vmatprep.subr.bf16.mxu0 %v2617
    %3929 = vmatpush1.bf16.msra.mxu0 %v2616
    %3930 = vmatprep.subr.bf16.mxu0 %v2625
    %3931 = vmatpush1.bf16.msra.mxu0 %v2624
    %3932 = vmatprep.subr.bf16.mxu0 %v2633
    %3933 = vmatpush1.bf16.msra.mxu0 %v2632
    %3934 = vmatprep.subr.bf16.mxu0 %v2641
    %3935 = vmatpush1.bf16.msra.mxu0 %v2640
    %3936 = vmatprep.subr.bf16.mxu0 %v2649
    %3937 = vmatpush1.bf16.msra.mxu0 %v2648
    %3938 = vmatprep.subr.bf16.mxu0 %v2657
    %3939 = vmatpush1.bf16.msra.mxu0 %v2656
    %3940 = vmatprep.subr.bf16.mxu0 %v2665
    %3941 = vmatpush1.bf16.msra.mxu0 %v2664
    %3942 = vmatprep.subr.bf16.mxu0 %v2673
    %3943 = vmatpush1.bf16.msra.mxu0 %v2672
    %3944 = vmatprep.subr.bf16.mxu0 %v2681
    %3945 = vmatpush1.bf16.msra.mxu0 %v2680
    %3946 = vmatprep.subr.bf16.mxu0 %v2689
    %3947 = vmatpush1.bf16.msra.mxu0 %v2688
    %3948 = vmatprep.mubr.bf16.mxu0 %v467
    %3949 = vmatmul.mubr.bf16.gmra.mrb[0].mxu0 %v466
    %v3950 = vpop.f32.mrb[0].mxu0
    %v3951 = vadd.f32 %v1007, %v3950
    %v3952 = vpop.f32.mrb[0].mxu0
    %v3953 = vadd.f32 %v1011, %v3952
    %v3954 = vpop.f32.mrb[0].mxu0
    %v3955 = vpop.f32.mrb[0].mxu0
    %3956 = vdwg.mxu0
    %3957 = vmatprep.subr.bf16.mxu0 %v2697
    %3958 = vmatpush1.bf16.msra.mxu0 %v2696
    %3959 = vmatprep.subr.bf16.mxu0 %v2705
    %3960 = vmatpush1.bf16.msra.mxu0 %v2704
    %3961 = vmatprep.subr.bf16.mxu0 %v2713
    %3962 = vmatpush1.bf16.msra.mxu0 %v2712
    %3963 = vmatprep.subr.bf16.mxu0 %v2721
    %3964 = vmatpush1.bf16.msra.mxu0 %v2720
    %3965 = vmatprep.subr.bf16.mxu0 %v2729
    %3966 = vmatpush1.bf16.msra.mxu0 %v2728
    %3967 = vmatprep.subr.bf16.mxu0 %v2737
    %3968 = vmatpush1.bf16.msra.mxu0 %v2736
    %3969 = vmatprep.subr.bf16.mxu0 %v2745
    %3970 = vmatpush1.bf16.msra.mxu0 %v2744
    %3971 = vmatprep.subr.bf16.mxu0 %v2753
    %3972 = vmatpush1.bf16.msra.mxu0 %v2752
    %3973 = vmatprep.subr.bf16.mxu0 %v2761
    %3974 = vmatpush1.bf16.msra.mxu0 %v2760
    %3975 = vmatprep.subr.bf16.mxu0 %v2769
    %3976 = vmatpush1.bf16.msra.mxu0 %v2768
    %3977 = vmatprep.subr.bf16.mxu0 %v2777
    %3978 = vmatpush1.bf16.msra.mxu0 %v2776
    %3979 = vmatprep.subr.bf16.mxu0 %v2785
    %3980 = vmatpush1.bf16.msra.mxu0 %v2784
    %3981 = vmatprep.subr.bf16.mxu0 %v2793
    %3982 = vmatpush1.bf16.msra.mxu0 %v2792
    %3983 = vmatprep.subr.bf16.mxu0 %v2801
    %3984 = vmatpush1.bf16.msra.mxu0 %v2800
    %3985 = vmatprep.subr.bf16.mxu0 %v2809
    %3986 = vmatpush1.bf16.msra.mxu0 %v2808
    %3987 = vmatprep.subr.bf16.mxu0 %v2817
    %3988 = vmatpush1.bf16.msra.mxu0 %v2816
    %3989 = vmatprep.mubr.bf16.mxu0 %v469
    %3990 = vmatmul.mubr.bf16.gmra.mrb[0].mxu0 %v468
    %v3991 = vpop.f32.mrb[0].mxu0
    %v3992 = vadd.f32 %v3951, %v3991
    %v3993 = vpop.f32.mrb[0].mxu0
    %v3994 = vadd.f32 %v3953, %v3993
    %v3995 = vpop.f32.mrb[0].mxu0
    %v3996 = vpop.f32.mrb[0].mxu0
    %3997 = vdwg.mxu0
    %3998 = vmatprep.subr.bf16.mxu0 %v2825
    %3999 = vmatpush1.bf16.msra.mxu0 %v2824
    %4000 = vmatprep.subr.bf16.mxu0 %v2833
    %4001 = vmatpush1.bf16.msra.mxu0 %v2832
    %4002 = vmatprep.subr.bf16.mxu0 %v2841
    %4003 = vmatpush1.bf16.msra.mxu0 %v2840
    %4004 = vmatprep.subr.bf16.mxu0 %v2849
    %4005 = vmatpush1.bf16.msra.mxu0 %v2848
    %4006 = vmatprep.subr.bf16.mxu0 %v2857
    %4007 = vmatpush1.bf16.msra.mxu0 %v2856
    %4008 = vmatprep.subr.bf16.mxu0 %v2865
    %4009 = vmatpush1.bf16.msra.mxu0 %v2864
    %4010 = vmatprep.subr.bf16.mxu0 %v2873
    %4011 = vmatpush1.bf16.msra.mxu0 %v2872
    %4012 = vmatprep.subr.bf16.mxu0 %v2881
    %4013 = vmatpush1.bf16.msra.mxu0 %v2880
    %4014 = vmatprep.subr.bf16.mxu0 %v2889
    %4015 = vmatpush1.bf16.msra.mxu0 %v2888
    %4016 = vmatprep.subr.bf16.mxu0 %v2897
    %4017 = vmatpush1.bf16.msra.mxu0 %v2896
    %4018 = vmatprep.subr.bf16.mxu0 %v2905
    %4019 = vmatpush1.bf16.msra.mxu0 %v2904
    %4020 = vmatprep.subr.bf16.mxu0 %v2913
    %4021 = vmatpush1.bf16.msra.mxu0 %v2912
    %4022 = vmatprep.subr.bf16.mxu0 %v2921
    %4023 = vmatpush1.bf16.msra.mxu0 %v2920
    %4024 = vmatprep.subr.bf16.mxu0 %v2929
    %4025 = vmatpush1.bf16.msra.mxu0 %v2928
    %4026 = vmatprep.subr.bf16.mxu0 %v2937
    %4027 = vmatpush1.bf16.msra.mxu0 %v2936
    %4028 = vmatprep.subr.bf16.mxu0 %v2945
    %4029 = vmatpush1.bf16.msra.mxu0 %v2944
    %4030 = vmatprep.mubr.bf16.mxu0 %v471
    %4031 = vmatmul.mubr.bf16.gmra.mrb[0].mxu0 %v470
    %v4032 = vpop.f32.mrb[0].mxu0
    %v4033 = vadd.f32 %v3992, %v4032
    %v4034 = vpop.f32.mrb[0].mxu0
    %v4035 = vadd.f32 %v3994, %v4034
    %v4036 = vpop.f32.mrb[0].mxu0
    %v4037 = vpop.f32.mrb[0].mxu0
    %4038 = vdwg.mxu0
    %4039 = vmatprep.subr.bf16.mxu0 %v2953
    %4040 = vmatpush1.bf16.msra.mxu0 %v2952
    %4041 = vmatprep.subr.bf16.mxu0 %v2961
    %4042 = vmatpush1.bf16.msra.mxu0 %v2960
    %4043 = vmatprep.subr.bf16.mxu0 %v2969
    %4044 = vmatpush1.bf16.msra.mxu0 %v2968
    %4045 = vmatprep.subr.bf16.mxu0 %v2977
    %4046 = vmatpush1.bf16.msra.mxu0 %v2976
    %4047 = vmatprep.subr.bf16.mxu0 %v2985
    %4048 = vmatpush1.bf16.msra.mxu0 %v2984
    %4049 = vmatprep.subr.bf16.mxu0 %v2993
    %4050 = vmatpush1.bf16.msra.mxu0 %v2992
    %4051 = vmatprep.subr.bf16.mxu0 %v3001
    %4052 = vmatpush1.bf16.msra.mxu0 %v3000
    %4053 = vmatprep.subr.bf16.mxu0 %v3009
    %4054 = vmatpush1.bf16.msra.mxu0 %v3008
    %4055 = vmatprep.subr.bf16.mxu0 %v3017
    %4056 = vmatpush1.bf16.msra.mxu0 %v3016
    %4057 = vmatprep.subr.bf16.mxu0 %v3025
    %4058 = vmatpush1.bf16.msra.mxu0 %v3024
    %4059 = vmatprep.subr.bf16.mxu0 %v3033
    %4060 = vmatpush1.bf16.msra.mxu0 %v3032
    %4061 = vmatprep.subr.bf16.mxu0 %v3041
    %4062 = vmatpush1.bf16.msra.mxu0 %v3040
    %4063 = vmatprep.subr.bf16.mxu0 %v3049
    %4064 = vmatpush1.bf16.msra.mxu0 %v3048
    %4065 = vmatprep.subr.bf16.mxu0 %v3057
    %4066 = vmatpush1.bf16.msra.mxu0 %v3056
    %4067 = vmatprep.subr.bf16.mxu0 %v3065
    %4068 = vmatpush1.bf16.msra.mxu0 %v3064
    %4069 = vmatprep.subr.bf16.mxu0 %v3073
    %4070 = vmatpush1.bf16.msra.mxu0 %v3072
    %4071 = vmatprep.mubr.bf16.mxu0 %v473
    %4072 = vmatmul.mubr.bf16.gmra.mrb[0].mxu0 %v472
    %v4073 = vpop.f32.mrb[0].mxu0
    %v4074 = vadd.f32 %v4033, %v4073
    %v4075 = vpop.f32.mrb[0].mxu0
    %v4076 = vadd.f32 %v4035, %v4075
    %v4077 = vpop.f32.mrb[0].mxu0
    %v4078 = vpop.f32.mrb[0].mxu0
    %4079 = vdwg.mxu0
    %4080 = vmatprep.subr.bf16.mxu0 %v2571
    %4081 = vmatpush1.bf16.msra.mxu0 %v2570
    %4082 = vmatprep.subr.bf16.mxu0 %v2579
    %4083 = vmatpush1.bf16.msra.mxu0 %v2578
    %4084 = vmatprep.subr.bf16.mxu0 %v2587
    %4085 = vmatpush1.bf16.msra.mxu0 %v2586
    %4086 = vmatprep.subr.bf16.mxu0 %v2595
    %4087 = vmatpush1.bf16.msra.mxu0 %v2594
    %4088 = vmatprep.subr.bf16.mxu0 %v2603
    %4089 = vmatpush1.bf16.msra.mxu0 %v2602
    %4090 = vmatprep.subr.bf16.mxu0 %v2611
    %4091 = vmatpush1.bf16.msra.mxu0 %v2610
    %4092 = vmatprep.subr.bf16.mxu0 %v2619
    %4093 = vmatpush1.bf16.msra.mxu0 %v2618
    %4094 = vmatprep.subr.bf16.mxu0 %v2627
    %4095 = vmatpush1.bf16.msra.mxu0 %v2626
    %4096 = vmatprep.subr.bf16.mxu0 %v2635
    %4097 = vmatpush1.bf16.msra.mxu0 %v2634
    %4098 = vmatprep.subr.bf16.mxu0 %v2643
    %4099 = vmatpush1.bf16.msra.mxu0 %v2642
    %4100 = vmatprep.subr.bf16.mxu0 %v2651
    %4101 = vmatpush1.bf16.msra.mxu0 %v2650
    %4102 = vmatprep.subr.bf16.mxu0 %v2659
    %4103 = vmatpush1.bf16.msra.mxu0 %v2658
    %4104 = vmatprep.subr.bf16.mxu0 %v2667
    %4105 = vmatpush1.bf16.msra.mxu0 %v2666
    %4106 = vmatprep.subr.bf16.mxu0 %v2675
    %4107 = vmatpush1.bf16.msra.mxu0 %v2674
    %4108 = vmatprep.subr.bf16.mxu0 %v2683
    %4109 = vmatpush1.bf16.msra.mxu0 %v2682
    %4110 = vmatprep.subr.bf16.mxu0 %v2691
    %4111 = vmatpush1.bf16.msra.mxu0 %v2690
    %4112 = vmatprep.mubr.bf16.mxu0 %v467
    %4113 = vmatmul.mubr.bf16.gmra.mrb[0].mxu0 %v466
    %v4114 = vpop.f32.mrb[0].mxu0
    %v4115 = vadd.f32 %v1015, %v4114
    %v4116 = vpop.f32.mrb[0].mxu0
    %v4117 = vadd.f32 %v1019, %v4116
    %v4118 = vpop.f32.mrb[0].mxu0
    %v4119 = vpop.f32.mrb[0].mxu0
    %4120 = vdwg.mxu0
    %4121 = vmatprep.subr.bf16.mxu0 %v2699
    %4122 = vmatpush1.bf16.msra.mxu0 %v2698
    %4123 = vmatprep.subr.bf16.mxu0 %v2707
    %4124 = vmatpush1.bf16.msra.mxu0 %v2706
    %4125 = vmatprep.subr.bf16.mxu0 %v2715
    %4126 = vmatpush1.bf16.msra.mxu0 %v2714
    %4127 = vmatprep.subr.bf16.mxu0 %v2723
    %4128 = vmatpush1.bf16.msra.mxu0 %v2722
    %4129 = vmatprep.subr.bf16.mxu0 %v2731
    %4130 = vmatpush1.bf16.msra.mxu0 %v2730
    %4131 = vmatprep.subr.bf16.mxu0 %v2739
    %4132 = vmatpush1.bf16.msra.mxu0 %v2738
    %4133 = vmatprep.subr.bf16.mxu0 %v2747
    %4134 = vmatpush1.bf16.msra.mxu0 %v2746
    %4135 = vmatprep.subr.bf16.mxu0 %v2755
    %4136 = vmatpush1.bf16.msra.mxu0 %v2754
    %4137 = vmatprep.subr.bf16.mxu0 %v2763
    %4138 = vmatpush1.bf16.msra.mxu0 %v2762
    %4139 = vmatprep.subr.bf16.mxu0 %v2771
    %4140 = vmatpush1.bf16.msra.mxu0 %v2770
    %4141 = vmatprep.subr.bf16.mxu0 %v2779
    %4142 = vmatpush1.bf16.msra.mxu0 %v2778
    %4143 = vmatprep.subr.bf16.mxu0 %v2787
    %4144 = vmatpush1.bf16.msra.mxu0 %v2786
    %4145 = vmatprep.subr.bf16.mxu0 %v2795
    %4146 = vmatpush1.bf16.msra.mxu0 %v2794
    %4147 = vmatprep.subr.bf16.mxu0 %v2803
    %4148 = vmatpush1.bf16.msra.mxu0 %v2802
    %4149 = vmatprep.subr.bf16.mxu0 %v2811
    %4150 = vmatpush1.bf16.msra.mxu0 %v2810
    %4151 = vmatprep.subr.bf16.mxu0 %v2819
    %4152 = vmatpush1.bf16.msra.mxu0 %v2818
    %4153 = vmatprep.mubr.bf16.mxu0 %v469
    %4154 = vmatmul.mubr.bf16.gmra.mrb[0].mxu0 %v468
    %v4155 = vpop.f32.mrb[0].mxu0
    %v4156 = vadd.f32 %v4115, %v4155
    %v4157 = vpop.f32.mrb[0].mxu0
    %v4158 = vadd.f32 %v4117, %v4157
    %v4159 = vpop.f32.mrb[0].mxu0
    %v4160 = vpop.f32.mrb[0].mxu0
    %4161 = vdwg.mxu0
    %4162 = vmatprep.subr.bf16.mxu0 %v2827
    %4163 = vmatpush1.bf16.msra.mxu0 %v2826
    %4164 = vmatprep.subr.bf16.mxu0 %v2835
    %4165 = vmatpush1.bf16.msra.mxu0 %v2834
    %4166 = vmatprep.subr.bf16.mxu0 %v2843
    %4167 = vmatpush1.bf16.msra.mxu0 %v2842
    %4168 = vmatprep.subr.bf16.mxu0 %v2851
    %4169 = vmatpush1.bf16.msra.mxu0 %v2850
    %4170 = vmatprep.subr.bf16.mxu0 %v2859
    %4171 = vmatpush1.bf16.msra.mxu0 %v2858
    %4172 = vmatprep.subr.bf16.mxu0 %v2867
    %4173 = vmatpush1.bf16.msra.mxu0 %v2866
    %4174 = vmatprep.subr.bf16.mxu0 %v2875
    %4175 = vmatpush1.bf16.msra.mxu0 %v2874
    %4176 = vmatprep.subr.bf16.mxu0 %v2883
    %4177 = vmatpush1.bf16.msra.mxu0 %v2882
    %4178 = vmatprep.subr.bf16.mxu0 %v2891
    %4179 = vmatpush1.bf16.msra.mxu0 %v2890
    %4180 = vmatprep.subr.bf16.mxu0 %v2899
    %4181 = vmatpush1.bf16.msra.mxu0 %v2898
    %4182 = vmatprep.subr.bf16.mxu0 %v2907
    %4183 = vmatpush1.bf16.msra.mxu0 %v2906
    %4184 = vmatprep.subr.bf16.mxu0 %v2915
    %4185 = vmatpush1.bf16.msra.mxu0 %v2914
    %4186 = vmatprep.subr.bf16.mxu0 %v2923
    %4187 = vmatpush1.bf16.msra.mxu0 %v2922
    %4188 = vmatprep.subr.bf16.mxu0 %v2931
    %4189 = vmatpush1.bf16.msra.mxu0 %v2930
    %4190 = vmatprep.subr.bf16.mxu0 %v2939
    %4191 = vmatpush1.bf16.msra.mxu0 %v2938
    %4192 = vmatprep.subr.bf16.mxu0 %v2947
    %4193 = vmatpush1.bf16.msra.mxu0 %v2946
    %4194 = vmatprep.mubr.bf16.mxu0 %v471
    %4195 = vmatmul.mubr.bf16.gmra.mrb[0].mxu0 %v470
    %v4196 = vpop.f32.mrb[0].mxu0
    %v4197 = vadd.f32 %v4156, %v4196
    %v4198 = vpop.f32.mrb[0].mxu0
    %v4199 = vadd.f32 %v4158, %v4198
    %v4200 = vpop.f32.mrb[0].mxu0
    %v4201 = vpop.f32.mrb[0].mxu0
    %4202 = vdwg.mxu0
    %4203 = vmatprep.subr.bf16.mxu0 %v2955
    %4204 = vmatpush1.bf16.msra.mxu0 %v2954
    %4205 = vmatprep.subr.bf16.mxu0 %v2963
    %4206 = vmatpush1.bf16.msra.mxu0 %v2962
    %4207 = vmatprep.subr.bf16.mxu0 %v2971
    %4208 = vmatpush1.bf16.msra.mxu0 %v2970
    %4209 = vmatprep.subr.bf16.mxu0 %v2979
    %4210 = vmatpush1.bf16.msra.mxu0 %v2978
    %4211 = vmatprep.subr.bf16.mxu0 %v2987
    %4212 = vmatpush1.bf16.msra.mxu0 %v2986
    %4213 = vmatprep.subr.bf16.mxu0 %v2995
    %4214 = vmatpush1.bf16.msra.mxu0 %v2994
    %4215 = vmatprep.subr.bf16.mxu0 %v3003
    %4216 = vmatpush1.bf16.msra.mxu0 %v3002
    %4217 = vmatprep.subr.bf16.mxu0 %v3011
    %4218 = vmatpush1.bf16.msra.mxu0 %v3010
    %4219 = vmatprep.subr.bf16.mxu0 %v3019
    %4220 = vmatpush1.bf16.msra.mxu0 %v3018
    %4221 = vmatprep.subr.bf16.mxu0 %v3027
    %4222 = vmatpush1.bf16.msra.mxu0 %v3026
    %4223 = vmatprep.subr.bf16.mxu0 %v3035
    %4224 = vmatpush1.bf16.msra.mxu0 %v3034
    %4225 = vmatprep.subr.bf16.mxu0 %v3043
    %4226 = vmatpush1.bf16.msra.mxu0 %v3042
    %4227 = vmatprep.subr.bf16.mxu0 %v3051
    %4228 = vmatpush1.bf16.msra.mxu0 %v3050
    %4229 = vmatprep.subr.bf16.mxu0 %v3059
    %4230 = vmatpush1.bf16.msra.mxu0 %v3058
    %4231 = vmatprep.subr.bf16.mxu0 %v3067
    %4232 = vmatpush1.bf16.msra.mxu0 %v3066
    %4233 = vmatprep.subr.bf16.mxu0 %v3075
    %4234 = vmatpush1.bf16.msra.mxu0 %v3074
    %4235 = vmatprep.mubr.bf16.mxu0 %v473
    %4236 = vmatmul.mubr.bf16.gmra.mrb[0].mxu0 %v472
    %v4237 = vpop.f32.mrb[0].mxu0
    %v4238 = vadd.f32 %v4197, %v4237
    %v4239 = vpop.f32.mrb[0].mxu0
    %v4240 = vadd.f32 %v4199, %v4239
    %v4241 = vpop.f32.mrb[0].mxu0
    %v4242 = vpop.f32.mrb[0].mxu0
    %4243 = vdwg.mxu0
    %vm4244 = vcmp.gt.f32.partialorder %v3746, 0.0
    %vm4245 = vcmp.gt.f32.partialorder %v3748, 0.0
    %vm4246 = vcmp.gt.f32.partialorder %v3910, 0.0
    %vm4247 = vcmp.gt.f32.partialorder %v3912, 0.0
    %vm4248 = vcmp.gt.f32.partialorder %v4074, 0.0
    %vm4249 = vcmp.gt.f32.partialorder %v4076, 0.0
    %vm4250 = vcmp.gt.f32.partialorder %v4238, 0.0
    %vm4251 = vcmp.gt.f32.partialorder %v4240, 0.0
    %v4252 = vmul.f32 %v3746, 0.2
    %v4253 = vmul.f32 %v3748, 0.2
    %v4254 = vmul.f32 %v3910, 0.2
    %v4255 = vmul.f32 %v3912, 0.2
    %v4256 = vmul.f32 %v4074, 0.2
    %v4257 = vmul.f32 %v4076, 0.2
    %v4258 = vmul.f32 %v4238, 0.2
    %v4259 = vmul.f32 %v4240, 0.2
    %v4260 = vsel %vm4244, %v3746, %v4252
    %v4261 = vsel %vm4245, %v3748, %v4253
    %v4262 = vsel %vm4246, %v3910, %v4254
    %v4263 = vsel %vm4247, %v3912, %v4255
    %v4264 = vsel %vm4248, %v4074, %v4256
    %v4265 = vsel %vm4249, %v4076, %v4257
    %v4266 = vsel %vm4250, %v4238, %v4258
    %v4267 = vsel %vm4251, %v4240, %v4259
    %v4268 = vpack.c.bf16 %v4260, %v4260
    %v4269 = vpack.c.bf16 %v4261, %v4261
    %v4270 = vpack.c.bf16 %v4262, %v4262
    %v4271 = vpack.c.bf16 %v4263, %v4263
    %v4272 = vpack.c.bf16 %v4264, %v4264
    %v4273 = vpack.c.bf16 %v4265, %v4265
    %v4274 = vpack.c.bf16 %v4266, %v4266
    %v4275 = vpack.c.bf16 %v4267, %v4267
    %v4276 = vld [vmem:[#allocation11] sm:$0xff]
    %v4277 = vld [vmem:[#allocation11 + $0x8] sm:$0xff]
    %v4278 = vld [vmem:[#allocation11 + $0x10] sm:$0xff]
    %v4279 = vld [vmem:[#allocation11 + $0x18] sm:$0xff]
    %v4280 = vld [vmem:[#allocation11 + $0x20] sm:$0xff]
    %v4281 = vld [vmem:[#allocation11 + $0x28] sm:$0xff]
    %v4282 = vld [vmem:[#allocation11 + $0x30] sm:$0xff]
    %v4283 = vld [vmem:[#allocation11 + $0x38] sm:$0xff]
    %v4284 = vld [vmem:[#allocation11 + $0x40] sm:$0xff]
    %v4285 = vld [vmem:[#allocation11 + $0x48] sm:$0xff]
    %v4286 = vld [vmem:[#allocation11 + $0x50] sm:$0xff]
    %v4287 = vld [vmem:[#allocation11 + $0x58] sm:$0xff]
    %v4288 = vld [vmem:[#allocation11 + $0x60] sm:$0xff]
    %v4289 = vld [vmem:[#allocation11 + $0x68] sm:$0xff]
    %v4290 = vld [vmem:[#allocation11 + $0x70] sm:$0xff]
    %v4291 = vld [vmem:[#allocation11 + $0x78] sm:$0xff]
    %v4292 = vld [vmem:[#allocation11 + $0x80] sm:$0xff]
    %v4293 = vld [vmem:[#allocation11 + $0x88] sm:$0xff]
    %v4294 = vld [vmem:[#allocation11 + $0x90] sm:$0xff]
    %v4295 = vld [vmem:[#allocation11 + $0x98] sm:$0xff]
    %v4296 = vld [vmem:[#allocation11 + $0xa0] sm:$0xff]
    %v4297 = vld [vmem:[#allocation11 + $0xa8] sm:$0xff]
    %v4298 = vld [vmem:[#allocation11 + $0xb0] sm:$0xff]
    %v4299 = vld [vmem:[#allocation11 + $0xb8] sm:$0xff]
    %v4300 = vld [vmem:[#allocation11 + $0xc0] sm:$0xff]
    %v4301 = vld [vmem:[#allocation11 + $0xc8] sm:$0xff]
    %v4302 = vld [vmem:[#allocation11 + $0xd0] sm:$0xff]
    %v4303 = vld [vmem:[#allocation11 + $0xd8] sm:$0xff]
    %v4304 = vld [vmem:[#allocation11 + $0xe0] sm:$0xff]
    %v4305 = vld [vmem:[#allocation11 + $0xe8] sm:$0xff]
    %v4306 = vld [vmem:[#allocation11 + $0xf0] sm:$0xff]
    %v4307 = vld [vmem:[#allocation11 + $0xf8] sm:$0xff]
    %v4308 = vld [vmem:[#allocation11 + $0x100] sm:$0xff]
    %v4309 = vld [vmem:[#allocation11 + $0x108] sm:$0xff]
    %v4310 = vld [vmem:[#allocation11 + $0x110] sm:$0xff]
    %v4311 = vld [vmem:[#allocation11 + $0x118] sm:$0xff]
    %v4312 = vld [vmem:[#allocation11 + $0x120] sm:$0xff]
    %v4313 = vld [vmem:[#allocation11 + $0x128] sm:$0xff]
    %v4314 = vld [vmem:[#allocation11 + $0x130] sm:$0xff]
    %v4315 = vld [vmem:[#allocation11 + $0x138] sm:$0xff]
    %v4316 = vld [vmem:[#allocation11 + $0x140] sm:$0xff]
    %v4317 = vld [vmem:[#allocation11 + $0x148] sm:$0xff]
    %v4318 = vld [vmem:[#allocation11 + $0x150] sm:$0xff]
    %v4319 = vld [vmem:[#allocation11 + $0x158] sm:$0xff]
    %v4320 = vld [vmem:[#allocation11 + $0x160] sm:$0xff]
    %v4321 = vld [vmem:[#allocation11 + $0x168] sm:$0xff]
    %v4322 = vld [vmem:[#allocation11 + $0x170] sm:$0xff]
    %v4323 = vld [vmem:[#allocation11 + $0x178] sm:$0xff]
    %v4324 = vld [vmem:[#allocation11 + $0x180] sm:$0xff]
    %v4325 = vld [vmem:[#allocation11 + $0x188] sm:$0xff]
    %v4326 = vld [vmem:[#allocation11 + $0x190] sm:$0xff]
    %v4327 = vld [vmem:[#allocation11 + $0x198] sm:$0xff]
    %v4328 = vld [vmem:[#allocation11 + $0x1a0] sm:$0xff]
    %v4329 = vld [vmem:[#allocation11 + $0x1a8] sm:$0xff]
    %v4330 = vld [vmem:[#allocation11 + $0x1b0] sm:$0xff]
    %v4331 = vld [vmem:[#allocation11 + $0x1b8] sm:$0xff]
    %v4332 = vld [vmem:[#allocation11 + $0x1c0] sm:$0xff]
    %v4333 = vld [vmem:[#allocation11 + $0x1c8] sm:$0xff]
    %v4334 = vld [vmem:[#allocation11 + $0x1d0] sm:$0xff]
    %v4335 = vld [vmem:[#allocation11 + $0x1d8] sm:$0xff]
    %v4336 = vld [vmem:[#allocation11 + $0x1e0] sm:$0xff]
    %v4337 = vld [vmem:[#allocation11 + $0x1e8] sm:$0xff]
    %v4338 = vld [vmem:[#allocation11 + $0x1f0] sm:$0xff]
    %v4339 = vld [vmem:[#allocation11 + $0x1f8] sm:$0xff]
    %v4340 = vld [vmem:[#allocation11 + $0x200] sm:$0xff]
    %v4341 = vld [vmem:[#allocation11 + $0x208] sm:$0xff]
    %v4342 = vld [vmem:[#allocation11 + $0x210] sm:$0xff]
    %v4343 = vld [vmem:[#allocation11 + $0x218] sm:$0xff]
    %v4344 = vld [vmem:[#allocation11 + $0x220] sm:$0xff]
    %v4345 = vld [vmem:[#allocation11 + $0x228] sm:$0xff]
    %v4346 = vld [vmem:[#allocation11 + $0x230] sm:$0xff]
    %v4347 = vld [vmem:[#allocation11 + $0x238] sm:$0xff]
    %v4348 = vld [vmem:[#allocation11 + $0x240] sm:$0xff]
    %v4349 = vld [vmem:[#allocation11 + $0x248] sm:$0xff]
    %v4350 = vld [vmem:[#allocation11 + $0x250] sm:$0xff]
    %v4351 = vld [vmem:[#allocation11 + $0x258] sm:$0xff]
    %v4352 = vld [vmem:[#allocation11 + $0x260] sm:$0xff]
    %v4353 = vld [vmem:[#allocation11 + $0x268] sm:$0xff]
    %v4354 = vld [vmem:[#allocation11 + $0x270] sm:$0xff]
    %v4355 = vld [vmem:[#allocation11 + $0x278] sm:$0xff]
    %v4356 = vld [vmem:[#allocation11 + $0x280] sm:$0xff]
    %v4357 = vld [vmem:[#allocation11 + $0x288] sm:$0xff]
    %v4358 = vld [vmem:[#allocation11 + $0x290] sm:$0xff]
    %v4359 = vld [vmem:[#allocation11 + $0x298] sm:$0xff]
    %v4360 = vld [vmem:[#allocation11 + $0x2a0] sm:$0xff]
    %v4361 = vld [vmem:[#allocation11 + $0x2a8] sm:$0xff]
    %v4362 = vld [vmem:[#allocation11 + $0x2b0] sm:$0xff]
    %v4363 = vld [vmem:[#allocation11 + $0x2b8] sm:$0xff]
    %v4364 = vld [vmem:[#allocation11 + $0x2c0] sm:$0xff]
    %v4365 = vld [vmem:[#allocation11 + $0x2c8] sm:$0xff]
    %v4366 = vld [vmem:[#allocation11 + $0x2d0] sm:$0xff]
    %v4367 = vld [vmem:[#allocation11 + $0x2d8] sm:$0xff]
    %v4368 = vld [vmem:[#allocation11 + $0x2e0] sm:$0xff]
    %v4369 = vld [vmem:[#allocation11 + $0x2e8] sm:$0xff]
    %v4370 = vld [vmem:[#allocation11 + $0x2f0] sm:$0xff]
    %v4371 = vld [vmem:[#allocation11 + $0x2f8] sm:$0xff]
    %v4372 = vld [vmem:[#allocation11 + $0x300] sm:$0xff]
    %v4373 = vld [vmem:[#allocation11 + $0x308] sm:$0xff]
    %v4374 = vld [vmem:[#allocation11 + $0x310] sm:$0xff]
    %v4375 = vld [vmem:[#allocation11 + $0x318] sm:$0xff]
    %v4376 = vld [vmem:[#allocation11 + $0x320] sm:$0xff]
    %v4377 = vld [vmem:[#allocation11 + $0x328] sm:$0xff]
    %v4378 = vld [vmem:[#allocation11 + $0x330] sm:$0xff]
    %v4379 = vld [vmem:[#allocation11 + $0x338] sm:$0xff]
    %v4380 = vld [vmem:[#allocation11 + $0x340] sm:$0xff]
    %v4381 = vld [vmem:[#allocation11 + $0x348] sm:$0xff]
    %v4382 = vld [vmem:[#allocation11 + $0x350] sm:$0xff]
    %v4383 = vld [vmem:[#allocation11 + $0x358] sm:$0xff]
    %v4384 = vld [vmem:[#allocation11 + $0x360] sm:$0xff]
    %v4385 = vld [vmem:[#allocation11 + $0x368] sm:$0xff]
    %v4386 = vld [vmem:[#allocation11 + $0x370] sm:$0xff]
    %v4387 = vld [vmem:[#allocation11 + $0x378] sm:$0xff]
    %v4388 = vld [vmem:[#allocation11 + $0x380] sm:$0xff]
    %v4389 = vld [vmem:[#allocation11 + $0x388] sm:$0xff]
    %v4390 = vld [vmem:[#allocation11 + $0x390] sm:$0xff]
    %v4391 = vld [vmem:[#allocation11 + $0x398] sm:$0xff]
    %v4392 = vld [vmem:[#allocation11 + $0x3a0] sm:$0xff]
    %v4393 = vld [vmem:[#allocation11 + $0x3a8] sm:$0xff]
    %v4394 = vld [vmem:[#allocation11 + $0x3b0] sm:$0xff]
    %v4395 = vld [vmem:[#allocation11 + $0x3b8] sm:$0xff]
    %v4396 = vld [vmem:[#allocation11 + $0x3c0] sm:$0xff]
    %v4397 = vld [vmem:[#allocation11 + $0x3c8] sm:$0xff]
    %v4398 = vld [vmem:[#allocation11 + $0x3d0] sm:$0xff]
    %v4399 = vld [vmem:[#allocation11 + $0x3d8] sm:$0xff]
    %v4400 = vld [vmem:[#allocation11 + $0x3e0] sm:$0xff]
    %v4401 = vld [vmem:[#allocation11 + $0x3e8] sm:$0xff]
    %v4402 = vld [vmem:[#allocation11 + $0x3f0] sm:$0xff]
    %v4403 = vld [vmem:[#allocation11 + $0x3f8] sm:$0xff]
    %v4404 = vld [vmem:[#allocation11 + $0x400] sm:$0xff]
    %v4405 = vld [vmem:[#allocation11 + $0x408] sm:$0xff]
    %v4406 = vld [vmem:[#allocation11 + $0x410] sm:$0xff]
    %v4407 = vld [vmem:[#allocation11 + $0x418] sm:$0xff]
    %v4408 = vld [vmem:[#allocation11 + $0x420] sm:$0xff]
    %v4409 = vld [vmem:[#allocation11 + $0x428] sm:$0xff]
    %v4410 = vld [vmem:[#allocation11 + $0x430] sm:$0xff]
    %v4411 = vld [vmem:[#allocation11 + $0x438] sm:$0xff]
    %v4412 = vld [vmem:[#allocation11 + $0x440] sm:$0xff]
    %v4413 = vld [vmem:[#allocation11 + $0x448] sm:$0xff]
    %v4414 = vld [vmem:[#allocation11 + $0x450] sm:$0xff]
    %v4415 = vld [vmem:[#allocation11 + $0x458] sm:$0xff]
    %v4416 = vld [vmem:[#allocation11 + $0x460] sm:$0xff]
    %v4417 = vld [vmem:[#allocation11 + $0x468] sm:$0xff]
    %v4418 = vld [vmem:[#allocation11 + $0x470] sm:$0xff]
    %v4419 = vld [vmem:[#allocation11 + $0x478] sm:$0xff]
    %v4420 = vld [vmem:[#allocation11 + $0x480] sm:$0xff]
    %v4421 = vld [vmem:[#allocation11 + $0x488] sm:$0xff]
    %v4422 = vld [vmem:[#allocation11 + $0x490] sm:$0xff]
    %v4423 = vld [vmem:[#allocation11 + $0x498] sm:$0xff]
    %v4424 = vld [vmem:[#allocation11 + $0x4a0] sm:$0xff]
    %v4425 = vld [vmem:[#allocation11 + $0x4a8] sm:$0xff]
    %v4426 = vld [vmem:[#allocation11 + $0x4b0] sm:$0xff]
    %v4427 = vld [vmem:[#allocation11 + $0x4b8] sm:$0xff]
    %v4428 = vld [vmem:[#allocation11 + $0x4c0] sm:$0xff]
    %v4429 = vld [vmem:[#allocation11 + $0x4c8] sm:$0xff]
    %v4430 = vld [vmem:[#allocation11 + $0x4d0] sm:$0xff]
    %v4431 = vld [vmem:[#allocation11 + $0x4d8] sm:$0xff]
    %v4432 = vld [vmem:[#allocation11 + $0x4e0] sm:$0xff]
    %v4433 = vld [vmem:[#allocation11 + $0x4e8] sm:$0xff]
    %v4434 = vld [vmem:[#allocation11 + $0x4f0] sm:$0xff]
    %v4435 = vld [vmem:[#allocation11 + $0x4f8] sm:$0xff]
    %v4436 = vld [vmem:[#allocation11 + $0x500] sm:$0xff]
    %v4437 = vld [vmem:[#allocation11 + $0x508] sm:$0xff]
    %v4438 = vld [vmem:[#allocation11 + $0x510] sm:$0xff]
    %v4439 = vld [vmem:[#allocation11 + $0x518] sm:$0xff]
    %v4440 = vld [vmem:[#allocation11 + $0x520] sm:$0xff]
    %v4441 = vld [vmem:[#allocation11 + $0x528] sm:$0xff]
    %v4442 = vld [vmem:[#allocation11 + $0x530] sm:$0xff]
    %v4443 = vld [vmem:[#allocation11 + $0x538] sm:$0xff]
    %v4444 = vld [vmem:[#allocation11 + $0x540] sm:$0xff]
    %v4445 = vld [vmem:[#allocation11 + $0x548] sm:$0xff]
    %v4446 = vld [vmem:[#allocation11 + $0x550] sm:$0xff]
    %v4447 = vld [vmem:[#allocation11 + $0x558] sm:$0xff]
    %v4448 = vld [vmem:[#allocation11 + $0x560] sm:$0xff]
    %v4449 = vld [vmem:[#allocation11 + $0x568] sm:$0xff]
    %v4450 = vld [vmem:[#allocation11 + $0x570] sm:$0xff]
    %v4451 = vld [vmem:[#allocation11 + $0x578] sm:$0xff]
    %v4452 = vld [vmem:[#allocation11 + $0x580] sm:$0xff]
    %v4453 = vld [vmem:[#allocation11 + $0x588] sm:$0xff]
    %v4454 = vld [vmem:[#allocation11 + $0x590] sm:$0xff]
    %v4455 = vld [vmem:[#allocation11 + $0x598] sm:$0xff]
    %v4456 = vld [vmem:[#allocation11 + $0x5a0] sm:$0xff]
    %v4457 = vld [vmem:[#allocation11 + $0x5a8] sm:$0xff]
    %v4458 = vld [vmem:[#allocation11 + $0x5b0] sm:$0xff]
    %v4459 = vld [vmem:[#allocation11 + $0x5b8] sm:$0xff]
    %v4460 = vld [vmem:[#allocation11 + $0x5c0] sm:$0xff]
    %v4461 = vld [vmem:[#allocation11 + $0x5c8] sm:$0xff]
    %v4462 = vld [vmem:[#allocation11 + $0x5d0] sm:$0xff]
    %v4463 = vld [vmem:[#allocation11 + $0x5d8] sm:$0xff]
    %v4464 = vld [vmem:[#allocation11 + $0x5e0] sm:$0xff]
    %v4465 = vld [vmem:[#allocation11 + $0x5e8] sm:$0xff]
    %v4466 = vld [vmem:[#allocation11 + $0x5f0] sm:$0xff]
    %v4467 = vld [vmem:[#allocation11 + $0x5f8] sm:$0xff]
    %v4468 = vld [vmem:[#allocation11 + $0x600] sm:$0xff]
    %v4469 = vld [vmem:[#allocation11 + $0x608] sm:$0xff]
    %v4470 = vld [vmem:[#allocation11 + $0x610] sm:$0xff]
    %v4471 = vld [vmem:[#allocation11 + $0x618] sm:$0xff]
    %v4472 = vld [vmem:[#allocation11 + $0x620] sm:$0xff]
    %v4473 = vld [vmem:[#allocation11 + $0x628] sm:$0xff]
    %v4474 = vld [vmem:[#allocation11 + $0x630] sm:$0xff]
    %v4475 = vld [vmem:[#allocation11 + $0x638] sm:$0xff]
    %v4476 = vld [vmem:[#allocation11 + $0x640] sm:$0xff]
    %v4477 = vld [vmem:[#allocation11 + $0x648] sm:$0xff]
    %v4478 = vld [vmem:[#allocation11 + $0x650] sm:$0xff]
    %v4479 = vld [vmem:[#allocation11 + $0x658] sm:$0xff]
    %v4480 = vld [vmem:[#allocation11 + $0x660] sm:$0xff]
    %v4481 = vld [vmem:[#allocation11 + $0x668] sm:$0xff]
    %v4482 = vld [vmem:[#allocation11 + $0x670] sm:$0xff]
    %v4483 = vld [vmem:[#allocation11 + $0x678] sm:$0xff]
    %v4484 = vld [vmem:[#allocation11 + $0x680] sm:$0xff]
    %v4485 = vld [vmem:[#allocation11 + $0x688] sm:$0xff]
    %v4486 = vld [vmem:[#allocation11 + $0x690] sm:$0xff]
    %v4487 = vld [vmem:[#allocation11 + $0x698] sm:$0xff]
    %v4488 = vld [vmem:[#allocation11 + $0x6a0] sm:$0xff]
    %v4489 = vld [vmem:[#allocation11 + $0x6a8] sm:$0xff]
    %v4490 = vld [vmem:[#allocation11 + $0x6b0] sm:$0xff]
    %v4491 = vld [vmem:[#allocation11 + $0x6b8] sm:$0xff]
    %v4492 = vld [vmem:[#allocation11 + $0x6c0] sm:$0xff]
    %v4493 = vld [vmem:[#allocation11 + $0x6c8] sm:$0xff]
    %v4494 = vld [vmem:[#allocation11 + $0x6d0] sm:$0xff]
    %v4495 = vld [vmem:[#allocation11 + $0x6d8] sm:$0xff]
    %v4496 = vld [vmem:[#allocation11 + $0x6e0] sm:$0xff]
    %v4497 = vld [vmem:[#allocation11 + $0x6e8] sm:$0xff]
    %v4498 = vld [vmem:[#allocation11 + $0x6f0] sm:$0xff]
    %v4499 = vld [vmem:[#allocation11 + $0x6f8] sm:$0xff]
    %v4500 = vld [vmem:[#allocation11 + $0x700] sm:$0xff]
    %v4501 = vld [vmem:[#allocation11 + $0x708] sm:$0xff]
    %v4502 = vld [vmem:[#allocation11 + $0x710] sm:$0xff]
    %v4503 = vld [vmem:[#allocation11 + $0x718] sm:$0xff]
    %v4504 = vld [vmem:[#allocation11 + $0x720] sm:$0xff]
    %v4505 = vld [vmem:[#allocation11 + $0x728] sm:$0xff]
    %v4506 = vld [vmem:[#allocation11 + $0x730] sm:$0xff]
    %v4507 = vld [vmem:[#allocation11 + $0x738] sm:$0xff]
    %v4508 = vld [vmem:[#allocation11 + $0x740] sm:$0xff]
    %v4509 = vld [vmem:[#allocation11 + $0x748] sm:$0xff]
    %v4510 = vld [vmem:[#allocation11 + $0x750] sm:$0xff]
    %v4511 = vld [vmem:[#allocation11 + $0x758] sm:$0xff]
    %v4512 = vld [vmem:[#allocation11 + $0x760] sm:$0xff]
    %v4513 = vld [vmem:[#allocation11 + $0x768] sm:$0xff]
    %v4514 = vld [vmem:[#allocation11 + $0x770] sm:$0xff]
    %v4515 = vld [vmem:[#allocation11 + $0x778] sm:$0xff]
    %v4516 = vld [vmem:[#allocation11 + $0x780] sm:$0xff]
    %v4517 = vld [vmem:[#allocation11 + $0x788] sm:$0xff]
    %v4518 = vld [vmem:[#allocation11 + $0x790] sm:$0xff]
    %v4519 = vld [vmem:[#allocation11 + $0x798] sm:$0xff]
    %v4520 = vld [vmem:[#allocation11 + $0x7a0] sm:$0xff]
    %v4521 = vld [vmem:[#allocation11 + $0x7a8] sm:$0xff]
    %v4522 = vld [vmem:[#allocation11 + $0x7b0] sm:$0xff]
    %v4523 = vld [vmem:[#allocation11 + $0x7b8] sm:$0xff]
    %v4524 = vld [vmem:[#allocation11 + $0x7c0] sm:$0xff]
    %v4525 = vld [vmem:[#allocation11 + $0x7c8] sm:$0xff]
    %v4526 = vld [vmem:[#allocation11 + $0x7d0] sm:$0xff]
    %v4527 = vld [vmem:[#allocation11 + $0x7d8] sm:$0xff]
    %v4528 = vld [vmem:[#allocation11 + $0x7e0] sm:$0xff]
    %v4529 = vld [vmem:[#allocation11 + $0x7e8] sm:$0xff]
    %v4530 = vld [vmem:[#allocation11 + $0x7f0] sm:$0xff]
    %v4531 = vld [vmem:[#allocation11 + $0x7f8] sm:$0xff]
    %v4532 = vld [vmem:[#allocation11 + $0x800] sm:$0xff]
    %v4533 = vld [vmem:[#allocation11 + $0x808] sm:$0xff]
    %v4534 = vld [vmem:[#allocation11 + $0x810] sm:$0xff]
    %v4535 = vld [vmem:[#allocation11 + $0x818] sm:$0xff]
    %v4536 = vld [vmem:[#allocation11 + $0x820] sm:$0xff]
    %v4537 = vld [vmem:[#allocation11 + $0x828] sm:$0xff]
    %v4538 = vld [vmem:[#allocation11 + $0x830] sm:$0xff]
    %v4539 = vld [vmem:[#allocation11 + $0x838] sm:$0xff]
    %v4540 = vld [vmem:[#allocation11 + $0x840] sm:$0xff]
    %v4541 = vld [vmem:[#allocation11 + $0x848] sm:$0xff]
    %v4542 = vld [vmem:[#allocation11 + $0x850] sm:$0xff]
    %v4543 = vld [vmem:[#allocation11 + $0x858] sm:$0xff]
    %v4544 = vld [vmem:[#allocation11 + $0x860] sm:$0xff]
    %v4545 = vld [vmem:[#allocation11 + $0x868] sm:$0xff]
    %v4546 = vld [vmem:[#allocation11 + $0x870] sm:$0xff]
    %v4547 = vld [vmem:[#allocation11 + $0x878] sm:$0xff]
    %v4548 = vld [vmem:[#allocation11 + $0x880] sm:$0xff]
    %v4549 = vld [vmem:[#allocation11 + $0x888] sm:$0xff]
    %v4550 = vld [vmem:[#allocation11 + $0x890] sm:$0xff]
    %v4551 = vld [vmem:[#allocation11 + $0x898] sm:$0xff]
    %v4552 = vld [vmem:[#allocation11 + $0x8a0] sm:$0xff]
    %v4553 = vld [vmem:[#allocation11 + $0x8a8] sm:$0xff]
    %v4554 = vld [vmem:[#allocation11 + $0x8b0] sm:$0xff]
    %v4555 = vld [vmem:[#allocation11 + $0x8b8] sm:$0xff]
    %v4556 = vld [vmem:[#allocation11 + $0x8c0] sm:$0xff]
    %v4557 = vld [vmem:[#allocation11 + $0x8c8] sm:$0xff]
    %v4558 = vld [vmem:[#allocation11 + $0x8d0] sm:$0xff]
    %v4559 = vld [vmem:[#allocation11 + $0x8d8] sm:$0xff]
    %v4560 = vld [vmem:[#allocation11 + $0x8e0] sm:$0xff]
    %v4561 = vld [vmem:[#allocation11 + $0x8e8] sm:$0xff]
    %v4562 = vld [vmem:[#allocation11 + $0x8f0] sm:$0xff]
    %v4563 = vld [vmem:[#allocation11 + $0x8f8] sm:$0xff]
    %v4564 = vld [vmem:[#allocation11 + $0x900] sm:$0xff]
    %v4565 = vld [vmem:[#allocation11 + $0x908] sm:$0xff]
    %v4566 = vld [vmem:[#allocation11 + $0x910] sm:$0xff]
    %v4567 = vld [vmem:[#allocation11 + $0x918] sm:$0xff]
    %v4568 = vld [vmem:[#allocation11 + $0x920] sm:$0xff]
    %v4569 = vld [vmem:[#allocation11 + $0x928] sm:$0xff]
    %v4570 = vld [vmem:[#allocation11 + $0x930] sm:$0xff]
    %v4571 = vld [vmem:[#allocation11 + $0x938] sm:$0xff]
    %v4572 = vld [vmem:[#allocation11 + $0x940] sm:$0xff]
    %v4573 = vld [vmem:[#allocation11 + $0x948] sm:$0xff]
    %v4574 = vld [vmem:[#allocation11 + $0x950] sm:$0xff]
    %v4575 = vld [vmem:[#allocation11 + $0x958] sm:$0xff]
    %v4576 = vld [vmem:[#allocation11 + $0x960] sm:$0xff]
    %v4577 = vld [vmem:[#allocation11 + $0x968] sm:$0xff]
    %v4578 = vld [vmem:[#allocation11 + $0x970] sm:$0xff]
    %v4579 = vld [vmem:[#allocation11 + $0x978] sm:$0xff]
    %v4580 = vld [vmem:[#allocation11 + $0x980] sm:$0xff]
    %v4581 = vld [vmem:[#allocation11 + $0x988] sm:$0xff]
    %v4582 = vld [vmem:[#allocation11 + $0x990] sm:$0xff]
    %v4583 = vld [vmem:[#allocation11 + $0x998] sm:$0xff]
    %v4584 = vld [vmem:[#allocation11 + $0x9a0] sm:$0xff]
    %v4585 = vld [vmem:[#allocation11 + $0x9a8] sm:$0xff]
    %v4586 = vld [vmem:[#allocation11 + $0x9b0] sm:$0xff]
    %v4587 = vld [vmem:[#allocation11 + $0x9b8] sm:$0xff]
    %v4588 = vld [vmem:[#allocation11 + $0x9c0] sm:$0xff]
    %v4589 = vld [vmem:[#allocation11 + $0x9c8] sm:$0xff]
    %v4590 = vld [vmem:[#allocation11 + $0x9d0] sm:$0xff]
    %v4591 = vld [vmem:[#allocation11 + $0x9d8] sm:$0xff]
    %v4592 = vld [vmem:[#allocation11 + $0x9e0] sm:$0xff]
    %v4593 = vld [vmem:[#allocation11 + $0x9e8] sm:$0xff]
    %v4594 = vld [vmem:[#allocation11 + $0x9f0] sm:$0xff]
    %v4595 = vld [vmem:[#allocation11 + $0x9f8] sm:$0xff]
    %v4596 = vld [vmem:[#allocation11 + $0xa00] sm:$0xff]
    %v4597 = vld [vmem:[#allocation11 + $0xa08] sm:$0xff]
    %v4598 = vld [vmem:[#allocation11 + $0xa10] sm:$0xff]
    %v4599 = vld [vmem:[#allocation11 + $0xa18] sm:$0xff]
    %v4600 = vld [vmem:[#allocation11 + $0xa20] sm:$0xff]
    %v4601 = vld [vmem:[#allocation11 + $0xa28] sm:$0xff]
    %v4602 = vld [vmem:[#allocation11 + $0xa30] sm:$0xff]
    %v4603 = vld [vmem:[#allocation11 + $0xa38] sm:$0xff]
    %v4604 = vld [vmem:[#allocation11 + $0xa40] sm:$0xff]
    %v4605 = vld [vmem:[#allocation11 + $0xa48] sm:$0xff]
    %v4606 = vld [vmem:[#allocation11 + $0xa50] sm:$0xff]
    %v4607 = vld [vmem:[#allocation11 + $0xa58] sm:$0xff]
    %v4608 = vld [vmem:[#allocation11 + $0xa60] sm:$0xff]
    %v4609 = vld [vmem:[#allocation11 + $0xa68] sm:$0xff]
    %v4610 = vld [vmem:[#allocation11 + $0xa70] sm:$0xff]
    %v4611 = vld [vmem:[#allocation11 + $0xa78] sm:$0xff]
    %v4612 = vld [vmem:[#allocation11 + $0xa80] sm:$0xff]
    %v4613 = vld [vmem:[#allocation11 + $0xa88] sm:$0xff]
    %v4614 = vld [vmem:[#allocation11 + $0xa90] sm:$0xff]
    %v4615 = vld [vmem:[#allocation11 + $0xa98] sm:$0xff]
    %v4616 = vld [vmem:[#allocation11 + $0xaa0] sm:$0xff]
    %v4617 = vld [vmem:[#allocation11 + $0xaa8] sm:$0xff]
    %v4618 = vld [vmem:[#allocation11 + $0xab0] sm:$0xff]
    %v4619 = vld [vmem:[#allocation11 + $0xab8] sm:$0xff]
    %v4620 = vld [vmem:[#allocation11 + $0xac0] sm:$0xff]
    %v4621 = vld [vmem:[#allocation11 + $0xac8] sm:$0xff]
    %v4622 = vld [vmem:[#allocation11 + $0xad0] sm:$0xff]
    %v4623 = vld [vmem:[#allocation11 + $0xad8] sm:$0xff]
    %v4624 = vld [vmem:[#allocation11 + $0xae0] sm:$0xff]
    %v4625 = vld [vmem:[#allocation11 + $0xae8] sm:$0xff]
    %v4626 = vld [vmem:[#allocation11 + $0xaf0] sm:$0xff]
    %v4627 = vld [vmem:[#allocation11 + $0xaf8] sm:$0xff]
    %v4628 = vld [vmem:[#allocation11 + $0xb00] sm:$0xff]
    %v4629 = vld [vmem:[#allocation11 + $0xb08] sm:$0xff]
    %v4630 = vld [vmem:[#allocation11 + $0xb10] sm:$0xff]
    %v4631 = vld [vmem:[#allocation11 + $0xb18] sm:$0xff]
    %v4632 = vld [vmem:[#allocation11 + $0xb20] sm:$0xff]
    %v4633 = vld [vmem:[#allocation11 + $0xb28] sm:$0xff]
    %v4634 = vld [vmem:[#allocation11 + $0xb30] sm:$0xff]
    %v4635 = vld [vmem:[#allocation11 + $0xb38] sm:$0xff]
    %v4636 = vld [vmem:[#allocation11 + $0xb40] sm:$0xff]
    %v4637 = vld [vmem:[#allocation11 + $0xb48] sm:$0xff]
    %v4638 = vld [vmem:[#allocation11 + $0xb50] sm:$0xff]
    %v4639 = vld [vmem:[#allocation11 + $0xb58] sm:$0xff]
    %v4640 = vld [vmem:[#allocation11 + $0xb60] sm:$0xff]
    %v4641 = vld [vmem:[#allocation11 + $0xb68] sm:$0xff]
    %v4642 = vld [vmem:[#allocation11 + $0xb70] sm:$0xff]
    %v4643 = vld [vmem:[#allocation11 + $0xb78] sm:$0xff]
    %v4644 = vld [vmem:[#allocation11 + $0xb80] sm:$0xff]
    %v4645 = vld [vmem:[#allocation11 + $0xb88] sm:$0xff]
    %v4646 = vld [vmem:[#allocation11 + $0xb90] sm:$0xff]
    %v4647 = vld [vmem:[#allocation11 + $0xb98] sm:$0xff]
    %v4648 = vld [vmem:[#allocation11 + $0xba0] sm:$0xff]
    %v4649 = vld [vmem:[#allocation11 + $0xba8] sm:$0xff]
    %v4650 = vld [vmem:[#allocation11 + $0xbb0] sm:$0xff]
    %v4651 = vld [vmem:[#allocation11 + $0xbb8] sm:$0xff]
    %v4652 = vld [vmem:[#allocation11 + $0xbc0] sm:$0xff]
    %v4653 = vld [vmem:[#allocation11 + $0xbc8] sm:$0xff]
    %v4654 = vld [vmem:[#allocation11 + $0xbd0] sm:$0xff]
    %v4655 = vld [vmem:[#allocation11 + $0xbd8] sm:$0xff]
    %v4656 = vld [vmem:[#allocation11 + $0xbe0] sm:$0xff]
    %v4657 = vld [vmem:[#allocation11 + $0xbe8] sm:$0xff]
    %v4658 = vld [vmem:[#allocation11 + $0xbf0] sm:$0xff]
    %v4659 = vld [vmem:[#allocation11 + $0xbf8] sm:$0xff]
    %v4660 = vld [vmem:[#allocation11 + $0xc00] sm:$0xff]
    %v4661 = vld [vmem:[#allocation11 + $0xc08] sm:$0xff]
    %v4662 = vld [vmem:[#allocation11 + $0xc10] sm:$0xff]
    %v4663 = vld [vmem:[#allocation11 + $0xc18] sm:$0xff]
    %v4664 = vld [vmem:[#allocation11 + $0xc20] sm:$0xff]
    %v4665 = vld [vmem:[#allocation11 + $0xc28] sm:$0xff]
    %v4666 = vld [vmem:[#allocation11 + $0xc30] sm:$0xff]
    %v4667 = vld [vmem:[#allocation11 + $0xc38] sm:$0xff]
    %v4668 = vld [vmem:[#allocation11 + $0xc40] sm:$0xff]
    %v4669 = vld [vmem:[#allocation11 + $0xc48] sm:$0xff]
    %v4670 = vld [vmem:[#allocation11 + $0xc50] sm:$0xff]
    %v4671 = vld [vmem:[#allocation11 + $0xc58] sm:$0xff]
    %v4672 = vld [vmem:[#allocation11 + $0xc60] sm:$0xff]
    %v4673 = vld [vmem:[#allocation11 + $0xc68] sm:$0xff]
    %v4674 = vld [vmem:[#allocation11 + $0xc70] sm:$0xff]
    %v4675 = vld [vmem:[#allocation11 + $0xc78] sm:$0xff]
    %v4676 = vld [vmem:[#allocation11 + $0xc80] sm:$0xff]
    %v4677 = vld [vmem:[#allocation11 + $0xc88] sm:$0xff]
    %v4678 = vld [vmem:[#allocation11 + $0xc90] sm:$0xff]
    %v4679 = vld [vmem:[#allocation11 + $0xc98] sm:$0xff]
    %v4680 = vld [vmem:[#allocation11 + $0xca0] sm:$0xff]
    %v4681 = vld [vmem:[#allocation11 + $0xca8] sm:$0xff]
    %v4682 = vld [vmem:[#allocation11 + $0xcb0] sm:$0xff]
    %v4683 = vld [vmem:[#allocation11 + $0xcb8] sm:$0xff]
    %v4684 = vld [vmem:[#allocation11 + $0xcc0] sm:$0xff]
    %v4685 = vld [vmem:[#allocation11 + $0xcc8] sm:$0xff]
    %v4686 = vld [vmem:[#allocation11 + $0xcd0] sm:$0xff]
    %v4687 = vld [vmem:[#allocation11 + $0xcd8] sm:$0xff]
    %v4688 = vld [vmem:[#allocation11 + $0xce0] sm:$0xff]
    %v4689 = vld [vmem:[#allocation11 + $0xce8] sm:$0xff]
    %v4690 = vld [vmem:[#allocation11 + $0xcf0] sm:$0xff]
    %v4691 = vld [vmem:[#allocation11 + $0xcf8] sm:$0xff]
    %v4692 = vld [vmem:[#allocation11 + $0xd00] sm:$0xff]
    %v4693 = vld [vmem:[#allocation11 + $0xd08] sm:$0xff]
    %v4694 = vld [vmem:[#allocation11 + $0xd10] sm:$0xff]
    %v4695 = vld [vmem:[#allocation11 + $0xd18] sm:$0xff]
    %v4696 = vld [vmem:[#allocation11 + $0xd20] sm:$0xff]
    %v4697 = vld [vmem:[#allocation11 + $0xd28] sm:$0xff]
    %v4698 = vld [vmem:[#allocation11 + $0xd30] sm:$0xff]
    %v4699 = vld [vmem:[#allocation11 + $0xd38] sm:$0xff]
    %v4700 = vld [vmem:[#allocation11 + $0xd40] sm:$0xff]
    %v4701 = vld [vmem:[#allocation11 + $0xd48] sm:$0xff]
    %v4702 = vld [vmem:[#allocation11 + $0xd50] sm:$0xff]
    %v4703 = vld [vmem:[#allocation11 + $0xd58] sm:$0xff]
    %v4704 = vld [vmem:[#allocation11 + $0xd60] sm:$0xff]
    %v4705 = vld [vmem:[#allocation11 + $0xd68] sm:$0xff]
    %v4706 = vld [vmem:[#allocation11 + $0xd70] sm:$0xff]
    %v4707 = vld [vmem:[#allocation11 + $0xd78] sm:$0xff]
    %v4708 = vld [vmem:[#allocation11 + $0xd80] sm:$0xff]
    %v4709 = vld [vmem:[#allocation11 + $0xd88] sm:$0xff]
    %v4710 = vld [vmem:[#allocation11 + $0xd90] sm:$0xff]
    %v4711 = vld [vmem:[#allocation11 + $0xd98] sm:$0xff]
    %v4712 = vld [vmem:[#allocation11 + $0xda0] sm:$0xff]
    %v4713 = vld [vmem:[#allocation11 + $0xda8] sm:$0xff]
    %v4714 = vld [vmem:[#allocation11 + $0xdb0] sm:$0xff]
    %v4715 = vld [vmem:[#allocation11 + $0xdb8] sm:$0xff]
    %v4716 = vld [vmem:[#allocation11 + $0xdc0] sm:$0xff]
    %v4717 = vld [vmem:[#allocation11 + $0xdc8] sm:$0xff]
    %v4718 = vld [vmem:[#allocation11 + $0xdd0] sm:$0xff]
    %v4719 = vld [vmem:[#allocation11 + $0xdd8] sm:$0xff]
    %v4720 = vld [vmem:[#allocation11 + $0xde0] sm:$0xff]
    %v4721 = vld [vmem:[#allocation11 + $0xde8] sm:$0xff]
    %v4722 = vld [vmem:[#allocation11 + $0xdf0] sm:$0xff]
    %v4723 = vld [vmem:[#allocation11 + $0xdf8] sm:$0xff]
    %v4724 = vld [vmem:[#allocation11 + $0xe00] sm:$0xff]
    %v4725 = vld [vmem:[#allocation11 + $0xe08] sm:$0xff]
    %v4726 = vld [vmem:[#allocation11 + $0xe10] sm:$0xff]
    %v4727 = vld [vmem:[#allocation11 + $0xe18] sm:$0xff]
    %v4728 = vld [vmem:[#allocation11 + $0xe20] sm:$0xff]
    %v4729 = vld [vmem:[#allocation11 + $0xe28] sm:$0xff]
    %v4730 = vld [vmem:[#allocation11 + $0xe30] sm:$0xff]
    %v4731 = vld [vmem:[#allocation11 + $0xe38] sm:$0xff]
    %v4732 = vld [vmem:[#allocation11 + $0xe40] sm:$0xff]
    %v4733 = vld [vmem:[#allocation11 + $0xe48] sm:$0xff]
    %v4734 = vld [vmem:[#allocation11 + $0xe50] sm:$0xff]
    %v4735 = vld [vmem:[#allocation11 + $0xe58] sm:$0xff]
    %v4736 = vld [vmem:[#allocation11 + $0xe60] sm:$0xff]
    %v4737 = vld [vmem:[#allocation11 + $0xe68] sm:$0xff]
    %v4738 = vld [vmem:[#allocation11 + $0xe70] sm:$0xff]
    %v4739 = vld [vmem:[#allocation11 + $0xe78] sm:$0xff]
    %v4740 = vld [vmem:[#allocation11 + $0xe80] sm:$0xff]
    %v4741 = vld [vmem:[#allocation11 + $0xe88] sm:$0xff]
    %v4742 = vld [vmem:[#allocation11 + $0xe90] sm:$0xff]
    %v4743 = vld [vmem:[#allocation11 + $0xe98] sm:$0xff]
    %v4744 = vld [vmem:[#allocation11 + $0xea0] sm:$0xff]
    %v4745 = vld [vmem:[#allocation11 + $0xea8] sm:$0xff]
    %v4746 = vld [vmem:[#allocation11 + $0xeb0] sm:$0xff]
    %v4747 = vld [vmem:[#allocation11 + $0xeb8] sm:$0xff]
    %v4748 = vld [vmem:[#allocation11 + $0xec0] sm:$0xff]
    %v4749 = vld [vmem:[#allocation11 + $0xec8] sm:$0xff]
    %v4750 = vld [vmem:[#allocation11 + $0xed0] sm:$0xff]
    %v4751 = vld [vmem:[#allocation11 + $0xed8] sm:$0xff]
    %v4752 = vld [vmem:[#allocation11 + $0xee0] sm:$0xff]
    %v4753 = vld [vmem:[#allocation11 + $0xee8] sm:$0xff]
    %v4754 = vld [vmem:[#allocation11 + $0xef0] sm:$0xff]
    %v4755 = vld [vmem:[#allocation11 + $0xef8] sm:$0xff]
    %v4756 = vld [vmem:[#allocation11 + $0xf00] sm:$0xff]
    %v4757 = vld [vmem:[#allocation11 + $0xf08] sm:$0xff]
    %v4758 = vld [vmem:[#allocation11 + $0xf10] sm:$0xff]
    %v4759 = vld [vmem:[#allocation11 + $0xf18] sm:$0xff]
    %v4760 = vld [vmem:[#allocation11 + $0xf20] sm:$0xff]
    %v4761 = vld [vmem:[#allocation11 + $0xf28] sm:$0xff]
    %v4762 = vld [vmem:[#allocation11 + $0xf30] sm:$0xff]
    %v4763 = vld [vmem:[#allocation11 + $0xf38] sm:$0xff]
    %v4764 = vld [vmem:[#allocation11 + $0xf40] sm:$0xff]
    %v4765 = vld [vmem:[#allocation11 + $0xf48] sm:$0xff]
    %v4766 = vld [vmem:[#allocation11 + $0xf50] sm:$0xff]
    %v4767 = vld [vmem:[#allocation11 + $0xf58] sm:$0xff]
    %v4768 = vld [vmem:[#allocation11 + $0xf60] sm:$0xff]
    %v4769 = vld [vmem:[#allocation11 + $0xf68] sm:$0xff]
    %v4770 = vld [vmem:[#allocation11 + $0xf70] sm:$0xff]
    %v4771 = vld [vmem:[#allocation11 + $0xf78] sm:$0xff]
    %v4772 = vld [vmem:[#allocation11 + $0xf80] sm:$0xff]
    %v4773 = vld [vmem:[#allocation11 + $0xf88] sm:$0xff]
    %v4774 = vld [vmem:[#allocation11 + $0xf90] sm:$0xff]
    %v4775 = vld [vmem:[#allocation11 + $0xf98] sm:$0xff]
    %v4776 = vld [vmem:[#allocation11 + $0xfa0] sm:$0xff]
    %v4777 = vld [vmem:[#allocation11 + $0xfa8] sm:$0xff]
    %v4778 = vld [vmem:[#allocation11 + $0xfb0] sm:$0xff]
    %v4779 = vld [vmem:[#allocation11 + $0xfb8] sm:$0xff]
    %v4780 = vld [vmem:[#allocation11 + $0xfc0] sm:$0xff]
    %v4781 = vld [vmem:[#allocation11 + $0xfc8] sm:$0xff]
    %v4782 = vld [vmem:[#allocation11 + $0xfd0] sm:$0xff]
    %v4783 = vld [vmem:[#allocation11 + $0xfd8] sm:$0xff]
    %v4784 = vld [vmem:[#allocation11 + $0xfe0] sm:$0xff]
    %v4785 = vld [vmem:[#allocation11 + $0xfe8] sm:$0xff]
    %v4786 = vld [vmem:[#allocation11 + $0xff0] sm:$0xff]
    %v4787 = vld [vmem:[#allocation11 + $0xff8] sm:$0xff]
    %v4788 = vld [vmem:[#allocation13] sm:$0xff]
    %v4790 = vlaneseq
    %v4791 = vshrl.u32 %v4790, 7
    %v4792 = vsub.s32 0, %v4791
    %v4793 = vrot.slane %v4788, %v4792
    %v4794 = vlaneseq
    %v4795 = vshrl.u32 %v4794, 7
    %v4796 = vsub.s32 1, %v4795
    %v4797 = vrot.slane %v4788, %v4796
    %v4798 = vlaneseq
    %v4799 = vshrl.u32 %v4798, 7
    %v4800 = vsub.s32 2, %v4799
    %v4801 = vrot.slane %v4788, %v4800
    %v4802 = vlaneseq
    %v4803 = vshrl.u32 %v4802, 7
    %v4804 = vsub.s32 3, %v4803
    %v4805 = vrot.slane %v4788, %v4804
    %v4806 = vlaneseq
    %v4807 = vshrl.u32 %v4806, 7
    %v4808 = vsub.s32 4, %v4807
    %v4809 = vrot.slane %v4788, %v4808
    %v4810 = vlaneseq
    %v4811 = vshrl.u32 %v4810, 7
    %v4812 = vsub.s32 5, %v4811
    %v4813 = vrot.slane %v4788, %v4812
    %v4814 = vlaneseq
    %v4815 = vshrl.u32 %v4814, 7
    %v4816 = vsub.s32 6, %v4815
    %v4817 = vrot.slane %v4788, %v4816
    %v4818 = vlaneseq
    %v4819 = vshrl.u32 %v4818, 7
    %v4820 = vsub.s32 7, %v4819
    %v4821 = vrot.slane %v4788, %v4820
    %v5342 = vunpack.c.l.b16 %v4276
    %v5343 = vunpack.c.h.b16 %v4276
    %v5344 = vunpack.c.l.b16 %v4277
    %v5345 = vunpack.c.h.b16 %v4277
    %v5346 = vunpack.c.l.b16 %v4278
    %v5347 = vunpack.c.h.b16 %v4278
    %v5348 = vunpack.c.l.b16 %v4279
    %v5349 = vunpack.c.h.b16 %v4279
    %v5350 = vunpack.c.l.b16 %v4280
    %v5351 = vunpack.c.h.b16 %v4280
    %v5352 = vunpack.c.l.b16 %v4281
    %v5353 = vunpack.c.h.b16 %v4281
    %v5354 = vunpack.c.l.b16 %v4282
    %v5355 = vunpack.c.h.b16 %v4282
    %v5356 = vunpack.c.l.b16 %v4283
    %v5357 = vunpack.c.h.b16 %v4283
    %v5358 = vunpack.c.l.b16 %v4284
    %v5359 = vunpack.c.h.b16 %v4284
    %v5360 = vunpack.c.l.b16 %v4285
    %v5361 = vunpack.c.h.b16 %v4285
    %v5362 = vunpack.c.l.b16 %v4286
    %v5363 = vunpack.c.h.b16 %v4286
    %v5364 = vunpack.c.l.b16 %v4287
    %v5365 = vunpack.c.h.b16 %v4287
    %v5366 = vunpack.c.l.b16 %v4288
    %v5367 = vunpack.c.h.b16 %v4288
    %v5368 = vunpack.c.l.b16 %v4289
    %v5369 = vunpack.c.h.b16 %v4289
    %v5370 = vunpack.c.l.b16 %v4290
    %v5371 = vunpack.c.h.b16 %v4290
    %v5372 = vunpack.c.l.b16 %v4291
    %v5373 = vunpack.c.h.b16 %v4291
    %v5374 = vunpack.c.l.b16 %v4292
    %v5375 = vunpack.c.h.b16 %v4292
    %v5376 = vunpack.c.l.b16 %v4293
    %v5377 = vunpack.c.h.b16 %v4293
    %v5378 = vunpack.c.l.b16 %v4294
    %v5379 = vunpack.c.h.b16 %v4294
    %v5380 = vunpack.c.l.b16 %v4295
    %v5381 = vunpack.c.h.b16 %v4295
    %v5382 = vunpack.c.l.b16 %v4296
    %v5383 = vunpack.c.h.b16 %v4296
    %v5384 = vunpack.c.l.b16 %v4297
    %v5385 = vunpack.c.h.b16 %v4297
    %v5386 = vunpack.c.l.b16 %v4298
    %v5387 = vunpack.c.h.b16 %v4298
    %v5388 = vunpack.c.l.b16 %v4299
    %v5389 = vunpack.c.h.b16 %v4299
    %v5390 = vunpack.c.l.b16 %v4300
    %v5391 = vunpack.c.h.b16 %v4300
    %v5392 = vunpack.c.l.b16 %v4301
    %v5393 = vunpack.c.h.b16 %v4301
    %v5394 = vunpack.c.l.b16 %v4302
    %v5395 = vunpack.c.h.b16 %v4302
    %v5396 = vunpack.c.l.b16 %v4303
    %v5397 = vunpack.c.h.b16 %v4303
    %v5398 = vunpack.c.l.b16 %v4304
    %v5399 = vunpack.c.h.b16 %v4304
    %v5400 = vunpack.c.l.b16 %v4305
    %v5401 = vunpack.c.h.b16 %v4305
    %v5402 = vunpack.c.l.b16 %v4306
    %v5403 = vunpack.c.h.b16 %v4306
    %v5404 = vunpack.c.l.b16 %v4307
    %v5405 = vunpack.c.h.b16 %v4307
    %v5406 = vunpack.c.l.b16 %v4308
    %v5407 = vunpack.c.h.b16 %v4308
    %v5408 = vunpack.c.l.b16 %v4309
    %v5409 = vunpack.c.h.b16 %v4309
    %v5410 = vunpack.c.l.b16 %v4310
    %v5411 = vunpack.c.h.b16 %v4310
    %v5412 = vunpack.c.l.b16 %v4311
    %v5413 = vunpack.c.h.b16 %v4311
    %v5414 = vunpack.c.l.b16 %v4312
    %v5415 = vunpack.c.h.b16 %v4312
    %v5416 = vunpack.c.l.b16 %v4313
    %v5417 = vunpack.c.h.b16 %v4313
    %v5418 = vunpack.c.l.b16 %v4314
    %v5419 = vunpack.c.h.b16 %v4314
    %v5420 = vunpack.c.l.b16 %v4315
    %v5421 = vunpack.c.h.b16 %v4315
    %v5422 = vunpack.c.l.b16 %v4316
    %v5423 = vunpack.c.h.b16 %v4316
    %v5424 = vunpack.c.l.b16 %v4317
    %v5425 = vunpack.c.h.b16 %v4317
    %v5426 = vunpack.c.l.b16 %v4318
    %v5427 = vunpack.c.h.b16 %v4318
    %v5428 = vunpack.c.l.b16 %v4319
    %v5429 = vunpack.c.h.b16 %v4319
    %v5430 = vunpack.c.l.b16 %v4320
    %v5431 = vunpack.c.h.b16 %v4320
    %v5432 = vunpack.c.l.b16 %v4321
    %v5433 = vunpack.c.h.b16 %v4321
    %v5434 = vunpack.c.l.b16 %v4322
    %v5435 = vunpack.c.h.b16 %v4322
    %v5436 = vunpack.c.l.b16 %v4323
    %v5437 = vunpack.c.h.b16 %v4323
    %v5438 = vunpack.c.l.b16 %v4324
    %v5439 = vunpack.c.h.b16 %v4324
    %v5440 = vunpack.c.l.b16 %v4325
    %v5441 = vunpack.c.h.b16 %v4325
    %v5442 = vunpack.c.l.b16 %v4326
    %v5443 = vunpack.c.h.b16 %v4326
    %v5444 = vunpack.c.l.b16 %v4327
    %v5445 = vunpack.c.h.b16 %v4327
    %v5446 = vunpack.c.l.b16 %v4328
    %v5447 = vunpack.c.h.b16 %v4328
    %v5448 = vunpack.c.l.b16 %v4329
    %v5449 = vunpack.c.h.b16 %v4329
    %v5450 = vunpack.c.l.b16 %v4330
    %v5451 = vunpack.c.h.b16 %v4330
    %v5452 = vunpack.c.l.b16 %v4331
    %v5453 = vunpack.c.h.b16 %v4331
    %v5454 = vunpack.c.l.b16 %v4332
    %v5455 = vunpack.c.h.b16 %v4332
    %v5456 = vunpack.c.l.b16 %v4333
    %v5457 = vunpack.c.h.b16 %v4333
    %v5458 = vunpack.c.l.b16 %v4334
    %v5459 = vunpack.c.h.b16 %v4334
    %v5460 = vunpack.c.l.b16 %v4335
    %v5461 = vunpack.c.h.b16 %v4335
    %v5462 = vunpack.c.l.b16 %v4336
    %v5463 = vunpack.c.h.b16 %v4336
    %v5464 = vunpack.c.l.b16 %v4337
    %v5465 = vunpack.c.h.b16 %v4337
    %v5466 = vunpack.c.l.b16 %v4338
    %v5467 = vunpack.c.h.b16 %v4338
    %v5468 = vunpack.c.l.b16 %v4339
    %v5469 = vunpack.c.h.b16 %v4339
    %v5470 = vunpack.c.l.b16 %v4340
    %v5471 = vunpack.c.h.b16 %v4340
    %v5472 = vunpack.c.l.b16 %v4341
    %v5473 = vunpack.c.h.b16 %v4341
    %v5474 = vunpack.c.l.b16 %v4342
    %v5475 = vunpack.c.h.b16 %v4342
    %v5476 = vunpack.c.l.b16 %v4343
    %v5477 = vunpack.c.h.b16 %v4343
    %v5478 = vunpack.c.l.b16 %v4344
    %v5479 = vunpack.c.h.b16 %v4344
    %v5480 = vunpack.c.l.b16 %v4345
    %v5481 = vunpack.c.h.b16 %v4345
    %v5482 = vunpack.c.l.b16 %v4346
    %v5483 = vunpack.c.h.b16 %v4346
    %v5484 = vunpack.c.l.b16 %v4347
    %v5485 = vunpack.c.h.b16 %v4347
    %v5486 = vunpack.c.l.b16 %v4348
    %v5487 = vunpack.c.h.b16 %v4348
    %v5488 = vunpack.c.l.b16 %v4349
    %v5489 = vunpack.c.h.b16 %v4349
    %v5490 = vunpack.c.l.b16 %v4350
    %v5491 = vunpack.c.h.b16 %v4350
    %v5492 = vunpack.c.l.b16 %v4351
    %v5493 = vunpack.c.h.b16 %v4351
    %v5494 = vunpack.c.l.b16 %v4352
    %v5495 = vunpack.c.h.b16 %v4352
    %v5496 = vunpack.c.l.b16 %v4353
    %v5497 = vunpack.c.h.b16 %v4353
    %v5498 = vunpack.c.l.b16 %v4354
    %v5499 = vunpack.c.h.b16 %v4354
    %v5500 = vunpack.c.l.b16 %v4355
    %v5501 = vunpack.c.h.b16 %v4355
    %v5502 = vunpack.c.l.b16 %v4356
    %v5503 = vunpack.c.h.b16 %v4356
    %v5504 = vunpack.c.l.b16 %v4357
    %v5505 = vunpack.c.h.b16 %v4357
    %v5506 = vunpack.c.l.b16 %v4358
    %v5507 = vunpack.c.h.b16 %v4358
    %v5508 = vunpack.c.l.b16 %v4359
    %v5509 = vunpack.c.h.b16 %v4359
    %v5510 = vunpack.c.l.b16 %v4360
    %v5511 = vunpack.c.h.b16 %v4360
    %v5512 = vunpack.c.l.b16 %v4361
    %v5513 = vunpack.c.h.b16 %v4361
    %v5514 = vunpack.c.l.b16 %v4362
    %v5515 = vunpack.c.h.b16 %v4362
    %v5516 = vunpack.c.l.b16 %v4363
    %v5517 = vunpack.c.h.b16 %v4363
    %v5518 = vunpack.c.l.b16 %v4364
    %v5519 = vunpack.c.h.b16 %v4364
    %v5520 = vunpack.c.l.b16 %v4365
    %v5521 = vunpack.c.h.b16 %v4365
    %v5522 = vunpack.c.l.b16 %v4366
    %v5523 = vunpack.c.h.b16 %v4366
    %v5524 = vunpack.c.l.b16 %v4367
    %v5525 = vunpack.c.h.b16 %v4367
    %v5526 = vunpack.c.l.b16 %v4368
    %v5527 = vunpack.c.h.b16 %v4368
    %v5528 = vunpack.c.l.b16 %v4369
    %v5529 = vunpack.c.h.b16 %v4369
    %v5530 = vunpack.c.l.b16 %v4370
    %v5531 = vunpack.c.h.b16 %v4370
    %v5532 = vunpack.c.l.b16 %v4371
    %v5533 = vunpack.c.h.b16 %v4371
    %v5534 = vunpack.c.l.b16 %v4372
    %v5535 = vunpack.c.h.b16 %v4372
    %v5536 = vunpack.c.l.b16 %v4373
    %v5537 = vunpack.c.h.b16 %v4373
    %v5538 = vunpack.c.l.b16 %v4374
    %v5539 = vunpack.c.h.b16 %v4374
    %v5540 = vunpack.c.l.b16 %v4375
    %v5541 = vunpack.c.h.b16 %v4375
    %v5542 = vunpack.c.l.b16 %v4376
    %v5543 = vunpack.c.h.b16 %v4376
    %v5544 = vunpack.c.l.b16 %v4377
    %v5545 = vunpack.c.h.b16 %v4377
    %v5546 = vunpack.c.l.b16 %v4378
    %v5547 = vunpack.c.h.b16 %v4378
    %v5548 = vunpack.c.l.b16 %v4379
    %v5549 = vunpack.c.h.b16 %v4379
    %v5550 = vunpack.c.l.b16 %v4380
    %v5551 = vunpack.c.h.b16 %v4380
    %v5552 = vunpack.c.l.b16 %v4381
    %v5553 = vunpack.c.h.b16 %v4381
    %v5554 = vunpack.c.l.b16 %v4382
    %v5555 = vunpack.c.h.b16 %v4382
    %v5556 = vunpack.c.l.b16 %v4383
    %v5557 = vunpack.c.h.b16 %v4383
    %v5558 = vunpack.c.l.b16 %v4384
    %v5559 = vunpack.c.h.b16 %v4384
    %v5560 = vunpack.c.l.b16 %v4385
    %v5561 = vunpack.c.h.b16 %v4385
    %v5562 = vunpack.c.l.b16 %v4386
    %v5563 = vunpack.c.h.b16 %v4386
    %v5564 = vunpack.c.l.b16 %v4387
    %v5565 = vunpack.c.h.b16 %v4387
    %v5566 = vunpack.c.l.b16 %v4388
    %v5567 = vunpack.c.h.b16 %v4388
    %v5568 = vunpack.c.l.b16 %v4389
    %v5569 = vunpack.c.h.b16 %v4389
    %v5570 = vunpack.c.l.b16 %v4390
    %v5571 = vunpack.c.h.b16 %v4390
    %v5572 = vunpack.c.l.b16 %v4391
    %v5573 = vunpack.c.h.b16 %v4391
    %v5574 = vunpack.c.l.b16 %v4392
    %v5575 = vunpack.c.h.b16 %v4392
    %v5576 = vunpack.c.l.b16 %v4393
    %v5577 = vunpack.c.h.b16 %v4393
    %v5578 = vunpack.c.l.b16 %v4394
    %v5579 = vunpack.c.h.b16 %v4394
    %v5580 = vunpack.c.l.b16 %v4395
    %v5581 = vunpack.c.h.b16 %v4395
    %v5582 = vunpack.c.l.b16 %v4396
    %v5583 = vunpack.c.h.b16 %v4396
    %v5584 = vunpack.c.l.b16 %v4397
    %v5585 = vunpack.c.h.b16 %v4397
    %v5586 = vunpack.c.l.b16 %v4398
    %v5587 = vunpack.c.h.b16 %v4398
    %v5588 = vunpack.c.l.b16 %v4399
    %v5589 = vunpack.c.h.b16 %v4399
    %v5590 = vunpack.c.l.b16 %v4400
    %v5591 = vunpack.c.h.b16 %v4400
    %v5592 = vunpack.c.l.b16 %v4401
    %v5593 = vunpack.c.h.b16 %v4401
    %v5594 = vunpack.c.l.b16 %v4402
    %v5595 = vunpack.c.h.b16 %v4402
    %v5596 = vunpack.c.l.b16 %v4403
    %v5597 = vunpack.c.h.b16 %v4403
    %v5598 = vunpack.c.l.b16 %v4404
    %v5599 = vunpack.c.h.b16 %v4404
    %v5600 = vunpack.c.l.b16 %v4405
    %v5601 = vunpack.c.h.b16 %v4405
    %v5602 = vunpack.c.l.b16 %v4406
    %v5603 = vunpack.c.h.b16 %v4406
    %v5604 = vunpack.c.l.b16 %v4407
    %v5605 = vunpack.c.h.b16 %v4407
    %v5606 = vunpack.c.l.b16 %v4408
    %v5607 = vunpack.c.h.b16 %v4408
    %v5608 = vunpack.c.l.b16 %v4409
    %v5609 = vunpack.c.h.b16 %v4409
    %v5610 = vunpack.c.l.b16 %v4410
    %v5611 = vunpack.c.h.b16 %v4410
    %v5612 = vunpack.c.l.b16 %v4411
    %v5613 = vunpack.c.h.b16 %v4411
    %v5614 = vunpack.c.l.b16 %v4412
    %v5615 = vunpack.c.h.b16 %v4412
    %v5616 = vunpack.c.l.b16 %v4413
    %v5617 = vunpack.c.h.b16 %v4413
    %v5618 = vunpack.c.l.b16 %v4414
    %v5619 = vunpack.c.h.b16 %v4414
    %v5620 = vunpack.c.l.b16 %v4415
    %v5621 = vunpack.c.h.b16 %v4415
    %v5622 = vunpack.c.l.b16 %v4416
    %v5623 = vunpack.c.h.b16 %v4416
    %v5624 = vunpack.c.l.b16 %v4417
    %v5625 = vunpack.c.h.b16 %v4417
    %v5626 = vunpack.c.l.b16 %v4418
    %v5627 = vunpack.c.h.b16 %v4418
    %v5628 = vunpack.c.l.b16 %v4419
    %v5629 = vunpack.c.h.b16 %v4419
    %v5630 = vunpack.c.l.b16 %v4420
    %v5631 = vunpack.c.h.b16 %v4420
    %v5632 = vunpack.c.l.b16 %v4421
    %v5633 = vunpack.c.h.b16 %v4421
    %v5634 = vunpack.c.l.b16 %v4422
    %v5635 = vunpack.c.h.b16 %v4422
    %v5636 = vunpack.c.l.b16 %v4423
    %v5637 = vunpack.c.h.b16 %v4423
    %v5638 = vunpack.c.l.b16 %v4424
    %v5639 = vunpack.c.h.b16 %v4424
    %v5640 = vunpack.c.l.b16 %v4425
    %v5641 = vunpack.c.h.b16 %v4425
    %v5642 = vunpack.c.l.b16 %v4426
    %v5643 = vunpack.c.h.b16 %v4426
    %v5644 = vunpack.c.l.b16 %v4427
    %v5645 = vunpack.c.h.b16 %v4427
    %v5646 = vunpack.c.l.b16 %v4428
    %v5647 = vunpack.c.h.b16 %v4428
    %v5648 = vunpack.c.l.b16 %v4429
    %v5649 = vunpack.c.h.b16 %v4429
    %v5650 = vunpack.c.l.b16 %v4430
    %v5651 = vunpack.c.h.b16 %v4430
    %v5652 = vunpack.c.l.b16 %v4431
    %v5653 = vunpack.c.h.b16 %v4431
    %v5654 = vunpack.c.l.b16 %v4432
    %v5655 = vunpack.c.h.b16 %v4432
    %v5656 = vunpack.c.l.b16 %v4433
    %v5657 = vunpack.c.h.b16 %v4433
    %v5658 = vunpack.c.l.b16 %v4434
    %v5659 = vunpack.c.h.b16 %v4434
    %v5660 = vunpack.c.l.b16 %v4435
    %v5661 = vunpack.c.h.b16 %v4435
    %v5662 = vunpack.c.l.b16 %v4436
    %v5663 = vunpack.c.h.b16 %v4436
    %v5664 = vunpack.c.l.b16 %v4437
    %v5665 = vunpack.c.h.b16 %v4437
    %v5666 = vunpack.c.l.b16 %v4438
    %v5667 = vunpack.c.h.b16 %v4438
    %v5668 = vunpack.c.l.b16 %v4439
    %v5669 = vunpack.c.h.b16 %v4439
    %v5670 = vunpack.c.l.b16 %v4440
    %v5671 = vunpack.c.h.b16 %v4440
    %v5672 = vunpack.c.l.b16 %v4441
    %v5673 = vunpack.c.h.b16 %v4441
    %v5674 = vunpack.c.l.b16 %v4442
    %v5675 = vunpack.c.h.b16 %v4442
    %v5676 = vunpack.c.l.b16 %v4443
    %v5677 = vunpack.c.h.b16 %v4443
    %v5678 = vunpack.c.l.b16 %v4444
    %v5679 = vunpack.c.h.b16 %v4444
    %v5680 = vunpack.c.l.b16 %v4445
    %v5681 = vunpack.c.h.b16 %v4445
    %v5682 = vunpack.c.l.b16 %v4446
    %v5683 = vunpack.c.h.b16 %v4446
    %v5684 = vunpack.c.l.b16 %v4447
    %v5685 = vunpack.c.h.b16 %v4447
    %v5686 = vunpack.c.l.b16 %v4448
    %v5687 = vunpack.c.h.b16 %v4448
    %v5688 = vunpack.c.l.b16 %v4449
    %v5689 = vunpack.c.h.b16 %v4449
    %v5690 = vunpack.c.l.b16 %v4450
    %v5691 = vunpack.c.h.b16 %v4450
    %v5692 = vunpack.c.l.b16 %v4451
    %v5693 = vunpack.c.h.b16 %v4451
    %v5694 = vunpack.c.l.b16 %v4452
    %v5695 = vunpack.c.h.b16 %v4452
    %v5696 = vunpack.c.l.b16 %v4453
    %v5697 = vunpack.c.h.b16 %v4453
    %v5698 = vunpack.c.l.b16 %v4454
    %v5699 = vunpack.c.h.b16 %v4454
    %v5700 = vunpack.c.l.b16 %v4455
    %v5701 = vunpack.c.h.b16 %v4455
    %v5702 = vunpack.c.l.b16 %v4456
    %v5703 = vunpack.c.h.b16 %v4456
    %v5704 = vunpack.c.l.b16 %v4457
    %v5705 = vunpack.c.h.b16 %v4457
    %v5706 = vunpack.c.l.b16 %v4458
    %v5707 = vunpack.c.h.b16 %v4458
    %v5708 = vunpack.c.l.b16 %v4459
    %v5709 = vunpack.c.h.b16 %v4459
    %v5710 = vunpack.c.l.b16 %v4460
    %v5711 = vunpack.c.h.b16 %v4460
    %v5712 = vunpack.c.l.b16 %v4461
    %v5713 = vunpack.c.h.b16 %v4461
    %v5714 = vunpack.c.l.b16 %v4462
    %v5715 = vunpack.c.h.b16 %v4462
    %v5716 = vunpack.c.l.b16 %v4463
    %v5717 = vunpack.c.h.b16 %v4463
    %v5718 = vunpack.c.l.b16 %v4464
    %v5719 = vunpack.c.h.b16 %v4464
    %v5720 = vunpack.c.l.b16 %v4465
    %v5721 = vunpack.c.h.b16 %v4465
    %v5722 = vunpack.c.l.b16 %v4466
    %v5723 = vunpack.c.h.b16 %v4466
    %v5724 = vunpack.c.l.b16 %v4467
    %v5725 = vunpack.c.h.b16 %v4467
    %v5726 = vunpack.c.l.b16 %v4468
    %v5727 = vunpack.c.h.b16 %v4468
    %v5728 = vunpack.c.l.b16 %v4469
    %v5729 = vunpack.c.h.b16 %v4469
    %v5730 = vunpack.c.l.b16 %v4470
    %v5731 = vunpack.c.h.b16 %v4470
    %v5732 = vunpack.c.l.b16 %v4471
    %v5733 = vunpack.c.h.b16 %v4471
    %v5734 = vunpack.c.l.b16 %v4472
    %v5735 = vunpack.c.h.b16 %v4472
    %v5736 = vunpack.c.l.b16 %v4473
    %v5737 = vunpack.c.h.b16 %v4473
    %v5738 = vunpack.c.l.b16 %v4474
    %v5739 = vunpack.c.h.b16 %v4474
    %v5740 = vunpack.c.l.b16 %v4475
    %v5741 = vunpack.c.h.b16 %v4475
    %v5742 = vunpack.c.l.b16 %v4476
    %v5743 = vunpack.c.h.b16 %v4476
    %v5744 = vunpack.c.l.b16 %v4477
    %v5745 = vunpack.c.h.b16 %v4477
    %v5746 = vunpack.c.l.b16 %v4478
    %v5747 = vunpack.c.h.b16 %v4478
    %v5748 = vunpack.c.l.b16 %v4479
    %v5749 = vunpack.c.h.b16 %v4479
    %v5750 = vunpack.c.l.b16 %v4480
    %v5751 = vunpack.c.h.b16 %v4480
    %v5752 = vunpack.c.l.b16 %v4481
    %v5753 = vunpack.c.h.b16 %v4481
    %v5754 = vunpack.c.l.b16 %v4482
    %v5755 = vunpack.c.h.b16 %v4482
    %v5756 = vunpack.c.l.b16 %v4483
    %v5757 = vunpack.c.h.b16 %v4483
    %v5758 = vunpack.c.l.b16 %v4484
    %v5759 = vunpack.c.h.b16 %v4484
    %v5760 = vunpack.c.l.b16 %v4485
    %v5761 = vunpack.c.h.b16 %v4485
    %v5762 = vunpack.c.l.b16 %v4486
    %v5763 = vunpack.c.h.b16 %v4486
    %v5764 = vunpack.c.l.b16 %v4487
    %v5765 = vunpack.c.h.b16 %v4487
    %v5766 = vunpack.c.l.b16 %v4488
    %v5767 = vunpack.c.h.b16 %v4488
    %v5768 = vunpack.c.l.b16 %v4489
    %v5769 = vunpack.c.h.b16 %v4489
    %v5770 = vunpack.c.l.b16 %v4490
    %v5771 = vunpack.c.h.b16 %v4490
    %v5772 = vunpack.c.l.b16 %v4491
    %v5773 = vunpack.c.h.b16 %v4491
    %v5774 = vunpack.c.l.b16 %v4492
    %v5775 = vunpack.c.h.b16 %v4492
    %v5776 = vunpack.c.l.b16 %v4493
    %v5777 = vunpack.c.h.b16 %v4493
    %v5778 = vunpack.c.l.b16 %v4494
    %v5779 = vunpack.c.h.b16 %v4494
    %v5780 = vunpack.c.l.b16 %v4495
    %v5781 = vunpack.c.h.b16 %v4495
    %v5782 = vunpack.c.l.b16 %v4496
    %v5783 = vunpack.c.h.b16 %v4496
    %v5784 = vunpack.c.l.b16 %v4497
    %v5785 = vunpack.c.h.b16 %v4497
    %v5786 = vunpack.c.l.b16 %v4498
    %v5787 = vunpack.c.h.b16 %v4498
    %v5788 = vunpack.c.l.b16 %v4499
    %v5789 = vunpack.c.h.b16 %v4499
    %v5790 = vunpack.c.l.b16 %v4500
    %v5791 = vunpack.c.h.b16 %v4500
    %v5792 = vunpack.c.l.b16 %v4501
    %v5793 = vunpack.c.h.b16 %v4501
    %v5794 = vunpack.c.l.b16 %v4502
    %v5795 = vunpack.c.h.b16 %v4502
    %v5796 = vunpack.c.l.b16 %v4503
    %v5797 = vunpack.c.h.b16 %v4503
    %v5798 = vunpack.c.l.b16 %v4504
    %v5799 = vunpack.c.h.b16 %v4504
    %v5800 = vunpack.c.l.b16 %v4505
    %v5801 = vunpack.c.h.b16 %v4505
    %v5802 = vunpack.c.l.b16 %v4506
    %v5803 = vunpack.c.h.b16 %v4506
    %v5804 = vunpack.c.l.b16 %v4507
    %v5805 = vunpack.c.h.b16 %v4507
    %v5806 = vunpack.c.l.b16 %v4508
    %v5807 = vunpack.c.h.b16 %v4508
    %v5808 = vunpack.c.l.b16 %v4509
    %v5809 = vunpack.c.h.b16 %v4509
    %v5810 = vunpack.c.l.b16 %v4510
    %v5811 = vunpack.c.h.b16 %v4510
    %v5812 = vunpack.c.l.b16 %v4511
    %v5813 = vunpack.c.h.b16 %v4511
    %v5814 = vunpack.c.l.b16 %v4512
    %v5815 = vunpack.c.h.b16 %v4512
    %v5816 = vunpack.c.l.b16 %v4513
    %v5817 = vunpack.c.h.b16 %v4513
    %v5818 = vunpack.c.l.b16 %v4514
    %v5819 = vunpack.c.h.b16 %v4514
    %v5820 = vunpack.c.l.b16 %v4515
    %v5821 = vunpack.c.h.b16 %v4515
    %v5822 = vunpack.c.l.b16 %v4516
    %v5823 = vunpack.c.h.b16 %v4516
    %v5824 = vunpack.c.l.b16 %v4517
    %v5825 = vunpack.c.h.b16 %v4517
    %v5826 = vunpack.c.l.b16 %v4518
    %v5827 = vunpack.c.h.b16 %v4518
    %v5828 = vunpack.c.l.b16 %v4519
    %v5829 = vunpack.c.h.b16 %v4519
    %v5830 = vunpack.c.l.b16 %v4520
    %v5831 = vunpack.c.h.b16 %v4520
    %v5832 = vunpack.c.l.b16 %v4521
    %v5833 = vunpack.c.h.b16 %v4521
    %v5834 = vunpack.c.l.b16 %v4522
    %v5835 = vunpack.c.h.b16 %v4522
    %v5836 = vunpack.c.l.b16 %v4523
    %v5837 = vunpack.c.h.b16 %v4523
    %v5838 = vunpack.c.l.b16 %v4524
    %v5839 = vunpack.c.h.b16 %v4524
    %v5840 = vunpack.c.l.b16 %v4525
    %v5841 = vunpack.c.h.b16 %v4525
    %v5842 = vunpack.c.l.b16 %v4526
    %v5843 = vunpack.c.h.b16 %v4526
    %v5844 = vunpack.c.l.b16 %v4527
    %v5845 = vunpack.c.h.b16 %v4527
    %v5846 = vunpack.c.l.b16 %v4528
    %v5847 = vunpack.c.h.b16 %v4528
    %v5848 = vunpack.c.l.b16 %v4529
    %v5849 = vunpack.c.h.b16 %v4529
    %v5850 = vunpack.c.l.b16 %v4530
    %v5851 = vunpack.c.h.b16 %v4530
    %v5852 = vunpack.c.l.b16 %v4531
    %v5853 = vunpack.c.h.b16 %v4531
    %v5854 = vunpack.c.l.b16 %v4532
    %v5855 = vunpack.c.h.b16 %v4532
    %v5856 = vunpack.c.l.b16 %v4533
    %v5857 = vunpack.c.h.b16 %v4533
    %v5858 = vunpack.c.l.b16 %v4534
    %v5859 = vunpack.c.h.b16 %v4534
    %v5860 = vunpack.c.l.b16 %v4535
    %v5861 = vunpack.c.h.b16 %v4535
    %v5862 = vunpack.c.l.b16 %v4536
    %v5863 = vunpack.c.h.b16 %v4536
    %v5864 = vunpack.c.l.b16 %v4537
    %v5865 = vunpack.c.h.b16 %v4537
    %v5866 = vunpack.c.l.b16 %v4538
    %v5867 = vunpack.c.h.b16 %v4538
    %v5868 = vunpack.c.l.b16 %v4539
    %v5869 = vunpack.c.h.b16 %v4539
    %v5870 = vunpack.c.l.b16 %v4540
    %v5871 = vunpack.c.h.b16 %v4540
    %v5872 = vunpack.c.l.b16 %v4541
    %v5873 = vunpack.c.h.b16 %v4541
    %v5874 = vunpack.c.l.b16 %v4542
    %v5875 = vunpack.c.h.b16 %v4542
    %v5876 = vunpack.c.l.b16 %v4543
    %v5877 = vunpack.c.h.b16 %v4543
    %v5878 = vunpack.c.l.b16 %v4544
    %v5879 = vunpack.c.h.b16 %v4544
    %v5880 = vunpack.c.l.b16 %v4545
    %v5881 = vunpack.c.h.b16 %v4545
    %v5882 = vunpack.c.l.b16 %v4546
    %v5883 = vunpack.c.h.b16 %v4546
    %v5884 = vunpack.c.l.b16 %v4547
    %v5885 = vunpack.c.h.b16 %v4547
    %v5886 = vunpack.c.l.b16 %v4548
    %v5887 = vunpack.c.h.b16 %v4548
    %v5888 = vunpack.c.l.b16 %v4549
    %v5889 = vunpack.c.h.b16 %v4549
    %v5890 = vunpack.c.l.b16 %v4550
    %v5891 = vunpack.c.h.b16 %v4550
    %v5892 = vunpack.c.l.b16 %v4551
    %v5893 = vunpack.c.h.b16 %v4551
    %v5894 = vunpack.c.l.b16 %v4552
    %v5895 = vunpack.c.h.b16 %v4552
    %v5896 = vunpack.c.l.b16 %v4553
    %v5897 = vunpack.c.h.b16 %v4553
    %v5898 = vunpack.c.l.b16 %v4554
    %v5899 = vunpack.c.h.b16 %v4554
    %v5900 = vunpack.c.l.b16 %v4555
    %v5901 = vunpack.c.h.b16 %v4555
    %v5902 = vunpack.c.l.b16 %v4556
    %v5903 = vunpack.c.h.b16 %v4556
    %v5904 = vunpack.c.l.b16 %v4557
    %v5905 = vunpack.c.h.b16 %v4557
    %v5906 = vunpack.c.l.b16 %v4558
    %v5907 = vunpack.c.h.b16 %v4558
    %v5908 = vunpack.c.l.b16 %v4559
    %v5909 = vunpack.c.h.b16 %v4559
    %v5910 = vunpack.c.l.b16 %v4560
    %v5911 = vunpack.c.h.b16 %v4560
    %v5912 = vunpack.c.l.b16 %v4561
    %v5913 = vunpack.c.h.b16 %v4561
    %v5914 = vunpack.c.l.b16 %v4562
    %v5915 = vunpack.c.h.b16 %v4562
    %v5916 = vunpack.c.l.b16 %v4563
    %v5917 = vunpack.c.h.b16 %v4563
    %v5918 = vunpack.c.l.b16 %v4564
    %v5919 = vunpack.c.h.b16 %v4564
    %v5920 = vunpack.c.l.b16 %v4565
    %v5921 = vunpack.c.h.b16 %v4565
    %v5922 = vunpack.c.l.b16 %v4566
    %v5923 = vunpack.c.h.b16 %v4566
    %v5924 = vunpack.c.l.b16 %v4567
    %v5925 = vunpack.c.h.b16 %v4567
    %v5926 = vunpack.c.l.b16 %v4568
    %v5927 = vunpack.c.h.b16 %v4568
    %v5928 = vunpack.c.l.b16 %v4569
    %v5929 = vunpack.c.h.b16 %v4569
    %v5930 = vunpack.c.l.b16 %v4570
    %v5931 = vunpack.c.h.b16 %v4570
    %v5932 = vunpack.c.l.b16 %v4571
    %v5933 = vunpack.c.h.b16 %v4571
    %v5934 = vunpack.c.l.b16 %v4572
    %v5935 = vunpack.c.h.b16 %v4572
    %v5936 = vunpack.c.l.b16 %v4573
    %v5937 = vunpack.c.h.b16 %v4573
    %v5938 = vunpack.c.l.b16 %v4574
    %v5939 = vunpack.c.h.b16 %v4574
    %v5940 = vunpack.c.l.b16 %v4575
    %v5941 = vunpack.c.h.b16 %v4575
    %v5942 = vunpack.c.l.b16 %v4576
    %v5943 = vunpack.c.h.b16 %v4576
    %v5944 = vunpack.c.l.b16 %v4577
    %v5945 = vunpack.c.h.b16 %v4577
    %v5946 = vunpack.c.l.b16 %v4578
    %v5947 = vunpack.c.h.b16 %v4578
    %v5948 = vunpack.c.l.b16 %v4579
    %v5949 = vunpack.c.h.b16 %v4579
    %v5950 = vunpack.c.l.b16 %v4580
    %v5951 = vunpack.c.h.b16 %v4580
    %v5952 = vunpack.c.l.b16 %v4581
    %v5953 = vunpack.c.h.b16 %v4581
    %v5954 = vunpack.c.l.b16 %v4582
    %v5955 = vunpack.c.h.b16 %v4582
    %v5956 = vunpack.c.l.b16 %v4583
    %v5957 = vunpack.c.h.b16 %v4583
    %v5958 = vunpack.c.l.b16 %v4584
    %v5959 = vunpack.c.h.b16 %v4584
    %v5960 = vunpack.c.l.b16 %v4585
    %v5961 = vunpack.c.h.b16 %v4585
    %v5962 = vunpack.c.l.b16 %v4586
    %v5963 = vunpack.c.h.b16 %v4586
    %v5964 = vunpack.c.l.b16 %v4587
    %v5965 = vunpack.c.h.b16 %v4587
    %v5966 = vunpack.c.l.b16 %v4588
    %v5967 = vunpack.c.h.b16 %v4588
    %v5968 = vunpack.c.l.b16 %v4589
    %v5969 = vunpack.c.h.b16 %v4589
    %v5970 = vunpack.c.l.b16 %v4590
    %v5971 = vunpack.c.h.b16 %v4590
    %v5972 = vunpack.c.l.b16 %v4591
    %v5973 = vunpack.c.h.b16 %v4591
    %v5974 = vunpack.c.l.b16 %v4592
    %v5975 = vunpack.c.h.b16 %v4592
    %v5976 = vunpack.c.l.b16 %v4593
    %v5977 = vunpack.c.h.b16 %v4593
    %v5978 = vunpack.c.l.b16 %v4594
    %v5979 = vunpack.c.h.b16 %v4594
    %v5980 = vunpack.c.l.b16 %v4595
    %v5981 = vunpack.c.h.b16 %v4595
    %v5982 = vunpack.c.l.b16 %v4596
    %v5983 = vunpack.c.h.b16 %v4596
    %v5984 = vunpack.c.l.b16 %v4597
    %v5985 = vunpack.c.h.b16 %v4597
    %v5986 = vunpack.c.l.b16 %v4598
    %v5987 = vunpack.c.h.b16 %v4598
    %v5988 = vunpack.c.l.b16 %v4599
    %v5989 = vunpack.c.h.b16 %v4599
    %v5990 = vunpack.c.l.b16 %v4600
    %v5991 = vunpack.c.h.b16 %v4600
    %v5992 = vunpack.c.l.b16 %v4601
    %v5993 = vunpack.c.h.b16 %v4601
    %v5994 = vunpack.c.l.b16 %v4602
    %v5995 = vunpack.c.h.b16 %v4602
    %v5996 = vunpack.c.l.b16 %v4603
    %v5997 = vunpack.c.h.b16 %v4603
    %v5998 = vunpack.c.l.b16 %v4604
    %v5999 = vunpack.c.h.b16 %v4604
    %v6000 = vunpack.c.l.b16 %v4605
    %v6001 = vunpack.c.h.b16 %v4605
    %v6002 = vunpack.c.l.b16 %v4606
    %v6003 = vunpack.c.h.b16 %v4606
    %v6004 = vunpack.c.l.b16 %v4607
    %v6005 = vunpack.c.h.b16 %v4607
    %v6006 = vunpack.c.l.b16 %v4608
    %v6007 = vunpack.c.h.b16 %v4608
    %v6008 = vunpack.c.l.b16 %v4609
    %v6009 = vunpack.c.h.b16 %v4609
    %v6010 = vunpack.c.l.b16 %v4610
    %v6011 = vunpack.c.h.b16 %v4610
    %v6012 = vunpack.c.l.b16 %v4611
    %v6013 = vunpack.c.h.b16 %v4611
    %v6014 = vunpack.c.l.b16 %v4612
    %v6015 = vunpack.c.h.b16 %v4612
    %v6016 = vunpack.c.l.b16 %v4613
    %v6017 = vunpack.c.h.b16 %v4613
    %v6018 = vunpack.c.l.b16 %v4614
    %v6019 = vunpack.c.h.b16 %v4614
    %v6020 = vunpack.c.l.b16 %v4615
    %v6021 = vunpack.c.h.b16 %v4615
    %v6022 = vunpack.c.l.b16 %v4616
    %v6023 = vunpack.c.h.b16 %v4616
    %v6024 = vunpack.c.l.b16 %v4617
    %v6025 = vunpack.c.h.b16 %v4617
    %v6026 = vunpack.c.l.b16 %v4618
    %v6027 = vunpack.c.h.b16 %v4618
    %v6028 = vunpack.c.l.b16 %v4619
    %v6029 = vunpack.c.h.b16 %v4619
    %v6030 = vunpack.c.l.b16 %v4620
    %v6031 = vunpack.c.h.b16 %v4620
    %v6032 = vunpack.c.l.b16 %v4621
    %v6033 = vunpack.c.h.b16 %v4621
    %v6034 = vunpack.c.l.b16 %v4622
    %v6035 = vunpack.c.h.b16 %v4622
    %v6036 = vunpack.c.l.b16 %v4623
    %v6037 = vunpack.c.h.b16 %v4623
    %v6038 = vunpack.c.l.b16 %v4624
    %v6039 = vunpack.c.h.b16 %v4624
    %v6040 = vunpack.c.l.b16 %v4625
    %v6041 = vunpack.c.h.b16 %v4625
    %v6042 = vunpack.c.l.b16 %v4626
    %v6043 = vunpack.c.h.b16 %v4626
    %v6044 = vunpack.c.l.b16 %v4627
    %v6045 = vunpack.c.h.b16 %v4627
    %v6046 = vunpack.c.l.b16 %v4628
    %v6047 = vunpack.c.h.b16 %v4628
    %v6048 = vunpack.c.l.b16 %v4629
    %v6049 = vunpack.c.h.b16 %v4629
    %v6050 = vunpack.c.l.b16 %v4630
    %v6051 = vunpack.c.h.b16 %v4630
    %v6052 = vunpack.c.l.b16 %v4631
    %v6053 = vunpack.c.h.b16 %v4631
    %v6054 = vunpack.c.l.b16 %v4632
    %v6055 = vunpack.c.h.b16 %v4632
    %v6056 = vunpack.c.l.b16 %v4633
    %v6057 = vunpack.c.h.b16 %v4633
    %v6058 = vunpack.c.l.b16 %v4634
    %v6059 = vunpack.c.h.b16 %v4634
    %v6060 = vunpack.c.l.b16 %v4635
    %v6061 = vunpack.c.h.b16 %v4635
    %v6062 = vunpack.c.l.b16 %v4636
    %v6063 = vunpack.c.h.b16 %v4636
    %v6064 = vunpack.c.l.b16 %v4637
    %v6065 = vunpack.c.h.b16 %v4637
    %v6066 = vunpack.c.l.b16 %v4638
    %v6067 = vunpack.c.h.b16 %v4638
    %v6068 = vunpack.c.l.b16 %v4639
    %v6069 = vunpack.c.h.b16 %v4639
    %v6070 = vunpack.c.l.b16 %v4640
    %v6071 = vunpack.c.h.b16 %v4640
    %v6072 = vunpack.c.l.b16 %v4641
    %v6073 = vunpack.c.h.b16 %v4641
    %v6074 = vunpack.c.l.b16 %v4642
    %v6075 = vunpack.c.h.b16 %v4642
    %v6076 = vunpack.c.l.b16 %v4643
    %v6077 = vunpack.c.h.b16 %v4643
    %v6078 = vunpack.c.l.b16 %v4644
    %v6079 = vunpack.c.h.b16 %v4644
    %v6080 = vunpack.c.l.b16 %v4645
    %v6081 = vunpack.c.h.b16 %v4645
    %v6082 = vunpack.c.l.b16 %v4646
    %v6083 = vunpack.c.h.b16 %v4646
    %v6084 = vunpack.c.l.b16 %v4647
    %v6085 = vunpack.c.h.b16 %v4647
    %v6086 = vunpack.c.l.b16 %v4648
    %v6087 = vunpack.c.h.b16 %v4648
    %v6088 = vunpack.c.l.b16 %v4649
    %v6089 = vunpack.c.h.b16 %v4649
    %v6090 = vunpack.c.l.b16 %v4650
    %v6091 = vunpack.c.h.b16 %v4650
    %v6092 = vunpack.c.l.b16 %v4651
    %v6093 = vunpack.c.h.b16 %v4651
    %v6094 = vunpack.c.l.b16 %v4652
    %v6095 = vunpack.c.h.b16 %v4652
    %v6096 = vunpack.c.l.b16 %v4653
    %v6097 = vunpack.c.h.b16 %v4653
    %v6098 = vunpack.c.l.b16 %v4654
    %v6099 = vunpack.c.h.b16 %v4654
    %v6100 = vunpack.c.l.b16 %v4655
    %v6101 = vunpack.c.h.b16 %v4655
    %v6102 = vunpack.c.l.b16 %v4656
    %v6103 = vunpack.c.h.b16 %v4656
    %v6104 = vunpack.c.l.b16 %v4657
    %v6105 = vunpack.c.h.b16 %v4657
    %v6106 = vunpack.c.l.b16 %v4658
    %v6107 = vunpack.c.h.b16 %v4658
    %v6108 = vunpack.c.l.b16 %v4659
    %v6109 = vunpack.c.h.b16 %v4659
    %v6110 = vunpack.c.l.b16 %v4660
    %v6111 = vunpack.c.h.b16 %v4660
    %v6112 = vunpack.c.l.b16 %v4661
    %v6113 = vunpack.c.h.b16 %v4661
    %v6114 = vunpack.c.l.b16 %v4662
    %v6115 = vunpack.c.h.b16 %v4662
    %v6116 = vunpack.c.l.b16 %v4663
    %v6117 = vunpack.c.h.b16 %v4663
    %v6118 = vunpack.c.l.b16 %v4664
    %v6119 = vunpack.c.h.b16 %v4664
    %v6120 = vunpack.c.l.b16 %v4665
    %v6121 = vunpack.c.h.b16 %v4665
    %v6122 = vunpack.c.l.b16 %v4666
    %v6123 = vunpack.c.h.b16 %v4666
    %v6124 = vunpack.c.l.b16 %v4667
    %v6125 = vunpack.c.h.b16 %v4667
    %v6126 = vunpack.c.l.b16 %v4668
    %v6127 = vunpack.c.h.b16 %v4668
    %v6128 = vunpack.c.l.b16 %v4669
    %v6129 = vunpack.c.h.b16 %v4669
    %v6130 = vunpack.c.l.b16 %v4670
    %v6131 = vunpack.c.h.b16 %v4670
    %v6132 = vunpack.c.l.b16 %v4671
    %v6133 = vunpack.c.h.b16 %v4671
    %v6134 = vunpack.c.l.b16 %v4672
    %v6135 = vunpack.c.h.b16 %v4672
    %v6136 = vunpack.c.l.b16 %v4673
    %v6137 = vunpack.c.h.b16 %v4673
    %v6138 = vunpack.c.l.b16 %v4674
    %v6139 = vunpack.c.h.b16 %v4674
    %v6140 = vunpack.c.l.b16 %v4675
    %v6141 = vunpack.c.h.b16 %v4675
    %v6142 = vunpack.c.l.b16 %v4676
    %v6143 = vunpack.c.h.b16 %v4676
    %v6144 = vunpack.c.l.b16 %v4677
    %v6145 = vunpack.c.h.b16 %v4677
    %v6146 = vunpack.c.l.b16 %v4678
    %v6147 = vunpack.c.h.b16 %v4678
    %v6148 = vunpack.c.l.b16 %v4679
    %v6149 = vunpack.c.h.b16 %v4679
    %v6150 = vunpack.c.l.b16 %v4680
    %v6151 = vunpack.c.h.b16 %v4680
    %v6152 = vunpack.c.l.b16 %v4681
    %v6153 = vunpack.c.h.b16 %v4681
    %v6154 = vunpack.c.l.b16 %v4682
    %v6155 = vunpack.c.h.b16 %v4682
    %v6156 = vunpack.c.l.b16 %v4683
    %v6157 = vunpack.c.h.b16 %v4683
    %v6158 = vunpack.c.l.b16 %v4684
    %v6159 = vunpack.c.h.b16 %v4684
    %v6160 = vunpack.c.l.b16 %v4685
    %v6161 = vunpack.c.h.b16 %v4685
    %v6162 = vunpack.c.l.b16 %v4686
    %v6163 = vunpack.c.h.b16 %v4686
    %v6164 = vunpack.c.l.b16 %v4687
    %v6165 = vunpack.c.h.b16 %v4687
    %v6166 = vunpack.c.l.b16 %v4688
    %v6167 = vunpack.c.h.b16 %v4688
    %v6168 = vunpack.c.l.b16 %v4689
    %v6169 = vunpack.c.h.b16 %v4689
    %v6170 = vunpack.c.l.b16 %v4690
    %v6171 = vunpack.c.h.b16 %v4690
    %v6172 = vunpack.c.l.b16 %v4691
    %v6173 = vunpack.c.h.b16 %v4691
    %v6174 = vunpack.c.l.b16 %v4692
    %v6175 = vunpack.c.h.b16 %v4692
    %v6176 = vunpack.c.l.b16 %v4693
    %v6177 = vunpack.c.h.b16 %v4693
    %v6178 = vunpack.c.l.b16 %v4694
    %v6179 = vunpack.c.h.b16 %v4694
    %v6180 = vunpack.c.l.b16 %v4695
    %v6181 = vunpack.c.h.b16 %v4695
    %v6182 = vunpack.c.l.b16 %v4696
    %v6183 = vunpack.c.h.b16 %v4696
    %v6184 = vunpack.c.l.b16 %v4697
    %v6185 = vunpack.c.h.b16 %v4697
    %v6186 = vunpack.c.l.b16 %v4698
    %v6187 = vunpack.c.h.b16 %v4698
    %v6188 = vunpack.c.l.b16 %v4699
    %v6189 = vunpack.c.h.b16 %v4699
    %v6190 = vunpack.c.l.b16 %v4700
    %v6191 = vunpack.c.h.b16 %v4700
    %v6192 = vunpack.c.l.b16 %v4701
    %v6193 = vunpack.c.h.b16 %v4701
    %v6194 = vunpack.c.l.b16 %v4702
    %v6195 = vunpack.c.h.b16 %v4702
    %v6196 = vunpack.c.l.b16 %v4703
    %v6197 = vunpack.c.h.b16 %v4703
    %v6198 = vunpack.c.l.b16 %v4704
    %v6199 = vunpack.c.h.b16 %v4704
    %v6200 = vunpack.c.l.b16 %v4705
    %v6201 = vunpack.c.h.b16 %v4705
    %v6202 = vunpack.c.l.b16 %v4706
    %v6203 = vunpack.c.h.b16 %v4706
    %v6204 = vunpack.c.l.b16 %v4707
    %v6205 = vunpack.c.h.b16 %v4707
    %v6206 = vunpack.c.l.b16 %v4708
    %v6207 = vunpack.c.h.b16 %v4708
    %v6208 = vunpack.c.l.b16 %v4709
    %v6209 = vunpack.c.h.b16 %v4709
    %v6210 = vunpack.c.l.b16 %v4710
    %v6211 = vunpack.c.h.b16 %v4710
    %v6212 = vunpack.c.l.b16 %v4711
    %v6213 = vunpack.c.h.b16 %v4711
    %v6214 = vunpack.c.l.b16 %v4712
    %v6215 = vunpack.c.h.b16 %v4712
    %v6216 = vunpack.c.l.b16 %v4713
    %v6217 = vunpack.c.h.b16 %v4713
    %v6218 = vunpack.c.l.b16 %v4714
    %v6219 = vunpack.c.h.b16 %v4714
    %v6220 = vunpack.c.l.b16 %v4715
    %v6221 = vunpack.c.h.b16 %v4715
    %v6222 = vunpack.c.l.b16 %v4716
    %v6223 = vunpack.c.h.b16 %v4716
    %v6224 = vunpack.c.l.b16 %v4717
    %v6225 = vunpack.c.h.b16 %v4717
    %v6226 = vunpack.c.l.b16 %v4718
    %v6227 = vunpack.c.h.b16 %v4718
    %v6228 = vunpack.c.l.b16 %v4719
    %v6229 = vunpack.c.h.b16 %v4719
    %v6230 = vunpack.c.l.b16 %v4720
    %v6231 = vunpack.c.h.b16 %v4720
    %v6232 = vunpack.c.l.b16 %v4721
    %v6233 = vunpack.c.h.b16 %v4721
    %v6234 = vunpack.c.l.b16 %v4722
    %v6235 = vunpack.c.h.b16 %v4722
    %v6236 = vunpack.c.l.b16 %v4723
    %v6237 = vunpack.c.h.b16 %v4723
    %v6238 = vunpack.c.l.b16 %v4724
    %v6239 = vunpack.c.h.b16 %v4724
    %v6240 = vunpack.c.l.b16 %v4725
    %v6241 = vunpack.c.h.b16 %v4725
    %v6242 = vunpack.c.l.b16 %v4726
    %v6243 = vunpack.c.h.b16 %v4726
    %v6244 = vunpack.c.l.b16 %v4727
    %v6245 = vunpack.c.h.b16 %v4727
    %v6246 = vunpack.c.l.b16 %v4728
    %v6247 = vunpack.c.h.b16 %v4728
    %v6248 = vunpack.c.l.b16 %v4729
    %v6249 = vunpack.c.h.b16 %v4729
    %v6250 = vunpack.c.l.b16 %v4730
    %v6251 = vunpack.c.h.b16 %v4730
    %v6252 = vunpack.c.l.b16 %v4731
    %v6253 = vunpack.c.h.b16 %v4731
    %v6254 = vunpack.c.l.b16 %v4732
    %v6255 = vunpack.c.h.b16 %v4732
    %v6256 = vunpack.c.l.b16 %v4733
    %v6257 = vunpack.c.h.b16 %v4733
    %v6258 = vunpack.c.l.b16 %v4734
    %v6259 = vunpack.c.h.b16 %v4734
    %v6260 = vunpack.c.l.b16 %v4735
    %v6261 = vunpack.c.h.b16 %v4735
    %v6262 = vunpack.c.l.b16 %v4736
    %v6263 = vunpack.c.h.b16 %v4736
    %v6264 = vunpack.c.l.b16 %v4737
    %v6265 = vunpack.c.h.b16 %v4737
    %v6266 = vunpack.c.l.b16 %v4738
    %v6267 = vunpack.c.h.b16 %v4738
    %v6268 = vunpack.c.l.b16 %v4739
    %v6269 = vunpack.c.h.b16 %v4739
    %v6270 = vunpack.c.l.b16 %v4740
    %v6271 = vunpack.c.h.b16 %v4740
    %v6272 = vunpack.c.l.b16 %v4741
    %v6273 = vunpack.c.h.b16 %v4741
    %v6274 = vunpack.c.l.b16 %v4742
    %v6275 = vunpack.c.h.b16 %v4742
    %v6276 = vunpack.c.l.b16 %v4743
    %v6277 = vunpack.c.h.b16 %v4743
    %v6278 = vunpack.c.l.b16 %v4744
    %v6279 = vunpack.c.h.b16 %v4744
    %v6280 = vunpack.c.l.b16 %v4745
    %v6281 = vunpack.c.h.b16 %v4745
    %v6282 = vunpack.c.l.b16 %v4746
    %v6283 = vunpack.c.h.b16 %v4746
    %v6284 = vunpack.c.l.b16 %v4747
    %v6285 = vunpack.c.h.b16 %v4747
    %v6286 = vunpack.c.l.b16 %v4748
    %v6287 = vunpack.c.h.b16 %v4748
    %v6288 = vunpack.c.l.b16 %v4749
    %v6289 = vunpack.c.h.b16 %v4749
    %v6290 = vunpack.c.l.b16 %v4750
    %v6291 = vunpack.c.h.b16 %v4750
    %v6292 = vunpack.c.l.b16 %v4751
    %v6293 = vunpack.c.h.b16 %v4751
    %v6294 = vunpack.c.l.b16 %v4752
    %v6295 = vunpack.c.h.b16 %v4752
    %v6296 = vunpack.c.l.b16 %v4753
    %v6297 = vunpack.c.h.b16 %v4753
    %v6298 = vunpack.c.l.b16 %v4754
    %v6299 = vunpack.c.h.b16 %v4754
    %v6300 = vunpack.c.l.b16 %v4755
    %v6301 = vunpack.c.h.b16 %v4755
    %v6302 = vunpack.c.l.b16 %v4756
    %v6303 = vunpack.c.h.b16 %v4756
    %v6304 = vunpack.c.l.b16 %v4757
    %v6305 = vunpack.c.h.b16 %v4757
    %v6306 = vunpack.c.l.b16 %v4758
    %v6307 = vunpack.c.h.b16 %v4758
    %v6308 = vunpack.c.l.b16 %v4759
    %v6309 = vunpack.c.h.b16 %v4759
    %v6310 = vunpack.c.l.b16 %v4760
    %v6311 = vunpack.c.h.b16 %v4760
    %v6312 = vunpack.c.l.b16 %v4761
    %v6313 = vunpack.c.h.b16 %v4761
    %v6314 = vunpack.c.l.b16 %v4762
    %v6315 = vunpack.c.h.b16 %v4762
    %v6316 = vunpack.c.l.b16 %v4763
    %v6317 = vunpack.c.h.b16 %v4763
    %v6318 = vunpack.c.l.b16 %v4764
    %v6319 = vunpack.c.h.b16 %v4764
    %v6320 = vunpack.c.l.b16 %v4765
    %v6321 = vunpack.c.h.b16 %v4765
    %v6322 = vunpack.c.l.b16 %v4766
    %v6323 = vunpack.c.h.b16 %v4766
    %v6324 = vunpack.c.l.b16 %v4767
    %v6325 = vunpack.c.h.b16 %v4767
    %v6326 = vunpack.c.l.b16 %v4768
    %v6327 = vunpack.c.h.b16 %v4768
    %v6328 = vunpack.c.l.b16 %v4769
    %v6329 = vunpack.c.h.b16 %v4769
    %v6330 = vunpack.c.l.b16 %v4770
    %v6331 = vunpack.c.h.b16 %v4770
    %v6332 = vunpack.c.l.b16 %v4771
    %v6333 = vunpack.c.h.b16 %v4771
    %v6334 = vunpack.c.l.b16 %v4772
    %v6335 = vunpack.c.h.b16 %v4772
    %v6336 = vunpack.c.l.b16 %v4773
    %v6337 = vunpack.c.h.b16 %v4773
    %v6338 = vunpack.c.l.b16 %v4774
    %v6339 = vunpack.c.h.b16 %v4774
    %v6340 = vunpack.c.l.b16 %v4775
    %v6341 = vunpack.c.h.b16 %v4775
    %v6342 = vunpack.c.l.b16 %v4776
    %v6343 = vunpack.c.h.b16 %v4776
    %v6344 = vunpack.c.l.b16 %v4777
    %v6345 = vunpack.c.h.b16 %v4777
    %v6346 = vunpack.c.l.b16 %v4778
    %v6347 = vunpack.c.h.b16 %v4778
    %v6348 = vunpack.c.l.b16 %v4779
    %v6349 = vunpack.c.h.b16 %v4779
    %v6350 = vunpack.c.l.b16 %v4780
    %v6351 = vunpack.c.h.b16 %v4780
    %v6352 = vunpack.c.l.b16 %v4781
    %v6353 = vunpack.c.h.b16 %v4781
    %v6354 = vunpack.c.l.b16 %v4782
    %v6355 = vunpack.c.h.b16 %v4782
    %v6356 = vunpack.c.l.b16 %v4783
    %v6357 = vunpack.c.h.b16 %v4783
    %v6358 = vunpack.c.l.b16 %v4784
    %v6359 = vunpack.c.h.b16 %v4784
    %v6360 = vunpack.c.l.b16 %v4785
    %v6361 = vunpack.c.h.b16 %v4785
    %v6362 = vunpack.c.l.b16 %v4786
    %v6363 = vunpack.c.h.b16 %v4786
    %v6364 = vunpack.c.l.b16 %v4787
    %v6365 = vunpack.c.h.b16 %v4787
    %v6366 = vpack.c.b16 %v5350, %v5342
    %v6367 = vpack.c.b16 %v5351, %v5343
    %v6368 = vpack.c.b16 %v5352, %v5344
    %v6369 = vpack.c.b16 %v5353, %v5345
    %v6370 = vpack.c.b16 %v5354, %v5346
    %v6371 = vpack.c.b16 %v5355, %v5347
    %v6372 = vpack.c.b16 %v5356, %v5348
    %v6373 = vpack.c.b16 %v5357, %v5349
    %v6374 = vpack.c.b16 %v5366, %v5358
    %v6375 = vpack.c.b16 %v5367, %v5359
    %v6376 = vpack.c.b16 %v5368, %v5360
    %v6377 = vpack.c.b16 %v5369, %v5361
    %v6378 = vpack.c.b16 %v5370, %v5362
    %v6379 = vpack.c.b16 %v5371, %v5363
    %v6380 = vpack.c.b16 %v5372, %v5364
    %v6381 = vpack.c.b16 %v5373, %v5365
    %v6382 = vpack.c.b16 %v5382, %v5374
    %v6383 = vpack.c.b16 %v5383, %v5375
    %v6384 = vpack.c.b16 %v5384, %v5376
    %v6385 = vpack.c.b16 %v5385, %v5377
    %v6386 = vpack.c.b16 %v5386, %v5378
    %v6387 = vpack.c.b16 %v5387, %v5379
    %v6388 = vpack.c.b16 %v5388, %v5380
    %v6389 = vpack.c.b16 %v5389, %v5381
    %v6390 = vpack.c.b16 %v5398, %v5390
    %v6391 = vpack.c.b16 %v5399, %v5391
    %v6392 = vpack.c.b16 %v5400, %v5392
    %v6393 = vpack.c.b16 %v5401, %v5393
    %v6394 = vpack.c.b16 %v5402, %v5394
    %v6395 = vpack.c.b16 %v5403, %v5395
    %v6396 = vpack.c.b16 %v5404, %v5396
    %v6397 = vpack.c.b16 %v5405, %v5397
    %v6398 = vpack.c.b16 %v5414, %v5406
    %v6399 = vpack.c.b16 %v5415, %v5407
    %v6400 = vpack.c.b16 %v5416, %v5408
    %v6401 = vpack.c.b16 %v5417, %v5409
    %v6402 = vpack.c.b16 %v5418, %v5410
    %v6403 = vpack.c.b16 %v5419, %v5411
    %v6404 = vpack.c.b16 %v5420, %v5412
    %v6405 = vpack.c.b16 %v5421, %v5413
    %v6406 = vpack.c.b16 %v5430, %v5422
    %v6407 = vpack.c.b16 %v5431, %v5423
    %v6408 = vpack.c.b16 %v5432, %v5424
    %v6409 = vpack.c.b16 %v5433, %v5425
    %v6410 = vpack.c.b16 %v5434, %v5426
    %v6411 = vpack.c.b16 %v5435, %v5427
    %v6412 = vpack.c.b16 %v5436, %v5428
    %v6413 = vpack.c.b16 %v5437, %v5429
    %v6414 = vpack.c.b16 %v5446, %v5438
    %v6415 = vpack.c.b16 %v5447, %v5439
    %v6416 = vpack.c.b16 %v5448, %v5440
    %v6417 = vpack.c.b16 %v5449, %v5441
    %v6418 = vpack.c.b16 %v5450, %v5442
    %v6419 = vpack.c.b16 %v5451, %v5443
    %v6420 = vpack.c.b16 %v5452, %v5444
    %v6421 = vpack.c.b16 %v5453, %v5445
    %v6422 = vpack.c.b16 %v5462, %v5454
    %v6423 = vpack.c.b16 %v5463, %v5455
    %v6424 = vpack.c.b16 %v5464, %v5456
    %v6425 = vpack.c.b16 %v5465, %v5457
    %v6426 = vpack.c.b16 %v5466, %v5458
    %v6427 = vpack.c.b16 %v5467, %v5459
    %v6428 = vpack.c.b16 %v5468, %v5460
    %v6429 = vpack.c.b16 %v5469, %v5461
    %v6430 = vpack.c.b16 %v5478, %v5470
    %v6431 = vpack.c.b16 %v5479, %v5471
    %v6432 = vpack.c.b16 %v5480, %v5472
    %v6433 = vpack.c.b16 %v5481, %v5473
    %v6434 = vpack.c.b16 %v5482, %v5474
    %v6435 = vpack.c.b16 %v5483, %v5475
    %v6436 = vpack.c.b16 %v5484, %v5476
    %v6437 = vpack.c.b16 %v5485, %v5477
    %v6438 = vpack.c.b16 %v5494, %v5486
    %v6439 = vpack.c.b16 %v5495, %v5487
    %v6440 = vpack.c.b16 %v5496, %v5488
    %v6441 = vpack.c.b16 %v5497, %v5489
    %v6442 = vpack.c.b16 %v5498, %v5490
    %v6443 = vpack.c.b16 %v5499, %v5491
    %v6444 = vpack.c.b16 %v5500, %v5492
    %v6445 = vpack.c.b16 %v5501, %v5493
    %v6446 = vpack.c.b16 %v5510, %v5502
    %v6447 = vpack.c.b16 %v5511, %v5503
    %v6448 = vpack.c.b16 %v5512, %v5504
    %v6449 = vpack.c.b16 %v5513, %v5505
    %v6450 = vpack.c.b16 %v5514, %v5506
    %v6451 = vpack.c.b16 %v5515, %v5507
    %v6452 = vpack.c.b16 %v5516, %v5508
    %v6453 = vpack.c.b16 %v5517, %v5509
    %v6454 = vpack.c.b16 %v5526, %v5518
    %v6455 = vpack.c.b16 %v5527, %v5519
    %v6456 = vpack.c.b16 %v5528, %v5520
    %v6457 = vpack.c.b16 %v5529, %v5521
    %v6458 = vpack.c.b16 %v5530, %v5522
    %v6459 = vpack.c.b16 %v5531, %v5523
    %v6460 = vpack.c.b16 %v5532, %v5524
    %v6461 = vpack.c.b16 %v5533, %v5525
    %v6462 = vpack.c.b16 %v5542, %v5534
    %v6463 = vpack.c.b16 %v5543, %v5535
    %v6464 = vpack.c.b16 %v5544, %v5536
    %v6465 = vpack.c.b16 %v5545, %v5537
    %v6466 = vpack.c.b16 %v5546, %v5538
    %v6467 = vpack.c.b16 %v5547, %v5539
    %v6468 = vpack.c.b16 %v5548, %v5540
    %v6469 = vpack.c.b16 %v5549, %v5541
    %v6470 = vpack.c.b16 %v5558, %v5550
    %v6471 = vpack.c.b16 %v5559, %v5551
    %v6472 = vpack.c.b16 %v5560, %v5552
    %v6473 = vpack.c.b16 %v5561, %v5553
    %v6474 = vpack.c.b16 %v5562, %v5554
    %v6475 = vpack.c.b16 %v5563, %v5555
    %v6476 = vpack.c.b16 %v5564, %v5556
    %v6477 = vpack.c.b16 %v5565, %v5557
    %v6478 = vpack.c.b16 %v5574, %v5566
    %v6479 = vpack.c.b16 %v5575, %v5567
    %v6480 = vpack.c.b16 %v5576, %v5568
    %v6481 = vpack.c.b16 %v5577, %v5569
    %v6482 = vpack.c.b16 %v5578, %v5570
    %v6483 = vpack.c.b16 %v5579, %v5571
    %v6484 = vpack.c.b16 %v5580, %v5572
    %v6485 = vpack.c.b16 %v5581, %v5573
    %v6486 = vpack.c.b16 %v5590, %v5582
    %v6487 = vpack.c.b16 %v5591, %v5583
    %v6488 = vpack.c.b16 %v5592, %v5584
    %v6489 = vpack.c.b16 %v5593, %v5585
    %v6490 = vpack.c.b16 %v5594, %v5586
    %v6491 = vpack.c.b16 %v5595, %v5587
    %v6492 = vpack.c.b16 %v5596, %v5588
    %v6493 = vpack.c.b16 %v5597, %v5589
    %v6494 = vpack.c.b16 %v5606, %v5598
    %v6495 = vpack.c.b16 %v5607, %v5599
    %v6496 = vpack.c.b16 %v5608, %v5600
    %v6497 = vpack.c.b16 %v5609, %v5601
    %v6498 = vpack.c.b16 %v5610, %v5602
    %v6499 = vpack.c.b16 %v5611, %v5603
    %v6500 = vpack.c.b16 %v5612, %v5604
    %v6501 = vpack.c.b16 %v5613, %v5605
    %v6502 = vpack.c.b16 %v5622, %v5614
    %v6503 = vpack.c.b16 %v5623, %v5615
    %v6504 = vpack.c.b16 %v5624, %v5616
    %v6505 = vpack.c.b16 %v5625, %v5617
    %v6506 = vpack.c.b16 %v5626, %v5618
    %v6507 = vpack.c.b16 %v5627, %v5619
    %v6508 = vpack.c.b16 %v5628, %v5620
    %v6509 = vpack.c.b16 %v5629, %v5621
    %v6510 = vpack.c.b16 %v5638, %v5630
    %v6511 = vpack.c.b16 %v5639, %v5631
    %v6512 = vpack.c.b16 %v5640, %v5632
    %v6513 = vpack.c.b16 %v5641, %v5633
    %v6514 = vpack.c.b16 %v5642, %v5634
    %v6515 = vpack.c.b16 %v5643, %v5635
    %v6516 = vpack.c.b16 %v5644, %v5636
    %v6517 = vpack.c.b16 %v5645, %v5637
    %v6518 = vpack.c.b16 %v5654, %v5646
    %v6519 = vpack.c.b16 %v5655, %v5647
    %v6520 = vpack.c.b16 %v5656, %v5648
    %v6521 = vpack.c.b16 %v5657, %v5649
    %v6522 = vpack.c.b16 %v5658, %v5650
    %v6523 = vpack.c.b16 %v5659, %v5651
    %v6524 = vpack.c.b16 %v5660, %v5652
    %v6525 = vpack.c.b16 %v5661, %v5653
    %v6526 = vpack.c.b16 %v5670, %v5662
    %v6527 = vpack.c.b16 %v5671, %v5663
    %v6528 = vpack.c.b16 %v5672, %v5664
    %v6529 = vpack.c.b16 %v5673, %v5665
    %v6530 = vpack.c.b16 %v5674, %v5666
    %v6531 = vpack.c.b16 %v5675, %v5667
    %v6532 = vpack.c.b16 %v5676, %v5668
    %v6533 = vpack.c.b16 %v5677, %v5669
    %v6534 = vpack.c.b16 %v5686, %v5678
    %v6535 = vpack.c.b16 %v5687, %v5679
    %v6536 = vpack.c.b16 %v5688, %v5680
    %v6537 = vpack.c.b16 %v5689, %v5681
    %v6538 = vpack.c.b16 %v5690, %v5682
    %v6539 = vpack.c.b16 %v5691, %v5683
    %v6540 = vpack.c.b16 %v5692, %v5684
    %v6541 = vpack.c.b16 %v5693, %v5685
    %v6542 = vpack.c.b16 %v5702, %v5694
    %v6543 = vpack.c.b16 %v5703, %v5695
    %v6544 = vpack.c.b16 %v5704, %v5696
    %v6545 = vpack.c.b16 %v5705, %v5697
    %v6546 = vpack.c.b16 %v5706, %v5698
    %v6547 = vpack.c.b16 %v5707, %v5699
    %v6548 = vpack.c.b16 %v5708, %v5700
    %v6549 = vpack.c.b16 %v5709, %v5701
    %v6550 = vpack.c.b16 %v5718, %v5710
    %v6551 = vpack.c.b16 %v5719, %v5711
    %v6552 = vpack.c.b16 %v5720, %v5712
    %v6553 = vpack.c.b16 %v5721, %v5713
    %v6554 = vpack.c.b16 %v5722, %v5714
    %v6555 = vpack.c.b16 %v5723, %v5715
    %v6556 = vpack.c.b16 %v5724, %v5716
    %v6557 = vpack.c.b16 %v5725, %v5717
    %v6558 = vpack.c.b16 %v5734, %v5726
    %v6559 = vpack.c.b16 %v5735, %v5727
    %v6560 = vpack.c.b16 %v5736, %v5728
    %v6561 = vpack.c.b16 %v5737, %v5729
    %v6562 = vpack.c.b16 %v5738, %v5730
    %v6563 = vpack.c.b16 %v5739, %v5731
    %v6564 = vpack.c.b16 %v5740, %v5732
    %v6565 = vpack.c.b16 %v5741, %v5733
    %v6566 = vpack.c.b16 %v5750, %v5742
    %v6567 = vpack.c.b16 %v5751, %v5743
    %v6568 = vpack.c.b16 %v5752, %v5744
    %v6569 = vpack.c.b16 %v5753, %v5745
    %v6570 = vpack.c.b16 %v5754, %v5746
    %v6571 = vpack.c.b16 %v5755, %v5747
    %v6572 = vpack.c.b16 %v5756, %v5748
    %v6573 = vpack.c.b16 %v5757, %v5749
    %v6574 = vpack.c.b16 %v5766, %v5758
    %v6575 = vpack.c.b16 %v5767, %v5759
    %v6576 = vpack.c.b16 %v5768, %v5760
    %v6577 = vpack.c.b16 %v5769, %v5761
    %v6578 = vpack.c.b16 %v5770, %v5762
    %v6579 = vpack.c.b16 %v5771, %v5763
    %v6580 = vpack.c.b16 %v5772, %v5764
    %v6581 = vpack.c.b16 %v5773, %v5765
    %v6582 = vpack.c.b16 %v5782, %v5774
    %v6583 = vpack.c.b16 %v5783, %v5775
    %v6584 = vpack.c.b16 %v5784, %v5776
    %v6585 = vpack.c.b16 %v5785, %v5777
    %v6586 = vpack.c.b16 %v5786, %v5778
    %v6587 = vpack.c.b16 %v5787, %v5779
    %v6588 = vpack.c.b16 %v5788, %v5780
    %v6589 = vpack.c.b16 %v5789, %v5781
    %v6590 = vpack.c.b16 %v5798, %v5790
    %v6591 = vpack.c.b16 %v5799, %v5791
    %v6592 = vpack.c.b16 %v5800, %v5792
    %v6593 = vpack.c.b16 %v5801, %v5793
    %v6594 = vpack.c.b16 %v5802, %v5794
    %v6595 = vpack.c.b16 %v5803, %v5795
    %v6596 = vpack.c.b16 %v5804, %v5796
    %v6597 = vpack.c.b16 %v5805, %v5797
    %v6598 = vpack.c.b16 %v5814, %v5806
    %v6599 = vpack.c.b16 %v5815, %v5807
    %v6600 = vpack.c.b16 %v5816, %v5808
    %v6601 = vpack.c.b16 %v5817, %v5809
    %v6602 = vpack.c.b16 %v5818, %v5810
    %v6603 = vpack.c.b16 %v5819, %v5811
    %v6604 = vpack.c.b16 %v5820, %v5812
    %v6605 = vpack.c.b16 %v5821, %v5813
    %v6606 = vpack.c.b16 %v5830, %v5822
    %v6607 = vpack.c.b16 %v5831, %v5823
    %v6608 = vpack.c.b16 %v5832, %v5824
    %v6609 = vpack.c.b16 %v5833, %v5825
    %v6610 = vpack.c.b16 %v5834, %v5826
    %v6611 = vpack.c.b16 %v5835, %v5827
    %v6612 = vpack.c.b16 %v5836, %v5828
    %v6613 = vpack.c.b16 %v5837, %v5829
    %v6614 = vpack.c.b16 %v5846, %v5838
    %v6615 = vpack.c.b16 %v5847, %v5839
    %v6616 = vpack.c.b16 %v5848, %v5840
    %v6617 = vpack.c.b16 %v5849, %v5841
    %v6618 = vpack.c.b16 %v5850, %v5842
    %v6619 = vpack.c.b16 %v5851, %v5843
    %v6620 = vpack.c.b16 %v5852, %v5844
    %v6621 = vpack.c.b16 %v5853, %v5845
    %v6622 = vpack.c.b16 %v5862, %v5854
    %v6623 = vpack.c.b16 %v5863, %v5855
    %v6624 = vpack.c.b16 %v5864, %v5856
    %v6625 = vpack.c.b16 %v5865, %v5857
    %v6626 = vpack.c.b16 %v5866, %v5858
    %v6627 = vpack.c.b16 %v5867, %v5859
    %v6628 = vpack.c.b16 %v5868, %v5860
    %v6629 = vpack.c.b16 %v5869, %v5861
    %v6630 = vpack.c.b16 %v5878, %v5870
    %v6631 = vpack.c.b16 %v5879, %v5871
    %v6632 = vpack.c.b16 %v5880, %v5872
    %v6633 = vpack.c.b16 %v5881, %v5873
    %v6634 = vpack.c.b16 %v5882, %v5874
    %v6635 = vpack.c.b16 %v5883, %v5875
    %v6636 = vpack.c.b16 %v5884, %v5876
    %v6637 = vpack.c.b16 %v5885, %v5877
    %v6638 = vpack.c.b16 %v5894, %v5886
    %v6639 = vpack.c.b16 %v5895, %v5887
    %v6640 = vpack.c.b16 %v5896, %v5888
    %v6641 = vpack.c.b16 %v5897, %v5889
    %v6642 = vpack.c.b16 %v5898, %v5890
    %v6643 = vpack.c.b16 %v5899, %v5891
    %v6644 = vpack.c.b16 %v5900, %v5892
    %v6645 = vpack.c.b16 %v5901, %v5893
    %v6646 = vpack.c.b16 %v5910, %v5902
    %v6647 = vpack.c.b16 %v5911, %v5903
    %v6648 = vpack.c.b16 %v5912, %v5904
    %v6649 = vpack.c.b16 %v5913, %v5905
    %v6650 = vpack.c.b16 %v5914, %v5906
    %v6651 = vpack.c.b16 %v5915, %v5907
    %v6652 = vpack.c.b16 %v5916, %v5908
    %v6653 = vpack.c.b16 %v5917, %v5909
    %v6654 = vpack.c.b16 %v5926, %v5918
    %v6655 = vpack.c.b16 %v5927, %v5919
    %v6656 = vpack.c.b16 %v5928, %v5920
    %v6657 = vpack.c.b16 %v5929, %v5921
    %v6658 = vpack.c.b16 %v5930, %v5922
    %v6659 = vpack.c.b16 %v5931, %v5923
    %v6660 = vpack.c.b16 %v5932, %v5924
    %v6661 = vpack.c.b16 %v5933, %v5925
    %v6662 = vpack.c.b16 %v5942, %v5934
    %v6663 = vpack.c.b16 %v5943, %v5935
    %v6664 = vpack.c.b16 %v5944, %v5936
    %v6665 = vpack.c.b16 %v5945, %v5937
    %v6666 = vpack.c.b16 %v5946, %v5938
    %v6667 = vpack.c.b16 %v5947, %v5939
    %v6668 = vpack.c.b16 %v5948, %v5940
    %v6669 = vpack.c.b16 %v5949, %v5941
    %v6670 = vpack.c.b16 %v5958, %v5950
    %v6671 = vpack.c.b16 %v5959, %v5951
    %v6672 = vpack.c.b16 %v5960, %v5952
    %v6673 = vpack.c.b16 %v5961, %v5953
    %v6674 = vpack.c.b16 %v5962, %v5954
    %v6675 = vpack.c.b16 %v5963, %v5955
    %v6676 = vpack.c.b16 %v5964, %v5956
    %v6677 = vpack.c.b16 %v5965, %v5957
    %v6678 = vpack.c.b16 %v5974, %v5966
    %v6679 = vpack.c.b16 %v5975, %v5967
    %v6680 = vpack.c.b16 %v5976, %v5968
    %v6681 = vpack.c.b16 %v5977, %v5969
    %v6682 = vpack.c.b16 %v5978, %v5970
    %v6683 = vpack.c.b16 %v5979, %v5971
    %v6684 = vpack.c.b16 %v5980, %v5972
    %v6685 = vpack.c.b16 %v5981, %v5973
    %v6686 = vpack.c.b16 %v5990, %v5982
    %v6687 = vpack.c.b16 %v5991, %v5983
    %v6688 = vpack.c.b16 %v5992, %v5984
    %v6689 = vpack.c.b16 %v5993, %v5985
    %v6690 = vpack.c.b16 %v5994, %v5986
    %v6691 = vpack.c.b16 %v5995, %v5987
    %v6692 = vpack.c.b16 %v5996, %v5988
    %v6693 = vpack.c.b16 %v5997, %v5989
    %v6694 = vpack.c.b16 %v6006, %v5998
    %v6695 = vpack.c.b16 %v6007, %v5999
    %v6696 = vpack.c.b16 %v6008, %v6000
    %v6697 = vpack.c.b16 %v6009, %v6001
    %v6698 = vpack.c.b16 %v6010, %v6002
    %v6699 = vpack.c.b16 %v6011, %v6003
    %v6700 = vpack.c.b16 %v6012, %v6004
    %v6701 = vpack.c.b16 %v6013, %v6005
    %v6702 = vpack.c.b16 %v6022, %v6014
    %v6703 = vpack.c.b16 %v6023, %v6015
    %v6704 = vpack.c.b16 %v6024, %v6016
    %v6705 = vpack.c.b16 %v6025, %v6017
    %v6706 = vpack.c.b16 %v6026, %v6018
    %v6707 = vpack.c.b16 %v6027, %v6019
    %v6708 = vpack.c.b16 %v6028, %v6020
    %v6709 = vpack.c.b16 %v6029, %v6021
    %v6710 = vpack.c.b16 %v6038, %v6030
    %v6711 = vpack.c.b16 %v6039, %v6031
    %v6712 = vpack.c.b16 %v6040, %v6032
    %v6713 = vpack.c.b16 %v6041, %v6033
    %v6714 = vpack.c.b16 %v6042, %v6034
    %v6715 = vpack.c.b16 %v6043, %v6035
    %v6716 = vpack.c.b16 %v6044, %v6036
    %v6717 = vpack.c.b16 %v6045, %v6037
    %v6718 = vpack.c.b16 %v6054, %v6046
    %v6719 = vpack.c.b16 %v6055, %v6047
    %v6720 = vpack.c.b16 %v6056, %v6048
    %v6721 = vpack.c.b16 %v6057, %v6049
    %v6722 = vpack.c.b16 %v6058, %v6050
    %v6723 = vpack.c.b16 %v6059, %v6051
    %v6724 = vpack.c.b16 %v6060, %v6052
    %v6725 = vpack.c.b16 %v6061, %v6053
    %v6726 = vpack.c.b16 %v6070, %v6062
    %v6727 = vpack.c.b16 %v6071, %v6063
    %v6728 = vpack.c.b16 %v6072, %v6064
    %v6729 = vpack.c.b16 %v6073, %v6065
    %v6730 = vpack.c.b16 %v6074, %v6066
    %v6731 = vpack.c.b16 %v6075, %v6067
    %v6732 = vpack.c.b16 %v6076, %v6068
    %v6733 = vpack.c.b16 %v6077, %v6069
    %v6734 = vpack.c.b16 %v6086, %v6078
    %v6735 = vpack.c.b16 %v6087, %v6079
    %v6736 = vpack.c.b16 %v6088, %v6080
    %v6737 = vpack.c.b16 %v6089, %v6081
    %v6738 = vpack.c.b16 %v6090, %v6082
    %v6739 = vpack.c.b16 %v6091, %v6083
    %v6740 = vpack.c.b16 %v6092, %v6084
    %v6741 = vpack.c.b16 %v6093, %v6085
    %v6742 = vpack.c.b16 %v6102, %v6094
    %v6743 = vpack.c.b16 %v6103, %v6095
    %v6744 = vpack.c.b16 %v6104, %v6096
    %v6745 = vpack.c.b16 %v6105, %v6097
    %v6746 = vpack.c.b16 %v6106, %v6098
    %v6747 = vpack.c.b16 %v6107, %v6099
    %v6748 = vpack.c.b16 %v6108, %v6100
    %v6749 = vpack.c.b16 %v6109, %v6101
    %v6750 = vpack.c.b16 %v6118, %v6110
    %v6751 = vpack.c.b16 %v6119, %v6111
    %v6752 = vpack.c.b16 %v6120, %v6112
    %v6753 = vpack.c.b16 %v6121, %v6113
    %v6754 = vpack.c.b16 %v6122, %v6114
    %v6755 = vpack.c.b16 %v6123, %v6115
    %v6756 = vpack.c.b16 %v6124, %v6116
    %v6757 = vpack.c.b16 %v6125, %v6117
    %v6758 = vpack.c.b16 %v6134, %v6126
    %v6759 = vpack.c.b16 %v6135, %v6127
    %v6760 = vpack.c.b16 %v6136, %v6128
    %v6761 = vpack.c.b16 %v6137, %v6129
    %v6762 = vpack.c.b16 %v6138, %v6130
    %v6763 = vpack.c.b16 %v6139, %v6131
    %v6764 = vpack.c.b16 %v6140, %v6132
    %v6765 = vpack.c.b16 %v6141, %v6133
    %v6766 = vpack.c.b16 %v6150, %v6142
    %v6767 = vpack.c.b16 %v6151, %v6143
    %v6768 = vpack.c.b16 %v6152, %v6144
    %v6769 = vpack.c.b16 %v6153, %v6145
    %v6770 = vpack.c.b16 %v6154, %v6146
    %v6771 = vpack.c.b16 %v6155, %v6147
    %v6772 = vpack.c.b16 %v6156, %v6148
    %v6773 = vpack.c.b16 %v6157, %v6149
    %v6774 = vpack.c.b16 %v6166, %v6158
    %v6775 = vpack.c.b16 %v6167, %v6159
    %v6776 = vpack.c.b16 %v6168, %v6160
    %v6777 = vpack.c.b16 %v6169, %v6161
    %v6778 = vpack.c.b16 %v6170, %v6162
    %v6779 = vpack.c.b16 %v6171, %v6163
    %v6780 = vpack.c.b16 %v6172, %v6164
    %v6781 = vpack.c.b16 %v6173, %v6165
    %v6782 = vpack.c.b16 %v6182, %v6174
    %v6783 = vpack.c.b16 %v6183, %v6175
    %v6784 = vpack.c.b16 %v6184, %v6176
    %v6785 = vpack.c.b16 %v6185, %v6177
    %v6786 = vpack.c.b16 %v6186, %v6178
    %v6787 = vpack.c.b16 %v6187, %v6179
    %v6788 = vpack.c.b16 %v6188, %v6180
    %v6789 = vpack.c.b16 %v6189, %v6181
    %v6790 = vpack.c.b16 %v6198, %v6190
    %v6791 = vpack.c.b16 %v6199, %v6191
    %v6792 = vpack.c.b16 %v6200, %v6192
    %v6793 = vpack.c.b16 %v6201, %v6193
    %v6794 = vpack.c.b16 %v6202, %v6194
    %v6795 = vpack.c.b16 %v6203, %v6195
    %v6796 = vpack.c.b16 %v6204, %v6196
    %v6797 = vpack.c.b16 %v6205, %v6197
    %v6798 = vpack.c.b16 %v6214, %v6206
    %v6799 = vpack.c.b16 %v6215, %v6207
    %v6800 = vpack.c.b16 %v6216, %v6208
    %v6801 = vpack.c.b16 %v6217, %v6209
    %v6802 = vpack.c.b16 %v6218, %v6210
    %v6803 = vpack.c.b16 %v6219, %v6211
    %v6804 = vpack.c.b16 %v6220, %v6212
    %v6805 = vpack.c.b16 %v6221, %v6213
    %v6806 = vpack.c.b16 %v6230, %v6222
    %v6807 = vpack.c.b16 %v6231, %v6223
    %v6808 = vpack.c.b16 %v6232, %v6224
    %v6809 = vpack.c.b16 %v6233, %v6225
    %v6810 = vpack.c.b16 %v6234, %v6226
    %v6811 = vpack.c.b16 %v6235, %v6227
    %v6812 = vpack.c.b16 %v6236, %v6228
    %v6813 = vpack.c.b16 %v6237, %v6229
    %v6814 = vpack.c.b16 %v6246, %v6238
    %v6815 = vpack.c.b16 %v6247, %v6239
    %v6816 = vpack.c.b16 %v6248, %v6240
    %v6817 = vpack.c.b16 %v6249, %v6241
    %v6818 = vpack.c.b16 %v6250, %v6242
    %v6819 = vpack.c.b16 %v6251, %v6243
    %v6820 = vpack.c.b16 %v6252, %v6244
    %v6821 = vpack.c.b16 %v6253, %v6245
    %v6822 = vpack.c.b16 %v6262, %v6254
    %v6823 = vpack.c.b16 %v6263, %v6255
    %v6824 = vpack.c.b16 %v6264, %v6256
    %v6825 = vpack.c.b16 %v6265, %v6257
    %v6826 = vpack.c.b16 %v6266, %v6258
    %v6827 = vpack.c.b16 %v6267, %v6259
    %v6828 = vpack.c.b16 %v6268, %v6260
    %v6829 = vpack.c.b16 %v6269, %v6261
    %v6830 = vpack.c.b16 %v6278, %v6270
    %v6831 = vpack.c.b16 %v6279, %v6271
    %v6832 = vpack.c.b16 %v6280, %v6272
    %v6833 = vpack.c.b16 %v6281, %v6273
    %v6834 = vpack.c.b16 %v6282, %v6274
    %v6835 = vpack.c.b16 %v6283, %v6275
    %v6836 = vpack.c.b16 %v6284, %v6276
    %v6837 = vpack.c.b16 %v6285, %v6277
    %v6838 = vpack.c.b16 %v6294, %v6286
    %v6839 = vpack.c.b16 %v6295, %v6287
    %v6840 = vpack.c.b16 %v6296, %v6288
    %v6841 = vpack.c.b16 %v6297, %v6289
    %v6842 = vpack.c.b16 %v6298, %v6290
    %v6843 = vpack.c.b16 %v6299, %v6291
    %v6844 = vpack.c.b16 %v6300, %v6292
    %v6845 = vpack.c.b16 %v6301, %v6293
    %v6846 = vpack.c.b16 %v6310, %v6302
    %v6847 = vpack.c.b16 %v6311, %v6303
    %v6848 = vpack.c.b16 %v6312, %v6304
    %v6849 = vpack.c.b16 %v6313, %v6305
    %v6850 = vpack.c.b16 %v6314, %v6306
    %v6851 = vpack.c.b16 %v6315, %v6307
    %v6852 = vpack.c.b16 %v6316, %v6308
    %v6853 = vpack.c.b16 %v6317, %v6309
    %v6854 = vpack.c.b16 %v6326, %v6318
    %v6855 = vpack.c.b16 %v6327, %v6319
    %v6856 = vpack.c.b16 %v6328, %v6320
    %v6857 = vpack.c.b16 %v6329, %v6321
    %v6858 = vpack.c.b16 %v6330, %v6322
    %v6859 = vpack.c.b16 %v6331, %v6323
    %v6860 = vpack.c.b16 %v6332, %v6324
    %v6861 = vpack.c.b16 %v6333, %v6325
    %v6862 = vpack.c.b16 %v6342, %v6334
    %v6863 = vpack.c.b16 %v6343, %v6335
    %v6864 = vpack.c.b16 %v6344, %v6336
    %v6865 = vpack.c.b16 %v6345, %v6337
    %v6866 = vpack.c.b16 %v6346, %v6338
    %v6867 = vpack.c.b16 %v6347, %v6339
    %v6868 = vpack.c.b16 %v6348, %v6340
    %v6869 = vpack.c.b16 %v6349, %v6341
    %v6870 = vpack.c.b16 %v6358, %v6350
    %v6871 = vpack.c.b16 %v6359, %v6351
    %v6872 = vpack.c.b16 %v6360, %v6352
    %v6873 = vpack.c.b16 %v6361, %v6353
    %v6874 = vpack.c.b16 %v6362, %v6354
    %v6875 = vpack.c.b16 %v6363, %v6355
    %v6876 = vpack.c.b16 %v6364, %v6356
    %v6877 = vpack.c.b16 %v6365, %v6357
    %7390 = vmatprep.subr.bf16.mxu0 %v6367
    %7391 = vmatpush1.bf16.msra.mxu0 %v6366
    %7392 = vmatprep.subr.bf16.mxu0 %v6375
    %7393 = vmatpush1.bf16.msra.mxu0 %v6374
    %7394 = vmatprep.subr.bf16.mxu0 %v6383
    %7395 = vmatpush1.bf16.msra.mxu0 %v6382
    %7396 = vmatprep.subr.bf16.mxu0 %v6391
    %7397 = vmatpush1.bf16.msra.mxu0 %v6390
    %7398 = vmatprep.subr.bf16.mxu0 %v6399
    %7399 = vmatpush1.bf16.msra.mxu0 %v6398
    %7400 = vmatprep.subr.bf16.mxu0 %v6407
    %7401 = vmatpush1.bf16.msra.mxu0 %v6406
    %7402 = vmatprep.subr.bf16.mxu0 %v6415
    %7403 = vmatpush1.bf16.msra.mxu0 %v6414
    %7404 = vmatprep.subr.bf16.mxu0 %v6423
    %7405 = vmatpush1.bf16.msra.mxu0 %v6422
    %7406 = vmatprep.subr.bf16.mxu0 %v6431
    %7407 = vmatpush1.bf16.msra.mxu0 %v6430
    %7408 = vmatprep.subr.bf16.mxu0 %v6439
    %7409 = vmatpush1.bf16.msra.mxu0 %v6438
    %7410 = vmatprep.subr.bf16.mxu0 %v6447
    %7411 = vmatpush1.bf16.msra.mxu0 %v6446
    %7412 = vmatprep.subr.bf16.mxu0 %v6455
    %7413 = vmatpush1.bf16.msra.mxu0 %v6454
    %7414 = vmatprep.subr.bf16.mxu0 %v6463
    %7415 = vmatpush1.bf16.msra.mxu0 %v6462
    %7416 = vmatprep.subr.bf16.mxu0 %v6471
    %7417 = vmatpush1.bf16.msra.mxu0 %v6470
    %7418 = vmatprep.subr.bf16.mxu0 %v6479
    %7419 = vmatpush1.bf16.msra.mxu0 %v6478
    %7420 = vmatprep.subr.bf16.mxu0 %v6487
    %7421 = vmatpush1.bf16.msra.mxu0 %v6486
    %7422 = vmatprep.mubr.bf16.mxu0 %v4269
    %7423 = vmatmul.mubr.bf16.gmra.mrb[0].mxu0 %v4268
    %v7424 = vpop.f32.mrb[0].mxu0
    %v7425 = vadd.f32 %v4793, %v7424
    %v7426 = vpop.f32.mrb[0].mxu0
    %v7427 = vadd.f32 %v4797, %v7426
    %v7428 = vpop.f32.mrb[0].mxu0
    %v7429 = vpop.f32.mrb[0].mxu0
    %7430 = vdwg.mxu0
    %7431 = vmatprep.subr.bf16.mxu0 %v6495
    %7432 = vmatpush1.bf16.msra.mxu0 %v6494
    %7433 = vmatprep.subr.bf16.mxu0 %v6503
    %7434 = vmatpush1.bf16.msra.mxu0 %v6502
    %7435 = vmatprep.subr.bf16.mxu0 %v6511
    %7436 = vmatpush1.bf16.msra.mxu0 %v6510
    %7437 = vmatprep.subr.bf16.mxu0 %v6519
    %7438 = vmatpush1.bf16.msra.mxu0 %v6518
    %7439 = vmatprep.subr.bf16.mxu0 %v6527
    %7440 = vmatpush1.bf16.msra.mxu0 %v6526
    %7441 = vmatprep.subr.bf16.mxu0 %v6535
    %7442 = vmatpush1.bf16.msra.mxu0 %v6534
    %7443 = vmatprep.subr.bf16.mxu0 %v6543
    %7444 = vmatpush1.bf16.msra.mxu0 %v6542
    %7445 = vmatprep.subr.bf16.mxu0 %v6551
    %7446 = vmatpush1.bf16.msra.mxu0 %v6550
    %7447 = vmatprep.subr.bf16.mxu0 %v6559
    %7448 = vmatpush1.bf16.msra.mxu0 %v6558
    %7449 = vmatprep.subr.bf16.mxu0 %v6567
    %7450 = vmatpush1.bf16.msra.mxu0 %v6566
    %7451 = vmatprep.subr.bf16.mxu0 %v6575
    %7452 = vmatpush1.bf16.msra.mxu0 %v6574
    %7453 = vmatprep.subr.bf16.mxu0 %v6583
    %7454 = vmatpush1.bf16.msra.mxu0 %v6582
    %7455 = vmatprep.subr.bf16.mxu0 %v6591
    %7456 = vmatpush1.bf16.msra.mxu0 %v6590
    %7457 = vmatprep.subr.bf16.mxu0 %v6599
    %7458 = vmatpush1.bf16.msra.mxu0 %v6598
    %7459 = vmatprep.subr.bf16.mxu0 %v6607
    %7460 = vmatpush1.bf16.msra.mxu0 %v6606
    %7461 = vmatprep.subr.bf16.mxu0 %v6615
    %7462 = vmatpush1.bf16.msra.mxu0 %v6614
    %7463 = vmatprep.mubr.bf16.mxu0 %v4271
    %7464 = vmatmul.mubr.bf16.gmra.mrb[0].mxu0 %v4270
    %v7465 = vpop.f32.mrb[0].mxu0
    %v7466 = vadd.f32 %v7425, %v7465
    %v7467 = vpop.f32.mrb[0].mxu0
    %v7468 = vadd.f32 %v7427, %v7467
    %v7469 = vpop.f32.mrb[0].mxu0
    %v7470 = vpop.f32.mrb[0].mxu0
    %7471 = vdwg.mxu0
    %7472 = vmatprep.subr.bf16.mxu0 %v6623
    %7473 = vmatpush1.bf16.msra.mxu0 %v6622
    %7474 = vmatprep.subr.bf16.mxu0 %v6631
    %7475 = vmatpush1.bf16.msra.mxu0 %v6630
    %7476 = vmatprep.subr.bf16.mxu0 %v6639
    %7477 = vmatpush1.bf16.msra.mxu0 %v6638
    %7478 = vmatprep.subr.bf16.mxu0 %v6647
    %7479 = vmatpush1.bf16.msra.mxu0 %v6646
    %7480 = vmatprep.subr.bf16.mxu0 %v6655
    %7481 = vmatpush1.bf16.msra.mxu0 %v6654
    %7482 = vmatprep.subr.bf16.mxu0 %v6663
    %7483 = vmatpush1.bf16.msra.mxu0 %v6662
    %7484 = vmatprep.subr.bf16.mxu0 %v6671
    %7485 = vmatpush1.bf16.msra.mxu0 %v6670
    %7486 = vmatprep.subr.bf16.mxu0 %v6679
    %7487 = vmatpush1.bf16.msra.mxu0 %v6678
    %7488 = vmatprep.subr.bf16.mxu0 %v6687
    %7489 = vmatpush1.bf16.msra.mxu0 %v6686
    %7490 = vmatprep.subr.bf16.mxu0 %v6695
    %7491 = vmatpush1.bf16.msra.mxu0 %v6694
    %7492 = vmatprep.subr.bf16.mxu0 %v6703
    %7493 = vmatpush1.bf16.msra.mxu0 %v6702
    %7494 = vmatprep.subr.bf16.mxu0 %v6711
    %7495 = vmatpush1.bf16.msra.mxu0 %v6710
    %7496 = vmatprep.subr.bf16.mxu0 %v6719
    %7497 = vmatpush1.bf16.msra.mxu0 %v6718
    %7498 = vmatprep.subr.bf16.mxu0 %v6727
    %7499 = vmatpush1.bf16.msra.mxu0 %v6726
    %7500 = vmatprep.subr.bf16.mxu0 %v6735
    %7501 = vmatpush1.bf16.msra.mxu0 %v6734
    %7502 = vmatprep.subr.bf16.mxu0 %v6743
    %7503 = vmatpush1.bf16.msra.mxu0 %v6742
    %7504 = vmatprep.mubr.bf16.mxu0 %v4273
    %7505 = vmatmul.mubr.bf16.gmra.mrb[0].mxu0 %v4272
    %v7506 = vpop.f32.mrb[0].mxu0
    %v7507 = vadd.f32 %v7466, %v7506
    %v7508 = vpop.f32.mrb[0].mxu0
    %v7509 = vadd.f32 %v7468, %v7508
    %v7510 = vpop.f32.mrb[0].mxu0
    %v7511 = vpop.f32.mrb[0].mxu0
    %7512 = vdwg.mxu0
    %7513 = vmatprep.subr.bf16.mxu0 %v6751
    %7514 = vmatpush1.bf16.msra.mxu0 %v6750
    %7515 = vmatprep.subr.bf16.mxu0 %v6759
    %7516 = vmatpush1.bf16.msra.mxu0 %v6758
    %7517 = vmatprep.subr.bf16.mxu0 %v6767
    %7518 = vmatpush1.bf16.msra.mxu0 %v6766
    %7519 = vmatprep.subr.bf16.mxu0 %v6775
    %7520 = vmatpush1.bf16.msra.mxu0 %v6774
    %7521 = vmatprep.subr.bf16.mxu0 %v6783
    %7522 = vmatpush1.bf16.msra.mxu0 %v6782
    %7523 = vmatprep.subr.bf16.mxu0 %v6791
    %7524 = vmatpush1.bf16.msra.mxu0 %v6790
    %7525 = vmatprep.subr.bf16.mxu0 %v6799
    %7526 = vmatpush1.bf16.msra.mxu0 %v6798
    %7527 = vmatprep.subr.bf16.mxu0 %v6807
    %7528 = vmatpush1.bf16.msra.mxu0 %v6806
    %7529 = vmatprep.subr.bf16.mxu0 %v6815
    %7530 = vmatpush1.bf16.msra.mxu0 %v6814
    %7531 = vmatprep.subr.bf16.mxu0 %v6823
    %7532 = vmatpush1.bf16.msra.mxu0 %v6822
    %7533 = vmatprep.subr.bf16.mxu0 %v6831
    %7534 = vmatpush1.bf16.msra.mxu0 %v6830
    %7535 = vmatprep.subr.bf16.mxu0 %v6839
    %7536 = vmatpush1.bf16.msra.mxu0 %v6838
    %7537 = vmatprep.subr.bf16.mxu0 %v6847
    %7538 = vmatpush1.bf16.msra.mxu0 %v6846
    %7539 = vmatprep.subr.bf16.mxu0 %v6855
    %7540 = vmatpush1.bf16.msra.mxu0 %v6854
    %7541 = vmatprep.subr.bf16.mxu0 %v6863
    %7542 = vmatpush1.bf16.msra.mxu0 %v6862
    %7543 = vmatprep.subr.bf16.mxu0 %v6871
    %7544 = vmatpush1.bf16.msra.mxu0 %v6870
    %7545 = vmatprep.mubr.bf16.mxu0 %v4275
    %7546 = vmatmul.mubr.bf16.gmra.mrb[0].mxu0 %v4274
    %v7547 = vpop.f32.mrb[0].mxu0
    %v7548 = vadd.f32 %v7507, %v7547
    %v7549 = vpop.f32.mrb[0].mxu0
    %v7550 = vadd.f32 %v7509, %v7549
    %v7551 = vpop.f32.mrb[0].mxu0
    %v7552 = vpop.f32.mrb[0].mxu0
    %7553 = vdwg.mxu0
    %7554 = vmatprep.subr.bf16.mxu0 %v6369
    %7555 = vmatpush1.bf16.msra.mxu0 %v6368
    %7556 = vmatprep.subr.bf16.mxu0 %v6377
    %7557 = vmatpush1.bf16.msra.mxu0 %v6376
    %7558 = vmatprep.subr.bf16.mxu0 %v6385
    %7559 = vmatpush1.bf16.msra.mxu0 %v6384
    %7560 = vmatprep.subr.bf16.mxu0 %v6393
    %7561 = vmatpush1.bf16.msra.mxu0 %v6392
    %7562 = vmatprep.subr.bf16.mxu0 %v6401
    %7563 = vmatpush1.bf16.msra.mxu0 %v6400
    %7564 = vmatprep.subr.bf16.mxu0 %v6409
    %7565 = vmatpush1.bf16.msra.mxu0 %v6408
    %7566 = vmatprep.subr.bf16.mxu0 %v6417
    %7567 = vmatpush1.bf16.msra.mxu0 %v6416
    %7568 = vmatprep.subr.bf16.mxu0 %v6425
    %7569 = vmatpush1.bf16.msra.mxu0 %v6424
    %7570 = vmatprep.subr.bf16.mxu0 %v6433
    %7571 = vmatpush1.bf16.msra.mxu0 %v6432
    %7572 = vmatprep.subr.bf16.mxu0 %v6441
    %7573 = vmatpush1.bf16.msra.mxu0 %v6440
    %7574 = vmatprep.subr.bf16.mxu0 %v6449
    %7575 = vmatpush1.bf16.msra.mxu0 %v6448
    %7576 = vmatprep.subr.bf16.mxu0 %v6457
    %7577 = vmatpush1.bf16.msra.mxu0 %v6456
    %7578 = vmatprep.subr.bf16.mxu0 %v6465
    %7579 = vmatpush1.bf16.msra.mxu0 %v6464
    %7580 = vmatprep.subr.bf16.mxu0 %v6473
    %7581 = vmatpush1.bf16.msra.mxu0 %v6472
    %7582 = vmatprep.subr.bf16.mxu0 %v6481
    %7583 = vmatpush1.bf16.msra.mxu0 %v6480
    %7584 = vmatprep.subr.bf16.mxu0 %v6489
    %7585 = vmatpush1.bf16.msra.mxu0 %v6488
    %7586 = vmatprep.mubr.bf16.mxu0 %v4269
    %7587 = vmatmul.mubr.bf16.gmra.mrb[0].mxu0 %v4268
    %v7588 = vpop.f32.mrb[0].mxu0
    %v7589 = vadd.f32 %v4801, %v7588
    %v7590 = vpop.f32.mrb[0].mxu0
    %v7591 = vadd.f32 %v4805, %v7590
    %v7592 = vpop.f32.mrb[0].mxu0
    %v7593 = vpop.f32.mrb[0].mxu0
    %7594 = vdwg.mxu0
    %7595 = vmatprep.subr.bf16.mxu0 %v6497
    %7596 = vmatpush1.bf16.msra.mxu0 %v6496
    %7597 = vmatprep.subr.bf16.mxu0 %v6505
    %7598 = vmatpush1.bf16.msra.mxu0 %v6504
    %7599 = vmatprep.subr.bf16.mxu0 %v6513
    %7600 = vmatpush1.bf16.msra.mxu0 %v6512
    %7601 = vmatprep.subr.bf16.mxu0 %v6521
    %7602 = vmatpush1.bf16.msra.mxu0 %v6520
    %7603 = vmatprep.subr.bf16.mxu0 %v6529
    %7604 = vmatpush1.bf16.msra.mxu0 %v6528
    %7605 = vmatprep.subr.bf16.mxu0 %v6537
    %7606 = vmatpush1.bf16.msra.mxu0 %v6536
    %7607 = vmatprep.subr.bf16.mxu0 %v6545
    %7608 = vmatpush1.bf16.msra.mxu0 %v6544
    %7609 = vmatprep.subr.bf16.mxu0 %v6553
    %7610 = vmatpush1.bf16.msra.mxu0 %v6552
    %7611 = vmatprep.subr.bf16.mxu0 %v6561
    %7612 = vmatpush1.bf16.msra.mxu0 %v6560
    %7613 = vmatprep.subr.bf16.mxu0 %v6569
    %7614 = vmatpush1.bf16.msra.mxu0 %v6568
    %7615 = vmatprep.subr.bf16.mxu0 %v6577
    %7616 = vmatpush1.bf16.msra.mxu0 %v6576
    %7617 = vmatprep.subr.bf16.mxu0 %v6585
    %7618 = vmatpush1.bf16.msra.mxu0 %v6584
    %7619 = vmatprep.subr.bf16.mxu0 %v6593
    %7620 = vmatpush1.bf16.msra.mxu0 %v6592
    %7621 = vmatprep.subr.bf16.mxu0 %v6601
    %7622 = vmatpush1.bf16.msra.mxu0 %v6600
    %7623 = vmatprep.subr.bf16.mxu0 %v6609
    %7624 = vmatpush1.bf16.msra.mxu0 %v6608
    %7625 = vmatprep.subr.bf16.mxu0 %v6617
    %7626 = vmatpush1.bf16.msra.mxu0 %v6616
    %7627 = vmatprep.mubr.bf16.mxu0 %v4271
    %7628 = vmatmul.mubr.bf16.gmra.mrb[0].mxu0 %v4270
    %v7629 = vpop.f32.mrb[0].mxu0
    %v7630 = vadd.f32 %v7589, %v7629
    %v7631 = vpop.f32.mrb[0].mxu0
    %v7632 = vadd.f32 %v7591, %v7631
    %v7633 = vpop.f32.mrb[0].mxu0
    %v7634 = vpop.f32.mrb[0].mxu0
    %7635 = vdwg.mxu0
    %7636 = vmatprep.subr.bf16.mxu0 %v6625
    %7637 = vmatpush1.bf16.msra.mxu0 %v6624
    %7638 = vmatprep.subr.bf16.mxu0 %v6633
    %7639 = vmatpush1.bf16.msra.mxu0 %v6632
    %7640 = vmatprep.subr.bf16.mxu0 %v6641
    %7641 = vmatpush1.bf16.msra.mxu0 %v6640
    %7642 = vmatprep.subr.bf16.mxu0 %v6649
    %7643 = vmatpush1.bf16.msra.mxu0 %v6648
    %7644 = vmatprep.subr.bf16.mxu0 %v6657
    %7645 = vmatpush1.bf16.msra.mxu0 %v6656
    %7646 = vmatprep.subr.bf16.mxu0 %v6665
    %7647 = vmatpush1.bf16.msra.mxu0 %v6664
    %7648 = vmatprep.subr.bf16.mxu0 %v6673
    %7649 = vmatpush1.bf16.msra.mxu0 %v6672
    %7650 = vmatprep.subr.bf16.mxu0 %v6681
    %7651 = vmatpush1.bf16.msra.mxu0 %v6680
    %7652 = vmatprep.subr.bf16.mxu0 %v6689
    %7653 = vmatpush1.bf16.msra.mxu0 %v6688
    %7654 = vmatprep.subr.bf16.mxu0 %v6697
    %7655 = vmatpush1.bf16.msra.mxu0 %v6696
    %7656 = vmatprep.subr.bf16.mxu0 %v6705
    %7657 = vmatpush1.bf16.msra.mxu0 %v6704
    %7658 = vmatprep.subr.bf16.mxu0 %v6713
    %7659 = vmatpush1.bf16.msra.mxu0 %v6712
    %7660 = vmatprep.subr.bf16.mxu0 %v6721
    %7661 = vmatpush1.bf16.msra.mxu0 %v6720
    %7662 = vmatprep.subr.bf16.mxu0 %v6729
    %7663 = vmatpush1.bf16.msra.mxu0 %v6728
    %7664 = vmatprep.subr.bf16.mxu0 %v6737
    %7665 = vmatpush1.bf16.msra.mxu0 %v6736
    %7666 = vmatprep.subr.bf16.mxu0 %v6745
    %7667 = vmatpush1.bf16.msra.mxu0 %v6744
    %7668 = vmatprep.mubr.bf16.mxu0 %v4273
    %7669 = vmatmul.mubr.bf16.gmra.mrb[0].mxu0 %v4272
    %v7670 = vpop.f32.mrb[0].mxu0
    %v7671 = vadd.f32 %v7630, %v7670
    %v7672 = vpop.f32.mrb[0].mxu0
    %v7673 = vadd.f32 %v7632, %v7672
    %v7674 = vpop.f32.mrb[0].mxu0
    %v7675 = vpop.f32.mrb[0].mxu0
    %7676 = vdwg.mxu0
    %7677 = vmatprep.subr.bf16.mxu0 %v6753
    %7678 = vmatpush1.bf16.msra.mxu0 %v6752
    %7679 = vmatprep.subr.bf16.mxu0 %v6761
    %7680 = vmatpush1.bf16.msra.mxu0 %v6760
    %7681 = vmatprep.subr.bf16.mxu0 %v6769
    %7682 = vmatpush1.bf16.msra.mxu0 %v6768
    %7683 = vmatprep.subr.bf16.mxu0 %v6777
    %7684 = vmatpush1.bf16.msra.mxu0 %v6776
    %7685 = vmatprep.subr.bf16.mxu0 %v6785
    %7686 = vmatpush1.bf16.msra.mxu0 %v6784
    %7687 = vmatprep.subr.bf16.mxu0 %v6793
    %7688 = vmatpush1.bf16.msra.mxu0 %v6792
    %7689 = vmatprep.subr.bf16.mxu0 %v6801
    %7690 = vmatpush1.bf16.msra.mxu0 %v6800
    %7691 = vmatprep.subr.bf16.mxu0 %v6809
    %7692 = vmatpush1.bf16.msra.mxu0 %v6808
    %7693 = vmatprep.subr.bf16.mxu0 %v6817
    %7694 = vmatpush1.bf16.msra.mxu0 %v6816
    %7695 = vmatprep.subr.bf16.mxu0 %v6825
    %7696 = vmatpush1.bf16.msra.mxu0 %v6824
    %7697 = vmatprep.subr.bf16.mxu0 %v6833
    %7698 = vmatpush1.bf16.msra.mxu0 %v6832
    %7699 = vmatprep.subr.bf16.mxu0 %v6841
    %7700 = vmatpush1.bf16.msra.mxu0 %v6840
    %7701 = vmatprep.subr.bf16.mxu0 %v6849
    %7702 = vmatpush1.bf16.msra.mxu0 %v6848
    %7703 = vmatprep.subr.bf16.mxu0 %v6857
    %7704 = vmatpush1.bf16.msra.mxu0 %v6856
    %7705 = vmatprep.subr.bf16.mxu0 %v6865
    %7706 = vmatpush1.bf16.msra.mxu0 %v6864
    %7707 = vmatprep.subr.bf16.mxu0 %v6873
    %7708 = vmatpush1.bf16.msra.mxu0 %v6872
    %7709 = vmatprep.mubr.bf16.mxu0 %v4275
    %7710 = vmatmul.mubr.bf16.gmra.mrb[0].mxu0 %v4274
    %v7711 = vpop.f32.mrb[0].mxu0
    %v7712 = vadd.f32 %v7671, %v7711
    %v7713 = vpop.f32.mrb[0].mxu0
    %v7714 = vadd.f32 %v7673, %v7713
    %v7715 = vpop.f32.mrb[0].mxu0
    %v7716 = vpop.f32.mrb[0].mxu0
    %7717 = vdwg.mxu0
    %7718 = vmatprep.subr.bf16.mxu0 %v6371
    %7719 = vmatpush1.bf16.msra.mxu0 %v6370
    %7720 = vmatprep.subr.bf16.mxu0 %v6379
    %7721 = vmatpush1.bf16.msra.mxu0 %v6378
    %7722 = vmatprep.subr.bf16.mxu0 %v6387
    %7723 = vmatpush1.bf16.msra.mxu0 %v6386
    %7724 = vmatprep.subr.bf16.mxu0 %v6395
    %7725 = vmatpush1.bf16.msra.mxu0 %v6394
    %7726 = vmatprep.subr.bf16.mxu0 %v6403
    %7727 = vmatpush1.bf16.msra.mxu0 %v6402
    %7728 = vmatprep.subr.bf16.mxu0 %v6411
    %7729 = vmatpush1.bf16.msra.mxu0 %v6410
    %7730 = vmatprep.subr.bf16.mxu0 %v6419
    %7731 = vmatpush1.bf16.msra.mxu0 %v6418
    %7732 = vmatprep.subr.bf16.mxu0 %v6427
    %7733 = vmatpush1.bf16.msra.mxu0 %v6426
    %7734 = vmatprep.subr.bf16.mxu0 %v6435
    %7735 = vmatpush1.bf16.msra.mxu0 %v6434
    %7736 = vmatprep.subr.bf16.mxu0 %v6443
    %7737 = vmatpush1.bf16.msra.mxu0 %v6442
    %7738 = vmatprep.subr.bf16.mxu0 %v6451
    %7739 = vmatpush1.bf16.msra.mxu0 %v6450
    %7740 = vmatprep.subr.bf16.mxu0 %v6459
    %7741 = vmatpush1.bf16.msra.mxu0 %v6458
    %7742 = vmatprep.subr.bf16.mxu0 %v6467
    %7743 = vmatpush1.bf16.msra.mxu0 %v6466
    %7744 = vmatprep.subr.bf16.mxu0 %v6475
    %7745 = vmatpush1.bf16.msra.mxu0 %v6474
    %7746 = vmatprep.subr.bf16.mxu0 %v6483
    %7747 = vmatpush1.bf16.msra.mxu0 %v6482
    %7748 = vmatprep.subr.bf16.mxu0 %v6491
    %7749 = vmatpush1.bf16.msra.mxu0 %v6490
    %7750 = vmatprep.mubr.bf16.mxu0 %v4269
    %7751 = vmatmul.mubr.bf16.gmra.mrb[0].mxu0 %v4268
    %v7752 = vpop.f32.mrb[0].mxu0
    %v7753 = vadd.f32 %v4809, %v7752
    %v7754 = vpop.f32.mrb[0].mxu0
    %v7755 = vadd.f32 %v4813, %v7754
    %v7756 = vpop.f32.mrb[0].mxu0
    %v7757 = vpop.f32.mrb[0].mxu0
    %7758 = vdwg.mxu0
    %7759 = vmatprep.subr.bf16.mxu0 %v6499
    %7760 = vmatpush1.bf16.msra.mxu0 %v6498
    %7761 = vmatprep.subr.bf16.mxu0 %v6507
    %7762 = vmatpush1.bf16.msra.mxu0 %v6506
    %7763 = vmatprep.subr.bf16.mxu0 %v6515
    %7764 = vmatpush1.bf16.msra.mxu0 %v6514
    %7765 = vmatprep.subr.bf16.mxu0 %v6523
    %7766 = vmatpush1.bf16.msra.mxu0 %v6522
    %7767 = vmatprep.subr.bf16.mxu0 %v6531
    %7768 = vmatpush1.bf16.msra.mxu0 %v6530
    %7769 = vmatprep.subr.bf16.mxu0 %v6539
    %7770 = vmatpush1.bf16.msra.mxu0 %v6538
    %7771 = vmatprep.subr.bf16.mxu0 %v6547
    %7772 = vmatpush1.bf16.msra.mxu0 %v6546
    %7773 = vmatprep.subr.bf16.mxu0 %v6555
    %7774 = vmatpush1.bf16.msra.mxu0 %v6554
    %7775 = vmatprep.subr.bf16.mxu0 %v6563
    %7776 = vmatpush1.bf16.msra.mxu0 %v6562
    %7777 = vmatprep.subr.bf16.mxu0 %v6571
    %7778 = vmatpush1.bf16.msra.mxu0 %v6570
    %7779 = vmatprep.subr.bf16.mxu0 %v6579
    %7780 = vmatpush1.bf16.msra.mxu0 %v6578
    %7781 = vmatprep.subr.bf16.mxu0 %v6587
    %7782 = vmatpush1.bf16.msra.mxu0 %v6586
    %7783 = vmatprep.subr.bf16.mxu0 %v6595
    %7784 = vmatpush1.bf16.msra.mxu0 %v6594
    %7785 = vmatprep.subr.bf16.mxu0 %v6603
    %7786 = vmatpush1.bf16.msra.mxu0 %v6602
    %7787 = vmatprep.subr.bf16.mxu0 %v6611
    %7788 = vmatpush1.bf16.msra.mxu0 %v6610
    %7789 = vmatprep.subr.bf16.mxu0 %v6619
    %7790 = vmatpush1.bf16.msra.mxu0 %v6618
    %7791 = vmatprep.mubr.bf16.mxu0 %v4271
    %7792 = vmatmul.mubr.bf16.gmra.mrb[0].mxu0 %v4270
    %v7793 = vpop.f32.mrb[0].mxu0
    %v7794 = vadd.f32 %v7753, %v7793
    %v7795 = vpop.f32.mrb[0].mxu0
    %v7796 = vadd.f32 %v7755, %v7795
    %v7797 = vpop.f32.mrb[0].mxu0
    %v7798 = vpop.f32.mrb[0].mxu0
    %7799 = vdwg.mxu0
    %7800 = vmatprep.subr.bf16.mxu0 %v6627
    %7801 = vmatpush1.bf16.msra.mxu0 %v6626
    %7802 = vmatprep.subr.bf16.mxu0 %v6635
    %7803 = vmatpush1.bf16.msra.mxu0 %v6634
    %7804 = vmatprep.subr.bf16.mxu0 %v6643
    %7805 = vmatpush1.bf16.msra.mxu0 %v6642
    %7806 = vmatprep.subr.bf16.mxu0 %v6651
    %7807 = vmatpush1.bf16.msra.mxu0 %v6650
    %7808 = vmatprep.subr.bf16.mxu0 %v6659
    %7809 = vmatpush1.bf16.msra.mxu0 %v6658
    %7810 = vmatprep.subr.bf16.mxu0 %v6667
    %7811 = vmatpush1.bf16.msra.mxu0 %v6666
    %7812 = vmatprep.subr.bf16.mxu0 %v6675
    %7813 = vmatpush1.bf16.msra.mxu0 %v6674
    %7814 = vmatprep.subr.bf16.mxu0 %v6683
    %7815 = vmatpush1.bf16.msra.mxu0 %v6682
    %7816 = vmatprep.subr.bf16.mxu0 %v6691
    %7817 = vmatpush1.bf16.msra.mxu0 %v6690
    %7818 = vmatprep.subr.bf16.mxu0 %v6699
    %7819 = vmatpush1.bf16.msra.mxu0 %v6698
    %7820 = vmatprep.subr.bf16.mxu0 %v6707
    %7821 = vmatpush1.bf16.msra.mxu0 %v6706
    %7822 = vmatprep.subr.bf16.mxu0 %v6715
    %7823 = vmatpush1.bf16.msra.mxu0 %v6714
    %7824 = vmatprep.subr.bf16.mxu0 %v6723
    %7825 = vmatpush1.bf16.msra.mxu0 %v6722
    %7826 = vmatprep.subr.bf16.mxu0 %v6731
    %7827 = vmatpush1.bf16.msra.mxu0 %v6730
    %7828 = vmatprep.subr.bf16.mxu0 %v6739
    %7829 = vmatpush1.bf16.msra.mxu0 %v6738
    %7830 = vmatprep.subr.bf16.mxu0 %v6747
    %7831 = vmatpush1.bf16.msra.mxu0 %v6746
    %7832 = vmatprep.mubr.bf16.mxu0 %v4273
    %7833 = vmatmul.mubr.bf16.gmra.mrb[0].mxu0 %v4272
    %v7834 = vpop.f32.mrb[0].mxu0
    %v7835 = vadd.f32 %v7794, %v7834
    %v7836 = vpop.f32.mrb[0].mxu0
    %v7837 = vadd.f32 %v7796, %v7836
    %v7838 = vpop.f32.mrb[0].mxu0
    %v7839 = vpop.f32.mrb[0].mxu0
    %7840 = vdwg.mxu0
    %7841 = vmatprep.subr.bf16.mxu0 %v6755
    %7842 = vmatpush1.bf16.msra.mxu0 %v6754
    %7843 = vmatprep.subr.bf16.mxu0 %v6763
    %7844 = vmatpush1.bf16.msra.mxu0 %v6762
    %7845 = vmatprep.subr.bf16.mxu0 %v6771
    %7846 = vmatpush1.bf16.msra.mxu0 %v6770
    %7847 = vmatprep.subr.bf16.mxu0 %v6779
    %7848 = vmatpush1.bf16.msra.mxu0 %v6778
    %7849 = vmatprep.subr.bf16.mxu0 %v6787
    %7850 = vmatpush1.bf16.msra.mxu0 %v6786
    %7851 = vmatprep.subr.bf16.mxu0 %v6795
    %7852 = vmatpush1.bf16.msra.mxu0 %v6794
    %7853 = vmatprep.subr.bf16.mxu0 %v6803
    %7854 = vmatpush1.bf16.msra.mxu0 %v6802
    %7855 = vmatprep.subr.bf16.mxu0 %v6811
    %7856 = vmatpush1.bf16.msra.mxu0 %v6810
    %7857 = vmatprep.subr.bf16.mxu0 %v6819
    %7858 = vmatpush1.bf16.msra.mxu0 %v6818
    %7859 = vmatprep.subr.bf16.mxu0 %v6827
    %7860 = vmatpush1.bf16.msra.mxu0 %v6826
    %7861 = vmatprep.subr.bf16.mxu0 %v6835
    %7862 = vmatpush1.bf16.msra.mxu0 %v6834
    %7863 = vmatprep.subr.bf16.mxu0 %v6843
    %7864 = vmatpush1.bf16.msra.mxu0 %v6842
    %7865 = vmatprep.subr.bf16.mxu0 %v6851
    %7866 = vmatpush1.bf16.msra.mxu0 %v6850
    %7867 = vmatprep.subr.bf16.mxu0 %v6859
    %7868 = vmatpush1.bf16.msra.mxu0 %v6858
    %7869 = vmatprep.subr.bf16.mxu0 %v6867
    %7870 = vmatpush1.bf16.msra.mxu0 %v6866
    %7871 = vmatprep.subr.bf16.mxu0 %v6875
    %7872 = vmatpush1.bf16.msra.mxu0 %v6874
    %7873 = vmatprep.mubr.bf16.mxu0 %v4275
    %7874 = vmatmul.mubr.bf16.gmra.mrb[0].mxu0 %v4274
    %v7875 = vpop.f32.mrb[0].mxu0
    %v7876 = vadd.f32 %v7835, %v7875
    %v7877 = vpop.f32.mrb[0].mxu0
    %v7878 = vadd.f32 %v7837, %v7877
    %v7879 = vpop.f32.mrb[0].mxu0
    %v7880 = vpop.f32.mrb[0].mxu0
    %7881 = vdwg.mxu0
    %7882 = vmatprep.subr.bf16.mxu0 %v6373
    %7883 = vmatpush1.bf16.msra.mxu0 %v6372
    %7884 = vmatprep.subr.bf16.mxu0 %v6381
    %7885 = vmatpush1.bf16.msra.mxu0 %v6380
    %7886 = vmatprep.subr.bf16.mxu0 %v6389
    %7887 = vmatpush1.bf16.msra.mxu0 %v6388
    %7888 = vmatprep.subr.bf16.mxu0 %v6397
    %7889 = vmatpush1.bf16.msra.mxu0 %v6396
    %7890 = vmatprep.subr.bf16.mxu0 %v6405
    %7891 = vmatpush1.bf16.msra.mxu0 %v6404
    %7892 = vmatprep.subr.bf16.mxu0 %v6413
    %7893 = vmatpush1.bf16.msra.mxu0 %v6412
    %7894 = vmatprep.subr.bf16.mxu0 %v6421
    %7895 = vmatpush1.bf16.msra.mxu0 %v6420
    %7896 = vmatprep.subr.bf16.mxu0 %v6429
    %7897 = vmatpush1.bf16.msra.mxu0 %v6428
    %7898 = vmatprep.subr.bf16.mxu0 %v6437
    %7899 = vmatpush1.bf16.msra.mxu0 %v6436
    %7900 = vmatprep.subr.bf16.mxu0 %v6445
    %7901 = vmatpush1.bf16.msra.mxu0 %v6444
    %7902 = vmatprep.subr.bf16.mxu0 %v6453
    %7903 = vmatpush1.bf16.msra.mxu0 %v6452
    %7904 = vmatprep.subr.bf16.mxu0 %v6461
    %7905 = vmatpush1.bf16.msra.mxu0 %v6460
    %7906 = vmatprep.subr.bf16.mxu0 %v6469
    %7907 = vmatpush1.bf16.msra.mxu0 %v6468
    %7908 = vmatprep.subr.bf16.mxu0 %v6477
    %7909 = vmatpush1.bf16.msra.mxu0 %v6476
    %7910 = vmatprep.subr.bf16.mxu0 %v6485
    %7911 = vmatpush1.bf16.msra.mxu0 %v6484
    %7912 = vmatprep.subr.bf16.mxu0 %v6493
    %7913 = vmatpush1.bf16.msra.mxu0 %v6492
    %7914 = vmatprep.mubr.bf16.mxu0 %v4269
    %7915 = vmatmul.mubr.bf16.gmra.mrb[0].mxu0 %v4268
    %v7916 = vpop.f32.mrb[0].mxu0
    %v7917 = vadd.f32 %v4817, %v7916
    %v7918 = vpop.f32.mrb[0].mxu0
    %v7919 = vadd.f32 %v4821, %v7918
    %v7920 = vpop.f32.mrb[0].mxu0
    %v7921 = vpop.f32.mrb[0].mxu0
    %7922 = vdwg.mxu0
    %7923 = vmatprep.subr.bf16.mxu0 %v6501
    %7924 = vmatpush1.bf16.msra.mxu0 %v6500
    %7925 = vmatprep.subr.bf16.mxu0 %v6509
    %7926 = vmatpush1.bf16.msra.mxu0 %v6508
    %7927 = vmatprep.subr.bf16.mxu0 %v6517
    %7928 = vmatpush1.bf16.msra.mxu0 %v6516
    %7929 = vmatprep.subr.bf16.mxu0 %v6525
    %7930 = vmatpush1.bf16.msra.mxu0 %v6524
    %7931 = vmatprep.subr.bf16.mxu0 %v6533
    %7932 = vmatpush1.bf16.msra.mxu0 %v6532
    %7933 = vmatprep.subr.bf16.mxu0 %v6541
    %7934 = vmatpush1.bf16.msra.mxu0 %v6540
    %7935 = vmatprep.subr.bf16.mxu0 %v6549
    %7936 = vmatpush1.bf16.msra.mxu0 %v6548
    %7937 = vmatprep.subr.bf16.mxu0 %v6557
    %7938 = vmatpush1.bf16.msra.mxu0 %v6556
    %7939 = vmatprep.subr.bf16.mxu0 %v6565
    %7940 = vmatpush1.bf16.msra.mxu0 %v6564
    %7941 = vmatprep.subr.bf16.mxu0 %v6573
    %7942 = vmatpush1.bf16.msra.mxu0 %v6572
    %7943 = vmatprep.subr.bf16.mxu0 %v6581
    %7944 = vmatpush1.bf16.msra.mxu0 %v6580
    %7945 = vmatprep.subr.bf16.mxu0 %v6589
    %7946 = vmatpush1.bf16.msra.mxu0 %v6588
    %7947 = vmatprep.subr.bf16.mxu0 %v6597
    %7948 = vmatpush1.bf16.msra.mxu0 %v6596
    %7949 = vmatprep.subr.bf16.mxu0 %v6605
    %7950 = vmatpush1.bf16.msra.mxu0 %v6604
    %7951 = vmatprep.subr.bf16.mxu0 %v6613
    %7952 = vmatpush1.bf16.msra.mxu0 %v6612
    %7953 = vmatprep.subr.bf16.mxu0 %v6621
    %7954 = vmatpush1.bf16.msra.mxu0 %v6620
    %7955 = vmatprep.mubr.bf16.mxu0 %v4271
    %7956 = vmatmul.mubr.bf16.gmra.mrb[0].mxu0 %v4270
    %v7957 = vpop.f32.mrb[0].mxu0
    %v7958 = vadd.f32 %v7917, %v7957
    %v7959 = vpop.f32.mrb[0].mxu0
    %v7960 = vadd.f32 %v7919, %v7959
    %v7961 = vpop.f32.mrb[0].mxu0
    %v7962 = vpop.f32.mrb[0].mxu0
    %7963 = vdwg.mxu0
    %7964 = vmatprep.subr.bf16.mxu0 %v6629
    %7965 = vmatpush1.bf16.msra.mxu0 %v6628
    %7966 = vmatprep.subr.bf16.mxu0 %v6637
    %7967 = vmatpush1.bf16.msra.mxu0 %v6636
    %7968 = vmatprep.subr.bf16.mxu0 %v6645
    %7969 = vmatpush1.bf16.msra.mxu0 %v6644
    %7970 = vmatprep.subr.bf16.mxu0 %v6653
    %7971 = vmatpush1.bf16.msra.mxu0 %v6652
    %7972 = vmatprep.subr.bf16.mxu0 %v6661
    %7973 = vmatpush1.bf16.msra.mxu0 %v6660
    %7974 = vmatprep.subr.bf16.mxu0 %v6669
    %7975 = vmatpush1.bf16.msra.mxu0 %v6668
    %7976 = vmatprep.subr.bf16.mxu0 %v6677
    %7977 = vmatpush1.bf16.msra.mxu0 %v6676
    %7978 = vmatprep.subr.bf16.mxu0 %v6685
    %7979 = vmatpush1.bf16.msra.mxu0 %v6684
    %7980 = vmatprep.subr.bf16.mxu0 %v6693
    %7981 = vmatpush1.bf16.msra.mxu0 %v6692
    %7982 = vmatprep.subr.bf16.mxu0 %v6701
    %7983 = vmatpush1.bf16.msra.mxu0 %v6700
    %7984 = vmatprep.subr.bf16.mxu0 %v6709
    %7985 = vmatpush1.bf16.msra.mxu0 %v6708
    %7986 = vmatprep.subr.bf16.mxu0 %v6717
    %7987 = vmatpush1.bf16.msra.mxu0 %v6716
    %7988 = vmatprep.subr.bf16.mxu0 %v6725
    %7989 = vmatpush1.bf16.msra.mxu0 %v6724
    %7990 = vmatprep.subr.bf16.mxu0 %v6733
    %7991 = vmatpush1.bf16.msra.mxu0 %v6732
    %7992 = vmatprep.subr.bf16.mxu0 %v6741
    %7993 = vmatpush1.bf16.msra.mxu0 %v6740
    %7994 = vmatprep.subr.bf16.mxu0 %v6749
    %7995 = vmatpush1.bf16.msra.mxu0 %v6748
    %7996 = vmatprep.mubr.bf16.mxu0 %v4273
    %7997 = vmatmul.mubr.bf16.gmra.mrb[0].mxu0 %v4272
    %v7998 = vpop.f32.mrb[0].mxu0
    %v7999 = vadd.f32 %v7958, %v7998
    %v8000 = vpop.f32.mrb[0].mxu0
    %v8001 = vadd.f32 %v7960, %v8000
    %v8002 = vpop.f32.mrb[0].mxu0
    %v8003 = vpop.f32.mrb[0].mxu0
    %8004 = vdwg.mxu0
    %8005 = vmatprep.subr.bf16.mxu0 %v6757
    %8006 = vmatpush1.bf16.msra.mxu0 %v6756
    %8007 = vmatprep.subr.bf16.mxu0 %v6765
    %8008 = vmatpush1.bf16.msra.mxu0 %v6764
    %8009 = vmatprep.subr.bf16.mxu0 %v6773
    %8010 = vmatpush1.bf16.msra.mxu0 %v6772
    %8011 = vmatprep.subr.bf16.mxu0 %v6781
    %8012 = vmatpush1.bf16.msra.mxu0 %v6780
    %8013 = vmatprep.subr.bf16.mxu0 %v6789
    %8014 = vmatpush1.bf16.msra.mxu0 %v6788
    %8015 = vmatprep.subr.bf16.mxu0 %v6797
    %8016 = vmatpush1.bf16.msra.mxu0 %v6796
    %8017 = vmatprep.subr.bf16.mxu0 %v6805
    %8018 = vmatpush1.bf16.msra.mxu0 %v6804
    %8019 = vmatprep.subr.bf16.mxu0 %v6813
    %8020 = vmatpush1.bf16.msra.mxu0 %v6812
    %8021 = vmatprep.subr.bf16.mxu0 %v6821
    %8022 = vmatpush1.bf16.msra.mxu0 %v6820
    %8023 = vmatprep.subr.bf16.mxu0 %v6829
    %8024 = vmatpush1.bf16.msra.mxu0 %v6828
    %8025 = vmatprep.subr.bf16.mxu0 %v6837
    %8026 = vmatpush1.bf16.msra.mxu0 %v6836
    %8027 = vmatprep.subr.bf16.mxu0 %v6845
    %8028 = vmatpush1.bf16.msra.mxu0 %v6844
    %8029 = vmatprep.subr.bf16.mxu0 %v6853
    %8030 = vmatpush1.bf16.msra.mxu0 %v6852
    %8031 = vmatprep.subr.bf16.mxu0 %v6861
    %8032 = vmatpush1.bf16.msra.mxu0 %v6860
    %8033 = vmatprep.subr.bf16.mxu0 %v6869
    %8034 = vmatpush1.bf16.msra.mxu0 %v6868
    %8035 = vmatprep.subr.bf16.mxu0 %v6877
    %8036 = vmatpush1.bf16.msra.mxu0 %v6876
    %8037 = vmatprep.mubr.bf16.mxu0 %v4275
    %8038 = vmatmul.mubr.bf16.gmra.mrb[0].mxu0 %v4274
    %v8039 = vpop.f32.mrb[0].mxu0
    %v8040 = vadd.f32 %v7999, %v8039
    %v8041 = vpop.f32.mrb[0].mxu0
    %v8042 = vadd.f32 %v8001, %v8041
    %v8043 = vpop.f32.mrb[0].mxu0
    %v8044 = vpop.f32.mrb[0].mxu0
    %8045 = vdwg.mxu0
    %vm8046 = vcmp.gt.f32.partialorder %v7548, 0.0
    %vm8047 = vcmp.gt.f32.partialorder %v7550, 0.0
    %vm8048 = vcmp.gt.f32.partialorder %v7712, 0.0
    %vm8049 = vcmp.gt.f32.partialorder %v7714, 0.0
    %vm8050 = vcmp.gt.f32.partialorder %v7876, 0.0
    %vm8051 = vcmp.gt.f32.partialorder %v7878, 0.0
    %vm8052 = vcmp.gt.f32.partialorder %v8040, 0.0
    %vm8053 = vcmp.gt.f32.partialorder %v8042, 0.0
    %v8054 = vmul.f32 %v7548, 0.2
    %v8055 = vmul.f32 %v7550, 0.2
    %v8056 = vmul.f32 %v7712, 0.2
    %v8057 = vmul.f32 %v7714, 0.2
    %v8058 = vmul.f32 %v7876, 0.2
    %v8059 = vmul.f32 %v7878, 0.2
    %v8060 = vmul.f32 %v8040, 0.2
    %v8061 = vmul.f32 %v8042, 0.2
    %v8062 = vsel %vm8046, %v7548, %v8054
    %v8063 = vsel %vm8047, %v7550, %v8055
    %v8064 = vsel %vm8048, %v7712, %v8056
    %v8065 = vsel %vm8049, %v7714, %v8057
    %v8066 = vsel %vm8050, %v7876, %v8058
    %v8067 = vsel %vm8051, %v7878, %v8059
    %v8068 = vsel %vm8052, %v8040, %v8060
    %v8069 = vsel %vm8053, %v8042, %v8061
    %v8070 = vld [vmem:[#allocation14] sm:$0xff]
    %v8071 = vunpack.c.l.bf16 %v8070
    %v8072 = vunpack.c.h.bf16 %v8070
    %v8075 = vlaneseq
    %v8076 = vshrl.u32 %v8075, 7
    %v8077 = vsub.s32 0, %v8076
    %v8078 = vrot.slane %v8071, %v8077
    %v8079 = vlaneseq
    %v8080 = vshrl.u32 %v8079, 7
    %v8081 = vsub.s32 2, %v8080
    %v8082 = vrot.slane %v8071, %v8081
    %v8083 = vlaneseq
    %v8084 = vshrl.u32 %v8083, 7
    %v8085 = vsub.s32 4, %v8084
    %v8086 = vrot.slane %v8071, %v8085
    %v8087 = vlaneseq
    %v8088 = vshrl.u32 %v8087, 7
    %v8089 = vsub.s32 6, %v8088
    %v8090 = vrot.slane %v8071, %v8089
    %v8091 = vlaneseq
    %v8092 = vshrl.u32 %v8091, 7
    %v8093 = vsub.s32 0, %v8092
    %v8094 = vrot.slane %v8072, %v8093
    %v8095 = vlaneseq
    %v8096 = vshrl.u32 %v8095, 7
    %v8097 = vsub.s32 2, %v8096
    %v8098 = vrot.slane %v8072, %v8097
    %v8099 = vlaneseq
    %v8100 = vshrl.u32 %v8099, 7
    %v8101 = vsub.s32 4, %v8100
    %v8102 = vrot.slane %v8072, %v8101
    %v8103 = vlaneseq
    %v8104 = vshrl.u32 %v8103, 7
    %v8105 = vsub.s32 6, %v8104
    %v8106 = vrot.slane %v8072, %v8105
    %v8115 = vlaneseq
    %v8116 = vshrl.u32 %v8115, 7
    %v8117 = vsub.s32 0, %v8116
    %v8118 = vrot.slane %v8078, %v8117
    %v8119 = vlaneseq
    %v8120 = vshrl.u32 %v8119, 7
    %v8121 = vsub.s32 0, %v8120
    %v8122 = vrot.slane %v8082, %v8121
    %v8123 = vlaneseq
    %v8124 = vshrl.u32 %v8123, 7
    %v8125 = vsub.s32 0, %v8124
    %v8126 = vrot.slane %v8086, %v8125
    %v8127 = vlaneseq
    %v8128 = vshrl.u32 %v8127, 7
    %v8129 = vsub.s32 0, %v8128
    %v8130 = vrot.slane %v8090, %v8129
    %v8131 = vlaneseq
    %v8132 = vshrl.u32 %v8131, 7
    %v8133 = vsub.s32 0, %v8132
    %v8134 = vrot.slane %v8094, %v8133
    %v8135 = vlaneseq
    %v8136 = vshrl.u32 %v8135, 7
    %v8137 = vsub.s32 0, %v8136
    %v8138 = vrot.slane %v8098, %v8137
    %v8139 = vlaneseq
    %v8140 = vshrl.u32 %v8139, 7
    %v8141 = vsub.s32 0, %v8140
    %v8142 = vrot.slane %v8102, %v8141
    %v8143 = vlaneseq
    %v8144 = vshrl.u32 %v8143, 7
    %v8145 = vsub.s32 0, %v8144
    %v8146 = vrot.slane %v8106, %v8145
    %v8147 = vmul.f32 %v8062, %v8118
    %v8148 = vmul.f32 %v8063, %v8122
    %v8149 = vmul.f32 %v8064, %v8126
    %v8150 = vmul.f32 %v8065, %v8130
    %v8151 = vmul.f32 %v8066, %v8134
    %v8152 = vmul.f32 %v8067, %v8138
    %v8153 = vmul.f32 %v8068, %v8142
    %v8154 = vmul.f32 %v8069, %v8146
    %v8155 = vadd.f32 %v8147, %v8148
    %v8156 = vadd.f32 %v8155, %v8149
    %v8157 = vadd.f32 %v8156, %v8150
    %v8158 = vadd.f32 %v8157, %v8151
    %v8159 = vadd.f32 %v8158, %v8152
    %v8160 = vadd.f32 %v8159, %v8153
    %v8161 = vadd.f32 %v8160, %v8154
    %8162 = vadd.xlane.f32.xlu0 %v8161
    %v8163 = vpop.xlane.xlu0 %8162
    %v8164 = vld [vmem:[#allocation2] sm:$0x1]
    %v8166 = vlaneseq
    %v8167 = vshrl.u32 %v8166, 7
    %v8168 = vsub.s32 0, %v8167
    %v8169 = vrot.slane %v8164, %v8168
    %v8171 = vadd.f32 %v8163, %v8169
    %v8172 = vxor.u32 %v8171, 2147483648
    %v8173 = vmul.f32 %v8172, 1.442695
    %v8174 = vpow.pop %v8173
    %v8175 = vadd.f32 %v8174, 1.0
    %v8176 = vrcp.pop %v8175
    %v8177 = vmul.f32 1.0, %v8176
    %vm8178 = vcmask 7168
    %8179 = vst.msk [vmem:[%s9] sm:$0xff] %vm8178, %v8177
    // Predicated region
    $region70: #{discriminator_forward.1} parent=1 // pred_check
      _
    $region71: #{discriminator_forward.1} parent=1 // pred_check_branch
      %8181 = sbr.rel (0) target = $region73
    $region72: #{discriminator_forward.1} parent=1 // pred_region
      _
    $region73: #{discriminator_forward.1} parent=1 // pred_fallthru
      _
    // Predicated region
    $region74: #{discriminator_forward.1} parent=1 // pred_check
      _
    $region75: #{discriminator_forward.1} parent=1 // pred_check_branch
      %8183 = sbr.rel (0) target = $region77
    $region76: #{discriminator_forward.1} parent=1 // pred_region
      _
    $region77: #{discriminator_forward.1} parent=1 // pred_fallthru
      _
    %8184 = vsyncpa [#allocation4], 1
    %8185 = vsyncpa [#allocation6], 1
    %8186 = vsyncpa [#allocation9], 1
    %8187 = vsyncpa [#allocation12], 1
    %8188 = vsyncpa [#allocation15], 1

</llo_original>
